<compile_context>
chip_gen: v7x
topology: tpu7x:2x2x1
jax: 0.10.0
libtpu: 0.0.40
codegen_flags: <defaults>
</compile_context>

<pallas_src>
import jax
import jax.numpy as jnp
from jax import lax
from jax.experimental import pallas as pl
from jax.experimental.pallas import tpu as pltpu

# ----------------------------- model constants ------------------------------
C_IN = 3                       # RGB input
H = W = 16                     # small spatial size (imgsize analogue)
PATCH = 4                      # patch size analogue
GRID = H // PATCH              # 4
NP = GRID * GRID               # 16 ViT patch tokens
EMBED = 32                     # embed_dim analogue
DEPTH = 12                     # ViT depth (forward uses patch_feas[1:12], [2::2])
KSP = 9                        # superpixel assignment channels (3x3 stand-in)
HW = H * W                     # 256
PATCH_DIM = C_IN * PATCH * PATCH   # 48
CNN_DIM = 32                   # feature_root analogue (== EMBED; MDN add relies on it)
N192 = (H // 2) * (W // 2)     # 64
N96 = (H // 4) * (W // 4)      # 16 (== NP)


def _vmem():
    return pl.BlockSpec(memory_space=pltpu.MemorySpace.VMEM)


def _rowmm(w_row, x):
    """(1, E) x (N, E) -> (1, N): contract the trailing feature dim (rhs^T)."""
    return lax.dot_general(w_row, x, (((1,), (1,)), ((), ())),
                           preferred_element_type=jnp.float32)


# ------------------------------ Pallas kernels -------------------------------
def _encoder_kernel(xin_ref, wp_ref, wenc_ref, feas_ref):
    """Fused patch-embed + 12 residual-tanh blocks; emits all 12 layer outputs.

    xin:  (B*(NP+1), PATCH_DIM)   wp: (PATCH_DIM, EMBED)
    wenc: (DEPTH, EMBED, EMBED)   feas: (DEPTH, B*(NP+1), EMBED)
    """
    xt = jnp.dot(xin_ref[...], wp_ref[...], preferred_element_type=jnp.float32)
    for i in range(DEPTH):
        xt = xt + jnp.tanh(
            jnp.dot(xt, wenc_ref[i], preferred_element_type=jnp.float32))
        feas_ref[i] = xt


def _spnet_kernel(img_chw_ref, img_tok_ref, p2_ref, p4_ref,
                  wsp_ref, w192_ref, w96_ref, wspe_ref,
                  prob_ref, f192_ref, f96_ref, spemb_ref):
    """Fused SuperPixelNet + hard assignment + SP_Embedding (per-batch loop).

    img_chw: (B, C, HW)  img_tok: (B, HW, C)  p2: (B, 64, C)  p4: (B, 16, C)
    wsp: (KSP, C)  w192/w96: (C, CNN_DIM)  wspe: (C, EMBED)
    prob: (B, KSP, HW)  f192: (B, 64, CNN_DIM)  f96: (B, 16, CNN_DIM)
    spemb: (B, KSP, EMBED)
    """
    bsz = img_chw_ref.shape[0]
    for b in range(bsz):
        img_c = img_chw_ref[b]                                    # (C, HW)
        logits = jnp.dot(wsp_ref[...], img_c,
                         preferred_element_type=jnp.float32)      # (KSP, HW)
        # Hard assignment straight from the logits (== argmax of the softmax).
        m = jnp.max(logits, axis=0, keepdims=True)
        prob_b = jnp.where(logits == m, 1.0, 0.0).astype(jnp.float32)
        prob_ref[b] = prob_b
        f192_ref[b] = jnp.dot(p2_ref[b], w192_ref[...],
                              preferred_element_type=jnp.float32)  # (64, 32)
        f96_ref[b] = jnp.dot(p4_ref[b], w96_ref[...],
                             preferred_element_type=jnp.float32)   # (16, 32)
        # superpixel pooling + embedding, all VMEM-resident
        pooled = jnp.dot(prob_b, img_tok_ref[b],
                         preferred_element_type=jnp.float32)       # (KSP, C)
        denom = jnp.sum(prob_b, axis=1, keepdims=True) + 1e-6
        pooled = pooled / denom
        spemb_ref[b] = jnp.dot(pooled, wspe_ref[...],
                               preferred_element_type=jnp.float32)  # (KSP, E)


def _spe_branch_kernel(sp_ref, pf_ref, out_ref):
    """Fused 11-level cross attention: sp tokens attend to ViT patch tokens.

    sp: (B, KSP, E)   pf: (NLEV, B, NP, E)   out: (NLEV, B, KSP, E)
    """
    nlev = pf_ref.shape[0]
    bsz = sp_ref.shape[0]
    scale = float(EMBED) ** -0.5
    for b in range(bsz):
        sp = sp_ref[b]                                            # (KSP, E)
        for l in range(nlev):
            kv = pf_ref[l, b]                                     # (NP, E)
            s = lax.dot_general(sp, kv, (((1,), (1,)), ((), ())),
                                preferred_element_type=jnp.float32) * scale
            m = jnp.max(s, axis=-1, keepdims=True)
            e = jnp.exp(s - m)
            attn = e / jnp.sum(e, axis=-1, keepdims=True)          # exact softmax
            sp = sp + jnp.dot(attn, kv, preferred_element_type=jnp.float32)
            out_ref[l, b] = sp


def _mdn_kernel(patch_ref, spsel_ref, f96_ref, prob_ref, up_ref,
                wpatch_ref, wsp_ref, maps_ref):
    """Fused MDN decoder: 5 projection heads, nearest upsample (as a matmul
    against a one-hot map) and superpixel scatter, lane-dense output.

    patch: (NSEL, B, NP, E)   spsel: (NSEL, B, KSP, E)
    f96:   (B, NP, CNN_DIM)   prob:  (B, KSP, HW)   up: (NP, HW)
    wpatch: (3, E) rows=[seg, assist_patch, assist_patch1]
    wsp:    (2, E) rows=[assist_sp, assist_sp1]
    maps:  (B, 5, HW) rows=[seg, assist_patch, assist_sp, assist_patch1, assist_sp1]
    """
    nsel = patch_ref.shape[0]
    bsz = prob_ref.shape[0]
    inv = 1.0 / float(nsel)
    up = up_ref[...]                                              # (NP, HW)
    for b in range(bsz):
        pf = patch_ref[0, b]
        spf = spsel_ref[0, b]
        for l in range(1, nsel):
            pf = pf + patch_ref[l, b]
            spf = spf + spsel_ref[l, b]
        pf = pf * inv                                             # (NP, E)
        spf = spf * inv                                           # (KSP, E)
        pf_last = patch_ref[nsel - 1, b]
        sp_last = spsel_ref[nsel - 1, b]
        # NOTE: relies on CNN_DIM == EMBED (true in this stand-in config).
        dec = f96_ref[b] + pf                                     # (NP, E)
        prob_b = prob_ref[b]                                      # (KSP, HW)

        seg_row = jax.nn.sigmoid(_rowmm(wpatch_ref[0:1, :], dec))      # (1, NP)
        ap_row = jax.nn.sigmoid(_rowmm(wpatch_ref[1:2, :], pf))        # (1, NP)
        ap1_row = jax.nn.sigmoid(_rowmm(wpatch_ref[2:3, :], pf_last))  # (1, NP)
        as_row = jax.nn.sigmoid(_rowmm(wsp_ref[0:1, :], spf))          # (1, KSP)
        as1_row = jax.nn.sigmoid(_rowmm(wsp_ref[1:2, :], sp_last))     # (1, KSP)

        maps_ref[b, 0:1, :] = jnp.dot(seg_row, up,
                                      preferred_element_type=jnp.float32)
        maps_ref[b, 1:2, :] = jnp.dot(ap_row, up,
                                      preferred_element_type=jnp.float32)
        maps_ref[b, 2:3, :] = jnp.dot(as_row, prob_b,
                                      preferred_element_type=jnp.float32)
        maps_ref[b, 3:4, :] = jnp.dot(ap1_row, up,
                                      preferred_element_type=jnp.float32)
        maps_ref[b, 4:5, :] = jnp.dot(as1_row, prob_b,
                                      preferred_element_type=jnp.float32)


# ------------------------------ parameters -----------------------------------
def init_params(key):
    keys = jax.random.split(key, 8)

    def w(k, shape, scale=0.1):
        return (scale * jax.random.normal(k, shape)).astype(jnp.float32)

    return {
        "w_patch": w(keys[0], (PATCH_DIM, EMBED)),
        "w_enc": w(keys[1], (DEPTH, EMBED, EMBED)),       # stacked encoder weights
        "w_sp_logit_t": w(keys[2], (KSP, C_IN)),          # (out, in) layout
        "w_f192": w(keys[3], (C_IN, CNN_DIM)),
        "w_f96": w(keys[4], (C_IN, CNN_DIM)),
        "w_spe": w(keys[5], (C_IN, EMBED)),
        "w_patch_proj": w(keys[6], (3, EMBED)),           # rows: seg, ap, ap1
        "w_sp_proj": w(keys[7], (2, EMBED)),              # rows: as, as1
    }


# ------------------------------ sub-modules -----------------------------------
def encoder(p, imgs):
    """Stand-in VisionTransformer fused into one kernel; returns the 12
    intermediate token tensors (cls token at position 0)."""
    B = imgs.shape[0]
    x = imgs.reshape(B, C_IN, GRID, PATCH, GRID, PATCH)
    x = x.transpose(0, 2, 4, 1, 3, 5).reshape(B, NP, PATCH_DIM)
    # zero cls-token row (0 @ w_patch == 0, matching a zero cls embedding)
    xin = jnp.concatenate([jnp.zeros((B, 1, PATCH_DIM), jnp.float32), x], axis=1)
    xin = xin.reshape(B * (NP + 1), PATCH_DIM)
    feas = pl.pallas_call(
        _encoder_kernel,
        out_shape=jax.ShapeDtypeStruct((DEPTH, B * (NP + 1), EMBED), jnp.float32),
        in_specs=[_vmem(), _vmem(), _vmem()],
        out_specs=_vmem(),
    )(xin, p["w_patch"], p["w_enc"])
    return feas.reshape(DEPTH, B, NP + 1, EMBED)


def sp_net_and_embed(p, imgs):
    """Stand-in SuperPixelNet + hard assignment + SP_Embedding in one kernel."""
    B = imgs.shape[0]
    img_chw = imgs.reshape(B, C_IN, HW)
    img_tok = img_chw.transpose(0, 2, 1)                          # (B, HW, C)
    x2 = imgs.reshape(B, C_IN, H // 2, 2, W // 2, 2).mean(axis=(3, 5))
    p2_tok = x2.reshape(B, C_IN, N192).transpose(0, 2, 1)         # (B, 64, C)
    x4 = imgs.reshape(B, C_IN, H // 4, 4, W // 4, 4).mean(axis=(3, 5))
    p4_tok = x4.reshape(B, C_IN, N96).transpose(0, 2, 1)          # (B, 16, C)
    prob, f192, f96, sp_emb = pl.pallas_call(
        _spnet_kernel,
        out_shape=(
            jax.ShapeDtypeStruct((B, KSP, HW), jnp.float32),
            jax.ShapeDtypeStruct((B, N192, CNN_DIM), jnp.float32),
            jax.ShapeDtypeStruct((B, N96, CNN_DIM), jnp.float32),
            jax.ShapeDtypeStruct((B, KSP, EMBED), jnp.float32),
        ),
        in_specs=[_vmem()] * 8,
        out_specs=(_vmem(), _vmem(), _vmem(), _vmem()),
    )(img_chw, img_tok, p2_tok, p4_tok,
      p["w_sp_logit_t"], p["w_f192"], p["w_f96"], p["w_spe"])
    return prob, f192, f96, sp_emb


def spe_branch(sp_emb, pf_stack):
    """Stand-in SPE_Branch: 11 cross-attention levels fused into one kernel."""
    nlev, B = pf_stack.shape[0], pf_stack.shape[1]
    return pl.pallas_call(
        _spe_branch_kernel,
        out_shape=jax.ShapeDtypeStruct((nlev, B, KSP, EMBED), jnp.float32),
        in_specs=[_vmem(), _vmem()],
        out_specs=_vmem(),
    )(sp_emb, pf_stack)


def _upsample_matrix():
    # up[p, h*W + w] == 1  iff  p == (h // PATCH) * GRID + (w // PATCH)
    pidx = ((jnp.arange(H)[:, None] // PATCH) * GRID
            + (jnp.arange(W)[None, :] // PATCH))
    return jax.nn.one_hot(pidx.reshape(HW), NP, dtype=jnp.float32).T   # (NP, HW)


def mdn(p, img_fea192, img_fea96, patch_sel, sp_sel, prob_flat):
    """Stand-in MDN decoder fused into one kernel with lane-dense output."""
    del img_fea192  # stand-in decoder only uses the H/4 feature map
    B = prob_flat.shape[0]
    up = _upsample_matrix()
    maps = pl.pallas_call(
        _mdn_kernel,
        out_shape=jax.ShapeDtypeStruct((B, 5, HW), jnp.float32),
        in_specs=[_vmem()] * 7,
        out_specs=_vmem(),
    )(patch_sel, sp_sel, img_fea96, prob_flat, up,
      p["w_patch_proj"], p["w_sp_proj"])
    seg_pred = maps[:, 0, :].reshape(B, 1, H, W)
    assist_patch = maps[:, 1, :].reshape(B, 1, H, W)
    assist_sp = maps[:, 2, :].reshape(B, 1, H, W)
    assist_patch1 = maps[:, 3, :].reshape(B, 1, H, W)
    assist_sp1 = maps[:, 4, :].reshape(B, 1, H, W)
    return seg_pred, assist_patch, assist_sp, assist_patch1, assist_sp1


# ------------------------------ Model.forward ---------------------------------
def forward(p, imgs_nor, labels, img_lab, xy_feat):
    # labels / img_lab / xy_feat are accepted (to mirror the torch signature)
    # but are not used by the reference forward pass.
    del labels, img_lab, xy_feat
    B = imgs_nor.shape[0]

    feas = encoder(p, imgs_nor)                          # (DEPTH, B, NP+1, E)
    patch_feas = feas[:, :, 1:, :]                       # drop cls token

    prob_flat, img_fea192, img_fea96, sp_emb = sp_net_and_embed(p, imgs_nor)
    prob = prob_flat.reshape(B, KSP, H, W)               # hard assignment map

    sp_feas = spe_branch(sp_emb, patch_feas[1:12])       # (11, B, KSP, E)

    seg_pred, assist_patch, assist_sp, assist_patch1, assist_sp1 = mdn(
        p, img_fea192, img_fea96, patch_feas[2::2], sp_feas[1::2], prob_flat)

    return prob, seg_pred, assist_patch, assist_sp, assist_patch1, assist_sp1


# ----------------------------------- main -------------------------------------
if __name__ == "__main__":
    B = 2
    key = jax.random.PRNGKey(0)
    k1, k2, k3, k4 = jax.random.split(key, 4)
    imgs_nor = jax.random.normal(k1, (B, C_IN, H, W), jnp.float32)
    labels = jax.random.uniform(k2, (B, 1, H, W), jnp.float32)
    img_lab = jax.random.normal(k3, (B, C_IN, H, W), jnp.float32)
    xy_feat = jax.random.normal(k4, (B, 2, H, W), jnp.float32)

    params = init_params(jax.random.PRNGKey(42))

    fwd = jax.jit(forward)
    outs = fwd(params, imgs_nor, labels, img_lab, xy_feat)
    jax.block_until_ready(outs)

    prob, seg_pred, ap, asp, ap1, asp1 = outs
    assert prob.shape == (B, KSP, H, W)
    assert seg_pred.shape == (B, 1, H, W)
    assert ap.shape == (B, 1, H, W) and ap1.shape == (B, 1, H, W)
    assert asp.shape == (B, 1, H, W) and asp1.shape == (B, 1, H, W)
    print("KERNEL_OK")
</pallas_src>

<mosaic_0001>
module attributes {stable_mosaic.version = 11 : i64} {
  func.func @_spnet_kernel(%arg0: memref<2x3x256xf32, #tpu.memory_space<vmem>>, %arg1: memref<2x256x3xf32, #tpu.memory_space<vmem>>, %arg2: memref<2x64x3xf32, #tpu.memory_space<vmem>>, %arg3: memref<2x16x3xf32, #tpu.memory_space<vmem>>, %arg4: memref<9x3xf32, #tpu.memory_space<vmem>>, %arg5: memref<3x32xf32, #tpu.memory_space<vmem>>, %arg6: memref<3x32xf32, #tpu.memory_space<vmem>>, %arg7: memref<3x32xf32, #tpu.memory_space<vmem>>, %arg8: memref<2x9x256xf32, #tpu.memory_space<vmem>>, %arg9: memref<2x64x32xf32, #tpu.memory_space<vmem>>, %arg10: memref<2x16x32xf32, #tpu.memory_space<vmem>>, %arg11: memref<2x9x32xf32, #tpu.memory_space<vmem>>) attributes {dimension_semantics = [], scalar_prefetch = 0 : i64, scratch_operands = 0 : i64, tpu.core_type = #tpu.core_type<tc>} {
    %c0 = arith.constant 0 : index
    %c0_0 = arith.constant 0 : index
    %c0_1 = arith.constant 0 : index
    %0 = vector.load %arg0[%c0, %c0_0, %c0_1] : memref<2x3x256xf32, #tpu.memory_space<vmem>>, vector<1x3x256xf32>
    %1 = vector.shape_cast %0 : vector<1x3x256xf32> to vector<3x256xf32>
    %c0_2 = arith.constant 0 : index
    %c0_3 = arith.constant 0 : index
    %2 = vector.load %arg4[%c0_2, %c0_3] : memref<9x3xf32, #tpu.memory_space<vmem>>, vector<9x3xf32>
    %cst = arith.constant dense<0.000000e+00> : vector<9x256xf32>
    %3 = tpu.matmul %2, %1, %cst {dimension_numbers = #tpu.dot_dimension_numbers<[1], [0], [0], [1], [0, 0, 1, 1], [], []>} : vector<9x3xf32>, vector<3x256xf32>, vector<9x256xf32> -> vector<9x256xf32>
    %cst_4 = arith.constant dense<0xFF800000> : vector<256xf32>
    %4 = vector.multi_reduction <maximumf>, %3, %cst_4 [0] : vector<9x256xf32> to vector<256xf32>
    %5 = vector.shape_cast %4 : vector<256xf32> to vector<1x256xf32>
    %6 = vector.broadcast %5 : vector<1x256xf32> to vector<9x256xf32>
    %7 = arith.cmpf oeq, %3, %6 : vector<9x256xf32>
    %cst_5 = arith.constant 1.000000e+00 : f32
    %cst_6 = arith.constant 0.000000e+00 : f32
    %8 = vector.broadcast %cst_5 : f32 to vector<9x256xf32>
    %9 = vector.broadcast %cst_6 : f32 to vector<9x256xf32>
    %10 = arith.select %7, %8, %9 : vector<9x256xi1>, vector<9x256xf32>
    %c0_7 = arith.constant 0 : index
    %c0_8 = arith.constant 0 : index
    %c0_9 = arith.constant 0 : index
    %11 = vector.load %arg8[%c0_7, %c0_8, %c0_9] : memref<2x9x256xf32, #tpu.memory_space<vmem>>, vector<1x9x256xf32>
    %12 = vector.shape_cast %11 : vector<1x9x256xf32> to vector<9x256xf32>
    %13 = vector.shape_cast %10 : vector<9x256xf32> to vector<1x9x256xf32>
    tpu.vector_store %arg8[%c0_7, %c0_8, %c0_9], %13 {strides = array<i32>} : memref<2x9x256xf32, #tpu.memory_space<vmem>>, vector<1x9x256xf32>,
    %c0_10 = arith.constant 0 : index
    %c0_11 = arith.constant 0 : index
    %c0_12 = arith.constant 0 : index
    %14 = vector.load %arg2[%c0_10, %c0_11, %c0_12] : memref<2x64x3xf32, #tpu.memory_space<vmem>>, vector<1x64x3xf32>
    %15 = vector.shape_cast %14 : vector<1x64x3xf32> to vector<64x3xf32>
    %c0_13 = arith.constant 0 : index
    %c0_14 = arith.constant 0 : index
    %16 = vector.load %arg5[%c0_13, %c0_14] : memref<3x32xf32, #tpu.memory_space<vmem>>, vector<3x32xf32>
    %cst_15 = arith.constant dense<0.000000e+00> : vector<64x32xf32>
    %17 = tpu.matmul %15, %16, %cst_15 {dimension_numbers = #tpu.dot_dimension_numbers<[1], [0], [0], [1], [0, 0, 1, 1], [], []>} : vector<64x3xf32>, vector<3x32xf32>, vector<64x32xf32> -> vector<64x32xf32>
    %c0_16 = arith.constant 0 : index
    %c0_17 = arith.constant 0 : index
    %c0_18 = arith.constant 0 : index
    %18 = vector.load %arg9[%c0_16, %c0_17, %c0_18] : memref<2x64x32xf32, #tpu.memory_space<vmem>>, vector<1x64x32xf32>
    %19 = vector.shape_cast %18 : vector<1x64x32xf32> to vector<64x32xf32>
    %20 = vector.shape_cast %17 : vector<64x32xf32> to vector<1x64x32xf32>
    tpu.vector_store %arg9[%c0_16, %c0_17, %c0_18], %20 {strides = array<i32>} : memref<2x64x32xf32, #tpu.memory_space<vmem>>, vector<1x64x32xf32>,
    %c0_19 = arith.constant 0 : index
    %c0_20 = arith.constant 0 : index
    %c0_21 = arith.constant 0 : index
    %21 = vector.load %arg3[%c0_19, %c0_20, %c0_21] : memref<2x16x3xf32, #tpu.memory_space<vmem>>, vector<1x16x3xf32>
    %22 = vector.shape_cast %21 : vector<1x16x3xf32> to vector<16x3xf32>
    %c0_22 = arith.constant 0 : index
    %c0_23 = arith.constant 0 : index
    %23 = vector.load %arg6[%c0_22, %c0_23] : memref<3x32xf32, #tpu.memory_space<vmem>>, vector<3x32xf32>
    %cst_24 = arith.constant dense<0.000000e+00> : vector<16x32xf32>
    %24 = tpu.matmul %22, %23, %cst_24 {dimension_numbers = #tpu.dot_dimension_numbers<[1], [0], [0], [1], [0, 0, 1, 1], [], []>} : vector<16x3xf32>, vector<3x32xf32>, vector<16x32xf32> -> vector<16x32xf32>
    %c0_25 = arith.constant 0 : index
    %c0_26 = arith.constant 0 : index
    %c0_27 = arith.constant 0 : index
    %25 = vector.load %arg10[%c0_25, %c0_26, %c0_27] : memref<2x16x32xf32, #tpu.memory_space<vmem>>, vector<1x16x32xf32>
    %26 = vector.shape_cast %25 : vector<1x16x32xf32> to vector<16x32xf32>
    %27 = vector.shape_cast %24 : vector<16x32xf32> to vector<1x16x32xf32>
    tpu.vector_store %arg10[%c0_25, %c0_26, %c0_27], %27 {strides = array<i32>} : memref<2x16x32xf32, #tpu.memory_space<vmem>>, vector<1x16x32xf32>,
    %c0_28 = arith.constant 0 : index
    %c0_29 = arith.constant 0 : index
    %c0_30 = arith.constant 0 : index
    %28 = vector.load %arg1[%c0_28, %c0_29, %c0_30] : memref<2x256x3xf32, #tpu.memory_space<vmem>>, vector<1x256x3xf32>
    %29 = vector.shape_cast %28 : vector<1x256x3xf32> to vector<256x3xf32>
    %cst_31 = arith.constant dense<0.000000e+00> : vector<9x3xf32>
    %30 = tpu.matmul %10, %29, %cst_31 {dimension_numbers = #tpu.dot_dimension_numbers<[1], [0], [0], [1], [0, 0, 1, 1], [], []>} : vector<9x256xf32>, vector<256x3xf32>, vector<9x3xf32> -> vector<9x3xf32>
    %cst_32 = arith.constant dense<0.000000e+00> : vector<9xf32>
    %31 = vector.multi_reduction <add>, %10, %cst_32 [1] : vector<9x256xf32> to vector<9xf32>
    %32 = vector.shape_cast %31 : vector<9xf32> to vector<9x1xf32>
    %cst_33 = arith.constant 9.99999997E-7 : f32
    %33 = vector.broadcast %cst_33 : f32 to vector<9x1xf32>
    %34 = arith.addf %32, %33 : vector<9x1xf32>
    %35 = vector.broadcast %34 : vector<9x1xf32> to vector<9x3xf32>
    %36 = arith.divf %30, %35 : vector<9x3xf32>
    %c0_34 = arith.constant 0 : index
    %c0_35 = arith.constant 0 : index
    %37 = vector.load %arg7[%c0_34, %c0_35] : memref<3x32xf32, #tpu.memory_space<vmem>>, vector<3x32xf32>
    %cst_36 = arith.constant dense<0.000000e+00> : vector<9x32xf32>
    %38 = tpu.matmul %36, %37, %cst_36 {dimension_numbers = #tpu.dot_dimension_numbers<[1], [0], [0], [1], [0, 0, 1, 1], [], []>} : vector<9x3xf32>, vector<3x32xf32>, vector<9x32xf32> -> vector<9x32xf32>
    %c0_37 = arith.constant 0 : index
    %c0_38 = arith.constant 0 : index
    %c0_39 = arith.constant 0 : index
    %39 = vector.load %arg11[%c0_37, %c0_38, %c0_39] : memref<2x9x32xf32, #tpu.memory_space<vmem>>, vector<1x9x32xf32>
    %40 = vector.shape_cast %39 : vector<1x9x32xf32> to vector<9x32xf32>
    %41 = vector.shape_cast %38 : vector<9x32xf32> to vector<1x9x32xf32>
    tpu.vector_store %arg11[%c0_37, %c0_38, %c0_39], %41 {strides = array<i32>} : memref<2x9x32xf32, #tpu.memory_space<vmem>>, vector<1x9x32xf32>,
    %c1 = arith.constant 1 : index
    %c0_40 = arith.constant 0 : index
    %c0_41 = arith.constant 0 : index
    %42 = vector.load %arg0[%c1, %c0_40, %c0_41] : memref<2x3x256xf32, #tpu.memory_space<vmem>>, vector<1x3x256xf32>
    %43 = vector.shape_cast %42 : vector<1x3x256xf32> to vector<3x256xf32>
    %c0_42 = arith.constant 0 : index
    %c0_43 = arith.constant 0 : index
    %44 = vector.load %arg4[%c0_42, %c0_43] : memref<9x3xf32, #tpu.memory_space<vmem>>, vector<9x3xf32>
    %cst_44 = arith.constant dense<0.000000e+00> : vector<9x256xf32>
    %45 = tpu.matmul %44, %43, %cst_44 {dimension_numbers = #tpu.dot_dimension_numbers<[1], [0], [0], [1], [0, 0, 1, 1], [], []>} : vector<9x3xf32>, vector<3x256xf32>, vector<9x256xf32> -> vector<9x256xf32>
    %cst_45 = arith.constant dense<0xFF800000> : vector<256xf32>
    %46 = vector.multi_reduction <maximumf>, %45, %cst_45 [0] : vector<9x256xf32> to vector<256xf32>
    %47 = vector.shape_cast %46 : vector<256xf32> to vector<1x256xf32>
    %48 = vector.broadcast %47 : vector<1x256xf32> to vector<9x256xf32>
    %49 = arith.cmpf oeq, %45, %48 : vector<9x256xf32>
    %cst_46 = arith.constant 1.000000e+00 : f32
    %cst_47 = arith.constant 0.000000e+00 : f32
    %50 = vector.broadcast %cst_46 : f32 to vector<9x256xf32>
    %51 = vector.broadcast %cst_47 : f32 to vector<9x256xf32>
    %52 = arith.select %49, %50, %51 : vector<9x256xi1>, vector<9x256xf32>
    %c1_48 = arith.constant 1 : index
    %c0_49 = arith.constant 0 : index
    %c0_50 = arith.constant 0 : index
    %53 = vector.load %arg8[%c1_48, %c0_49, %c0_50] : memref<2x9x256xf32, #tpu.memory_space<vmem>>, vector<1x9x256xf32>
    %54 = vector.shape_cast %53 : vector<1x9x256xf32> to vector<9x256xf32>
    %55 = vector.shape_cast %52 : vector<9x256xf32> to vector<1x9x256xf32>
    tpu.vector_store %arg8[%c1_48, %c0_49, %c0_50], %55 {strides = array<i32>} : memref<2x9x256xf32, #tpu.memory_space<vmem>>, vector<1x9x256xf32>,
    %c1_51 = arith.constant 1 : index
    %c0_52 = arith.constant 0 : index
    %c0_53 = arith.constant 0 : index
    %56 = vector.load %arg2[%c1_51, %c0_52, %c0_53] : memref<2x64x3xf32, #tpu.memory_space<vmem>>, vector<1x64x3xf32>
    %57 = vector.shape_cast %56 : vector<1x64x3xf32> to vector<64x3xf32>
    %c0_54 = arith.constant 0 : index
    %c0_55 = arith.constant 0 : index
    %58 = vector.load %arg5[%c0_54, %c0_55] : memref<3x32xf32, #tpu.memory_space<vmem>>, vector<3x32xf32>
    %cst_56 = arith.constant dense<0.000000e+00> : vector<64x32xf32>
    %59 = tpu.matmul %57, %58, %cst_56 {dimension_numbers = #tpu.dot_dimension_numbers<[1], [0], [0], [1], [0, 0, 1, 1], [], []>} : vector<64x3xf32>, vector<3x32xf32>, vector<64x32xf32> -> vector<64x32xf32>
    %c1_57 = arith.constant 1 : index
    %c0_58 = arith.constant 0 : index
    %c0_59 = arith.constant 0 : index
    %60 = vector.load %arg9[%c1_57, %c0_58, %c0_59] : memref<2x64x32xf32, #tpu.memory_space<vmem>>, vector<1x64x32xf32>
    %61 = vector.shape_cast %60 : vector<1x64x32xf32> to vector<64x32xf32>
    %62 = vector.shape_cast %59 : vector<64x32xf32> to vector<1x64x32xf32>
    tpu.vector_store %arg9[%c1_57, %c0_58, %c0_59], %62 {strides = array<i32>} : memref<2x64x32xf32, #tpu.memory_space<vmem>>, vector<1x64x32xf32>,
    %c1_60 = arith.constant 1 : index
    %c0_61 = arith.constant 0 : index
    %c0_62 = arith.constant 0 : index
    %63 = vector.load %arg3[%c1_60, %c0_61, %c0_62] : memref<2x16x3xf32, #tpu.memory_space<vmem>>, vector<1x16x3xf32>
    %64 = vector.shape_cast %63 : vector<1x16x3xf32> to vector<16x3xf32>
    %c0_63 = arith.constant 0 : index
    %c0_64 = arith.constant 0 : index
    %65 = vector.load %arg6[%c0_63, %c0_64] : memref<3x32xf32, #tpu.memory_space<vmem>>, vector<3x32xf32>
    %cst_65 = arith.constant dense<0.000000e+00> : vector<16x32xf32>
    %66 = tpu.matmul %64, %65, %cst_65 {dimension_numbers = #tpu.dot_dimension_numbers<[1], [0], [0], [1], [0, 0, 1, 1], [], []>} : vector<16x3xf32>, vector<3x32xf32>, vector<16x32xf32> -> vector<16x32xf32>
    %c1_66 = arith.constant 1 : index
    %c0_67 = arith.constant 0 : index
    %c0_68 = arith.constant 0 : index
    %67 = vector.load %arg10[%c1_66, %c0_67, %c0_68] : memref<2x16x32xf32, #tpu.memory_space<vmem>>, vector<1x16x32xf32>
    %68 = vector.shape_cast %67 : vector<1x16x32xf32> to vector<16x32xf32>
    %69 = vector.shape_cast %66 : vector<16x32xf32> to vector<1x16x32xf32>
    tpu.vector_store %arg10[%c1_66, %c0_67, %c0_68], %69 {strides = array<i32>} : memref<2x16x32xf32, #tpu.memory_space<vmem>>, vector<1x16x32xf32>,
    %c1_69 = arith.constant 1 : index
    %c0_70 = arith.constant 0 : index
    %c0_71 = arith.constant 0 : index
    %70 = vector.load %arg1[%c1_69, %c0_70, %c0_71] : memref<2x256x3xf32, #tpu.memory_space<vmem>>, vector<1x256x3xf32>
    %71 = vector.shape_cast %70 : vector<1x256x3xf32> to vector<256x3xf32>
    %cst_72 = arith.constant dense<0.000000e+00> : vector<9x3xf32>
    %72 = tpu.matmul %52, %71, %cst_72 {dimension_numbers = #tpu.dot_dimension_numbers<[1], [0], [0], [1], [0, 0, 1, 1], [], []>} : vector<9x256xf32>, vector<256x3xf32>, vector<9x3xf32> -> vector<9x3xf32>
    %cst_73 = arith.constant dense<0.000000e+00> : vector<9xf32>
    %73 = vector.multi_reduction <add>, %52, %cst_73 [1] : vector<9x256xf32> to vector<9xf32>
    %74 = vector.shape_cast %73 : vector<9xf32> to vector<9x1xf32>
    %cst_74 = arith.constant 9.99999997E-7 : f32
    %75 = vector.broadcast %cst_74 : f32 to vector<9x1xf32>
    %76 = arith.addf %74, %75 : vector<9x1xf32>
    %77 = vector.broadcast %76 : vector<9x1xf32> to vector<9x3xf32>
    %78 = arith.divf %72, %77 : vector<9x3xf32>
    %c0_75 = arith.constant 0 : index
    %c0_76 = arith.constant 0 : index
    %79 = vector.load %arg7[%c0_75, %c0_76] : memref<3x32xf32, #tpu.memory_space<vmem>>, vector<3x32xf32>
    %cst_77 = arith.constant dense<0.000000e+00> : vector<9x32xf32>
    %80 = tpu.matmul %78, %79, %cst_77 {dimension_numbers = #tpu.dot_dimension_numbers<[1], [0], [0], [1], [0, 0, 1, 1], [], []>} : vector<9x3xf32>, vector<3x32xf32>, vector<9x32xf32> -> vector<9x32xf32>
    %c1_78 = arith.constant 1 : index
    %c0_79 = arith.constant 0 : index
    %c0_80 = arith.constant 0 : index
    %81 = vector.load %arg11[%c1_78, %c0_79, %c0_80] : memref<2x9x32xf32, #tpu.memory_space<vmem>>, vector<1x9x32xf32>
    %82 = vector.shape_cast %81 : vector<1x9x32xf32> to vector<9x32xf32>
    %83 = vector.shape_cast %80 : vector<9x32xf32> to vector<1x9x32xf32>
    tpu.vector_store %arg11[%c1_78, %c0_79, %c0_80], %83 {strides = array<i32>} : memref<2x9x32xf32, #tpu.memory_space<vmem>>, vector<1x9x32xf32>,
    return
  }
}

module attributes {stable_mosaic.version = 11 : i64} {
  func.func @_encoder_kernel(%arg0: memref<34x48xf32, #tpu.memory_space<vmem>>, %arg1: memref<48x32xf32, #tpu.memory_space<vmem>>, %arg2: memref<12x32x32xf32, #tpu.memory_space<vmem>>, %arg3: memref<12x34x32xf32, #tpu.memory_space<vmem>>) attributes {dimension_semantics = [], scalar_prefetch = 0 : i64, scratch_operands = 0 : i64, tpu.core_type = #tpu.core_type<tc>} {
    %c0 = arith.constant 0 : index
    %c0_0 = arith.constant 0 : index
    %0 = vector.load %arg0[%c0, %c0_0] : memref<34x48xf32, #tpu.memory_space<vmem>>, vector<34x48xf32>
    %c0_1 = arith.constant 0 : index
    %c0_2 = arith.constant 0 : index
    %1 = vector.load %arg1[%c0_1, %c0_2] : memref<48x32xf32, #tpu.memory_space<vmem>>, vector<48x32xf32>
    %cst = arith.constant dense<0.000000e+00> : vector<34x32xf32>
    %2 = tpu.matmul %0, %1, %cst {dimension_numbers = #tpu.dot_dimension_numbers<[1], [0], [0], [1], [0, 0, 1, 1], [], []>} : vector<34x48xf32>, vector<48x32xf32>, vector<34x32xf32> -> vector<34x32xf32>
    %c0_3 = arith.constant 0 : index
    %c0_4 = arith.constant 0 : index
    %c0_5 = arith.constant 0 : index
    %3 = vector.load %arg2[%c0_3, %c0_4, %c0_5] : memref<12x32x32xf32, #tpu.memory_space<vmem>>, vector<1x32x32xf32>
    %4 = vector.shape_cast %3 : vector<1x32x32xf32> to vector<32x32xf32>
    %cst_6 = arith.constant dense<0.000000e+00> : vector<34x32xf32>
    %5 = tpu.matmul %2, %4, %cst_6 {dimension_numbers = #tpu.dot_dimension_numbers<[1], [0], [0], [1], [0, 0, 1, 1], [], []>} : vector<34x32xf32>, vector<32x32xf32>, vector<34x32xf32> -> vector<34x32xf32>
    %6 = math.tanh %5 : vector<34x32xf32>
    %7 = arith.addf %2, %6 : vector<34x32xf32>
    %c0_7 = arith.constant 0 : index
    %c0_8 = arith.constant 0 : index
    %c0_9 = arith.constant 0 : index
    %8 = vector.load %arg3[%c0_7, %c0_8, %c0_9] : memref<12x34x32xf32, #tpu.memory_space<vmem>>, vector<1x34x32xf32>
    %9 = vector.shape_cast %8 : vector<1x34x32xf32> to vector<34x32xf32>
    %10 = vector.shape_cast %7 : vector<34x32xf32> to vector<1x34x32xf32>
    tpu.vector_store %arg3[%c0_7, %c0_8, %c0_9], %10 {strides = array<i32>} : memref<12x34x32xf32, #tpu.memory_space<vmem>>, vector<1x34x32xf32>,
    %c1 = arith.constant 1 : index
    %c0_10 = arith.constant 0 : index
    %c0_11 = arith.constant 0 : index
    %11 = vector.load %arg2[%c1, %c0_10, %c0_11] : memref<12x32x32xf32, #tpu.memory_space<vmem>>, vector<1x32x32xf32>
    %12 = vector.shape_cast %11 : vector<1x32x32xf32> to vector<32x32xf32>
    %cst_12 = arith.constant dense<0.000000e+00> : vector<34x32xf32>
    %13 = tpu.matmul %7, %12, %cst_12 {dimension_numbers = #tpu.dot_dimension_numbers<[1], [0], [0], [1], [0, 0, 1, 1], [], []>} : vector<34x32xf32>, vector<32x32xf32>, vector<34x32xf32> -> vector<34x32xf32>
    %14 = math.tanh %13 : vector<34x32xf32>
    %15 = arith.addf %7, %14 : vector<34x32xf32>
    %c1_13 = arith.constant 1 : index
    %c0_14 = arith.constant 0 : index
    %c0_15 = arith.constant 0 : index
    %16 = vector.load %arg3[%c1_13, %c0_14, %c0_15] : memref<12x34x32xf32, #tpu.memory_space<vmem>>, vector<1x34x32xf32>
    %17 = vector.shape_cast %16 : vector<1x34x32xf32> to vector<34x32xf32>
    %18 = vector.shape_cast %15 : vector<34x32xf32> to vector<1x34x32xf32>
    tpu.vector_store %arg3[%c1_13, %c0_14, %c0_15], %18 {strides = array<i32>} : memref<12x34x32xf32, #tpu.memory_space<vmem>>, vector<1x34x32xf32>,
    %c2 = arith.constant 2 : index
    %c0_16 = arith.constant 0 : index
    %c0_17 = arith.constant 0 : index
    %19 = vector.load %arg2[%c2, %c0_16, %c0_17] : memref<12x32x32xf32, #tpu.memory_space<vmem>>, vector<1x32x32xf32>
    %20 = vector.shape_cast %19 : vector<1x32x32xf32> to vector<32x32xf32>
    %cst_18 = arith.constant dense<0.000000e+00> : vector<34x32xf32>
    %21 = tpu.matmul %15, %20, %cst_18 {dimension_numbers = #tpu.dot_dimension_numbers<[1], [0], [0], [1], [0, 0, 1, 1], [], []>} : vector<34x32xf32>, vector<32x32xf32>, vector<34x32xf32> -> vector<34x32xf32>
    %22 = math.tanh %21 : vector<34x32xf32>
    %23 = arith.addf %15, %22 : vector<34x32xf32>
    %c2_19 = arith.constant 2 : index
    %c0_20 = arith.constant 0 : index
    %c0_21 = arith.constant 0 : index
    %24 = vector.load %arg3[%c2_19, %c0_20, %c0_21] : memref<12x34x32xf32, #tpu.memory_space<vmem>>, vector<1x34x32xf32>
    %25 = vector.shape_cast %24 : vector<1x34x32xf32> to vector<34x32xf32>
    %26 = vector.shape_cast %23 : vector<34x32xf32> to vector<1x34x32xf32>
    tpu.vector_store %arg3[%c2_19, %c0_20, %c0_21], %26 {strides = array<i32>} : memref<12x34x32xf32, #tpu.memory_space<vmem>>, vector<1x34x32xf32>,
    %c3 = arith.constant 3 : index
    %c0_22 = arith.constant 0 : index
    %c0_23 = arith.constant 0 : index
    %27 = vector.load %arg2[%c3, %c0_22, %c0_23] : memref<12x32x32xf32, #tpu.memory_space<vmem>>, vector<1x32x32xf32>
    %28 = vector.shape_cast %27 : vector<1x32x32xf32> to vector<32x32xf32>
    %cst_24 = arith.constant dense<0.000000e+00> : vector<34x32xf32>
    %29 = tpu.matmul %23, %28, %cst_24 {dimension_numbers = #tpu.dot_dimension_numbers<[1], [0], [0], [1], [0, 0, 1, 1], [], []>} : vector<34x32xf32>, vector<32x32xf32>, vector<34x32xf32> -> vector<34x32xf32>
    %30 = math.tanh %29 : vector<34x32xf32>
    %31 = arith.addf %23, %30 : vector<34x32xf32>
    %c3_25 = arith.constant 3 : index
    %c0_26 = arith.constant 0 : index
    %c0_27 = arith.constant 0 : index
    %32 = vector.load %arg3[%c3_25, %c0_26, %c0_27] : memref<12x34x32xf32, #tpu.memory_space<vmem>>, vector<1x34x32xf32>
    %33 = vector.shape_cast %32 : vector<1x34x32xf32> to vector<34x32xf32>
    %34 = vector.shape_cast %31 : vector<34x32xf32> to vector<1x34x32xf32>
    tpu.vector_store %arg3[%c3_25, %c0_26, %c0_27], %34 {strides = array<i32>} : memref<12x34x32xf32, #tpu.memory_space<vmem>>, vector<1x34x32xf32>,
    %c4 = arith.constant 4 : index
    %c0_28 = arith.constant 0 : index
    %c0_29 = arith.constant 0 : index
    %35 = vector.load %arg2[%c4, %c0_28, %c0_29] : memref<12x32x32xf32, #tpu.memory_space<vmem>>, vector<1x32x32xf32>
    %36 = vector.shape_cast %35 : vector<1x32x32xf32> to vector<32x32xf32>
    %cst_30 = arith.constant dense<0.000000e+00> : vector<34x32xf32>
    %37 = tpu.matmul %31, %36, %cst_30 {dimension_numbers = #tpu.dot_dimension_numbers<[1], [0], [0], [1], [0, 0, 1, 1], [], []>} : vector<34x32xf32>, vector<32x32xf32>, vector<34x32xf32> -> vector<34x32xf32>
    %38 = math.tanh %37 : vector<34x32xf32>
    %39 = arith.addf %31, %38 : vector<34x32xf32>
    %c4_31 = arith.constant 4 : index
    %c0_32 = arith.constant 0 : index
    %c0_33 = arith.constant 0 : index
    %40 = vector.load %arg3[%c4_31, %c0_32, %c0_33] : memref<12x34x32xf32, #tpu.memory_space<vmem>>, vector<1x34x32xf32>
    %41 = vector.shape_cast %40 : vector<1x34x32xf32> to vector<34x32xf32>
    %42 = vector.shape_cast %39 : vector<34x32xf32> to vector<1x34x32xf32>
    tpu.vector_store %arg3[%c4_31, %c0_32, %c0_33], %42 {strides = array<i32>} : memref<12x34x32xf32, #tpu.memory_space<vmem>>, vector<1x34x32xf32>,
    %c5 = arith.constant 5 : index
    %c0_34 = arith.constant 0 : index
    %c0_35 = arith.constant 0 : index
    %43 = vector.load %arg2[%c5, %c0_34, %c0_35] : memref<12x32x32xf32, #tpu.memory_space<vmem>>, vector<1x32x32xf32>
    %44 = vector.shape_cast %43 : vector<1x32x32xf32> to vector<32x32xf32>
    %cst_36 = arith.constant dense<0.000000e+00> : vector<34x32xf32>
    %45 = tpu.matmul %39, %44, %cst_36 {dimension_numbers = #tpu.dot_dimension_numbers<[1], [0], [0], [1], [0, 0, 1, 1], [], []>} : vector<34x32xf32>, vector<32x32xf32>, vector<34x32xf32> -> vector<34x32xf32>
    %46 = math.tanh %45 : vector<34x32xf32>
    %47 = arith.addf %39, %46 : vector<34x32xf32>
    %c5_37 = arith.constant 5 : index
    %c0_38 = arith.constant 0 : index
    %c0_39 = arith.constant 0 : index
    %48 = vector.load %arg3[%c5_37, %c0_38, %c0_39] : memref<12x34x32xf32, #tpu.memory_space<vmem>>, vector<1x34x32xf32>
    %49 = vector.shape_cast %48 : vector<1x34x32xf32> to vector<34x32xf32>
    %50 = vector.shape_cast %47 : vector<34x32xf32> to vector<1x34x32xf32>
    tpu.vector_store %arg3[%c5_37, %c0_38, %c0_39], %50 {strides = array<i32>} : memref<12x34x32xf32, #tpu.memory_space<vmem>>, vector<1x34x32xf32>,
    %c6 = arith.constant 6 : index
    %c0_40 = arith.constant 0 : index
    %c0_41 = arith.constant 0 : index
    %51 = vector.load %arg2[%c6, %c0_40, %c0_41] : memref<12x32x32xf32, #tpu.memory_space<vmem>>, vector<1x32x32xf32>
    %52 = vector.shape_cast %51 : vector<1x32x32xf32> to vector<32x32xf32>
    %cst_42 = arith.constant dense<0.000000e+00> : vector<34x32xf32>
    %53 = tpu.matmul %47, %52, %cst_42 {dimension_numbers = #tpu.dot_dimension_numbers<[1], [0], [0], [1], [0, 0, 1, 1], [], []>} : vector<34x32xf32>, vector<32x32xf32>, vector<34x32xf32> -> vector<34x32xf32>
    %54 = math.tanh %53 : vector<34x32xf32>
    %55 = arith.addf %47, %54 : vector<34x32xf32>
    %c6_43 = arith.constant 6 : index
    %c0_44 = arith.constant 0 : index
    %c0_45 = arith.constant 0 : index
    %56 = vector.load %arg3[%c6_43, %c0_44, %c0_45] : memref<12x34x32xf32, #tpu.memory_space<vmem>>, vector<1x34x32xf32>
    %57 = vector.shape_cast %56 : vector<1x34x32xf32> to vector<34x32xf32>
    %58 = vector.shape_cast %55 : vector<34x32xf32> to vector<1x34x32xf32>
    tpu.vector_store %arg3[%c6_43, %c0_44, %c0_45], %58 {strides = array<i32>} : memref<12x34x32xf32, #tpu.memory_space<vmem>>, vector<1x34x32xf32>,
    %c7 = arith.constant 7 : index
    %c0_46 = arith.constant 0 : index
    %c0_47 = arith.constant 0 : index
    %59 = vector.load %arg2[%c7, %c0_46, %c0_47] : memref<12x32x32xf32, #tpu.memory_space<vmem>>, vector<1x32x32xf32>
    %60 = vector.shape_cast %59 : vector<1x32x32xf32> to vector<32x32xf32>
    %cst_48 = arith.constant dense<0.000000e+00> : vector<34x32xf32>
    %61 = tpu.matmul %55, %60, %cst_48 {dimension_numbers = #tpu.dot_dimension_numbers<[1], [0], [0], [1], [0, 0, 1, 1], [], []>} : vector<34x32xf32>, vector<32x32xf32>, vector<34x32xf32> -> vector<34x32xf32>
    %62 = math.tanh %61 : vector<34x32xf32>
    %63 = arith.addf %55, %62 : vector<34x32xf32>
    %c7_49 = arith.constant 7 : index
    %c0_50 = arith.constant 0 : index
    %c0_51 = arith.constant 0 : index
    %64 = vector.load %arg3[%c7_49, %c0_50, %c0_51] : memref<12x34x32xf32, #tpu.memory_space<vmem>>, vector<1x34x32xf32>
    %65 = vector.shape_cast %64 : vector<1x34x32xf32> to vector<34x32xf32>
    %66 = vector.shape_cast %63 : vector<34x32xf32> to vector<1x34x32xf32>
    tpu.vector_store %arg3[%c7_49, %c0_50, %c0_51], %66 {strides = array<i32>} : memref<12x34x32xf32, #tpu.memory_space<vmem>>, vector<1x34x32xf32>,
    %c8 = arith.constant 8 : index
    %c0_52 = arith.constant 0 : index
    %c0_53 = arith.constant 0 : index
    %67 = vector.load %arg2[%c8, %c0_52, %c0_53] : memref<12x32x32xf32, #tpu.memory_space<vmem>>, vector<1x32x32xf32>
    %68 = vector.shape_cast %67 : vector<1x32x32xf32> to vector<32x32xf32>
    %cst_54 = arith.constant dense<0.000000e+00> : vector<34x32xf32>
    %69 = tpu.matmul %63, %68, %cst_54 {dimension_numbers = #tpu.dot_dimension_numbers<[1], [0], [0], [1], [0, 0, 1, 1], [], []>} : vector<34x32xf32>, vector<32x32xf32>, vector<34x32xf32> -> vector<34x32xf32>
    %70 = math.tanh %69 : vector<34x32xf32>
    %71 = arith.addf %63, %70 : vector<34x32xf32>
    %c8_55 = arith.constant 8 : index
    %c0_56 = arith.constant 0 : index
    %c0_57 = arith.constant 0 : index
    %72 = vector.load %arg3[%c8_55, %c0_56, %c0_57] : memref<12x34x32xf32, #tpu.memory_space<vmem>>, vector<1x34x32xf32>
    %73 = vector.shape_cast %72 : vector<1x34x32xf32> to vector<34x32xf32>
    %74 = vector.shape_cast %71 : vector<34x32xf32> to vector<1x34x32xf32>
    tpu.vector_store %arg3[%c8_55, %c0_56, %c0_57], %74 {strides = array<i32>} : memref<12x34x32xf32, #tpu.memory_space<vmem>>, vector<1x34x32xf32>,
    %c9 = arith.constant 9 : index
    %c0_58 = arith.constant 0 : index
    %c0_59 = arith.constant 0 : index
    %75 = vector.load %arg2[%c9, %c0_58, %c0_59] : memref<12x32x32xf32, #tpu.memory_space<vmem>>, vector<1x32x32xf32>
    %76 = vector.shape_cast %75 : vector<1x32x32xf32> to vector<32x32xf32>
    %cst_60 = arith.constant dense<0.000000e+00> : vector<34x32xf32>
    %77 = tpu.matmul %71, %76, %cst_60 {dimension_numbers = #tpu.dot_dimension_numbers<[1], [0], [0], [1], [0, 0, 1, 1], [], []>} : vector<34x32xf32>, vector<32x32xf32>, vector<34x32xf32> -> vector<34x32xf32>
    %78 = math.tanh %77 : vector<34x32xf32>
    %79 = arith.addf %71, %78 : vector<34x32xf32>
    %c9_61 = arith.constant 9 : index
    %c0_62 = arith.constant 0 : index
    %c0_63 = arith.constant 0 : index
    %80 = vector.load %arg3[%c9_61, %c0_62, %c0_63] : memref<12x34x32xf32, #tpu.memory_space<vmem>>, vector<1x34x32xf32>
    %81 = vector.shape_cast %80 : vector<1x34x32xf32> to vector<34x32xf32>
    %82 = vector.shape_cast %79 : vector<34x32xf32> to vector<1x34x32xf32>
    tpu.vector_store %arg3[%c9_61, %c0_62, %c0_63], %82 {strides = array<i32>} : memref<12x34x32xf32, #tpu.memory_space<vmem>>, vector<1x34x32xf32>,
    %c10 = arith.constant 10 : index
    %c0_64 = arith.constant 0 : index
    %c0_65 = arith.constant 0 : index
    %83 = vector.load %arg2[%c10, %c0_64, %c0_65] : memref<12x32x32xf32, #tpu.memory_space<vmem>>, vector<1x32x32xf32>
    %84 = vector.shape_cast %83 : vector<1x32x32xf32> to vector<32x32xf32>
    %cst_66 = arith.constant dense<0.000000e+00> : vector<34x32xf32>
    %85 = tpu.matmul %79, %84, %cst_66 {dimension_numbers = #tpu.dot_dimension_numbers<[1], [0], [0], [1], [0, 0, 1, 1], [], []>} : vector<34x32xf32>, vector<32x32xf32>, vector<34x32xf32> -> vector<34x32xf32>
    %86 = math.tanh %85 : vector<34x32xf32>
    %87 = arith.addf %79, %86 : vector<34x32xf32>
    %c10_67 = arith.constant 10 : index
    %c0_68 = arith.constant 0 : index
    %c0_69 = arith.constant 0 : index
    %88 = vector.load %arg3[%c10_67, %c0_68, %c0_69] : memref<12x34x32xf32, #tpu.memory_space<vmem>>, vector<1x34x32xf32>
    %89 = vector.shape_cast %88 : vector<1x34x32xf32> to vector<34x32xf32>
    %90 = vector.shape_cast %87 : vector<34x32xf32> to vector<1x34x32xf32>
    tpu.vector_store %arg3[%c10_67, %c0_68, %c0_69], %90 {strides = array<i32>} : memref<12x34x32xf32, #tpu.memory_space<vmem>>, vector<1x34x32xf32>,
    %c11 = arith.constant 11 : index
    %c0_70 = arith.constant 0 : index
    %c0_71 = arith.constant 0 : index
    %91 = vector.load %arg2[%c11, %c0_70, %c0_71] : memref<12x32x32xf32, #tpu.memory_space<vmem>>, vector<1x32x32xf32>
    %92 = vector.shape_cast %91 : vector<1x32x32xf32> to vector<32x32xf32>
    %cst_72 = arith.constant dense<0.000000e+00> : vector<34x32xf32>
    %93 = tpu.matmul %87, %92, %cst_72 {dimension_numbers = #tpu.dot_dimension_numbers<[1], [0], [0], [1], [0, 0, 1, 1], [], []>} : vector<34x32xf32>, vector<32x32xf32>, vector<34x32xf32> -> vector<34x32xf32>
    %94 = math.tanh %93 : vector<34x32xf32>
    %95 = arith.addf %87, %94 : vector<34x32xf32>
    %c11_73 = arith.constant 11 : index
    %c0_74 = arith.constant 0 : index
    %c0_75 = arith.constant 0 : index
    %96 = vector.load %arg3[%c11_73, %c0_74, %c0_75] : memref<12x34x32xf32, #tpu.memory_space<vmem>>, vector<1x34x32xf32>
    %97 = vector.shape_cast %96 : vector<1x34x32xf32> to vector<34x32xf32>
    %98 = vector.shape_cast %95 : vector<34x32xf32> to vector<1x34x32xf32>
    tpu.vector_store %arg3[%c11_73, %c0_74, %c0_75], %98 {strides = array<i32>} : memref<12x34x32xf32, #tpu.memory_space<vmem>>, vector<1x34x32xf32>,
    return
  }
}

module attributes {stable_mosaic.version = 11 : i64} {
  func.func @_spe_branch_kernel(%arg0: memref<2x9x32xf32, #tpu.memory_space<vmem>>, %arg1: memref<11x2x16x32xf32, #tpu.memory_space<vmem>>, %arg2: memref<11x2x9x32xf32, #tpu.memory_space<vmem>>) attributes {dimension_semantics = [], scalar_prefetch = 0 : i64, scratch_operands = 0 : i64, tpu.core_type = #tpu.core_type<tc>} {
    %c0 = arith.constant 0 : index
    %c0_0 = arith.constant 0 : index
    %c0_1 = arith.constant 0 : index
    %0 = vector.load %arg0[%c0, %c0_0, %c0_1] : memref<2x9x32xf32, #tpu.memory_space<vmem>>, vector<1x9x32xf32>
    %1 = vector.shape_cast %0 : vector<1x9x32xf32> to vector<9x32xf32>
    %c0_2 = arith.constant 0 : index
    %c0_3 = arith.constant 0 : index
    %c0_4 = arith.constant 0 : index
    %c0_5 = arith.constant 0 : index
    %2 = vector.load %arg1[%c0_2, %c0_3, %c0_4, %c0_5] : memref<11x2x16x32xf32, #tpu.memory_space<vmem>>, vector<1x1x16x32xf32>
    %3 = vector.shape_cast %2 : vector<1x1x16x32xf32> to vector<16x32xf32>
    %cst = arith.constant dense<0.000000e+00> : vector<9x16xf32>
    %4 = tpu.matmul %1, %3, %cst {dimension_numbers = #tpu.dot_dimension_numbers<[1], [1], [0], [0], [0, 0, 1, 0], [], []>} : vector<9x32xf32>, vector<16x32xf32>, vector<9x16xf32> -> vector<9x16xf32>
    %cst_6 = arith.constant 0.176776692 : f32
    %5 = vector.broadcast %cst_6 : f32 to vector<9x16xf32>
    %6 = arith.mulf %4, %5 : vector<9x16xf32>
    %cst_7 = arith.constant dense<0xFF800000> : vector<9xf32>
    %7 = vector.multi_reduction <maximumf>, %6, %cst_7 [1] : vector<9x16xf32> to vector<9xf32>
    %8 = vector.shape_cast %7 : vector<9xf32> to vector<9x1xf32>
    %9 = vector.broadcast %8 : vector<9x1xf32> to vector<9x16xf32>
    %10 = arith.subf %6, %9 : vector<9x16xf32>
    %11 = math.exp %10 : vector<9x16xf32>
    %cst_8 = arith.constant dense<0.000000e+00> : vector<9xf32>
    %12 = vector.multi_reduction <add>, %11, %cst_8 [1] : vector<9x16xf32> to vector<9xf32>
    %13 = vector.shape_cast %12 : vector<9xf32> to vector<9x1xf32>
    %14 = vector.broadcast %13 : vector<9x1xf32> to vector<9x16xf32>
    %15 = arith.divf %11, %14 : vector<9x16xf32>
    %cst_9 = arith.constant dense<0.000000e+00> : vector<9x32xf32>
    %16 = tpu.matmul %15, %3, %cst_9 {dimension_numbers = #tpu.dot_dimension_numbers<[1], [0], [0], [1], [0, 0, 1, 1], [], []>} : vector<9x16xf32>, vector<16x32xf32>, vector<9x32xf32> -> vector<9x32xf32>
    %17 = arith.addf %1, %16 : vector<9x32xf32>
    %c0_10 = arith.constant 0 : index
    %c0_11 = arith.constant 0 : index
    %c0_12 = arith.constant 0 : index
    %c0_13 = arith.constant 0 : index
    %18 = vector.load %arg2[%c0_10, %c0_11, %c0_12, %c0_13] : memref<11x2x9x32xf32, #tpu.memory_space<vmem>>, vector<1x1x9x32xf32>
    %19 = vector.shape_cast %18 : vector<1x1x9x32xf32> to vector<9x32xf32>
    %20 = vector.shape_cast %17 : vector<9x32xf32> to vector<1x1x9x32xf32>
    tpu.vector_store %arg2[%c0_10, %c0_11, %c0_12, %c0_13], %20 {strides = array<i32>} : memref<11x2x9x32xf32, #tpu.memory_space<vmem>>, vector<1x1x9x32xf32>,
    %c1 = arith.constant 1 : index
    %c0_14 = arith.constant 0 : index
    %c0_15 = arith.constant 0 : index
    %c0_16 = arith.constant 0 : index
    %21 = vector.load %arg1[%c1, %c0_14, %c0_15, %c0_16] : memref<11x2x16x32xf32, #tpu.memory_space<vmem>>, vector<1x1x16x32xf32>
    %22 = vector.shape_cast %21 : vector<1x1x16x32xf32> to vector<16x32xf32>
    %cst_17 = arith.constant dense<0.000000e+00> : vector<9x16xf32>
    %23 = tpu.matmul %17, %22, %cst_17 {dimension_numbers = #tpu.dot_dimension_numbers<[1], [1], [0], [0], [0, 0, 1, 0], [], []>} : vector<9x32xf32>, vector<16x32xf32>, vector<9x16xf32> -> vector<9x16xf32>
    %cst_18 = arith.constant 0.176776692 : f32
    %24 = vector.broadcast %cst_18 : f32 to vector<9x16xf32>
    %25 = arith.mulf %23, %24 : vector<9x16xf32>
    %cst_19 = arith.constant dense<0xFF800000> : vector<9xf32>
    %26 = vector.multi_reduction <maximumf>, %25, %cst_19 [1] : vector<9x16xf32> to vector<9xf32>
    %27 = vector.shape_cast %26 : vector<9xf32> to vector<9x1xf32>
    %28 = vector.broadcast %27 : vector<9x1xf32> to vector<9x16xf32>
    %29 = arith.subf %25, %28 : vector<9x16xf32>
    %30 = math.exp %29 : vector<9x16xf32>
    %cst_20 = arith.constant dense<0.000000e+00> : vector<9xf32>
    %31 = vector.multi_reduction <add>, %30, %cst_20 [1] : vector<9x16xf32> to vector<9xf32>
    %32 = vector.shape_cast %31 : vector<9xf32> to vector<9x1xf32>
    %33 = vector.broadcast %32 : vector<9x1xf32> to vector<9x16xf32>
    %34 = arith.divf %30, %33 : vector<9x16xf32>
    %cst_21 = arith.constant dense<0.000000e+00> : vector<9x32xf32>
    %35 = tpu.matmul %34, %22, %cst_21 {dimension_numbers = #tpu.dot_dimension_numbers<[1], [0], [0], [1], [0, 0, 1, 1], [], []>} : vector<9x16xf32>, vector<16x32xf32>, vector<9x32xf32> -> vector<9x32xf32>
    %36 = arith.addf %17, %35 : vector<9x32xf32>
    %c1_22 = arith.constant 1 : index
    %c0_23 = arith.constant 0 : index
    %c0_24 = arith.constant 0 : index
    %c0_25 = arith.constant 0 : index
    %37 = vector.load %arg2[%c1_22, %c0_23, %c0_24, %c0_25] : memref<11x2x9x32xf32, #tpu.memory_space<vmem>>, vector<1x1x9x32xf32>
    %38 = vector.shape_cast %37 : vector<1x1x9x32xf32> to vector<9x32xf32>
    %39 = vector.shape_cast %36 : vector<9x32xf32> to vector<1x1x9x32xf32>
    tpu.vector_store %arg2[%c1_22, %c0_23, %c0_24, %c0_25], %39 {strides = array<i32>} : memref<11x2x9x32xf32, #tpu.memory_space<vmem>>, vector<1x1x9x32xf32>,
    %c2 = arith.constant 2 : index
    %c0_26 = arith.constant 0 : index
    %c0_27 = arith.constant 0 : index
    %c0_28 = arith.constant 0 : index
    %40 = vector.load %arg1[%c2, %c0_26, %c0_27, %c0_28] : memref<11x2x16x32xf32, #tpu.memory_space<vmem>>, vector<1x1x16x32xf32>
    %41 = vector.shape_cast %40 : vector<1x1x16x32xf32> to vector<16x32xf32>
    %cst_29 = arith.constant dense<0.000000e+00> : vector<9x16xf32>
    %42 = tpu.matmul %36, %41, %cst_29 {dimension_numbers = #tpu.dot_dimension_numbers<[1], [1], [0], [0], [0, 0, 1, 0], [], []>} : vector<9x32xf32>, vector<16x32xf32>, vector<9x16xf32> -> vector<9x16xf32>
    %cst_30 = arith.constant 0.176776692 : f32
    %43 = vector.broadcast %cst_30 : f32 to vector<9x16xf32>
    %44 = arith.mulf %42, %43 : vector<9x16xf32>
    %cst_31 = arith.constant dense<0xFF800000> : vector<9xf32>
    %45 = vector.multi_reduction <maximumf>, %44, %cst_31 [1] : vector<9x16xf32> to vector<9xf32>
    %46 = vector.shape_cast %45 : vector<9xf32> to vector<9x1xf32>
    %47 = vector.broadcast %46 : vector<9x1xf32> to vector<9x16xf32>
    %48 = arith.subf %44, %47 : vector<9x16xf32>
    %49 = math.exp %48 : vector<9x16xf32>
    %cst_32 = arith.constant dense<0.000000e+00> : vector<9xf32>
    %50 = vector.multi_reduction <add>, %49, %cst_32 [1] : vector<9x16xf32> to vector<9xf32>
    %51 = vector.shape_cast %50 : vector<9xf32> to vector<9x1xf32>
    %52 = vector.broadcast %51 : vector<9x1xf32> to vector<9x16xf32>
    %53 = arith.divf %49, %52 : vector<9x16xf32>
    %cst_33 = arith.constant dense<0.000000e+00> : vector<9x32xf32>
    %54 = tpu.matmul %53, %41, %cst_33 {dimension_numbers = #tpu.dot_dimension_numbers<[1], [0], [0], [1], [0, 0, 1, 1], [], []>} : vector<9x16xf32>, vector<16x32xf32>, vector<9x32xf32> -> vector<9x32xf32>
    %55 = arith.addf %36, %54 : vector<9x32xf32>
    %c2_34 = arith.constant 2 : index
    %c0_35 = arith.constant 0 : index
    %c0_36 = arith.constant 0 : index
    %c0_37 = arith.constant 0 : index
    %56 = vector.load %arg2[%c2_34, %c0_35, %c0_36, %c0_37] : memref<11x2x9x32xf32, #tpu.memory_space<vmem>>, vector<1x1x9x32xf32>
    %57 = vector.shape_cast %56 : vector<1x1x9x32xf32> to vector<9x32xf32>
    %58 = vector.shape_cast %55 : vector<9x32xf32> to vector<1x1x9x32xf32>
    tpu.vector_store %arg2[%c2_34, %c0_35, %c0_36, %c0_37], %58 {strides = array<i32>} : memref<11x2x9x32xf32, #tpu.memory_space<vmem>>, vector<1x1x9x32xf32>,
    %c3 = arith.constant 3 : index
    %c0_38 = arith.constant 0 : index
    %c0_39 = arith.constant 0 : index
    %c0_40 = arith.constant 0 : index
    %59 = vector.load %arg1[%c3, %c0_38, %c0_39, %c0_40] : memref<11x2x16x32xf32, #tpu.memory_space<vmem>>, vector<1x1x16x32xf32>
    %60 = vector.shape_cast %59 : vector<1x1x16x32xf32> to vector<16x32xf32>
    %cst_41 = arith.constant dense<0.000000e+00> : vector<9x16xf32>
    %61 = tpu.matmul %55, %60, %cst_41 {dimension_numbers = #tpu.dot_dimension_numbers<[1], [1], [0], [0], [0, 0, 1, 0], [], []>} : vector<9x32xf32>, vector<16x32xf32>, vector<9x16xf32> -> vector<9x16xf32>
    %cst_42 = arith.constant 0.176776692 : f32
    %62 = vector.broadcast %cst_42 : f32 to vector<9x16xf32>
    %63 = arith.mulf %61, %62 : vector<9x16xf32>
    %cst_43 = arith.constant dense<0xFF800000> : vector<9xf32>
    %64 = vector.multi_reduction <maximumf>, %63, %cst_43 [1] : vector<9x16xf32> to vector<9xf32>
    %65 = vector.shape_cast %64 : vector<9xf32> to vector<9x1xf32>
    %66 = vector.broadcast %65 : vector<9x1xf32> to vector<9x16xf32>
    %67 = arith.subf %63, %66 : vector<9x16xf32>
    %68 = math.exp %67 : vector<9x16xf32>
    %cst_44 = arith.constant dense<0.000000e+00> : vector<9xf32>
    %69 = vector.multi_reduction <add>, %68, %cst_44 [1] : vector<9x16xf32> to vector<9xf32>
    %70 = vector.shape_cast %69 : vector<9xf32> to vector<9x1xf32>
    %71 = vector.broadcast %70 : vector<9x1xf32> to vector<9x16xf32>
    %72 = arith.divf %68, %71 : vector<9x16xf32>
    %cst_45 = arith.constant dense<0.000000e+00> : vector<9x32xf32>
    %73 = tpu.matmul %72, %60, %cst_45 {dimension_numbers = #tpu.dot_dimension_numbers<[1], [0], [0], [1], [0, 0, 1, 1], [], []>} : vector<9x16xf32>, vector<16x32xf32>, vector<9x32xf32> -> vector<9x32xf32>
    %74 = arith.addf %55, %73 : vector<9x32xf32>
    %c3_46 = arith.constant 3 : index
    %c0_47 = arith.constant 0 : index
    %c0_48 = arith.constant 0 : index
    %c0_49 = arith.constant 0 : index
    %75 = vector.load %arg2[%c3_46, %c0_47, %c0_48, %c0_49] : memref<11x2x9x32xf32, #tpu.memory_space<vmem>>, vector<1x1x9x32xf32>
    %76 = vector.shape_cast %75 : vector<1x1x9x32xf32> to vector<9x32xf32>
    %77 = vector.shape_cast %74 : vector<9x32xf32> to vector<1x1x9x32xf32>
    tpu.vector_store %arg2[%c3_46, %c0_47, %c0_48, %c0_49], %77 {strides = array<i32>} : memref<11x2x9x32xf32, #tpu.memory_space<vmem>>, vector<1x1x9x32xf32>,
    %c4 = arith.constant 4 : index
    %c0_50 = arith.constant 0 : index
    %c0_51 = arith.constant 0 : index
    %c0_52 = arith.constant 0 : index
    %78 = vector.load %arg1[%c4, %c0_50, %c0_51, %c0_52] : memref<11x2x16x32xf32, #tpu.memory_space<vmem>>, vector<1x1x16x32xf32>
    %79 = vector.shape_cast %78 : vector<1x1x16x32xf32> to vector<16x32xf32>
    %cst_53 = arith.constant dense<0.000000e+00> : vector<9x16xf32>
    %80 = tpu.matmul %74, %79, %cst_53 {dimension_numbers = #tpu.dot_dimension_numbers<[1], [1], [0], [0], [0, 0, 1, 0], [], []>} : vector<9x32xf32>, vector<16x32xf32>, vector<9x16xf32> -> vector<9x16xf32>
    %cst_54 = arith.constant 0.176776692 : f32
    %81 = vector.broadcast %cst_54 : f32 to vector<9x16xf32>
    %82 = arith.mulf %80, %81 : vector<9x16xf32>
    %cst_55 = arith.constant dense<0xFF800000> : vector<9xf32>
    %83 = vector.multi_reduction <maximumf>, %82, %cst_55 [1] : vector<9x16xf32> to vector<9xf32>
    %84 = vector.shape_cast %83 : vector<9xf32> to vector<9x1xf32>
    %85 = vector.broadcast %84 : vector<9x1xf32> to vector<9x16xf32>
    %86 = arith.subf %82, %85 : vector<9x16xf32>
    %87 = math.exp %86 : vector<9x16xf32>
    %cst_56 = arith.constant dense<0.000000e+00> : vector<9xf32>
    %88 = vector.multi_reduction <add>, %87, %cst_56 [1] : vector<9x16xf32> to vector<9xf32>
    %89 = vector.shape_cast %88 : vector<9xf32> to vector<9x1xf32>
    %90 = vector.broadcast %89 : vector<9x1xf32> to vector<9x16xf32>
    %91 = arith.divf %87, %90 : vector<9x16xf32>
    %cst_57 = arith.constant dense<0.000000e+00> : vector<9x32xf32>
    %92 = tpu.matmul %91, %79, %cst_57 {dimension_numbers = #tpu.dot_dimension_numbers<[1], [0], [0], [1], [0, 0, 1, 1], [], []>} : vector<9x16xf32>, vector<16x32xf32>, vector<9x32xf32> -> vector<9x32xf32>
    %93 = arith.addf %74, %92 : vector<9x32xf32>
    %c4_58 = arith.constant 4 : index
    %c0_59 = arith.constant 0 : index
    %c0_60 = arith.constant 0 : index
    %c0_61 = arith.constant 0 : index
    %94 = vector.load %arg2[%c4_58, %c0_59, %c0_60, %c0_61] : memref<11x2x9x32xf32, #tpu.memory_space<vmem>>, vector<1x1x9x32xf32>
    %95 = vector.shape_cast %94 : vector<1x1x9x32xf32> to vector<9x32xf32>
    %96 = vector.shape_cast %93 : vector<9x32xf32> to vector<1x1x9x32xf32>
    tpu.vector_store %arg2[%c4_58, %c0_59, %c0_60, %c0_61], %96 {strides = array<i32>} : memref<11x2x9x32xf32, #tpu.memory_space<vmem>>, vector<1x1x9x32xf32>,
    %c5 = arith.constant 5 : index
    %c0_62 = arith.constant 0 : index
    %c0_63 = arith.constant 0 : index
    %c0_64 = arith.constant 0 : index
    %97 = vector.load %arg1[%c5, %c0_62, %c0_63, %c0_64] : memref<11x2x16x32xf32, #tpu.memory_space<vmem>>, vector<1x1x16x32xf32>
    %98 = vector.shape_cast %97 : vector<1x1x16x32xf32> to vector<16x32xf32>
    %cst_65 = arith.constant dense<0.000000e+00> : vector<9x16xf32>
    %99 = tpu.matmul %93, %98, %cst_65 {dimension_numbers = #tpu.dot_dimension_numbers<[1], [1], [0], [0], [0, 0, 1, 0], [], []>} : vector<9x32xf32>, vector<16x32xf32>, vector<9x16xf32> -> vector<9x16xf32>
    %cst_66 = arith.constant 0.176776692 : f32
    %100 = vector.broadcast %cst_66 : f32 to vector<9x16xf32>
    %101 = arith.mulf %99, %100 : vector<9x16xf32>
    %cst_67 = arith.constant dense<0xFF800000> : vector<9xf32>
    %102 = vector.multi_reduction <maximumf>, %101, %cst_67 [1] : vector<9x16xf32> to vector<9xf32>
    %103 = vector.shape_cast %102 : vector<9xf32> to vector<9x1xf32>
    %104 = vector.broadcast %103 : vector<9x1xf32> to vector<9x16xf32>
    %105 = arith.subf %101, %104 : vector<9x16xf32>
    %106 = math.exp %105 : vector<9x16xf32>
    %cst_68 = arith.constant dense<0.000000e+00> : vector<9xf32>
    %107 = vector.multi_reduction <add>, %106, %cst_68 [1] : vector<9x16xf32> to vector<9xf32>
    %108 = vector.shape_cast %107 : vector<9xf32> to vector<9x1xf32>
    %109 = vector.broadcast %108 : vector<9x1xf32> to vector<9x16xf32>
    %110 = arith.divf %106, %109 : vector<9x16xf32>
    %cst_69 = arith.constant dense<0.000000e+00> : vector<9x32xf32>
    %111 = tpu.matmul %110, %98, %cst_69 {dimension_numbers = #tpu.dot_dimension_numbers<[1], [0], [0], [1], [0, 0, 1, 1], [], []>} : vector<9x16xf32>, vector<16x32xf32>, vector<9x32xf32> -> vector<9x32xf32>
    %112 = arith.addf %93, %111 : vector<9x32xf32>
    %c5_70 = arith.constant 5 : index
    %c0_71 = arith.constant 0 : index
    %c0_72 = arith.constant 0 : index
    %c0_73 = arith.constant 0 : index
    %113 = vector.load %arg2[%c5_70, %c0_71, %c0_72, %c0_73] : memref<11x2x9x32xf32, #tpu.memory_space<vmem>>, vector<1x1x9x32xf32>
    %114 = vector.shape_cast %113 : vector<1x1x9x32xf32> to vector<9x32xf32>
    %115 = vector.shape_cast %112 : vector<9x32xf32> to vector<1x1x9x32xf32>
    tpu.vector_store %arg2[%c5_70, %c0_71, %c0_72, %c0_73], %115 {strides = array<i32>} : memref<11x2x9x32xf32, #tpu.memory_space<vmem>>, vector<1x1x9x32xf32>,
    %c6 = arith.constant 6 : index
    %c0_74 = arith.constant 0 : index
    %c0_75 = arith.constant 0 : index
    %c0_76 = arith.constant 0 : index
    %116 = vector.load %arg1[%c6, %c0_74, %c0_75, %c0_76] : memref<11x2x16x32xf32, #tpu.memory_space<vmem>>, vector<1x1x16x32xf32>
    %117 = vector.shape_cast %116 : vector<1x1x16x32xf32> to vector<16x32xf32>
    %cst_77 = arith.constant dense<0.000000e+00> : vector<9x16xf32>
    %118 = tpu.matmul %112, %117, %cst_77 {dimension_numbers = #tpu.dot_dimension_numbers<[1], [1], [0], [0], [0, 0, 1, 0], [], []>} : vector<9x32xf32>, vector<16x32xf32>, vector<9x16xf32> -> vector<9x16xf32>
    %cst_78 = arith.constant 0.176776692 : f32
    %119 = vector.broadcast %cst_78 : f32 to vector<9x16xf32>
    %120 = arith.mulf %118, %119 : vector<9x16xf32>
    %cst_79 = arith.constant dense<0xFF800000> : vector<9xf32>
    %121 = vector.multi_reduction <maximumf>, %120, %cst_79 [1] : vector<9x16xf32> to vector<9xf32>
    %122 = vector.shape_cast %121 : vector<9xf32> to vector<9x1xf32>
    %123 = vector.broadcast %122 : vector<9x1xf32> to vector<9x16xf32>
    %124 = arith.subf %120, %123 : vector<9x16xf32>
    %125 = math.exp %124 : vector<9x16xf32>
    %cst_80 = arith.constant dense<0.000000e+00> : vector<9xf32>
    %126 = vector.multi_reduction <add>, %125, %cst_80 [1] : vector<9x16xf32> to vector<9xf32>
    %127 = vector.shape_cast %126 : vector<9xf32> to vector<9x1xf32>
    %128 = vector.broadcast %127 : vector<9x1xf32> to vector<9x16xf32>
    %129 = arith.divf %125, %128 : vector<9x16xf32>
    %cst_81 = arith.constant dense<0.000000e+00> : vector<9x32xf32>
    %130 = tpu.matmul %129, %117, %cst_81 {dimension_numbers = #tpu.dot_dimension_numbers<[1], [0], [0], [1], [0, 0, 1, 1], [], []>} : vector<9x16xf32>, vector<16x32xf32>, vector<9x32xf32> -> vector<9x32xf32>
    %131 = arith.addf %112, %130 : vector<9x32xf32>
    %c6_82 = arith.constant 6 : index
    %c0_83 = arith.constant 0 : index
    %c0_84 = arith.constant 0 : index
    %c0_85 = arith.constant 0 : index
    %132 = vector.load %arg2[%c6_82, %c0_83, %c0_84, %c0_85] : memref<11x2x9x32xf32, #tpu.memory_space<vmem>>, vector<1x1x9x32xf32>
    %133 = vector.shape_cast %132 : vector<1x1x9x32xf32> to vector<9x32xf32>
    %134 = vector.shape_cast %131 : vector<9x32xf32> to vector<1x1x9x32xf32>
    tpu.vector_store %arg2[%c6_82, %c0_83, %c0_84, %c0_85], %134 {strides = array<i32>} : memref<11x2x9x32xf32, #tpu.memory_space<vmem>>, vector<1x1x9x32xf32>,
    %c7 = arith.constant 7 : index
    %c0_86 = arith.constant 0 : index
    %c0_87 = arith.constant 0 : index
    %c0_88 = arith.constant 0 : index
    %135 = vector.load %arg1[%c7, %c0_86, %c0_87, %c0_88] : memref<11x2x16x32xf32, #tpu.memory_space<vmem>>, vector<1x1x16x32xf32>
    %136 = vector.shape_cast %135 : vector<1x1x16x32xf32> to vector<16x32xf32>
    %cst_89 = arith.constant dense<0.000000e+00> : vector<9x16xf32>
    %137 = tpu.matmul %131, %136, %cst_89 {dimension_numbers = #tpu.dot_dimension_numbers<[1], [1], [0], [0], [0, 0, 1, 0], [], []>} : vector<9x32xf32>, vector<16x32xf32>, vector<9x16xf32> -> vector<9x16xf32>
    %cst_90 = arith.constant 0.176776692 : f32
    %138 = vector.broadcast %cst_90 : f32 to vector<9x16xf32>
    %139 = arith.mulf %137, %138 : vector<9x16xf32>
    %cst_91 = arith.constant dense<0xFF800000> : vector<9xf32>
    %140 = vector.multi_reduction <maximumf>, %139, %cst_91 [1] : vector<9x16xf32> to vector<9xf32>
    %141 = vector.shape_cast %140 : vector<9xf32> to vector<9x1xf32>
    %142 = vector.broadcast %141 : vector<9x1xf32> to vector<9x16xf32>
    %143 = arith.subf %139, %142 : vector<9x16xf32>
    %144 = math.exp %143 : vector<9x16xf32>
    %cst_92 = arith.constant dense<0.000000e+00> : vector<9xf32>
    %145 = vector.multi_reduction <add>, %144, %cst_92 [1] : vector<9x16xf32> to vector<9xf32>
    %146 = vector.shape_cast %145 : vector<9xf32> to vector<9x1xf32>
    %147 = vector.broadcast %146 : vector<9x1xf32> to vector<9x16xf32>
    %148 = arith.divf %144, %147 : vector<9x16xf32>
    %cst_93 = arith.constant dense<0.000000e+00> : vector<9x32xf32>
    %149 = tpu.matmul %148, %136, %cst_93 {dimension_numbers = #tpu.dot_dimension_numbers<[1], [0], [0], [1], [0, 0, 1, 1], [], []>} : vector<9x16xf32>, vector<16x32xf32>, vector<9x32xf32> -> vector<9x32xf32>
    %150 = arith.addf %131, %149 : vector<9x32xf32>
    %c7_94 = arith.constant 7 : index
    %c0_95 = arith.constant 0 : index
    %c0_96 = arith.constant 0 : index
    %c0_97 = arith.constant 0 : index
    %151 = vector.load %arg2[%c7_94, %c0_95, %c0_96, %c0_97] : memref<11x2x9x32xf32, #tpu.memory_space<vmem>>, vector<1x1x9x32xf32>
    %152 = vector.shape_cast %151 : vector<1x1x9x32xf32> to vector<9x32xf32>
    %153 = vector.shape_cast %150 : vector<9x32xf32> to vector<1x1x9x32xf32>
    tpu.vector_store %arg2[%c7_94, %c0_95, %c0_96, %c0_97], %153 {strides = array<i32>} : memref<11x2x9x32xf32, #tpu.memory_space<vmem>>, vector<1x1x9x32xf32>,
    %c8 = arith.constant 8 : index
    %c0_98 = arith.constant 0 : index
    %c0_99 = arith.constant 0 : index
    %c0_100 = arith.constant 0 : index
    %154 = vector.load %arg1[%c8, %c0_98, %c0_99, %c0_100] : memref<11x2x16x32xf32, #tpu.memory_space<vmem>>, vector<1x1x16x32xf32>
    %155 = vector.shape_cast %154 : vector<1x1x16x32xf32> to vector<16x32xf32>
    %cst_101 = arith.constant dense<0.000000e+00> : vector<9x16xf32>
    %156 = tpu.matmul %150, %155, %cst_101 {dimension_numbers = #tpu.dot_dimension_numbers<[1], [1], [0], [0], [0, 0, 1, 0], [], []>} : vector<9x32xf32>, vector<16x32xf32>, vector<9x16xf32> -> vector<9x16xf32>
    %cst_102 = arith.constant 0.176776692 : f32
    %157 = vector.broadcast %cst_102 : f32 to vector<9x16xf32>
    %158 = arith.mulf %156, %157 : vector<9x16xf32>
    %cst_103 = arith.constant dense<0xFF800000> : vector<9xf32>
    %159 = vector.multi_reduction <maximumf>, %158, %cst_103 [1] : vector<9x16xf32> to vector<9xf32>
    %160 = vector.shape_cast %159 : vector<9xf32> to vector<9x1xf32>
    %161 = vector.broadcast %160 : vector<9x1xf32> to vector<9x16xf32>
    %162 = arith.subf %158, %161 : vector<9x16xf32>
    %163 = math.exp %162 : vector<9x16xf32>
    %cst_104 = arith.constant dense<0.000000e+00> : vector<9xf32>
    %164 = vector.multi_reduction <add>, %163, %cst_104 [1] : vector<9x16xf32> to vector<9xf32>
    %165 = vector.shape_cast %164 : vector<9xf32> to vector<9x1xf32>
    %166 = vector.broadcast %165 : vector<9x1xf32> to vector<9x16xf32>
    %167 = arith.divf %163, %166 : vector<9x16xf32>
    %cst_105 = arith.constant dense<0.000000e+00> : vector<9x32xf32>
    %168 = tpu.matmul %167, %155, %cst_105 {dimension_numbers = #tpu.dot_dimension_numbers<[1], [0], [0], [1], [0, 0, 1, 1], [], []>} : vector<9x16xf32>, vector<16x32xf32>, vector<9x32xf32> -> vector<9x32xf32>
    %169 = arith.addf %150, %168 : vector<9x32xf32>
    %c8_106 = arith.constant 8 : index
    %c0_107 = arith.constant 0 : index
    %c0_108 = arith.constant 0 : index
    %c0_109 = arith.constant 0 : index
    %170 = vector.load %arg2[%c8_106, %c0_107, %c0_108, %c0_109] : memref<11x2x9x32xf32, #tpu.memory_space<vmem>>, vector<1x1x9x32xf32>
    %171 = vector.shape_cast %170 : vector<1x1x9x32xf32> to vector<9x32xf32>
    %172 = vector.shape_cast %169 : vector<9x32xf32> to vector<1x1x9x32xf32>
    tpu.vector_store %arg2[%c8_106, %c0_107, %c0_108, %c0_109], %172 {strides = array<i32>} : memref<11x2x9x32xf32, #tpu.memory_space<vmem>>, vector<1x1x9x32xf32>,
    %c9 = arith.constant 9 : index
    %c0_110 = arith.constant 0 : index
    %c0_111 = arith.constant 0 : index
    %c0_112 = arith.constant 0 : index
    %173 = vector.load %arg1[%c9, %c0_110, %c0_111, %c0_112] : memref<11x2x16x32xf32, #tpu.memory_space<vmem>>, vector<1x1x16x32xf32>
    %174 = vector.shape_cast %173 : vector<1x1x16x32xf32> to vector<16x32xf32>
    %cst_113 = arith.constant dense<0.000000e+00> : vector<9x16xf32>
    %175 = tpu.matmul %169, %174, %cst_113 {dimension_numbers = #tpu.dot_dimension_numbers<[1], [1], [0], [0], [0, 0, 1, 0], [], []>} : vector<9x32xf32>, vector<16x32xf32>, vector<9x16xf32> -> vector<9x16xf32>
    %cst_114 = arith.constant 0.176776692 : f32
    %176 = vector.broadcast %cst_114 : f32 to vector<9x16xf32>
    %177 = arith.mulf %175, %176 : vector<9x16xf32>
    %cst_115 = arith.constant dense<0xFF800000> : vector<9xf32>
    %178 = vector.multi_reduction <maximumf>, %177, %cst_115 [1] : vector<9x16xf32> to vector<9xf32>
    %179 = vector.shape_cast %178 : vector<9xf32> to vector<9x1xf32>
    %180 = vector.broadcast %179 : vector<9x1xf32> to vector<9x16xf32>
    %181 = arith.subf %177, %180 : vector<9x16xf32>
    %182 = math.exp %181 : vector<9x16xf32>
    %cst_116 = arith.constant dense<0.000000e+00> : vector<9xf32>
    %183 = vector.multi_reduction <add>, %182, %cst_116 [1] : vector<9x16xf32> to vector<9xf32>
    %184 = vector.shape_cast %183 : vector<9xf32> to vector<9x1xf32>
    %185 = vector.broadcast %184 : vector<9x1xf32> to vector<9x16xf32>
    %186 = arith.divf %182, %185 : vector<9x16xf32>
    %cst_117 = arith.constant dense<0.000000e+00> : vector<9x32xf32>
    %187 = tpu.matmul %186, %174, %cst_117 {dimension_numbers = #tpu.dot_dimension_numbers<[1], [0], [0], [1], [0, 0, 1, 1], [], []>} : vector<9x16xf32>, vector<16x32xf32>, vector<9x32xf32> -> vector<9x32xf32>
    %188 = arith.addf %169, %187 : vector<9x32xf32>
    %c9_118 = arith.constant 9 : index
    %c0_119 = arith.constant 0 : index
    %c0_120 = arith.constant 0 : index
    %c0_121 = arith.constant 0 : index
    %189 = vector.load %arg2[%c9_118, %c0_119, %c0_120, %c0_121] : memref<11x2x9x32xf32, #tpu.memory_space<vmem>>, vector<1x1x9x32xf32>
    %190 = vector.shape_cast %189 : vector<1x1x9x32xf32> to vector<9x32xf32>
    %191 = vector.shape_cast %188 : vector<9x32xf32> to vector<1x1x9x32xf32>
    tpu.vector_store %arg2[%c9_118, %c0_119, %c0_120, %c0_121], %191 {strides = array<i32>} : memref<11x2x9x32xf32, #tpu.memory_space<vmem>>, vector<1x1x9x32xf32>,
    %c10 = arith.constant 10 : index
    %c0_122 = arith.constant 0 : index
    %c0_123 = arith.constant 0 : index
    %c0_124 = arith.constant 0 : index
    %192 = vector.load %arg1[%c10, %c0_122, %c0_123, %c0_124] : memref<11x2x16x32xf32, #tpu.memory_space<vmem>>, vector<1x1x16x32xf32>
    %193 = vector.shape_cast %192 : vector<1x1x16x32xf32> to vector<16x32xf32>
    %cst_125 = arith.constant dense<0.000000e+00> : vector<9x16xf32>
    %194 = tpu.matmul %188, %193, %cst_125 {dimension_numbers = #tpu.dot_dimension_numbers<[1], [1], [0], [0], [0, 0, 1, 0], [], []>} : vector<9x32xf32>, vector<16x32xf32>, vector<9x16xf32> -> vector<9x16xf32>
    %cst_126 = arith.constant 0.176776692 : f32
    %195 = vector.broadcast %cst_126 : f32 to vector<9x16xf32>
    %196 = arith.mulf %194, %195 : vector<9x16xf32>
    %cst_127 = arith.constant dense<0xFF800000> : vector<9xf32>
    %197 = vector.multi_reduction <maximumf>, %196, %cst_127 [1] : vector<9x16xf32> to vector<9xf32>
    %198 = vector.shape_cast %197 : vector<9xf32> to vector<9x1xf32>
    %199 = vector.broadcast %198 : vector<9x1xf32> to vector<9x16xf32>
    %200 = arith.subf %196, %199 : vector<9x16xf32>
    %201 = math.exp %200 : vector<9x16xf32>
    %cst_128 = arith.constant dense<0.000000e+00> : vector<9xf32>
    %202 = vector.multi_reduction <add>, %201, %cst_128 [1] : vector<9x16xf32> to vector<9xf32>
    %203 = vector.shape_cast %202 : vector<9xf32> to vector<9x1xf32>
    %204 = vector.broadcast %203 : vector<9x1xf32> to vector<9x16xf32>
    %205 = arith.divf %201, %204 : vector<9x16xf32>
    %cst_129 = arith.constant dense<0.000000e+00> : vector<9x32xf32>
    %206 = tpu.matmul %205, %193, %cst_129 {dimension_numbers = #tpu.dot_dimension_numbers<[1], [0], [0], [1], [0, 0, 1, 1], [], []>} : vector<9x16xf32>, vector<16x32xf32>, vector<9x32xf32> -> vector<9x32xf32>
    %207 = arith.addf %188, %206 : vector<9x32xf32>
    %c10_130 = arith.constant 10 : index
    %c0_131 = arith.constant 0 : index
    %c0_132 = arith.constant 0 : index
    %c0_133 = arith.constant 0 : index
    %208 = vector.load %arg2[%c10_130, %c0_131, %c0_132, %c0_133] : memref<11x2x9x32xf32, #tpu.memory_space<vmem>>, vector<1x1x9x32xf32>
    %209 = vector.shape_cast %208 : vector<1x1x9x32xf32> to vector<9x32xf32>
    %210 = vector.shape_cast %207 : vector<9x32xf32> to vector<1x1x9x32xf32>
    tpu.vector_store %arg2[%c10_130, %c0_131, %c0_132, %c0_133], %210 {strides = array<i32>} : memref<11x2x9x32xf32, #tpu.memory_space<vmem>>, vector<1x1x9x32xf32>,
    %c1_134 = arith.constant 1 : index
    %c0_135 = arith.constant 0 : index
    %c0_136 = arith.constant 0 : index
    %211 = vector.load %arg0[%c1_134, %c0_135, %c0_136] : memref<2x9x32xf32, #tpu.memory_space<vmem>>, vector<1x9x32xf32>
    %212 = vector.shape_cast %211 : vector<1x9x32xf32> to vector<9x32xf32>
    %c0_137 = arith.constant 0 : index
    %c1_138 = arith.constant 1 : index
    %c0_139 = arith.constant 0 : index
    %c0_140 = arith.constant 0 : index
    %213 = vector.load %arg1[%c0_137, %c1_138, %c0_139, %c0_140] : memref<11x2x16x32xf32, #tpu.memory_space<vmem>>, vector<1x1x16x32xf32>
    %214 = vector.shape_cast %213 : vector<1x1x16x32xf32> to vector<16x32xf32>
    %cst_141 = arith.constant dense<0.000000e+00> : vector<9x16xf32>
    %215 = tpu.matmul %212, %214, %cst_141 {dimension_numbers = #tpu.dot_dimension_numbers<[1], [1], [0], [0], [0, 0, 1, 0], [], []>} : vector<9x32xf32>, vector<16x32xf32>, vector<9x16xf32> -> vector<9x16xf32>
    %cst_142 = arith.constant 0.176776692 : f32
    %216 = vector.broadcast %cst_142 : f32 to vector<9x16xf32>
    %217 = arith.mulf %215, %216 : vector<9x16xf32>
    %cst_143 = arith.constant dense<0xFF800000> : vector<9xf32>
    %218 = vector.multi_reduction <maximumf>, %217, %cst_143 [1] : vector<9x16xf32> to vector<9xf32>
    %219 = vector.shape_cast %218 : vector<9xf32> to vector<9x1xf32>
    %220 = vector.broadcast %219 : vector<9x1xf32> to vector<9x16xf32>
    %221 = arith.subf %217, %220 : vector<9x16xf32>
    %222 = math.exp %221 : vector<9x16xf32>
    %cst_144 = arith.constant dense<0.000000e+00> : vector<9xf32>
    %223 = vector.multi_reduction <add>, %222, %cst_144 [1] : vector<9x16xf32> to vector<9xf32>
    %224 = vector.shape_cast %223 : vector<9xf32> to vector<9x1xf32>
    %225 = vector.broadcast %224 : vector<9x1xf32> to vector<9x16xf32>
    %226 = arith.divf %222, %225 : vector<9x16xf32>
    %cst_145 = arith.constant dense<0.000000e+00> : vector<9x32xf32>
    %227 = tpu.matmul %226, %214, %cst_145 {dimension_numbers = #tpu.dot_dimension_numbers<[1], [0], [0], [1], [0, 0, 1, 1], [], []>} : vector<9x16xf32>, vector<16x32xf32>, vector<9x32xf32> -> vector<9x32xf32>
    %228 = arith.addf %212, %227 : vector<9x32xf32>
    %c0_146 = arith.constant 0 : index
    %c1_147 = arith.constant 1 : index
    %c0_148 = arith.constant 0 : index
    %c0_149 = arith.constant 0 : index
    %229 = vector.load %arg2[%c0_146, %c1_147, %c0_148, %c0_149] : memref<11x2x9x32xf32, #tpu.memory_space<vmem>>, vector<1x1x9x32xf32>
    %230 = vector.shape_cast %229 : vector<1x1x9x32xf32> to vector<9x32xf32>
    %231 = vector.shape_cast %228 : vector<9x32xf32> to vector<1x1x9x32xf32>
    tpu.vector_store %arg2[%c0_146, %c1_147, %c0_148, %c0_149], %231 {strides = array<i32>} : memref<11x2x9x32xf32, #tpu.memory_space<vmem>>, vector<1x1x9x32xf32>,
    %c1_150 = arith.constant 1 : index
    %c1_151 = arith.constant 1 : index
    %c0_152 = arith.constant 0 : index
    %c0_153 = arith.constant 0 : index
    %232 = vector.load %arg1[%c1_150, %c1_151, %c0_152, %c0_153] : memref<11x2x16x32xf32, #tpu.memory_space<vmem>>, vector<1x1x16x32xf32>
    %233 = vector.shape_cast %232 : vector<1x1x16x32xf32> to vector<16x32xf32>
    %cst_154 = arith.constant dense<0.000000e+00> : vector<9x16xf32>
    %234 = tpu.matmul %228, %233, %cst_154 {dimension_numbers = #tpu.dot_dimension_numbers<[1], [1], [0], [0], [0, 0, 1, 0], [], []>} : vector<9x32xf32>, vector<16x32xf32>, vector<9x16xf32> -> vector<9x16xf32>
    %cst_155 = arith.constant 0.176776692 : f32
    %235 = vector.broadcast %cst_155 : f32 to vector<9x16xf32>
    %236 = arith.mulf %234, %235 : vector<9x16xf32>
    %cst_156 = arith.constant dense<0xFF800000> : vector<9xf32>
    %237 = vector.multi_reduction <maximumf>, %236, %cst_156 [1] : vector<9x16xf32> to vector<9xf32>
    %238 = vector.shape_cast %237 : vector<9xf32> to vector<9x1xf32>
    %239 = vector.broadcast %238 : vector<9x1xf32> to vector<9x16xf32>
    %240 = arith.subf %236, %239 : vector<9x16xf32>
    %241 = math.exp %240 : vector<9x16xf32>
    %cst_157 = arith.constant dense<0.000000e+00> : vector<9xf32>
    %242 = vector.multi_reduction <add>, %241, %cst_157 [1] : vector<9x16xf32> to vector<9xf32>
    %243 = vector.shape_cast %242 : vector<9xf32> to vector<9x1xf32>
    %244 = vector.broadcast %243 : vector<9x1xf32> to vector<9x16xf32>
    %245 = arith.divf %241, %244 : vector<9x16xf32>
    %cst_158 = arith.constant dense<0.000000e+00> : vector<9x32xf32>
    %246 = tpu.matmul %245, %233, %cst_158 {dimension_numbers = #tpu.dot_dimension_numbers<[1], [0], [0], [1], [0, 0, 1, 1], [], []>} : vector<9x16xf32>, vector<16x32xf32>, vector<9x32xf32> -> vector<9x32xf32>
    %247 = arith.addf %228, %246 : vector<9x32xf32>
    %c1_159 = arith.constant 1 : index
    %c1_160 = arith.constant 1 : index
    %c0_161 = arith.constant 0 : index
    %c0_162 = arith.constant 0 : index
    %248 = vector.load %arg2[%c1_159, %c1_160, %c0_161, %c0_162] : memref<11x2x9x32xf32, #tpu.memory_space<vmem>>, vector<1x1x9x32xf32>
    %249 = vector.shape_cast %248 : vector<1x1x9x32xf32> to vector<9x32xf32>
    %250 = vector.shape_cast %247 : vector<9x32xf32> to vector<1x1x9x32xf32>
    tpu.vector_store %arg2[%c1_159, %c1_160, %c0_161, %c0_162], %250 {strides = array<i32>} : memref<11x2x9x32xf32, #tpu.memory_space<vmem>>, vector<1x1x9x32xf32>,
    %c2_163 = arith.constant 2 : index
    %c1_164 = arith.constant 1 : index
    %c0_165 = arith.constant 0 : index
    %c0_166 = arith.constant 0 : index
    %251 = vector.load %arg1[%c2_163, %c1_164, %c0_165, %c0_166] : memref<11x2x16x32xf32, #tpu.memory_space<vmem>>, vector<1x1x16x32xf32>
    %252 = vector.shape_cast %251 : vector<1x1x16x32xf32> to vector<16x32xf32>
    %cst_167 = arith.constant dense<0.000000e+00> : vector<9x16xf32>
    %253 = tpu.matmul %247, %252, %cst_167 {dimension_numbers = #tpu.dot_dimension_numbers<[1], [1], [0], [0], [0, 0, 1, 0], [], []>} : vector<9x32xf32>, vector<16x32xf32>, vector<9x16xf32> -> vector<9x16xf32>
    %cst_168 = arith.constant 0.176776692 : f32
    %254 = vector.broadcast %cst_168 : f32 to vector<9x16xf32>
    %255 = arith.mulf %253, %254 : vector<9x16xf32>
    %cst_169 = arith.constant dense<0xFF800000> : vector<9xf32>
    %256 = vector.multi_reduction <maximumf>, %255, %cst_169 [1] : vector<9x16xf32> to vector<9xf32>
    %257 = vector.shape_cast %256 : vector<9xf32> to vector<9x1xf32>
    %258 = vector.broadcast %257 : vector<9x1xf32> to vector<9x16xf32>
    %259 = arith.subf %255, %258 : vector<9x16xf32>
    %260 = math.exp %259 : vector<9x16xf32>
    %cst_170 = arith.constant dense<0.000000e+00> : vector<9xf32>
    %261 = vector.multi_reduction <add>, %260, %cst_170 [1] : vector<9x16xf32> to vector<9xf32>
    %262 = vector.shape_cast %261 : vector<9xf32> to vector<9x1xf32>
    %263 = vector.broadcast %262 : vector<9x1xf32> to vector<9x16xf32>
    %264 = arith.divf %260, %263 : vector<9x16xf32>
    %cst_171 = arith.constant dense<0.000000e+00> : vector<9x32xf32>
    %265 = tpu.matmul %264, %252, %cst_171 {dimension_numbers = #tpu.dot_dimension_numbers<[1], [0], [0], [1], [0, 0, 1, 1], [], []>} : vector<9x16xf32>, vector<16x32xf32>, vector<9x32xf32> -> vector<9x32xf32>
    %266 = arith.addf %247, %265 : vector<9x32xf32>
    %c2_172 = arith.constant 2 : index
    %c1_173 = arith.constant 1 : index
    %c0_174 = arith.constant 0 : index
    %c0_175 = arith.constant 0 : index
    %267 = vector.load %arg2[%c2_172, %c1_173, %c0_174, %c0_175] : memref<11x2x9x32xf32, #tpu.memory_space<vmem>>, vector<1x1x9x32xf32>
    %268 = vector.shape_cast %267 : vector<1x1x9x32xf32> to vector<9x32xf32>
    %269 = vector.shape_cast %266 : vector<9x32xf32> to vector<1x1x9x32xf32>
    tpu.vector_store %arg2[%c2_172, %c1_173, %c0_174, %c0_175], %269 {strides = array<i32>} : memref<11x2x9x32xf32, #tpu.memory_space<vmem>>, vector<1x1x9x32xf32>,
    %c3_176 = arith.constant 3 : index
    %c1_177 = arith.constant 1 : index
    %c0_178 = arith.constant 0 : index
    %c0_179 = arith.constant 0 : index
    %270 = vector.load %arg1[%c3_176, %c1_177, %c0_178, %c0_179] : memref<11x2x16x32xf32, #tpu.memory_space<vmem>>, vector<1x1x16x32xf32>
    %271 = vector.shape_cast %270 : vector<1x1x16x32xf32> to vector<16x32xf32>
    %cst_180 = arith.constant dense<0.000000e+00> : vector<9x16xf32>
    %272 = tpu.matmul %266, %271, %cst_180 {dimension_numbers = #tpu.dot_dimension_numbers<[1], [1], [0], [0], [0, 0, 1, 0], [], []>} : vector<9x32xf32>, vector<16x32xf32>, vector<9x16xf32> -> vector<9x16xf32>
    %cst_181 = arith.constant 0.176776692 : f32
    %273 = vector.broadcast %cst_181 : f32 to vector<9x16xf32>
    %274 = arith.mulf %272, %273 : vector<9x16xf32>
    %cst_182 = arith.constant dense<0xFF800000> : vector<9xf32>
    %275 = vector.multi_reduction <maximumf>, %274, %cst_182 [1] : vector<9x16xf32> to vector<9xf32>
    %276 = vector.shape_cast %275 : vector<9xf32> to vector<9x1xf32>
    %277 = vector.broadcast %276 : vector<9x1xf32> to vector<9x16xf32>
    %278 = arith.subf %274, %277 : vector<9x16xf32>
    %279 = math.exp %278 : vector<9x16xf32>
    %cst_183 = arith.constant dense<0.000000e+00> : vector<9xf32>
    %280 = vector.multi_reduction <add>, %279, %cst_183 [1] : vector<9x16xf32> to vector<9xf32>
    %281 = vector.shape_cast %280 : vector<9xf32> to vector<9x1xf32>
    %282 = vector.broadcast %281 : vector<9x1xf32> to vector<9x16xf32>
    %283 = arith.divf %279, %282 : vector<9x16xf32>
    %cst_184 = arith.constant dense<0.000000e+00> : vector<9x32xf32>
    %284 = tpu.matmul %283, %271, %cst_184 {dimension_numbers = #tpu.dot_dimension_numbers<[1], [0], [0], [1], [0, 0, 1, 1], [], []>} : vector<9x16xf32>, vector<16x32xf32>, vector<9x32xf32> -> vector<9x32xf32>
    %285 = arith.addf %266, %284 : vector<9x32xf32>
    %c3_185 = arith.constant 3 : index
    %c1_186 = arith.constant 1 : index
    %c0_187 = arith.constant 0 : index
    %c0_188 = arith.constant 0 : index
    %286 = vector.load %arg2[%c3_185, %c1_186, %c0_187, %c0_188] : memref<11x2x9x32xf32, #tpu.memory_space<vmem>>, vector<1x1x9x32xf32>
    %287 = vector.shape_cast %286 : vector<1x1x9x32xf32> to vector<9x32xf32>
    %288 = vector.shape_cast %285 : vector<9x32xf32> to vector<1x1x9x32xf32>
    tpu.vector_store %arg2[%c3_185, %c1_186, %c0_187, %c0_188], %288 {strides = array<i32>} : memref<11x2x9x32xf32, #tpu.memory_space<vmem>>, vector<1x1x9x32xf32>,
    %c4_189 = arith.constant 4 : index
    %c1_190 = arith.constant 1 : index
    %c0_191 = arith.constant 0 : index
    %c0_192 = arith.constant 0 : index
    %289 = vector.load %arg1[%c4_189, %c1_190, %c0_191, %c0_192] : memref<11x2x16x32xf32, #tpu.memory_space<vmem>>, vector<1x1x16x32xf32>
    %290 = vector.shape_cast %289 : vector<1x1x16x32xf32> to vector<16x32xf32>
    %cst_193 = arith.constant dense<0.000000e+00> : vector<9x16xf32>
    %291 = tpu.matmul %285, %290, %cst_193 {dimension_numbers = #tpu.dot_dimension_numbers<[1], [1], [0], [0], [0, 0, 1, 0], [], []>} : vector<9x32xf32>, vector<16x32xf32>, vector<9x16xf32> -> vector<9x16xf32>
    %cst_194 = arith.constant 0.176776692 : f32
    %292 = vector.broadcast %cst_194 : f32 to vector<9x16xf32>
    %293 = arith.mulf %291, %292 : vector<9x16xf32>
    %cst_195 = arith.constant dense<0xFF800000> : vector<9xf32>
    %294 = vector.multi_reduction <maximumf>, %293, %cst_195 [1] : vector<9x16xf32> to vector<9xf32>
    %295 = vector.shape_cast %294 : vector<9xf32> to vector<9x1xf32>
    %296 = vector.broadcast %295 : vector<9x1xf32> to vector<9x16xf32>
    %297 = arith.subf %293, %296 : vector<9x16xf32>
    %298 = math.exp %297 : vector<9x16xf32>
    %cst_196 = arith.constant dense<0.000000e+00> : vector<9xf32>
    %299 = vector.multi_reduction <add>, %298, %cst_196 [1] : vector<9x16xf32> to vector<9xf32>
    %300 = vector.shape_cast %299 : vector<9xf32> to vector<9x1xf32>
    %301 = vector.broadcast %300 : vector<9x1xf32> to vector<9x16xf32>
    %302 = arith.divf %298, %301 : vector<9x16xf32>
    %cst_197 = arith.constant dense<0.000000e+00> : vector<9x32xf32>
    %303 = tpu.matmul %302, %290, %cst_197 {dimension_numbers = #tpu.dot_dimension_numbers<[1], [0], [0], [1], [0, 0, 1, 1], [], []>} : vector<9x16xf32>, vector<16x32xf32>, vector<9x32xf32> -> vector<9x32xf32>
    %304 = arith.addf %285, %303 : vector<9x32xf32>
    %c4_198 = arith.constant 4 : index
    %c1_199 = arith.constant 1 : index
    %c0_200 = arith.constant 0 : index
    %c0_201 = arith.constant 0 : index
    %305 = vector.load %arg2[%c4_198, %c1_199, %c0_200, %c0_201] : memref<11x2x9x32xf32, #tpu.memory_space<vmem>>, vector<1x1x9x32xf32>
    %306 = vector.shape_cast %305 : vector<1x1x9x32xf32> to vector<9x32xf32>
    %307 = vector.shape_cast %304 : vector<9x32xf32> to vector<1x1x9x32xf32>
    tpu.vector_store %arg2[%c4_198, %c1_199, %c0_200, %c0_201], %307 {strides = array<i32>} : memref<11x2x9x32xf32, #tpu.memory_space<vmem>>, vector<1x1x9x32xf32>,
    %c5_202 = arith.constant 5 : index
    %c1_203 = arith.constant 1 : index
    %c0_204 = arith.constant 0 : index
    %c0_205 = arith.constant 0 : index
    %308 = vector.load %arg1[%c5_202, %c1_203, %c0_204, %c0_205] : memref<11x2x16x32xf32, #tpu.memory_space<vmem>>, vector<1x1x16x32xf32>
    %309 = vector.shape_cast %308 : vector<1x1x16x32xf32> to vector<16x32xf32>
    %cst_206 = arith.constant dense<0.000000e+00> : vector<9x16xf32>
    %310 = tpu.matmul %304, %309, %cst_206 {dimension_numbers = #tpu.dot_dimension_numbers<[1], [1], [0], [0], [0, 0, 1, 0], [], []>} : vector<9x32xf32>, vector<16x32xf32>, vector<9x16xf32> -> vector<9x16xf32>
    %cst_207 = arith.constant 0.176776692 : f32
    %311 = vector.broadcast %cst_207 : f32 to vector<9x16xf32>
    %312 = arith.mulf %310, %311 : vector<9x16xf32>
    %cst_208 = arith.constant dense<0xFF800000> : vector<9xf32>
    %313 = vector.multi_reduction <maximumf>, %312, %cst_208 [1] : vector<9x16xf32> to vector<9xf32>
    %314 = vector.shape_cast %313 : vector<9xf32> to vector<9x1xf32>
    %315 = vector.broadcast %314 : vector<9x1xf32> to vector<9x16xf32>
    %316 = arith.subf %312, %315 : vector<9x16xf32>
    %317 = math.exp %316 : vector<9x16xf32>
    %cst_209 = arith.constant dense<0.000000e+00> : vector<9xf32>
    %318 = vector.multi_reduction <add>, %317, %cst_209 [1] : vector<9x16xf32> to vector<9xf32>
    %319 = vector.shape_cast %318 : vector<9xf32> to vector<9x1xf32>
    %320 = vector.broadcast %319 : vector<9x1xf32> to vector<9x16xf32>
    %321 = arith.divf %317, %320 : vector<9x16xf32>
    %cst_210 = arith.constant dense<0.000000e+00> : vector<9x32xf32>
    %322 = tpu.matmul %321, %309, %cst_210 {dimension_numbers = #tpu.dot_dimension_numbers<[1], [0], [0], [1], [0, 0, 1, 1], [], []>} : vector<9x16xf32>, vector<16x32xf32>, vector<9x32xf32> -> vector<9x32xf32>
    %323 = arith.addf %304, %322 : vector<9x32xf32>
    %c5_211 = arith.constant 5 : index
    %c1_212 = arith.constant 1 : index
    %c0_213 = arith.constant 0 : index
    %c0_214 = arith.constant 0 : index
    %324 = vector.load %arg2[%c5_211, %c1_212, %c0_213, %c0_214] : memref<11x2x9x32xf32, #tpu.memory_space<vmem>>, vector<1x1x9x32xf32>
    %325 = vector.shape_cast %324 : vector<1x1x9x32xf32> to vector<9x32xf32>
    %326 = vector.shape_cast %323 : vector<9x32xf32> to vector<1x1x9x32xf32>
    tpu.vector_store %arg2[%c5_211, %c1_212, %c0_213, %c0_214], %326 {strides = array<i32>} : memref<11x2x9x32xf32, #tpu.memory_space<vmem>>, vector<1x1x9x32xf32>,
    %c6_215 = arith.constant 6 : index
    %c1_216 = arith.constant 1 : index
    %c0_217 = arith.constant 0 : index
    %c0_218 = arith.constant 0 : index
    %327 = vector.load %arg1[%c6_215, %c1_216, %c0_217, %c0_218] : memref<11x2x16x32xf32, #tpu.memory_space<vmem>>, vector<1x1x16x32xf32>
    %328 = vector.shape_cast %327 : vector<1x1x16x32xf32> to vector<16x32xf32>
    %cst_219 = arith.constant dense<0.000000e+00> : vector<9x16xf32>
    %329 = tpu.matmul %323, %328, %cst_219 {dimension_numbers = #tpu.dot_dimension_numbers<[1], [1], [0], [0], [0, 0, 1, 0], [], []>} : vector<9x32xf32>, vector<16x32xf32>, vector<9x16xf32> -> vector<9x16xf32>
    %cst_220 = arith.constant 0.176776692 : f32
    %330 = vector.broadcast %cst_220 : f32 to vector<9x16xf32>
    %331 = arith.mulf %329, %330 : vector<9x16xf32>
    %cst_221 = arith.constant dense<0xFF800000> : vector<9xf32>
    %332 = vector.multi_reduction <maximumf>, %331, %cst_221 [1] : vector<9x16xf32> to vector<9xf32>
    %333 = vector.shape_cast %332 : vector<9xf32> to vector<9x1xf32>
    %334 = vector.broadcast %333 : vector<9x1xf32> to vector<9x16xf32>
    %335 = arith.subf %331, %334 : vector<9x16xf32>
    %336 = math.exp %335 : vector<9x16xf32>
    %cst_222 = arith.constant dense<0.000000e+00> : vector<9xf32>
    %337 = vector.multi_reduction <add>, %336, %cst_222 [1] : vector<9x16xf32> to vector<9xf32>
    %338 = vector.shape_cast %337 : vector<9xf32> to vector<9x1xf32>
    %339 = vector.broadcast %338 : vector<9x1xf32> to vector<9x16xf32>
    %340 = arith.divf %336, %339 : vector<9x16xf32>
    %cst_223 = arith.constant dense<0.000000e+00> : vector<9x32xf32>
    %341 = tpu.matmul %340, %328, %cst_223 {dimension_numbers = #tpu.dot_dimension_numbers<[1], [0], [0], [1], [0, 0, 1, 1], [], []>} : vector<9x16xf32>, vector<16x32xf32>, vector<9x32xf32> -> vector<9x32xf32>
    %342 = arith.addf %323, %341 : vector<9x32xf32>
    %c6_224 = arith.constant 6 : index
    %c1_225 = arith.constant 1 : index
    %c0_226 = arith.constant 0 : index
    %c0_227 = arith.constant 0 : index
    %343 = vector.load %arg2[%c6_224, %c1_225, %c0_226, %c0_227] : memref<11x2x9x32xf32, #tpu.memory_space<vmem>>, vector<1x1x9x32xf32>
    %344 = vector.shape_cast %343 : vector<1x1x9x32xf32> to vector<9x32xf32>
    %345 = vector.shape_cast %342 : vector<9x32xf32> to vector<1x1x9x32xf32>
    tpu.vector_store %arg2[%c6_224, %c1_225, %c0_226, %c0_227], %345 {strides = array<i32>} : memref<11x2x9x32xf32, #tpu.memory_space<vmem>>, vector<1x1x9x32xf32>,
    %c7_228 = arith.constant 7 : index
    %c1_229 = arith.constant 1 : index
    %c0_230 = arith.constant 0 : index
    %c0_231 = arith.constant 0 : index
    %346 = vector.load %arg1[%c7_228, %c1_229, %c0_230, %c0_231] : memref<11x2x16x32xf32, #tpu.memory_space<vmem>>, vector<1x1x16x32xf32>
    %347 = vector.shape_cast %346 : vector<1x1x16x32xf32> to vector<16x32xf32>
    %cst_232 = arith.constant dense<0.000000e+00> : vector<9x16xf32>
    %348 = tpu.matmul %342, %347, %cst_232 {dimension_numbers = #tpu.dot_dimension_numbers<[1], [1], [0], [0], [0, 0, 1, 0], [], []>} : vector<9x32xf32>, vector<16x32xf32>, vector<9x16xf32> -> vector<9x16xf32>
    %cst_233 = arith.constant 0.176776692 : f32
    %349 = vector.broadcast %cst_233 : f32 to vector<9x16xf32>
    %350 = arith.mulf %348, %349 : vector<9x16xf32>
    %cst_234 = arith.constant dense<0xFF800000> : vector<9xf32>
    %351 = vector.multi_reduction <maximumf>, %350, %cst_234 [1] : vector<9x16xf32> to vector<9xf32>
    %352 = vector.shape_cast %351 : vector<9xf32> to vector<9x1xf32>
    %353 = vector.broadcast %352 : vector<9x1xf32> to vector<9x16xf32>
    %354 = arith.subf %350, %353 : vector<9x16xf32>
    %355 = math.exp %354 : vector<9x16xf32>
    %cst_235 = arith.constant dense<0.000000e+00> : vector<9xf32>
    %356 = vector.multi_reduction <add>, %355, %cst_235 [1] : vector<9x16xf32> to vector<9xf32>
    %357 = vector.shape_cast %356 : vector<9xf32> to vector<9x1xf32>
    %358 = vector.broadcast %357 : vector<9x1xf32> to vector<9x16xf32>
    %359 = arith.divf %355, %358 : vector<9x16xf32>
    %cst_236 = arith.constant dense<0.000000e+00> : vector<9x32xf32>
    %360 = tpu.matmul %359, %347, %cst_236 {dimension_numbers = #tpu.dot_dimension_numbers<[1], [0], [0], [1], [0, 0, 1, 1], [], []>} : vector<9x16xf32>, vector<16x32xf32>, vector<9x32xf32> -> vector<9x32xf32>
    %361 = arith.addf %342, %360 : vector<9x32xf32>
    %c7_237 = arith.constant 7 : index
    %c1_238 = arith.constant 1 : index
    %c0_239 = arith.constant 0 : index
    %c0_240 = arith.constant 0 : index
    %362 = vector.load %arg2[%c7_237, %c1_238, %c0_239, %c0_240] : memref<11x2x9x32xf32, #tpu.memory_space<vmem>>, vector<1x1x9x32xf32>
    %363 = vector.shape_cast %362 : vector<1x1x9x32xf32> to vector<9x32xf32>
    %364 = vector.shape_cast %361 : vector<9x32xf32> to vector<1x1x9x32xf32>
    tpu.vector_store %arg2[%c7_237, %c1_238, %c0_239, %c0_240], %364 {strides = array<i32>} : memref<11x2x9x32xf32, #tpu.memory_space<vmem>>, vector<1x1x9x32xf32>,
    %c8_241 = arith.constant 8 : index
    %c1_242 = arith.constant 1 : index
    %c0_243 = arith.constant 0 : index
    %c0_244 = arith.constant 0 : index
    %365 = vector.load %arg1[%c8_241, %c1_242, %c0_243, %c0_244] : memref<11x2x16x32xf32, #tpu.memory_space<vmem>>, vector<1x1x16x32xf32>
    %366 = vector.shape_cast %365 : vector<1x1x16x32xf32> to vector<16x32xf32>
    %cst_245 = arith.constant dense<0.000000e+00> : vector<9x16xf32>
    %367 = tpu.matmul %361, %366, %cst_245 {dimension_numbers = #tpu.dot_dimension_numbers<[1], [1], [0], [0], [0, 0, 1, 0], [], []>} : vector<9x32xf32>, vector<16x32xf32>, vector<9x16xf32> -> vector<9x16xf32>
    %cst_246 = arith.constant 0.176776692 : f32
    %368 = vector.broadcast %cst_246 : f32 to vector<9x16xf32>
    %369 = arith.mulf %367, %368 : vector<9x16xf32>
    %cst_247 = arith.constant dense<0xFF800000> : vector<9xf32>
    %370 = vector.multi_reduction <maximumf>, %369, %cst_247 [1] : vector<9x16xf32> to vector<9xf32>
    %371 = vector.shape_cast %370 : vector<9xf32> to vector<9x1xf32>
    %372 = vector.broadcast %371 : vector<9x1xf32> to vector<9x16xf32>
    %373 = arith.subf %369, %372 : vector<9x16xf32>
    %374 = math.exp %373 : vector<9x16xf32>
    %cst_248 = arith.constant dense<0.000000e+00> : vector<9xf32>
    %375 = vector.multi_reduction <add>, %374, %cst_248 [1] : vector<9x16xf32> to vector<9xf32>
    %376 = vector.shape_cast %375 : vector<9xf32> to vector<9x1xf32>
    %377 = vector.broadcast %376 : vector<9x1xf32> to vector<9x16xf32>
    %378 = arith.divf %374, %377 : vector<9x16xf32>
    %cst_249 = arith.constant dense<0.000000e+00> : vector<9x32xf32>
    %379 = tpu.matmul %378, %366, %cst_249 {dimension_numbers = #tpu.dot_dimension_numbers<[1], [0], [0], [1], [0, 0, 1, 1], [], []>} : vector<9x16xf32>, vector<16x32xf32>, vector<9x32xf32> -> vector<9x32xf32>
    %380 = arith.addf %361, %379 : vector<9x32xf32>
    %c8_250 = arith.constant 8 : index
    %c1_251 = arith.constant 1 : index
    %c0_252 = arith.constant 0 : index
    %c0_253 = arith.constant 0 : index
    %381 = vector.load %arg2[%c8_250, %c1_251, %c0_252, %c0_253] : memref<11x2x9x32xf32, #tpu.memory_space<vmem>>, vector<1x1x9x32xf32>
    %382 = vector.shape_cast %381 : vector<1x1x9x32xf32> to vector<9x32xf32>
    %383 = vector.shape_cast %380 : vector<9x32xf32> to vector<1x1x9x32xf32>
    tpu.vector_store %arg2[%c8_250, %c1_251, %c0_252, %c0_253], %383 {strides = array<i32>} : memref<11x2x9x32xf32, #tpu.memory_space<vmem>>, vector<1x1x9x32xf32>,
    %c9_254 = arith.constant 9 : index
    %c1_255 = arith.constant 1 : index
    %c0_256 = arith.constant 0 : index
    %c0_257 = arith.constant 0 : index
    %384 = vector.load %arg1[%c9_254, %c1_255, %c0_256, %c0_257] : memref<11x2x16x32xf32, #tpu.memory_space<vmem>>, vector<1x1x16x32xf32>
    %385 = vector.shape_cast %384 : vector<1x1x16x32xf32> to vector<16x32xf32>
    %cst_258 = arith.constant dense<0.000000e+00> : vector<9x16xf32>
    %386 = tpu.matmul %380, %385, %cst_258 {dimension_numbers = #tpu.dot_dimension_numbers<[1], [1], [0], [0], [0, 0, 1, 0], [], []>} : vector<9x32xf32>, vector<16x32xf32>, vector<9x16xf32> -> vector<9x16xf32>
    %cst_259 = arith.constant 0.176776692 : f32
    %387 = vector.broadcast %cst_259 : f32 to vector<9x16xf32>
    %388 = arith.mulf %386, %387 : vector<9x16xf32>
    %cst_260 = arith.constant dense<0xFF800000> : vector<9xf32>
    %389 = vector.multi_reduction <maximumf>, %388, %cst_260 [1] : vector<9x16xf32> to vector<9xf32>
    %390 = vector.shape_cast %389 : vector<9xf32> to vector<9x1xf32>
    %391 = vector.broadcast %390 : vector<9x1xf32> to vector<9x16xf32>
    %392 = arith.subf %388, %391 : vector<9x16xf32>
    %393 = math.exp %392 : vector<9x16xf32>
    %cst_261 = arith.constant dense<0.000000e+00> : vector<9xf32>
    %394 = vector.multi_reduction <add>, %393, %cst_261 [1] : vector<9x16xf32> to vector<9xf32>
    %395 = vector.shape_cast %394 : vector<9xf32> to vector<9x1xf32>
    %396 = vector.broadcast %395 : vector<9x1xf32> to vector<9x16xf32>
    %397 = arith.divf %393, %396 : vector<9x16xf32>
    %cst_262 = arith.constant dense<0.000000e+00> : vector<9x32xf32>
    %398 = tpu.matmul %397, %385, %cst_262 {dimension_numbers = #tpu.dot_dimension_numbers<[1], [0], [0], [1], [0, 0, 1, 1], [], []>} : vector<9x16xf32>, vector<16x32xf32>, vector<9x32xf32> -> vector<9x32xf32>
    %399 = arith.addf %380, %398 : vector<9x32xf32>
    %c9_263 = arith.constant 9 : index
    %c1_264 = arith.constant 1 : index
    %c0_265 = arith.constant 0 : index
    %c0_266 = arith.constant 0 : index
    %400 = vector.load %arg2[%c9_263, %c1_264, %c0_265, %c0_266] : memref<11x2x9x32xf32, #tpu.memory_space<vmem>>, vector<1x1x9x32xf32>
    %401 = vector.shape_cast %400 : vector<1x1x9x32xf32> to vector<9x32xf32>
    %402 = vector.shape_cast %399 : vector<9x32xf32> to vector<1x1x9x32xf32>
    tpu.vector_store %arg2[%c9_263, %c1_264, %c0_265, %c0_266], %402 {strides = array<i32>} : memref<11x2x9x32xf32, #tpu.memory_space<vmem>>, vector<1x1x9x32xf32>,
    %c10_267 = arith.constant 10 : index
    %c1_268 = arith.constant 1 : index
    %c0_269 = arith.constant 0 : index
    %c0_270 = arith.constant 0 : index
    %403 = vector.load %arg1[%c10_267, %c1_268, %c0_269, %c0_270] : memref<11x2x16x32xf32, #tpu.memory_space<vmem>>, vector<1x1x16x32xf32>
    %404 = vector.shape_cast %403 : vector<1x1x16x32xf32> to vector<16x32xf32>
    %cst_271 = arith.constant dense<0.000000e+00> : vector<9x16xf32>
    %405 = tpu.matmul %399, %404, %cst_271 {dimension_numbers = #tpu.dot_dimension_numbers<[1], [1], [0], [0], [0, 0, 1, 0], [], []>} : vector<9x32xf32>, vector<16x32xf32>, vector<9x16xf32> -> vector<9x16xf32>
    %cst_272 = arith.constant 0.176776692 : f32
    %406 = vector.broadcast %cst_272 : f32 to vector<9x16xf32>
    %407 = arith.mulf %405, %406 : vector<9x16xf32>
    %cst_273 = arith.constant dense<0xFF800000> : vector<9xf32>
    %408 = vector.multi_reduction <maximumf>, %407, %cst_273 [1] : vector<9x16xf32> to vector<9xf32>
    %409 = vector.shape_cast %408 : vector<9xf32> to vector<9x1xf32>
    %410 = vector.broadcast %409 : vector<9x1xf32> to vector<9x16xf32>
    %411 = arith.subf %407, %410 : vector<9x16xf32>
    %412 = math.exp %411 : vector<9x16xf32>
    %cst_274 = arith.constant dense<0.000000e+00> : vector<9xf32>
    %413 = vector.multi_reduction <add>, %412, %cst_274 [1] : vector<9x16xf32> to vector<9xf32>
    %414 = vector.shape_cast %413 : vector<9xf32> to vector<9x1xf32>
    %415 = vector.broadcast %414 : vector<9x1xf32> to vector<9x16xf32>
    %416 = arith.divf %412, %415 : vector<9x16xf32>
    %cst_275 = arith.constant dense<0.000000e+00> : vector<9x32xf32>
    %417 = tpu.matmul %416, %404, %cst_275 {dimension_numbers = #tpu.dot_dimension_numbers<[1], [0], [0], [1], [0, 0, 1, 1], [], []>} : vector<9x16xf32>, vector<16x32xf32>, vector<9x32xf32> -> vector<9x32xf32>
    %418 = arith.addf %399, %417 : vector<9x32xf32>
    %c10_276 = arith.constant 10 : index
    %c1_277 = arith.constant 1 : index
    %c0_278 = arith.constant 0 : index
    %c0_279 = arith.constant 0 : index
    %419 = vector.load %arg2[%c10_276, %c1_277, %c0_278, %c0_279] : memref<11x2x9x32xf32, #tpu.memory_space<vmem>>, vector<1x1x9x32xf32>
    %420 = vector.shape_cast %419 : vector<1x1x9x32xf32> to vector<9x32xf32>
    %421 = vector.shape_cast %418 : vector<9x32xf32> to vector<1x1x9x32xf32>
    tpu.vector_store %arg2[%c10_276, %c1_277, %c0_278, %c0_279], %421 {strides = array<i32>} : memref<11x2x9x32xf32, #tpu.memory_space<vmem>>, vector<1x1x9x32xf32>,
    return
  }
}

module attributes {stable_mosaic.version = 11 : i64} {
  func.func @_mdn_kernel(%arg0: memref<5x2x16x32xf32, #tpu.memory_space<vmem>>, %arg1: memref<5x2x9x32xf32, #tpu.memory_space<vmem>>, %arg2: memref<2x16x32xf32, #tpu.memory_space<vmem>>, %arg3: memref<2x9x256xf32, #tpu.memory_space<vmem>>, %arg4: memref<16x256xf32, #tpu.memory_space<vmem>>, %arg5: memref<3x32xf32, #tpu.memory_space<vmem>>, %arg6: memref<2x32xf32, #tpu.memory_space<vmem>>, %arg7: memref<2x5x256xf32, #tpu.memory_space<vmem>>) attributes {dimension_semantics = [], scalar_prefetch = 0 : i64, scratch_operands = 0 : i64, tpu.core_type = #tpu.core_type<tc>} {
    %c0 = arith.constant 0 : index
    %c0_0 = arith.constant 0 : index
    %0 = vector.load %arg4[%c0, %c0_0] : memref<16x256xf32, #tpu.memory_space<vmem>>, vector<16x256xf32>
    %c0_1 = arith.constant 0 : index
    %c0_2 = arith.constant 0 : index
    %c0_3 = arith.constant 0 : index
    %c0_4 = arith.constant 0 : index
    %1 = vector.load %arg0[%c0_1, %c0_2, %c0_3, %c0_4] : memref<5x2x16x32xf32, #tpu.memory_space<vmem>>, vector<1x1x16x32xf32>
    %2 = vector.shape_cast %1 : vector<1x1x16x32xf32> to vector<16x32xf32>
    %c0_5 = arith.constant 0 : index
    %c0_6 = arith.constant 0 : index
    %c0_7 = arith.constant 0 : index
    %c0_8 = arith.constant 0 : index
    %3 = vector.load %arg1[%c0_5, %c0_6, %c0_7, %c0_8] : memref<5x2x9x32xf32, #tpu.memory_space<vmem>>, vector<1x1x9x32xf32>
    %4 = vector.shape_cast %3 : vector<1x1x9x32xf32> to vector<9x32xf32>
    %c1 = arith.constant 1 : index
    %c0_9 = arith.constant 0 : index
    %c0_10 = arith.constant 0 : index
    %c0_11 = arith.constant 0 : index
    %5 = vector.load %arg0[%c1, %c0_9, %c0_10, %c0_11] : memref<5x2x16x32xf32, #tpu.memory_space<vmem>>, vector<1x1x16x32xf32>
    %6 = vector.shape_cast %5 : vector<1x1x16x32xf32> to vector<16x32xf32>
    %7 = arith.addf %2, %6 : vector<16x32xf32>
    %c1_12 = arith.constant 1 : index
    %c0_13 = arith.constant 0 : index
    %c0_14 = arith.constant 0 : index
    %c0_15 = arith.constant 0 : index
    %8 = vector.load %arg1[%c1_12, %c0_13, %c0_14, %c0_15] : memref<5x2x9x32xf32, #tpu.memory_space<vmem>>, vector<1x1x9x32xf32>
    %9 = vector.shape_cast %8 : vector<1x1x9x32xf32> to vector<9x32xf32>
    %10 = arith.addf %4, %9 : vector<9x32xf32>
    %c2 = arith.constant 2 : index
    %c0_16 = arith.constant 0 : index
    %c0_17 = arith.constant 0 : index
    %c0_18 = arith.constant 0 : index
    %11 = vector.load %arg0[%c2, %c0_16, %c0_17, %c0_18] : memref<5x2x16x32xf32, #tpu.memory_space<vmem>>, vector<1x1x16x32xf32>
    %12 = vector.shape_cast %11 : vector<1x1x16x32xf32> to vector<16x32xf32>
    %13 = arith.addf %7, %12 : vector<16x32xf32>
    %c2_19 = arith.constant 2 : index
    %c0_20 = arith.constant 0 : index
    %c0_21 = arith.constant 0 : index
    %c0_22 = arith.constant 0 : index
    %14 = vector.load %arg1[%c2_19, %c0_20, %c0_21, %c0_22] : memref<5x2x9x32xf32, #tpu.memory_space<vmem>>, vector<1x1x9x32xf32>
    %15 = vector.shape_cast %14 : vector<1x1x9x32xf32> to vector<9x32xf32>
    %16 = arith.addf %10, %15 : vector<9x32xf32>
    %c3 = arith.constant 3 : index
    %c0_23 = arith.constant 0 : index
    %c0_24 = arith.constant 0 : index
    %c0_25 = arith.constant 0 : index
    %17 = vector.load %arg0[%c3, %c0_23, %c0_24, %c0_25] : memref<5x2x16x32xf32, #tpu.memory_space<vmem>>, vector<1x1x16x32xf32>
    %18 = vector.shape_cast %17 : vector<1x1x16x32xf32> to vector<16x32xf32>
    %19 = arith.addf %13, %18 : vector<16x32xf32>
    %c3_26 = arith.constant 3 : index
    %c0_27 = arith.constant 0 : index
    %c0_28 = arith.constant 0 : index
    %c0_29 = arith.constant 0 : index
    %20 = vector.load %arg1[%c3_26, %c0_27, %c0_28, %c0_29] : memref<5x2x9x32xf32, #tpu.memory_space<vmem>>, vector<1x1x9x32xf32>
    %21 = vector.shape_cast %20 : vector<1x1x9x32xf32> to vector<9x32xf32>
    %22 = arith.addf %16, %21 : vector<9x32xf32>
    %c4 = arith.constant 4 : index
    %c0_30 = arith.constant 0 : index
    %c0_31 = arith.constant 0 : index
    %c0_32 = arith.constant 0 : index
    %23 = vector.load %arg0[%c4, %c0_30, %c0_31, %c0_32] : memref<5x2x16x32xf32, #tpu.memory_space<vmem>>, vector<1x1x16x32xf32>
    %24 = vector.shape_cast %23 : vector<1x1x16x32xf32> to vector<16x32xf32>
    %25 = arith.addf %19, %24 : vector<16x32xf32>
    %c4_33 = arith.constant 4 : index
    %c0_34 = arith.constant 0 : index
    %c0_35 = arith.constant 0 : index
    %c0_36 = arith.constant 0 : index
    %26 = vector.load %arg1[%c4_33, %c0_34, %c0_35, %c0_36] : memref<5x2x9x32xf32, #tpu.memory_space<vmem>>, vector<1x1x9x32xf32>
    %27 = vector.shape_cast %26 : vector<1x1x9x32xf32> to vector<9x32xf32>
    %28 = arith.addf %22, %27 : vector<9x32xf32>
    %cst = arith.constant 2.000000e-01 : f32
    %29 = vector.broadcast %cst : f32 to vector<16x32xf32>
    %30 = arith.mulf %25, %29 : vector<16x32xf32>
    %cst_37 = arith.constant 2.000000e-01 : f32
    %31 = vector.broadcast %cst_37 : f32 to vector<9x32xf32>
    %32 = arith.mulf %28, %31 : vector<9x32xf32>
    %c4_38 = arith.constant 4 : index
    %c0_39 = arith.constant 0 : index
    %c0_40 = arith.constant 0 : index
    %c0_41 = arith.constant 0 : index
    %33 = vector.load %arg0[%c4_38, %c0_39, %c0_40, %c0_41] : memref<5x2x16x32xf32, #tpu.memory_space<vmem>>, vector<1x1x16x32xf32>
    %34 = vector.shape_cast %33 : vector<1x1x16x32xf32> to vector<16x32xf32>
    %c4_42 = arith.constant 4 : index
    %c0_43 = arith.constant 0 : index
    %c0_44 = arith.constant 0 : index
    %c0_45 = arith.constant 0 : index
    %35 = vector.load %arg1[%c4_42, %c0_43, %c0_44, %c0_45] : memref<5x2x9x32xf32, #tpu.memory_space<vmem>>, vector<1x1x9x32xf32>
    %36 = vector.shape_cast %35 : vector<1x1x9x32xf32> to vector<9x32xf32>
    %c0_46 = arith.constant 0 : index
    %c0_47 = arith.constant 0 : index
    %c0_48 = arith.constant 0 : index
    %37 = vector.load %arg2[%c0_46, %c0_47, %c0_48] : memref<2x16x32xf32, #tpu.memory_space<vmem>>, vector<1x16x32xf32>
    %38 = vector.shape_cast %37 : vector<1x16x32xf32> to vector<16x32xf32>
    %39 = arith.addf %38, %30 : vector<16x32xf32>
    %c0_49 = arith.constant 0 : index
    %c0_50 = arith.constant 0 : index
    %c0_51 = arith.constant 0 : index
    %40 = vector.load %arg3[%c0_49, %c0_50, %c0_51] : memref<2x9x256xf32, #tpu.memory_space<vmem>>, vector<1x9x256xf32>
    %41 = vector.shape_cast %40 : vector<1x9x256xf32> to vector<9x256xf32>
    %c0_52 = arith.constant 0 : index
    %c0_53 = arith.constant 0 : index
    %42 = vector.load %arg5[%c0_52, %c0_53] : memref<3x32xf32, #tpu.memory_space<vmem>>, vector<1x32xf32>
    %cst_54 = arith.constant dense<0.000000e+00> : vector<1x16xf32>
    %43 = tpu.matmul %42, %39, %cst_54 {dimension_numbers = #tpu.dot_dimension_numbers<[1], [1], [0], [0], [0, 0, 1, 0], [], []>} : vector<1x32xf32>, vector<16x32xf32>, vector<1x16xf32> -> vector<1x16xf32>
    %44 = arith.negf %43 : vector<1x16xf32>
    %45 = math.exp %44 : vector<1x16xf32>
    %cst_55 = arith.constant 1.000000e+00 : f32
    %46 = vector.broadcast %cst_55 : f32 to vector<1x16xf32>
    %47 = arith.addf %46, %45 : vector<1x16xf32>
    %48 = arith.divf %46, %47 : vector<1x16xf32>
    %c1_56 = arith.constant 1 : index
    %c0_57 = arith.constant 0 : index
    %49 = vector.load %arg5[%c1_56, %c0_57] : memref<3x32xf32, #tpu.memory_space<vmem>>, vector<1x32xf32>
    %cst_58 = arith.constant dense<0.000000e+00> : vector<1x16xf32>
    %50 = tpu.matmul %49, %30, %cst_58 {dimension_numbers = #tpu.dot_dimension_numbers<[1], [1], [0], [0], [0, 0, 1, 0], [], []>} : vector<1x32xf32>, vector<16x32xf32>, vector<1x16xf32> -> vector<1x16xf32>
    %51 = arith.negf %50 : vector<1x16xf32>
    %52 = math.exp %51 : vector<1x16xf32>
    %cst_59 = arith.constant 1.000000e+00 : f32
    %53 = vector.broadcast %cst_59 : f32 to vector<1x16xf32>
    %54 = arith.addf %53, %52 : vector<1x16xf32>
    %55 = arith.divf %53, %54 : vector<1x16xf32>
    %c2_60 = arith.constant 2 : index
    %c0_61 = arith.constant 0 : index
    %56 = vector.load %arg5[%c2_60, %c0_61] : memref<3x32xf32, #tpu.memory_space<vmem>>, vector<1x32xf32>
    %cst_62 = arith.constant dense<0.000000e+00> : vector<1x16xf32>
    %57 = tpu.matmul %56, %34, %cst_62 {dimension_numbers = #tpu.dot_dimension_numbers<[1], [1], [0], [0], [0, 0, 1, 0], [], []>} : vector<1x32xf32>, vector<16x32xf32>, vector<1x16xf32> -> vector<1x16xf32>
    %58 = arith.negf %57 : vector<1x16xf32>
    %59 = math.exp %58 : vector<1x16xf32>
    %cst_63 = arith.constant 1.000000e+00 : f32
    %60 = vector.broadcast %cst_63 : f32 to vector<1x16xf32>
    %61 = arith.addf %60, %59 : vector<1x16xf32>
    %62 = arith.divf %60, %61 : vector<1x16xf32>
    %c0_64 = arith.constant 0 : index
    %c0_65 = arith.constant 0 : index
    %63 = vector.load %arg6[%c0_64, %c0_65] : memref<2x32xf32, #tpu.memory_space<vmem>>, vector<1x32xf32>
    %cst_66 = arith.constant dense<0.000000e+00> : vector<1x9xf32>
    %64 = tpu.matmul %63, %32, %cst_66 {dimension_numbers = #tpu.dot_dimension_numbers<[1], [1], [0], [0], [0, 0, 1, 0], [], []>} : vector<1x32xf32>, vector<9x32xf32>, vector<1x9xf32> -> vector<1x9xf32>
    %65 = arith.negf %64 : vector<1x9xf32>
    %66 = math.exp %65 : vector<1x9xf32>
    %cst_67 = arith.constant 1.000000e+00 : f32
    %67 = vector.broadcast %cst_67 : f32 to vector<1x9xf32>
    %68 = arith.addf %67, %66 : vector<1x9xf32>
    %69 = arith.divf %67, %68 : vector<1x9xf32>
    %c1_68 = arith.constant 1 : index
    %c0_69 = arith.constant 0 : index
    %70 = vector.load %arg6[%c1_68, %c0_69] : memref<2x32xf32, #tpu.memory_space<vmem>>, vector<1x32xf32>
    %cst_70 = arith.constant dense<0.000000e+00> : vector<1x9xf32>
    %71 = tpu.matmul %70, %36, %cst_70 {dimension_numbers = #tpu.dot_dimension_numbers<[1], [1], [0], [0], [0, 0, 1, 0], [], []>} : vector<1x32xf32>, vector<9x32xf32>, vector<1x9xf32> -> vector<1x9xf32>
    %72 = arith.negf %71 : vector<1x9xf32>
    %73 = math.exp %72 : vector<1x9xf32>
    %cst_71 = arith.constant 1.000000e+00 : f32
    %74 = vector.broadcast %cst_71 : f32 to vector<1x9xf32>
    %75 = arith.addf %74, %73 : vector<1x9xf32>
    %76 = arith.divf %74, %75 : vector<1x9xf32>
    %cst_72 = arith.constant dense<0.000000e+00> : vector<1x256xf32>
    %77 = tpu.matmul %48, %0, %cst_72 {dimension_numbers = #tpu.dot_dimension_numbers<[1], [0], [0], [1], [0, 0, 1, 1], [], []>} : vector<1x16xf32>, vector<16x256xf32>, vector<1x256xf32> -> vector<1x256xf32>
    %c0_73 = arith.constant 0 : index
    %c0_74 = arith.constant 0 : index
    %c0_75 = arith.constant 0 : index
    %78 = vector.load %arg7[%c0_73, %c0_74, %c0_75] : memref<2x5x256xf32, #tpu.memory_space<vmem>>, vector<1x1x256xf32>
    %79 = vector.shape_cast %78 : vector<1x1x256xf32> to vector<1x256xf32>
    %80 = vector.shape_cast %77 : vector<1x256xf32> to vector<1x1x256xf32>
    tpu.vector_store %arg7[%c0_73, %c0_74, %c0_75], %80 {strides = array<i32>} : memref<2x5x256xf32, #tpu.memory_space<vmem>>, vector<1x1x256xf32>,
    %cst_76 = arith.constant dense<0.000000e+00> : vector<1x256xf32>
    %81 = tpu.matmul %55, %0, %cst_76 {dimension_numbers = #tpu.dot_dimension_numbers<[1], [0], [0], [1], [0, 0, 1, 1], [], []>} : vector<1x16xf32>, vector<16x256xf32>, vector<1x256xf32> -> vector<1x256xf32>
    %c0_77 = arith.constant 0 : index
    %c1_78 = arith.constant 1 : index
    %c0_79 = arith.constant 0 : index
    %82 = vector.load %arg7[%c0_77, %c1_78, %c0_79] : memref<2x5x256xf32, #tpu.memory_space<vmem>>, vector<1x1x256xf32>
    %83 = vector.shape_cast %82 : vector<1x1x256xf32> to vector<1x256xf32>
    %84 = vector.shape_cast %81 : vector<1x256xf32> to vector<1x1x256xf32>
    tpu.vector_store %arg7[%c0_77, %c1_78, %c0_79], %84 {strides = array<i32>} : memref<2x5x256xf32, #tpu.memory_space<vmem>>, vector<1x1x256xf32>,
    %cst_80 = arith.constant dense<0.000000e+00> : vector<1x256xf32>
    %85 = tpu.matmul %69, %41, %cst_80 {dimension_numbers = #tpu.dot_dimension_numbers<[1], [0], [0], [1], [0, 0, 1, 1], [], []>} : vector<1x9xf32>, vector<9x256xf32>, vector<1x256xf32> -> vector<1x256xf32>
    %c0_81 = arith.constant 0 : index
    %c2_82 = arith.constant 2 : index
    %c0_83 = arith.constant 0 : index
    %86 = vector.load %arg7[%c0_81, %c2_82, %c0_83] : memref<2x5x256xf32, #tpu.memory_space<vmem>>, vector<1x1x256xf32>
    %87 = vector.shape_cast %86 : vector<1x1x256xf32> to vector<1x256xf32>
    %88 = vector.shape_cast %85 : vector<1x256xf32> to vector<1x1x256xf32>
    tpu.vector_store %arg7[%c0_81, %c2_82, %c0_83], %88 {strides = array<i32>} : memref<2x5x256xf32, #tpu.memory_space<vmem>>, vector<1x1x256xf32>,
    %cst_84 = arith.constant dense<0.000000e+00> : vector<1x256xf32>
    %89 = tpu.matmul %62, %0, %cst_84 {dimension_numbers = #tpu.dot_dimension_numbers<[1], [0], [0], [1], [0, 0, 1, 1], [], []>} : vector<1x16xf32>, vector<16x256xf32>, vector<1x256xf32> -> vector<1x256xf32>
    %c0_85 = arith.constant 0 : index
    %c3_86 = arith.constant 3 : index
    %c0_87 = arith.constant 0 : index
    %90 = vector.load %arg7[%c0_85, %c3_86, %c0_87] : memref<2x5x256xf32, #tpu.memory_space<vmem>>, vector<1x1x256xf32>
    %91 = vector.shape_cast %90 : vector<1x1x256xf32> to vector<1x256xf32>
    %92 = vector.shape_cast %89 : vector<1x256xf32> to vector<1x1x256xf32>
    tpu.vector_store %arg7[%c0_85, %c3_86, %c0_87], %92 {strides = array<i32>} : memref<2x5x256xf32, #tpu.memory_space<vmem>>, vector<1x1x256xf32>,
    %cst_88 = arith.constant dense<0.000000e+00> : vector<1x256xf32>
    %93 = tpu.matmul %76, %41, %cst_88 {dimension_numbers = #tpu.dot_dimension_numbers<[1], [0], [0], [1], [0, 0, 1, 1], [], []>} : vector<1x9xf32>, vector<9x256xf32>, vector<1x256xf32> -> vector<1x256xf32>
    %c0_89 = arith.constant 0 : index
    %c4_90 = arith.constant 4 : index
    %c0_91 = arith.constant 0 : index
    %94 = vector.load %arg7[%c0_89, %c4_90, %c0_91] : memref<2x5x256xf32, #tpu.memory_space<vmem>>, vector<1x1x256xf32>
    %95 = vector.shape_cast %94 : vector<1x1x256xf32> to vector<1x256xf32>
    %96 = vector.shape_cast %93 : vector<1x256xf32> to vector<1x1x256xf32>
    tpu.vector_store %arg7[%c0_89, %c4_90, %c0_91], %96 {strides = array<i32>} : memref<2x5x256xf32, #tpu.memory_space<vmem>>, vector<1x1x256xf32>,
    %c0_92 = arith.constant 0 : index
    %c1_93 = arith.constant 1 : index
    %c0_94 = arith.constant 0 : index
    %c0_95 = arith.constant 0 : index
    %97 = vector.load %arg0[%c0_92, %c1_93, %c0_94, %c0_95] : memref<5x2x16x32xf32, #tpu.memory_space<vmem>>, vector<1x1x16x32xf32>
    %98 = vector.shape_cast %97 : vector<1x1x16x32xf32> to vector<16x32xf32>
    %c0_96 = arith.constant 0 : index
    %c1_97 = arith.constant 1 : index
    %c0_98 = arith.constant 0 : index
    %c0_99 = arith.constant 0 : index
    %99 = vector.load %arg1[%c0_96, %c1_97, %c0_98, %c0_99] : memref<5x2x9x32xf32, #tpu.memory_space<vmem>>, vector<1x1x9x32xf32>
    %100 = vector.shape_cast %99 : vector<1x1x9x32xf32> to vector<9x32xf32>
    %c1_100 = arith.constant 1 : index
    %c1_101 = arith.constant 1 : index
    %c0_102 = arith.constant 0 : index
    %c0_103 = arith.constant 0 : index
    %101 = vector.load %arg0[%c1_100, %c1_101, %c0_102, %c0_103] : memref<5x2x16x32xf32, #tpu.memory_space<vmem>>, vector<1x1x16x32xf32>
    %102 = vector.shape_cast %101 : vector<1x1x16x32xf32> to vector<16x32xf32>
    %103 = arith.addf %98, %102 : vector<16x32xf32>
    %c1_104 = arith.constant 1 : index
    %c1_105 = arith.constant 1 : index
    %c0_106 = arith.constant 0 : index
    %c0_107 = arith.constant 0 : index
    %104 = vector.load %arg1[%c1_104, %c1_105, %c0_106, %c0_107] : memref<5x2x9x32xf32, #tpu.memory_space<vmem>>, vector<1x1x9x32xf32>
    %105 = vector.shape_cast %104 : vector<1x1x9x32xf32> to vector<9x32xf32>
    %106 = arith.addf %100, %105 : vector<9x32xf32>
    %c2_108 = arith.constant 2 : index
    %c1_109 = arith.constant 1 : index
    %c0_110 = arith.constant 0 : index
    %c0_111 = arith.constant 0 : index
    %107 = vector.load %arg0[%c2_108, %c1_109, %c0_110, %c0_111] : memref<5x2x16x32xf32, #tpu.memory_space<vmem>>, vector<1x1x16x32xf32>
    %108 = vector.shape_cast %107 : vector<1x1x16x32xf32> to vector<16x32xf32>
    %109 = arith.addf %103, %108 : vector<16x32xf32>
    %c2_112 = arith.constant 2 : index
    %c1_113 = arith.constant 1 : index
    %c0_114 = arith.constant 0 : index
    %c0_115 = arith.constant 0 : index
    %110 = vector.load %arg1[%c2_112, %c1_113, %c0_114, %c0_115] : memref<5x2x9x32xf32, #tpu.memory_space<vmem>>, vector<1x1x9x32xf32>
    %111 = vector.shape_cast %110 : vector<1x1x9x32xf32> to vector<9x32xf32>
    %112 = arith.addf %106, %111 : vector<9x32xf32>
    %c3_116 = arith.constant 3 : index
    %c1_117 = arith.constant 1 : index
    %c0_118 = arith.constant 0 : index
    %c0_119 = arith.constant 0 : index
    %113 = vector.load %arg0[%c3_116, %c1_117, %c0_118, %c0_119] : memref<5x2x16x32xf32, #tpu.memory_space<vmem>>, vector<1x1x16x32xf32>
    %114 = vector.shape_cast %113 : vector<1x1x16x32xf32> to vector<16x32xf32>
    %115 = arith.addf %109, %114 : vector<16x32xf32>
    %c3_120 = arith.constant 3 : index
    %c1_121 = arith.constant 1 : index
    %c0_122 = arith.constant 0 : index
    %c0_123 = arith.constant 0 : index
    %116 = vector.load %arg1[%c3_120, %c1_121, %c0_122, %c0_123] : memref<5x2x9x32xf32, #tpu.memory_space<vmem>>, vector<1x1x9x32xf32>
    %117 = vector.shape_cast %116 : vector<1x1x9x32xf32> to vector<9x32xf32>
    %118 = arith.addf %112, %117 : vector<9x32xf32>
    %c4_124 = arith.constant 4 : index
    %c1_125 = arith.constant 1 : index
    %c0_126 = arith.constant 0 : index
    %c0_127 = arith.constant 0 : index
    %119 = vector.load %arg0[%c4_124, %c1_125, %c0_126, %c0_127] : memref<5x2x16x32xf32, #tpu.memory_space<vmem>>, vector<1x1x16x32xf32>
    %120 = vector.shape_cast %119 : vector<1x1x16x32xf32> to vector<16x32xf32>
    %121 = arith.addf %115, %120 : vector<16x32xf32>
    %c4_128 = arith.constant 4 : index
    %c1_129 = arith.constant 1 : index
    %c0_130 = arith.constant 0 : index
    %c0_131 = arith.constant 0 : index
    %122 = vector.load %arg1[%c4_128, %c1_129, %c0_130, %c0_131] : memref<5x2x9x32xf32, #tpu.memory_space<vmem>>, vector<1x1x9x32xf32>
    %123 = vector.shape_cast %122 : vector<1x1x9x32xf32> to vector<9x32xf32>
    %124 = arith.addf %118, %123 : vector<9x32xf32>
    %cst_132 = arith.constant 2.000000e-01 : f32
    %125 = vector.broadcast %cst_132 : f32 to vector<16x32xf32>
    %126 = arith.mulf %121, %125 : vector<16x32xf32>
    %cst_133 = arith.constant 2.000000e-01 : f32
    %127 = vector.broadcast %cst_133 : f32 to vector<9x32xf32>
    %128 = arith.mulf %124, %127 : vector<9x32xf32>
    %c4_134 = arith.constant 4 : index
    %c1_135 = arith.constant 1 : index
    %c0_136 = arith.constant 0 : index
    %c0_137 = arith.constant 0 : index
    %129 = vector.load %arg0[%c4_134, %c1_135, %c0_136, %c0_137] : memref<5x2x16x32xf32, #tpu.memory_space<vmem>>, vector<1x1x16x32xf32>
    %130 = vector.shape_cast %129 : vector<1x1x16x32xf32> to vector<16x32xf32>
    %c4_138 = arith.constant 4 : index
    %c1_139 = arith.constant 1 : index
    %c0_140 = arith.constant 0 : index
    %c0_141 = arith.constant 0 : index
    %131 = vector.load %arg1[%c4_138, %c1_139, %c0_140, %c0_141] : memref<5x2x9x32xf32, #tpu.memory_space<vmem>>, vector<1x1x9x32xf32>
    %132 = vector.shape_cast %131 : vector<1x1x9x32xf32> to vector<9x32xf32>
    %c1_142 = arith.constant 1 : index
    %c0_143 = arith.constant 0 : index
    %c0_144 = arith.constant 0 : index
    %133 = vector.load %arg2[%c1_142, %c0_143, %c0_144] : memref<2x16x32xf32, #tpu.memory_space<vmem>>, vector<1x16x32xf32>
    %134 = vector.shape_cast %133 : vector<1x16x32xf32> to vector<16x32xf32>
    %135 = arith.addf %134, %126 : vector<16x32xf32>
    %c1_145 = arith.constant 1 : index
    %c0_146 = arith.constant 0 : index
    %c0_147 = arith.constant 0 : index
    %136 = vector.load %arg3[%c1_145, %c0_146, %c0_147] : memref<2x9x256xf32, #tpu.memory_space<vmem>>, vector<1x9x256xf32>
    %137 = vector.shape_cast %136 : vector<1x9x256xf32> to vector<9x256xf32>
    %c0_148 = arith.constant 0 : index
    %c0_149 = arith.constant 0 : index
    %138 = vector.load %arg5[%c0_148, %c0_149] : memref<3x32xf32, #tpu.memory_space<vmem>>, vector<1x32xf32>
    %cst_150 = arith.constant dense<0.000000e+00> : vector<1x16xf32>
    %139 = tpu.matmul %138, %135, %cst_150 {dimension_numbers = #tpu.dot_dimension_numbers<[1], [1], [0], [0], [0, 0, 1, 0], [], []>} : vector<1x32xf32>, vector<16x32xf32>, vector<1x16xf32> -> vector<1x16xf32>
    %140 = arith.negf %139 : vector<1x16xf32>
    %141 = math.exp %140 : vector<1x16xf32>
    %cst_151 = arith.constant 1.000000e+00 : f32
    %142 = vector.broadcast %cst_151 : f32 to vector<1x16xf32>
    %143 = arith.addf %142, %141 : vector<1x16xf32>
    %144 = arith.divf %142, %143 : vector<1x16xf32>
    %c1_152 = arith.constant 1 : index
    %c0_153 = arith.constant 0 : index
    %145 = vector.load %arg5[%c1_152, %c0_153] : memref<3x32xf32, #tpu.memory_space<vmem>>, vector<1x32xf32>
    %cst_154 = arith.constant dense<0.000000e+00> : vector<1x16xf32>
    %146 = tpu.matmul %145, %126, %cst_154 {dimension_numbers = #tpu.dot_dimension_numbers<[1], [1], [0], [0], [0, 0, 1, 0], [], []>} : vector<1x32xf32>, vector<16x32xf32>, vector<1x16xf32> -> vector<1x16xf32>
    %147 = arith.negf %146 : vector<1x16xf32>
    %148 = math.exp %147 : vector<1x16xf32>
    %cst_155 = arith.constant 1.000000e+00 : f32
    %149 = vector.broadcast %cst_155 : f32 to vector<1x16xf32>
    %150 = arith.addf %149, %148 : vector<1x16xf32>
    %151 = arith.divf %149, %150 : vector<1x16xf32>
    %c2_156 = arith.constant 2 : index
    %c0_157 = arith.constant 0 : index
    %152 = vector.load %arg5[%c2_156, %c0_157] : memref<3x32xf32, #tpu.memory_space<vmem>>, vector<1x32xf32>
    %cst_158 = arith.constant dense<0.000000e+00> : vector<1x16xf32>
    %153 = tpu.matmul %152, %130, %cst_158 {dimension_numbers = #tpu.dot_dimension_numbers<[1], [1], [0], [0], [0, 0, 1, 0], [], []>} : vector<1x32xf32>, vector<16x32xf32>, vector<1x16xf32> -> vector<1x16xf32>
    %154 = arith.negf %153 : vector<1x16xf32>
    %155 = math.exp %154 : vector<1x16xf32>
    %cst_159 = arith.constant 1.000000e+00 : f32
    %156 = vector.broadcast %cst_159 : f32 to vector<1x16xf32>
    %157 = arith.addf %156, %155 : vector<1x16xf32>
    %158 = arith.divf %156, %157 : vector<1x16xf32>
    %c0_160 = arith.constant 0 : index
    %c0_161 = arith.constant 0 : index
    %159 = vector.load %arg6[%c0_160, %c0_161] : memref<2x32xf32, #tpu.memory_space<vmem>>, vector<1x32xf32>
    %cst_162 = arith.constant dense<0.000000e+00> : vector<1x9xf32>
    %160 = tpu.matmul %159, %128, %cst_162 {dimension_numbers = #tpu.dot_dimension_numbers<[1], [1], [0], [0], [0, 0, 1, 0], [], []>} : vector<1x32xf32>, vector<9x32xf32>, vector<1x9xf32> -> vector<1x9xf32>
    %161 = arith.negf %160 : vector<1x9xf32>
    %162 = math.exp %161 : vector<1x9xf32>
    %cst_163 = arith.constant 1.000000e+00 : f32
    %163 = vector.broadcast %cst_163 : f32 to vector<1x9xf32>
    %164 = arith.addf %163, %162 : vector<1x9xf32>
    %165 = arith.divf %163, %164 : vector<1x9xf32>
    %c1_164 = arith.constant 1 : index
    %c0_165 = arith.constant 0 : index
    %166 = vector.load %arg6[%c1_164, %c0_165] : memref<2x32xf32, #tpu.memory_space<vmem>>, vector<1x32xf32>
    %cst_166 = arith.constant dense<0.000000e+00> : vector<1x9xf32>
    %167 = tpu.matmul %166, %132, %cst_166 {dimension_numbers = #tpu.dot_dimension_numbers<[1], [1], [0], [0], [0, 0, 1, 0], [], []>} : vector<1x32xf32>, vector<9x32xf32>, vector<1x9xf32> -> vector<1x9xf32>
    %168 = arith.negf %167 : vector<1x9xf32>
    %169 = math.exp %168 : vector<1x9xf32>
    %cst_167 = arith.constant 1.000000e+00 : f32
    %170 = vector.broadcast %cst_167 : f32 to vector<1x9xf32>
    %171 = arith.addf %170, %169 : vector<1x9xf32>
    %172 = arith.divf %170, %171 : vector<1x9xf32>
    %cst_168 = arith.constant dense<0.000000e+00> : vector<1x256xf32>
    %173 = tpu.matmul %144, %0, %cst_168 {dimension_numbers = #tpu.dot_dimension_numbers<[1], [0], [0], [1], [0, 0, 1, 1], [], []>} : vector<1x16xf32>, vector<16x256xf32>, vector<1x256xf32> -> vector<1x256xf32>
    %c1_169 = arith.constant 1 : index
    %c0_170 = arith.constant 0 : index
    %c0_171 = arith.constant 0 : index
    %174 = vector.load %arg7[%c1_169, %c0_170, %c0_171] : memref<2x5x256xf32, #tpu.memory_space<vmem>>, vector<1x1x256xf32>
    %175 = vector.shape_cast %174 : vector<1x1x256xf32> to vector<1x256xf32>
    %176 = vector.shape_cast %173 : vector<1x256xf32> to vector<1x1x256xf32>
    tpu.vector_store %arg7[%c1_169, %c0_170, %c0_171], %176 {strides = array<i32>} : memref<2x5x256xf32, #tpu.memory_space<vmem>>, vector<1x1x256xf32>,
    %cst_172 = arith.constant dense<0.000000e+00> : vector<1x256xf32>
    %177 = tpu.matmul %151, %0, %cst_172 {dimension_numbers = #tpu.dot_dimension_numbers<[1], [0], [0], [1], [0, 0, 1, 1], [], []>} : vector<1x16xf32>, vector<16x256xf32>, vector<1x256xf32> -> vector<1x256xf32>
    %c1_173 = arith.constant 1 : index
    %c1_174 = arith.constant 1 : index
    %c0_175 = arith.constant 0 : index
    %178 = vector.load %arg7[%c1_173, %c1_174, %c0_175] : memref<2x5x256xf32, #tpu.memory_space<vmem>>, vector<1x1x256xf32>
    %179 = vector.shape_cast %178 : vector<1x1x256xf32> to vector<1x256xf32>
    %180 = vector.shape_cast %177 : vector<1x256xf32> to vector<1x1x256xf32>
    tpu.vector_store %arg7[%c1_173, %c1_174, %c0_175], %180 {strides = array<i32>} : memref<2x5x256xf32, #tpu.memory_space<vmem>>, vector<1x1x256xf32>,
    %cst_176 = arith.constant dense<0.000000e+00> : vector<1x256xf32>
    %181 = tpu.matmul %165, %137, %cst_176 {dimension_numbers = #tpu.dot_dimension_numbers<[1], [0], [0], [1], [0, 0, 1, 1], [], []>} : vector<1x9xf32>, vector<9x256xf32>, vector<1x256xf32> -> vector<1x256xf32>
    %c1_177 = arith.constant 1 : index
    %c2_178 = arith.constant 2 : index
    %c0_179 = arith.constant 0 : index
    %182 = vector.load %arg7[%c1_177, %c2_178, %c0_179] : memref<2x5x256xf32, #tpu.memory_space<vmem>>, vector<1x1x256xf32>
    %183 = vector.shape_cast %182 : vector<1x1x256xf32> to vector<1x256xf32>
    %184 = vector.shape_cast %181 : vector<1x256xf32> to vector<1x1x256xf32>
    tpu.vector_store %arg7[%c1_177, %c2_178, %c0_179], %184 {strides = array<i32>} : memref<2x5x256xf32, #tpu.memory_space<vmem>>, vector<1x1x256xf32>,
    %cst_180 = arith.constant dense<0.000000e+00> : vector<1x256xf32>
    %185 = tpu.matmul %158, %0, %cst_180 {dimension_numbers = #tpu.dot_dimension_numbers<[1], [0], [0], [1], [0, 0, 1, 1], [], []>} : vector<1x16xf32>, vector<16x256xf32>, vector<1x256xf32> -> vector<1x256xf32>
    %c1_181 = arith.constant 1 : index
    %c3_182 = arith.constant 3 : index
    %c0_183 = arith.constant 0 : index
    %186 = vector.load %arg7[%c1_181, %c3_182, %c0_183] : memref<2x5x256xf32, #tpu.memory_space<vmem>>, vector<1x1x256xf32>
    %187 = vector.shape_cast %186 : vector<1x1x256xf32> to vector<1x256xf32>
    %188 = vector.shape_cast %185 : vector<1x256xf32> to vector<1x1x256xf32>
    tpu.vector_store %arg7[%c1_181, %c3_182, %c0_183], %188 {strides = array<i32>} : memref<2x5x256xf32, #tpu.memory_space<vmem>>, vector<1x1x256xf32>,
    %cst_184 = arith.constant dense<0.000000e+00> : vector<1x256xf32>
    %189 = tpu.matmul %172, %137, %cst_184 {dimension_numbers = #tpu.dot_dimension_numbers<[1], [0], [0], [1], [0, 0, 1, 1], [], []>} : vector<1x9xf32>, vector<9x256xf32>, vector<1x256xf32> -> vector<1x256xf32>
    %c1_185 = arith.constant 1 : index
    %c4_186 = arith.constant 4 : index
    %c0_187 = arith.constant 0 : index
    %190 = vector.load %arg7[%c1_185, %c4_186, %c0_187] : memref<2x5x256xf32, #tpu.memory_space<vmem>>, vector<1x1x256xf32>
    %191 = vector.shape_cast %190 : vector<1x1x256xf32> to vector<1x256xf32>
    %192 = vector.shape_cast %189 : vector<1x256xf32> to vector<1x1x256xf32>
    tpu.vector_store %arg7[%c1_185, %c4_186, %c0_187], %192 {strides = array<i32>} : memref<2x5x256xf32, #tpu.memory_space<vmem>>, vector<1x1x256xf32>,
    return
  }
}

</mosaic_0001>

<llo_original>
// kernel: forward.5
$region0: #{forward.5}
  #allocation0 [shape = 'u32[]', space=smem, size = 0x4, offset = 0x4, fixed_abs, tag = 'smem constant byte address 0x4 - core index']
  #allocation1 [shape = 'u32[144,128]{1,0:T(1,128)}', space=vmem, size = 0x12000, scoped, tag = 'internal scratch']
  %s0 = inlined_call_operand.vmem [shape: f32[2,3,256], index: 0, kind: input, shape index: {}]
  %s1 = inlined_call_operand.vmem [shape: f32[2,256,3], index: 1, kind: input, shape index: {}]
  %s2 = inlined_call_operand.vmem [shape: f32[2,64,3], index: 2, kind: input, shape index: {}]
  %s3 = inlined_call_operand.vmem [shape: f32[2,16,3], index: 3, kind: input, shape index: {}]
  %s4 = inlined_call_operand.vmem [shape: f32[9,3], index: 4, kind: input, shape index: {}]
  %s5 = inlined_call_operand.vmem [shape: f32[3,32], index: 5, kind: input, shape index: {}]
  %s6 = inlined_call_operand.vmem [shape: f32[3,32], index: 6, kind: input, shape index: {}]
  %s7 = inlined_call_operand.vmem [shape: f32[3,32], index: 7, kind: input, shape index: {}]
  %s8 = inlined_call_operand.vmem [shape: f32[2,9,256], index: 8, kind: output, shape index: {0}]
  %s9 = inlined_call_operand.hbm [shape: f32[2,64,32], index: 9, kind: output, shape index: {1}]
  %s10 = inlined_call_operand.vmem [shape: f32[2,16,32], index: 10, kind: output, shape index: {2}]
  %s11 = inlined_call_operand.vmem [shape: f32[2,9,32], index: 11, kind: output, shape index: {3}]
  %12 = xla_tuple %s8, %s9, %s10, %s11
  %s13 = sld [smem:[#allocation0]]
  $region66: #{forward.5} parent=0
    _
  %s15 = ssub.s32 1, %s13
  %s16 = scalar_select 0, %s15, %s13
  $region1: #{forward.5} parent=0
    #allocation2 [shape = 'u8[65536]{0}', space=vmem, size = 0x10000, scoped, tag = 'output window, operand 1, single buffered']
    #allocation3 [shape = 's32[1]{0}', space=sflag, size = 0x4, scoped, tag = 'scoped memory for forward.5']
    %17 = vsyncpa [#allocation3], 0
    // Predicated region
    $region2: #{forward.5} parent=1 // pred_check
      _
    $region3: #{forward.5} parent=1 // pred_check_branch
      %19 = sbr.rel (0) target = $region5
    $region4: #{forward.5} parent=1 // pred_region
      _
    $region5: #{forward.5} parent=1 // pred_fallthru
      _
    // Predicated region
    $region6: #{forward.5} parent=1 // pred_check
      _
    $region7: #{forward.5} parent=1 // pred_check_branch
      %21 = sbr.rel (0) target = $region9
    $region8: #{forward.5} parent=1 // pred_region
      _
    $region9: #{forward.5} parent=1 // pred_fallthru
      _
    // Predicated region
    $region10: #{forward.5} parent=1 // pred_check
      _
    $region11: #{forward.5} parent=1 // pred_check_branch
      %23 = sbr.rel (0) target = $region13
    $region12: #{forward.5} parent=1 // pred_region
      _
    $region13: #{forward.5} parent=1 // pred_fallthru
      _
    // Predicated region
    $region14: #{forward.5} parent=1 // pred_check
      _
    $region15: #{forward.5} parent=1 // pred_check_branch
      %25 = sbr.rel (0) target = $region17
    $region16: #{forward.5} parent=1 // pred_region
      _
    $region17: #{forward.5} parent=1 // pred_fallthru
      _
    // Predicated region
    $region18: #{forward.5} parent=1 // pred_check
      _
    $region19: #{forward.5} parent=1 // pred_check_branch
      %27 = sbr.rel (0) target = $region21
    $region20: #{forward.5} parent=1 // pred_region
      _
    $region21: #{forward.5} parent=1 // pred_fallthru
      _
    // Predicated region
    $region22: #{forward.5} parent=1 // pred_check
      _
    $region23: #{forward.5} parent=1 // pred_check_branch
      %29 = sbr.rel (0) target = $region25
    $region24: #{forward.5} parent=1 // pred_region
      _
    $region25: #{forward.5} parent=1 // pred_fallthru
      _
    // Predicated region
    $region26: #{forward.5} parent=1 // pred_check
      _
    $region27: #{forward.5} parent=1 // pred_check_branch
      %31 = sbr.rel (0) target = $region29
    $region28: #{forward.5} parent=1 // pred_region
      _
    $region29: #{forward.5} parent=1 // pred_fallthru
      _
    // Predicated region
    $region30: #{forward.5} parent=1 // pred_check
      _
    $region31: #{forward.5} parent=1 // pred_check_branch
      %33 = sbr.rel (0) target = $region33
    $region32: #{forward.5} parent=1 // pred_region
      _
    $region33: #{forward.5} parent=1 // pred_fallthru
      _
    %v34 = vld [vmem:[%s0] sm:$0x77]
    %v35 = vld [vmem:[%s4] sm:$0xff]
    %v36 = vld [vmem:[%s4 + $0x8] sm:$0x1]
    %v38 = vcombine.high %v34, %v34
    %vm39 = vcmask 23552
    %v41 = vsel %vm39, %v35, 0
    %v44 = vsel %vm39, %v36, 0
    %vm46 = vcmask 1042432
    %v47 = vsel %vm46, %v34, 0
    %v49 = vsel %vm46, %v38, 0
    %51 = vmatprep.subr.mxu0 %v49
    %52 = vmatpush1.msra.mxu0 %v47
    %53 = vmatprep.subr.mxu0 0.0
    %54 = vmatpush1.msra.mxu0 0.0
    %55 = vmatprep.subr.mxu0 0.0
    %56 = vmatpush1.msra.mxu0 0.0
    %57 = vmatprep.subr.mxu0 0.0
    %58 = vmatpush1.msra.mxu0 0.0
    %59 = vmatprep.subr.mxu0 0.0
    %60 = vmatpush1.msra.mxu0 0.0
    %61 = vmatprep.subr.mxu0 0.0
    %62 = vmatpush1.msra.mxu0 0.0
    %63 = vmatprep.subr.mxu0 0.0
    %64 = vmatpush1.msra.mxu0 0.0
    %65 = vmatprep.subr.mxu0 0.0
    %66 = vmatpush1.msra.mxu0 0.0
    %67 = vmatprep.subr.mxu0 0.0
    %68 = vmatpush1.msra.mxu0 0.0
    %69 = vmatprep.subr.mxu0 0.0
    %70 = vmatpush1.msra.mxu0 0.0
    %71 = vmatprep.subr.mxu0 0.0
    %72 = vmatpush1.msra.mxu0 0.0
    %73 = vmatprep.subr.mxu0 0.0
    %74 = vmatpush1.msra.mxu0 0.0
    %75 = vmatprep.subr.mxu0 0.0
    %76 = vmatpush1.msra.mxu0 0.0
    %77 = vmatprep.subr.mxu0 0.0
    %78 = vmatpush1.msra.mxu0 0.0
    %79 = vmatprep.subr.mxu0 0.0
    %80 = vmatpush1.msra.mxu0 0.0
    %81 = vmatprep.subr.mxu0 0.0
    %82 = vmatpush1.msra.mxu0 0.0
    %83 = vmatprep.subr.mxu0 0.0
    %84 = vmatpush1.msra.mxu0 0.0
    %85 = vmatprep.subr.mxu0 0.0
    %86 = vmatpush1.msra.mxu0 0.0
    %87 = vmatprep.subr.mxu0 0.0
    %88 = vmatpush1.msra.mxu0 0.0
    %89 = vmatprep.subr.mxu0 0.0
    %90 = vmatpush1.msra.mxu0 0.0
    %91 = vmatprep.subr.mxu0 0.0
    %92 = vmatpush1.msra.mxu0 0.0
    %93 = vmatprep.subr.mxu0 0.0
    %94 = vmatpush1.msra.mxu0 0.0
    %95 = vmatprep.subr.mxu0 0.0
    %96 = vmatpush1.msra.mxu0 0.0
    %97 = vmatprep.subr.mxu0 0.0
    %98 = vmatpush1.msra.mxu0 0.0
    %99 = vmatprep.subr.mxu0 0.0
    %100 = vmatpush1.msra.mxu0 0.0
    %101 = vmatprep.subr.mxu0 0.0
    %102 = vmatpush1.msra.mxu0 0.0
    %103 = vmatprep.subr.mxu0 0.0
    %104 = vmatpush1.msra.mxu0 0.0
    %105 = vmatprep.subr.mxu0 0.0
    %106 = vmatpush1.msra.mxu0 0.0
    %107 = vmatprep.subr.mxu0 0.0
    %108 = vmatpush1.msra.mxu0 0.0
    %109 = vmatprep.subr.mxu0 0.0
    %110 = vmatpush1.msra.mxu0 0.0
    %111 = vmatprep.subr.mxu0 0.0
    %112 = vmatpush1.msra.mxu0 0.0
    %113 = vmatprep.subr.mxu0 0.0
    %114 = vmatpush1.msra.mxu0 0.0
    %115 = vmatprep.mubr.f32.mxu0 0.0
    %116 = vmatmul.mubr.f32.gmra.mrb[0].mxu0 %v41
    %v117 = vpop.f32.mrb[0].mxu0
    %v118 = vadd.f32 0.0, %v117
    %v119 = vpop.f32.mrb[0].mxu0
    %v120 = vadd.f32 0.0, %v119
    %121 = vmatprep.mubr.f32.mxu0 0.0
    %122 = vmatmul.mubr.f32.gmra.mrb[0].mxu0 %v44
    %v123 = vpop.f32.mrb[0].mxu0
    %v124 = vadd.f32 0.0, %v123
    %v125 = vpop.f32.mrb[0].mxu0
    %v126 = vadd.f32 0.0, %v125
    %127 = vdwg.mxu0
    %vm128 = vcmask 1040384
    %v129 = vsel %vm128, %v124, -inf
    %v130 = vmax.f32 %v118, %v129
    %v131 = vrot.slane %v130, 4
    %v132 = vmax.f32 %v130, %v131
    %v133 = vrot.slane %v132, 2
    %v134 = vmax.f32 %v132, %v133
    %v135 = vrot.slane %v134, 1
    %v136 = vmax.f32 %v134, %v135
    %v137 = vsel %vm128, %v126, -inf
    %v138 = vmax.f32 %v120, %v137
    %v139 = vrot.slane %v138, 4
    %v140 = vmax.f32 %v138, %v139
    %v141 = vrot.slane %v140, 2
    %v142 = vmax.f32 %v140, %v141
    %v143 = vrot.slane %v142, 1
    %v144 = vmax.f32 %v142, %v143
    %vm145 = vcmp.eq.f32.partialorder %v118, %v136
    %vm146 = vcmp.eq.f32.partialorder %v120, %v144
    %vm147 = vcmp.eq.f32.partialorder %v124, %v136
    %vm148 = vcmp.eq.f32.partialorder %v126, %v144
    %v149 = vsel %vm145, 1.0, 0.0
    %v150 = vsel %vm146, 1.0, 0.0
    %v151 = vsel %vm147, 1.0, 0.0
    %v152 = vsel %vm148, 1.0, 0.0
    %153 = vst [vmem:[%s8] sm:$0xff] %v149
    %154 = vst [vmem:[%s8 + $0x8] sm:$0xff] %v150
    %155 = vst [vmem:[%s8 + $0x10] sm:$0x1] %v151
    %156 = vst [vmem:[%s8 + $0x18] sm:$0x1] %v152
    %v157 = vld [vmem:[%s2] sm:$0xff]
    %v158 = vld [vmem:[%s2 + $0x8] sm:$0xff]
    %v159 = vld [vmem:[%s2 + $0x10] sm:$0xff]
    %v160 = vld [vmem:[%s2 + $0x18] sm:$0xff]
    %v161 = vld [vmem:[%s2 + $0x20] sm:$0xff]
    %v162 = vld [vmem:[%s2 + $0x28] sm:$0xff]
    %v163 = vld [vmem:[%s2 + $0x30] sm:$0xff]
    %v164 = vld [vmem:[%s2 + $0x38] sm:$0xff]
    %v165 = vld [vmem:[%s5] sm:$0x7]
    %v167 = vsel %vm39, %v157, 0
    %v170 = vsel %vm39, %v158, 0
    %v173 = vsel %vm39, %v159, 0
    %v176 = vsel %vm39, %v160, 0
    %v179 = vsel %vm39, %v161, 0
    %v182 = vsel %vm39, %v162, 0
    %v185 = vsel %vm39, %v163, 0
    %v188 = vsel %vm39, %v164, 0
    %v191 = vsel %vm46, %v165, 0
    %193 = vmatprep.subr.mxu0 0.0
    %194 = vmatpush1.msra.mxu0 %v191
    %195 = vmatprep.subr.mxu0 0.0
    %196 = vmatpush1.msra.mxu0 0.0
    %197 = vmatprep.subr.mxu0 0.0
    %198 = vmatpush1.msra.mxu0 0.0
    %199 = vmatprep.subr.mxu0 0.0
    %200 = vmatpush1.msra.mxu0 0.0
    %201 = vmatprep.subr.mxu0 0.0
    %202 = vmatpush1.msra.mxu0 0.0
    %203 = vmatprep.subr.mxu0 0.0
    %204 = vmatpush1.msra.mxu0 0.0
    %205 = vmatprep.subr.mxu0 0.0
    %206 = vmatpush1.msra.mxu0 0.0
    %207 = vmatprep.subr.mxu0 0.0
    %208 = vmatpush1.msra.mxu0 0.0
    %209 = vmatprep.subr.mxu0 0.0
    %210 = vmatpush1.msra.mxu0 0.0
    %211 = vmatprep.subr.mxu0 0.0
    %212 = vmatpush1.msra.mxu0 0.0
    %213 = vmatprep.subr.mxu0 0.0
    %214 = vmatpush1.msra.mxu0 0.0
    %215 = vmatprep.subr.mxu0 0.0
    %216 = vmatpush1.msra.mxu0 0.0
    %217 = vmatprep.subr.mxu0 0.0
    %218 = vmatpush1.msra.mxu0 0.0
    %219 = vmatprep.subr.mxu0 0.0
    %220 = vmatpush1.msra.mxu0 0.0
    %221 = vmatprep.subr.mxu0 0.0
    %222 = vmatpush1.msra.mxu0 0.0
    %223 = vmatprep.subr.mxu0 0.0
    %224 = vmatpush1.msra.mxu0 0.0
    %225 = vmatprep.subr.mxu0 0.0
    %226 = vmatpush1.msra.mxu0 0.0
    %227 = vmatprep.subr.mxu0 0.0
    %228 = vmatpush1.msra.mxu0 0.0
    %229 = vmatprep.subr.mxu0 0.0
    %230 = vmatpush1.msra.mxu0 0.0
    %231 = vmatprep.subr.mxu0 0.0
    %232 = vmatpush1.msra.mxu0 0.0
    %233 = vmatprep.subr.mxu0 0.0
    %234 = vmatpush1.msra.mxu0 0.0
    %235 = vmatprep.subr.mxu0 0.0
    %236 = vmatpush1.msra.mxu0 0.0
    %237 = vmatprep.subr.mxu0 0.0
    %238 = vmatpush1.msra.mxu0 0.0
    %239 = vmatprep.subr.mxu0 0.0
    %240 = vmatpush1.msra.mxu0 0.0
    %241 = vmatprep.subr.mxu0 0.0
    %242 = vmatpush1.msra.mxu0 0.0
    %243 = vmatprep.subr.mxu0 0.0
    %244 = vmatpush1.msra.mxu0 0.0
    %245 = vmatprep.subr.mxu0 0.0
    %246 = vmatpush1.msra.mxu0 0.0
    %247 = vmatprep.subr.mxu0 0.0
    %248 = vmatpush1.msra.mxu0 0.0
    %249 = vmatprep.subr.mxu0 0.0
    %250 = vmatpush1.msra.mxu0 0.0
    %251 = vmatprep.subr.mxu0 0.0
    %252 = vmatpush1.msra.mxu0 0.0
    %253 = vmatprep.subr.mxu0 0.0
    %254 = vmatpush1.msra.mxu0 0.0
    %255 = vmatprep.subr.mxu0 0.0
    %256 = vmatpush1.msra.mxu0 0.0
    %257 = vmatprep.mubr.f32.mxu0 0.0
    %258 = vmatmul.mubr.f32.gmra.mrb[0].mxu0 %v167
    %v259 = vpop.f32.mrb[0].mxu0
    %v260 = vadd.f32 0.0, %v259
    %v261 = vpop.f32.mrb[0].mxu0
    %262 = vmatprep.mubr.f32.mxu0 0.0
    %263 = vmatmul.mubr.f32.gmra.mrb[0].mxu0 %v170
    %v264 = vpop.f32.mrb[0].mxu0
    %v265 = vadd.f32 0.0, %v264
    %v266 = vpop.f32.mrb[0].mxu0
    %267 = vmatprep.mubr.f32.mxu0 0.0
    %268 = vmatmul.mubr.f32.gmra.mrb[0].mxu0 %v173
    %v269 = vpop.f32.mrb[0].mxu0
    %v270 = vadd.f32 0.0, %v269
    %v271 = vpop.f32.mrb[0].mxu0
    %272 = vmatprep.mubr.f32.mxu0 0.0
    %273 = vmatmul.mubr.f32.gmra.mrb[0].mxu0 %v176
    %v274 = vpop.f32.mrb[0].mxu0
    %v275 = vadd.f32 0.0, %v274
    %v276 = vpop.f32.mrb[0].mxu0
    %277 = vmatprep.mubr.f32.mxu0 0.0
    %278 = vmatmul.mubr.f32.gmra.mrb[0].mxu0 %v179
    %v279 = vpop.f32.mrb[0].mxu0
    %v280 = vadd.f32 0.0, %v279
    %v281 = vpop.f32.mrb[0].mxu0
    %282 = vmatprep.mubr.f32.mxu0 0.0
    %283 = vmatmul.mubr.f32.gmra.mrb[0].mxu0 %v182
    %v284 = vpop.f32.mrb[0].mxu0
    %v285 = vadd.f32 0.0, %v284
    %v286 = vpop.f32.mrb[0].mxu0
    %287 = vmatprep.mubr.f32.mxu0 0.0
    %288 = vmatmul.mubr.f32.gmra.mrb[0].mxu0 %v185
    %v289 = vpop.f32.mrb[0].mxu0
    %v290 = vadd.f32 0.0, %v289
    %v291 = vpop.f32.mrb[0].mxu0
    %292 = vmatprep.mubr.f32.mxu0 0.0
    %293 = vmatmul.mubr.f32.gmra.mrb[0].mxu0 %v188
    %v294 = vpop.f32.mrb[0].mxu0
    %v295 = vadd.f32 0.0, %v294
    %v296 = vpop.f32.mrb[0].mxu0
    %297 = vdwg.mxu0
    %vm298 = vcmask 261120
    %299 = vst.msk [vmem:[#allocation2] sm:$0xff] %vm298, %v260
    %300 = vst.msk [vmem:[#allocation2 + $0x8] sm:$0xff] %vm298, %v265
    %301 = vst.msk [vmem:[#allocation2 + $0x10] sm:$0xff] %vm298, %v270
    %302 = vst.msk [vmem:[#allocation2 + $0x18] sm:$0xff] %vm298, %v275
    %303 = vst.msk [vmem:[#allocation2 + $0x20] sm:$0xff] %vm298, %v280
    %304 = vst.msk [vmem:[#allocation2 + $0x28] sm:$0xff] %vm298, %v285
    %305 = vst.msk [vmem:[#allocation2 + $0x30] sm:$0xff] %vm298, %v290
    %306 = vst.msk [vmem:[#allocation2 + $0x38] sm:$0xff] %vm298, %v295
    %v307 = vld [vmem:[%s3] sm:$0xff]
    %v308 = vld [vmem:[%s3 + $0x8] sm:$0xff]
    %v309 = vld [vmem:[%s6] sm:$0x7]
    %v311 = vsel %vm39, %v307, 0
    %v314 = vsel %vm39, %v308, 0
    %v317 = vsel %vm46, %v309, 0
    %319 = vmatprep.subr.mxu0 0.0
    %320 = vmatpush1.msra.mxu0 %v317
    %321 = vmatprep.subr.mxu0 0.0
    %322 = vmatpush1.msra.mxu0 0.0
    %323 = vmatprep.subr.mxu0 0.0
    %324 = vmatpush1.msra.mxu0 0.0
    %325 = vmatprep.subr.mxu0 0.0
    %326 = vmatpush1.msra.mxu0 0.0
    %327 = vmatprep.subr.mxu0 0.0
    %328 = vmatpush1.msra.mxu0 0.0
    %329 = vmatprep.subr.mxu0 0.0
    %330 = vmatpush1.msra.mxu0 0.0
    %331 = vmatprep.subr.mxu0 0.0
    %332 = vmatpush1.msra.mxu0 0.0
    %333 = vmatprep.subr.mxu0 0.0
    %334 = vmatpush1.msra.mxu0 0.0
    %335 = vmatprep.subr.mxu0 0.0
    %336 = vmatpush1.msra.mxu0 0.0
    %337 = vmatprep.subr.mxu0 0.0
    %338 = vmatpush1.msra.mxu0 0.0
    %339 = vmatprep.subr.mxu0 0.0
    %340 = vmatpush1.msra.mxu0 0.0
    %341 = vmatprep.subr.mxu0 0.0
    %342 = vmatpush1.msra.mxu0 0.0
    %343 = vmatprep.subr.mxu0 0.0
    %344 = vmatpush1.msra.mxu0 0.0
    %345 = vmatprep.subr.mxu0 0.0
    %346 = vmatpush1.msra.mxu0 0.0
    %347 = vmatprep.subr.mxu0 0.0
    %348 = vmatpush1.msra.mxu0 0.0
    %349 = vmatprep.subr.mxu0 0.0
    %350 = vmatpush1.msra.mxu0 0.0
    %351 = vmatprep.subr.mxu0 0.0
    %352 = vmatpush1.msra.mxu0 0.0
    %353 = vmatprep.subr.mxu0 0.0
    %354 = vmatpush1.msra.mxu0 0.0
    %355 = vmatprep.subr.mxu0 0.0
    %356 = vmatpush1.msra.mxu0 0.0
    %357 = vmatprep.subr.mxu0 0.0
    %358 = vmatpush1.msra.mxu0 0.0
    %359 = vmatprep.subr.mxu0 0.0
    %360 = vmatpush1.msra.mxu0 0.0
    %361 = vmatprep.subr.mxu0 0.0
    %362 = vmatpush1.msra.mxu0 0.0
    %363 = vmatprep.subr.mxu0 0.0
    %364 = vmatpush1.msra.mxu0 0.0
    %365 = vmatprep.subr.mxu0 0.0
    %366 = vmatpush1.msra.mxu0 0.0
    %367 = vmatprep.subr.mxu0 0.0
    %368 = vmatpush1.msra.mxu0 0.0
    %369 = vmatprep.subr.mxu0 0.0
    %370 = vmatpush1.msra.mxu0 0.0
    %371 = vmatprep.subr.mxu0 0.0
    %372 = vmatpush1.msra.mxu0 0.0
    %373 = vmatprep.subr.mxu0 0.0
    %374 = vmatpush1.msra.mxu0 0.0
    %375 = vmatprep.subr.mxu0 0.0
    %376 = vmatpush1.msra.mxu0 0.0
    %377 = vmatprep.subr.mxu0 0.0
    %378 = vmatpush1.msra.mxu0 0.0
    %379 = vmatprep.subr.mxu0 0.0
    %380 = vmatpush1.msra.mxu0 0.0
    %381 = vmatprep.subr.mxu0 0.0
    %382 = vmatpush1.msra.mxu0 0.0
    %383 = vmatprep.mubr.f32.mxu0 0.0
    %384 = vmatmul.mubr.f32.gmra.mrb[0].mxu0 %v311
    %v385 = vpop.f32.mrb[0].mxu0
    %v386 = vadd.f32 0.0, %v385
    %v387 = vpop.f32.mrb[0].mxu0
    %388 = vmatprep.mubr.f32.mxu0 0.0
    %389 = vmatmul.mubr.f32.gmra.mrb[0].mxu0 %v314
    %v390 = vpop.f32.mrb[0].mxu0
    %v391 = vadd.f32 0.0, %v390
    %v392 = vpop.f32.mrb[0].mxu0
    %393 = vdwg.mxu0
    %394 = vst.msk [vmem:[%s10] sm:$0xff] %vm298, %v386
    %395 = vst.msk [vmem:[%s10 + $0x8] sm:$0xff] %vm298, %v391
    %v396 = vld [vmem:[%s1] sm:$0xff]
    %v397 = vld [vmem:[%s1 + $0x8] sm:$0xff]
    %v398 = vld [vmem:[%s1 + $0x10] sm:$0xff]
    %v399 = vld [vmem:[%s1 + $0x18] sm:$0xff]
    %v400 = vld [vmem:[%s1 + $0x20] sm:$0xff]
    %v401 = vld [vmem:[%s1 + $0x28] sm:$0xff]
    %v402 = vld [vmem:[%s1 + $0x30] sm:$0xff]
    %v403 = vld [vmem:[%s1 + $0x38] sm:$0xff]
    %v404 = vld [vmem:[%s1 + $0x40] sm:$0xff]
    %v405 = vld [vmem:[%s1 + $0x48] sm:$0xff]
    %v406 = vld [vmem:[%s1 + $0x50] sm:$0xff]
    %v407 = vld [vmem:[%s1 + $0x58] sm:$0xff]
    %v408 = vld [vmem:[%s1 + $0x60] sm:$0xff]
    %v409 = vld [vmem:[%s1 + $0x68] sm:$0xff]
    %v410 = vld [vmem:[%s1 + $0x70] sm:$0xff]
    %v411 = vld [vmem:[%s1 + $0x78] sm:$0xff]
    %v412 = vld [vmem:[%s1 + $0x80] sm:$0xff]
    %v413 = vld [vmem:[%s1 + $0x88] sm:$0xff]
    %v414 = vld [vmem:[%s1 + $0x90] sm:$0xff]
    %v415 = vld [vmem:[%s1 + $0x98] sm:$0xff]
    %v416 = vld [vmem:[%s1 + $0xa0] sm:$0xff]
    %v417 = vld [vmem:[%s1 + $0xa8] sm:$0xff]
    %v418 = vld [vmem:[%s1 + $0xb0] sm:$0xff]
    %v419 = vld [vmem:[%s1 + $0xb8] sm:$0xff]
    %v420 = vld [vmem:[%s1 + $0xc0] sm:$0xff]
    %v421 = vld [vmem:[%s1 + $0xc8] sm:$0xff]
    %v422 = vld [vmem:[%s1 + $0xd0] sm:$0xff]
    %v423 = vld [vmem:[%s1 + $0xd8] sm:$0xff]
    %v424 = vld [vmem:[%s1 + $0xe0] sm:$0xff]
    %v425 = vld [vmem:[%s1 + $0xe8] sm:$0xff]
    %v426 = vld [vmem:[%s1 + $0xf0] sm:$0xff]
    %v427 = vld [vmem:[%s1 + $0xf8] sm:$0xff]
    %428 = vmatprep.subr.mxu0 0.0
    %429 = vmatpush1.msra.mxu0 %v396
    %430 = vmatprep.subr.mxu0 0.0
    %431 = vmatpush1.msra.mxu0 %v397
    %432 = vmatprep.subr.mxu0 0.0
    %433 = vmatpush1.msra.mxu0 %v398
    %434 = vmatprep.subr.mxu0 0.0
    %435 = vmatpush1.msra.mxu0 %v399
    %436 = vmatprep.subr.mxu0 0.0
    %437 = vmatpush1.msra.mxu0 %v400
    %438 = vmatprep.subr.mxu0 0.0
    %439 = vmatpush1.msra.mxu0 %v401
    %440 = vmatprep.subr.mxu0 0.0
    %441 = vmatpush1.msra.mxu0 %v402
    %442 = vmatprep.subr.mxu0 0.0
    %443 = vmatpush1.msra.mxu0 %v403
    %444 = vmatprep.subr.mxu0 0.0
    %445 = vmatpush1.msra.mxu0 %v404
    %446 = vmatprep.subr.mxu0 0.0
    %447 = vmatpush1.msra.mxu0 %v405
    %448 = vmatprep.subr.mxu0 0.0
    %449 = vmatpush1.msra.mxu0 %v406
    %450 = vmatprep.subr.mxu0 0.0
    %451 = vmatpush1.msra.mxu0 %v407
    %452 = vmatprep.subr.mxu0 0.0
    %453 = vmatpush1.msra.mxu0 %v408
    %454 = vmatprep.subr.mxu0 0.0
    %455 = vmatpush1.msra.mxu0 %v409
    %456 = vmatprep.subr.mxu0 0.0
    %457 = vmatpush1.msra.mxu0 %v410
    %458 = vmatprep.subr.mxu0 0.0
    %459 = vmatpush1.msra.mxu0 %v411
    %460 = vmatprep.subr.mxu0 0.0
    %461 = vmatpush1.msra.mxu0 %v412
    %462 = vmatprep.subr.mxu0 0.0
    %463 = vmatpush1.msra.mxu0 %v413
    %464 = vmatprep.subr.mxu0 0.0
    %465 = vmatpush1.msra.mxu0 %v414
    %466 = vmatprep.subr.mxu0 0.0
    %467 = vmatpush1.msra.mxu0 %v415
    %468 = vmatprep.subr.mxu0 0.0
    %469 = vmatpush1.msra.mxu0 %v416
    %470 = vmatprep.subr.mxu0 0.0
    %471 = vmatpush1.msra.mxu0 %v417
    %472 = vmatprep.subr.mxu0 0.0
    %473 = vmatpush1.msra.mxu0 %v418
    %474 = vmatprep.subr.mxu0 0.0
    %475 = vmatpush1.msra.mxu0 %v419
    %476 = vmatprep.subr.mxu0 0.0
    %477 = vmatpush1.msra.mxu0 %v420
    %478 = vmatprep.subr.mxu0 0.0
    %479 = vmatpush1.msra.mxu0 %v421
    %480 = vmatprep.subr.mxu0 0.0
    %481 = vmatpush1.msra.mxu0 %v422
    %482 = vmatprep.subr.mxu0 0.0
    %483 = vmatpush1.msra.mxu0 %v423
    %484 = vmatprep.subr.mxu0 0.0
    %485 = vmatpush1.msra.mxu0 %v424
    %486 = vmatprep.subr.mxu0 0.0
    %487 = vmatpush1.msra.mxu0 %v425
    %488 = vmatprep.subr.mxu0 0.0
    %489 = vmatpush1.msra.mxu0 %v426
    %490 = vmatprep.subr.mxu0 0.0
    %491 = vmatpush1.msra.mxu0 %v427
    %492 = vmatprep.mubr.f32.mxu0 %v150
    %493 = vmatmul.mubr.f32.gmra.mrb[0].mxu0 %v149
    %v494 = vpop.f32.mrb[0].mxu0
    %v495 = vadd.f32 0.0, %v494
    %v496 = vpop.f32.mrb[0].mxu0
    %497 = vmatprep.mubr.f32.mxu0 %v152
    %498 = vmatmul.mubr.f32.gmra.mrb[0].mxu0 %v151
    %v499 = vpop.f32.mrb[0].mxu0
    %v500 = vadd.f32 0.0, %v499
    %v501 = vpop.f32.mrb[0].mxu0
    %502 = vdwg.mxu0
    %v503 = vadd.f32 %v149, %v150
    %504 = vadd.xlane.f32.xlu0 %v503
    %v505 = vpop.xlane.xlu0 %504
    %v506 = vsel %vm128, %v151, 0.0
    %v507 = vsel %vm128, %v152, 0.0
    %v508 = vadd.f32 %v506, %v507
    %509 = vadd.xlane.f32.xlu0 %v508
    %v510 = vpop.xlane.xlu0 %509
    %v511 = vadd.f32 %v505, 1e-06
    %v512 = vadd.f32 %v510, 1e-06
    %v513 = vrcp.pop %v511
    %v514 = vmul.f32 %v495, %v513
    %v515 = vrcp.pop %v512
    %v516 = vmul.f32 %v500, %v515
    %v517 = vld [vmem:[%s7] sm:$0x7]
    %v519 = vsel %vm39, %v514, 0
    %v522 = vsel %vm39, %v516, 0
    %v525 = vsel %vm46, %v517, 0
    %527 = vmatprep.subr.mxu0 0.0
    %528 = vmatpush1.msra.mxu0 %v525
    %529 = vmatprep.subr.mxu0 0.0
    %530 = vmatpush1.msra.mxu0 0.0
    %531 = vmatprep.subr.mxu0 0.0
    %532 = vmatpush1.msra.mxu0 0.0
    %533 = vmatprep.subr.mxu0 0.0
    %534 = vmatpush1.msra.mxu0 0.0
    %535 = vmatprep.subr.mxu0 0.0
    %536 = vmatpush1.msra.mxu0 0.0
    %537 = vmatprep.subr.mxu0 0.0
    %538 = vmatpush1.msra.mxu0 0.0
    %539 = vmatprep.subr.mxu0 0.0
    %540 = vmatpush1.msra.mxu0 0.0
    %541 = vmatprep.subr.mxu0 0.0
    %542 = vmatpush1.msra.mxu0 0.0
    %543 = vmatprep.subr.mxu0 0.0
    %544 = vmatpush1.msra.mxu0 0.0
    %545 = vmatprep.subr.mxu0 0.0
    %546 = vmatpush1.msra.mxu0 0.0
    %547 = vmatprep.subr.mxu0 0.0
    %548 = vmatpush1.msra.mxu0 0.0
    %549 = vmatprep.subr.mxu0 0.0
    %550 = vmatpush1.msra.mxu0 0.0
    %551 = vmatprep.subr.mxu0 0.0
    %552 = vmatpush1.msra.mxu0 0.0
    %553 = vmatprep.subr.mxu0 0.0
    %554 = vmatpush1.msra.mxu0 0.0
    %555 = vmatprep.subr.mxu0 0.0
    %556 = vmatpush1.msra.mxu0 0.0
    %557 = vmatprep.subr.mxu0 0.0
    %558 = vmatpush1.msra.mxu0 0.0
    %559 = vmatprep.subr.mxu0 0.0
    %560 = vmatpush1.msra.mxu0 0.0
    %561 = vmatprep.subr.mxu0 0.0
    %562 = vmatpush1.msra.mxu0 0.0
    %563 = vmatprep.subr.mxu0 0.0
    %564 = vmatpush1.msra.mxu0 0.0
    %565 = vmatprep.subr.mxu0 0.0
    %566 = vmatpush1.msra.mxu0 0.0
    %567 = vmatprep.subr.mxu0 0.0
    %568 = vmatpush1.msra.mxu0 0.0
    %569 = vmatprep.subr.mxu0 0.0
    %570 = vmatpush1.msra.mxu0 0.0
    %571 = vmatprep.subr.mxu0 0.0
    %572 = vmatpush1.msra.mxu0 0.0
    %573 = vmatprep.subr.mxu0 0.0
    %574 = vmatpush1.msra.mxu0 0.0
    %575 = vmatprep.subr.mxu0 0.0
    %576 = vmatpush1.msra.mxu0 0.0
    %577 = vmatprep.subr.mxu0 0.0
    %578 = vmatpush1.msra.mxu0 0.0
    %579 = vmatprep.subr.mxu0 0.0
    %580 = vmatpush1.msra.mxu0 0.0
    %581 = vmatprep.subr.mxu0 0.0
    %582 = vmatpush1.msra.mxu0 0.0
    %583 = vmatprep.subr.mxu0 0.0
    %584 = vmatpush1.msra.mxu0 0.0
    %585 = vmatprep.subr.mxu0 0.0
    %586 = vmatpush1.msra.mxu0 0.0
    %587 = vmatprep.subr.mxu0 0.0
    %588 = vmatpush1.msra.mxu0 0.0
    %589 = vmatprep.subr.mxu0 0.0
    %590 = vmatpush1.msra.mxu0 0.0
    %591 = vmatprep.mubr.f32.mxu0 0.0
    %592 = vmatmul.mubr.f32.gmra.mrb[0].mxu0 %v519
    %v593 = vpop.f32.mrb[0].mxu0
    %v594 = vadd.f32 0.0, %v593
    %v595 = vpop.f32.mrb[0].mxu0
    %596 = vmatprep.mubr.f32.mxu0 0.0
    %597 = vmatmul.mubr.f32.gmra.mrb[0].mxu0 %v522
    %v598 = vpop.f32.mrb[0].mxu0
    %v599 = vadd.f32 0.0, %v598
    %v600 = vpop.f32.mrb[0].mxu0
    %601 = vdwg.mxu0
    %602 = vst.msk [vmem:[%s11] sm:$0xff] %vm298, %v594
    %vm603 = vcmask 253952
    %604 = vst.msk [vmem:[%s11 + $0x8] sm:$0x1] %vm603, %v599
    %s605 = scalar_lea.vmem %s0, 8
    %v606 = vld [vmem:[%s605] sm:$0x77]
    %v607 = vld [vmem:[%s4] sm:$0xff]
    %v608 = vld [vmem:[%s4 + $0x8] sm:$0x1]
    %v610 = vcombine.high %v606, %v606
    %v612 = vsel %vm39, %v607, 0
    %v615 = vsel %vm39, %v608, 0
    %v617 = vsel %vm46, %v606, 0
    %v619 = vsel %vm46, %v610, 0
    %621 = vmatprep.subr.mxu0 %v619
    %622 = vmatpush1.msra.mxu0 %v617
    %623 = vmatprep.subr.mxu0 0.0
    %624 = vmatpush1.msra.mxu0 0.0
    %625 = vmatprep.subr.mxu0 0.0
    %626 = vmatpush1.msra.mxu0 0.0
    %627 = vmatprep.subr.mxu0 0.0
    %628 = vmatpush1.msra.mxu0 0.0
    %629 = vmatprep.subr.mxu0 0.0
    %630 = vmatpush1.msra.mxu0 0.0
    %631 = vmatprep.subr.mxu0 0.0
    %632 = vmatpush1.msra.mxu0 0.0
    %633 = vmatprep.subr.mxu0 0.0
    %634 = vmatpush1.msra.mxu0 0.0
    %635 = vmatprep.subr.mxu0 0.0
    %636 = vmatpush1.msra.mxu0 0.0
    %637 = vmatprep.subr.mxu0 0.0
    %638 = vmatpush1.msra.mxu0 0.0
    %639 = vmatprep.subr.mxu0 0.0
    %640 = vmatpush1.msra.mxu0 0.0
    %641 = vmatprep.subr.mxu0 0.0
    %642 = vmatpush1.msra.mxu0 0.0
    %643 = vmatprep.subr.mxu0 0.0
    %644 = vmatpush1.msra.mxu0 0.0
    %645 = vmatprep.subr.mxu0 0.0
    %646 = vmatpush1.msra.mxu0 0.0
    %647 = vmatprep.subr.mxu0 0.0
    %648 = vmatpush1.msra.mxu0 0.0
    %649 = vmatprep.subr.mxu0 0.0
    %650 = vmatpush1.msra.mxu0 0.0
    %651 = vmatprep.subr.mxu0 0.0
    %652 = vmatpush1.msra.mxu0 0.0
    %653 = vmatprep.subr.mxu0 0.0
    %654 = vmatpush1.msra.mxu0 0.0
    %655 = vmatprep.subr.mxu0 0.0
    %656 = vmatpush1.msra.mxu0 0.0
    %657 = vmatprep.subr.mxu0 0.0
    %658 = vmatpush1.msra.mxu0 0.0
    %659 = vmatprep.subr.mxu0 0.0
    %660 = vmatpush1.msra.mxu0 0.0
    %661 = vmatprep.subr.mxu0 0.0
    %662 = vmatpush1.msra.mxu0 0.0
    %663 = vmatprep.subr.mxu0 0.0
    %664 = vmatpush1.msra.mxu0 0.0
    %665 = vmatprep.subr.mxu0 0.0
    %666 = vmatpush1.msra.mxu0 0.0
    %667 = vmatprep.subr.mxu0 0.0
    %668 = vmatpush1.msra.mxu0 0.0
    %669 = vmatprep.subr.mxu0 0.0
    %670 = vmatpush1.msra.mxu0 0.0
    %671 = vmatprep.subr.mxu0 0.0
    %672 = vmatpush1.msra.mxu0 0.0
    %673 = vmatprep.subr.mxu0 0.0
    %674 = vmatpush1.msra.mxu0 0.0
    %675 = vmatprep.subr.mxu0 0.0
    %676 = vmatpush1.msra.mxu0 0.0
    %677 = vmatprep.subr.mxu0 0.0
    %678 = vmatpush1.msra.mxu0 0.0
    %679 = vmatprep.subr.mxu0 0.0
    %680 = vmatpush1.msra.mxu0 0.0
    %681 = vmatprep.subr.mxu0 0.0
    %682 = vmatpush1.msra.mxu0 0.0
    %683 = vmatprep.subr.mxu0 0.0
    %684 = vmatpush1.msra.mxu0 0.0
    %685 = vmatprep.mubr.f32.mxu0 0.0
    %686 = vmatmul.mubr.f32.gmra.mrb[0].mxu0 %v612
    %v687 = vpop.f32.mrb[0].mxu0
    %v688 = vadd.f32 0.0, %v687
    %v689 = vpop.f32.mrb[0].mxu0
    %v690 = vadd.f32 0.0, %v689
    %691 = vmatprep.mubr.f32.mxu0 0.0
    %692 = vmatmul.mubr.f32.gmra.mrb[0].mxu0 %v615
    %v693 = vpop.f32.mrb[0].mxu0
    %v694 = vadd.f32 0.0, %v693
    %v695 = vpop.f32.mrb[0].mxu0
    %v696 = vadd.f32 0.0, %v695
    %697 = vdwg.mxu0
    %v698 = vsel %vm128, %v694, -inf
    %v699 = vmax.f32 %v688, %v698
    %v700 = vrot.slane %v699, 4
    %v701 = vmax.f32 %v699, %v700
    %v702 = vrot.slane %v701, 2
    %v703 = vmax.f32 %v701, %v702
    %v704 = vrot.slane %v703, 1
    %v705 = vmax.f32 %v703, %v704
    %v706 = vsel %vm128, %v696, -inf
    %v707 = vmax.f32 %v690, %v706
    %v708 = vrot.slane %v707, 4
    %v709 = vmax.f32 %v707, %v708
    %v710 = vrot.slane %v709, 2
    %v711 = vmax.f32 %v709, %v710
    %v712 = vrot.slane %v711, 1
    %v713 = vmax.f32 %v711, %v712
    %vm714 = vcmp.eq.f32.partialorder %v688, %v705
    %vm715 = vcmp.eq.f32.partialorder %v690, %v713
    %vm716 = vcmp.eq.f32.partialorder %v694, %v705
    %vm717 = vcmp.eq.f32.partialorder %v696, %v713
    %v718 = vsel %vm714, 1.0, 0.0
    %v719 = vsel %vm715, 1.0, 0.0
    %v720 = vsel %vm716, 1.0, 0.0
    %v721 = vsel %vm717, 1.0, 0.0
    %s722 = scalar_lea.vmem %s8, 32
    %723 = vst [vmem:[%s722] sm:$0xff] %v718
    %724 = vst [vmem:[%s722 + $0x8] sm:$0xff] %v719
    %725 = vst [vmem:[%s722 + $0x10] sm:$0x1] %v720
    %726 = vst [vmem:[%s722 + $0x18] sm:$0x1] %v721
    %s727 = scalar_lea.vmem %s2, 64
    %v728 = vld [vmem:[%s727] sm:$0xff]
    %v729 = vld [vmem:[%s727 + $0x8] sm:$0xff]
    %v730 = vld [vmem:[%s727 + $0x10] sm:$0xff]
    %v731 = vld [vmem:[%s727 + $0x18] sm:$0xff]
    %v732 = vld [vmem:[%s727 + $0x20] sm:$0xff]
    %v733 = vld [vmem:[%s727 + $0x28] sm:$0xff]
    %v734 = vld [vmem:[%s727 + $0x30] sm:$0xff]
    %v735 = vld [vmem:[%s727 + $0x38] sm:$0xff]
    %v736 = vld [vmem:[%s5] sm:$0x7]
    %v738 = vsel %vm39, %v728, 0
    %v741 = vsel %vm39, %v729, 0
    %v744 = vsel %vm39, %v730, 0
    %v747 = vsel %vm39, %v731, 0
    %v750 = vsel %vm39, %v732, 0
    %v753 = vsel %vm39, %v733, 0
    %v756 = vsel %vm39, %v734, 0
    %v759 = vsel %vm39, %v735, 0
    %v762 = vsel %vm46, %v736, 0
    %764 = vmatprep.subr.mxu0 0.0
    %765 = vmatpush1.msra.mxu0 %v762
    %766 = vmatprep.subr.mxu0 0.0
    %767 = vmatpush1.msra.mxu0 0.0
    %768 = vmatprep.subr.mxu0 0.0
    %769 = vmatpush1.msra.mxu0 0.0
    %770 = vmatprep.subr.mxu0 0.0
    %771 = vmatpush1.msra.mxu0 0.0
    %772 = vmatprep.subr.mxu0 0.0
    %773 = vmatpush1.msra.mxu0 0.0
    %774 = vmatprep.subr.mxu0 0.0
    %775 = vmatpush1.msra.mxu0 0.0
    %776 = vmatprep.subr.mxu0 0.0
    %777 = vmatpush1.msra.mxu0 0.0
    %778 = vmatprep.subr.mxu0 0.0
    %779 = vmatpush1.msra.mxu0 0.0
    %780 = vmatprep.subr.mxu0 0.0
    %781 = vmatpush1.msra.mxu0 0.0
    %782 = vmatprep.subr.mxu0 0.0
    %783 = vmatpush1.msra.mxu0 0.0
    %784 = vmatprep.subr.mxu0 0.0
    %785 = vmatpush1.msra.mxu0 0.0
    %786 = vmatprep.subr.mxu0 0.0
    %787 = vmatpush1.msra.mxu0 0.0
    %788 = vmatprep.subr.mxu0 0.0
    %789 = vmatpush1.msra.mxu0 0.0
    %790 = vmatprep.subr.mxu0 0.0
    %791 = vmatpush1.msra.mxu0 0.0
    %792 = vmatprep.subr.mxu0 0.0
    %793 = vmatpush1.msra.mxu0 0.0
    %794 = vmatprep.subr.mxu0 0.0
    %795 = vmatpush1.msra.mxu0 0.0
    %796 = vmatprep.subr.mxu0 0.0
    %797 = vmatpush1.msra.mxu0 0.0
    %798 = vmatprep.subr.mxu0 0.0
    %799 = vmatpush1.msra.mxu0 0.0
    %800 = vmatprep.subr.mxu0 0.0
    %801 = vmatpush1.msra.mxu0 0.0
    %802 = vmatprep.subr.mxu0 0.0
    %803 = vmatpush1.msra.mxu0 0.0
    %804 = vmatprep.subr.mxu0 0.0
    %805 = vmatpush1.msra.mxu0 0.0
    %806 = vmatprep.subr.mxu0 0.0
    %807 = vmatpush1.msra.mxu0 0.0
    %808 = vmatprep.subr.mxu0 0.0
    %809 = vmatpush1.msra.mxu0 0.0
    %810 = vmatprep.subr.mxu0 0.0
    %811 = vmatpush1.msra.mxu0 0.0
    %812 = vmatprep.subr.mxu0 0.0
    %813 = vmatpush1.msra.mxu0 0.0
    %814 = vmatprep.subr.mxu0 0.0
    %815 = vmatpush1.msra.mxu0 0.0
    %816 = vmatprep.subr.mxu0 0.0
    %817 = vmatpush1.msra.mxu0 0.0
    %818 = vmatprep.subr.mxu0 0.0
    %819 = vmatpush1.msra.mxu0 0.0
    %820 = vmatprep.subr.mxu0 0.0
    %821 = vmatpush1.msra.mxu0 0.0
    %822 = vmatprep.subr.mxu0 0.0
    %823 = vmatpush1.msra.mxu0 0.0
    %824 = vmatprep.subr.mxu0 0.0
    %825 = vmatpush1.msra.mxu0 0.0
    %826 = vmatprep.subr.mxu0 0.0
    %827 = vmatpush1.msra.mxu0 0.0
    %828 = vmatprep.mubr.f32.mxu0 0.0
    %829 = vmatmul.mubr.f32.gmra.mrb[0].mxu0 %v738
    %v830 = vpop.f32.mrb[0].mxu0
    %v831 = vadd.f32 0.0, %v830
    %v832 = vpop.f32.mrb[0].mxu0
    %833 = vmatprep.mubr.f32.mxu0 0.0
    %834 = vmatmul.mubr.f32.gmra.mrb[0].mxu0 %v741
    %v835 = vpop.f32.mrb[0].mxu0
    %v836 = vadd.f32 0.0, %v835
    %v837 = vpop.f32.mrb[0].mxu0
    %838 = vmatprep.mubr.f32.mxu0 0.0
    %839 = vmatmul.mubr.f32.gmra.mrb[0].mxu0 %v744
    %v840 = vpop.f32.mrb[0].mxu0
    %v841 = vadd.f32 0.0, %v840
    %v842 = vpop.f32.mrb[0].mxu0
    %843 = vmatprep.mubr.f32.mxu0 0.0
    %844 = vmatmul.mubr.f32.gmra.mrb[0].mxu0 %v747
    %v845 = vpop.f32.mrb[0].mxu0
    %v846 = vadd.f32 0.0, %v845
    %v847 = vpop.f32.mrb[0].mxu0
    %848 = vmatprep.mubr.f32.mxu0 0.0
    %849 = vmatmul.mubr.f32.gmra.mrb[0].mxu0 %v750
    %v850 = vpop.f32.mrb[0].mxu0
    %v851 = vadd.f32 0.0, %v850
    %v852 = vpop.f32.mrb[0].mxu0
    %853 = vmatprep.mubr.f32.mxu0 0.0
    %854 = vmatmul.mubr.f32.gmra.mrb[0].mxu0 %v753
    %v855 = vpop.f32.mrb[0].mxu0
    %v856 = vadd.f32 0.0, %v855
    %v857 = vpop.f32.mrb[0].mxu0
    %858 = vmatprep.mubr.f32.mxu0 0.0
    %859 = vmatmul.mubr.f32.gmra.mrb[0].mxu0 %v756
    %v860 = vpop.f32.mrb[0].mxu0
    %v861 = vadd.f32 0.0, %v860
    %v862 = vpop.f32.mrb[0].mxu0
    %863 = vmatprep.mubr.f32.mxu0 0.0
    %864 = vmatmul.mubr.f32.gmra.mrb[0].mxu0 %v759
    %v865 = vpop.f32.mrb[0].mxu0
    %v866 = vadd.f32 0.0, %v865
    %v867 = vpop.f32.mrb[0].mxu0
    %868 = vdwg.mxu0
    %s869 = scalar_lea.vmem [#allocation2], 64
    %870 = vst.msk [vmem:[%s869] sm:$0xff] %vm298, %v831
    %871 = vst.msk [vmem:[%s869 + $0x8] sm:$0xff] %vm298, %v836
    %872 = vst.msk [vmem:[%s869 + $0x10] sm:$0xff] %vm298, %v841
    %873 = vst.msk [vmem:[%s869 + $0x18] sm:$0xff] %vm298, %v846
    %874 = vst.msk [vmem:[%s869 + $0x20] sm:$0xff] %vm298, %v851
    %875 = vst.msk [vmem:[%s869 + $0x28] sm:$0xff] %vm298, %v856
    %876 = vst.msk [vmem:[%s869 + $0x30] sm:$0xff] %vm298, %v861
    %877 = vst.msk [vmem:[%s869 + $0x38] sm:$0xff] %vm298, %v866
    %s878 = scalar_lea.vmem %s3, 16
    %v879 = vld [vmem:[%s878] sm:$0xff]
    %v880 = vld [vmem:[%s878 + $0x8] sm:$0xff]
    %v881 = vld [vmem:[%s6] sm:$0x7]
    %v883 = vsel %vm39, %v879, 0
    %v886 = vsel %vm39, %v880, 0
    %v889 = vsel %vm46, %v881, 0
    %891 = vmatprep.subr.mxu0 0.0
    %892 = vmatpush1.msra.mxu0 %v889
    %893 = vmatprep.subr.mxu0 0.0
    %894 = vmatpush1.msra.mxu0 0.0
    %895 = vmatprep.subr.mxu0 0.0
    %896 = vmatpush1.msra.mxu0 0.0
    %897 = vmatprep.subr.mxu0 0.0
    %898 = vmatpush1.msra.mxu0 0.0
    %899 = vmatprep.subr.mxu0 0.0
    %900 = vmatpush1.msra.mxu0 0.0
    %901 = vmatprep.subr.mxu0 0.0
    %902 = vmatpush1.msra.mxu0 0.0
    %903 = vmatprep.subr.mxu0 0.0
    %904 = vmatpush1.msra.mxu0 0.0
    %905 = vmatprep.subr.mxu0 0.0
    %906 = vmatpush1.msra.mxu0 0.0
    %907 = vmatprep.subr.mxu0 0.0
    %908 = vmatpush1.msra.mxu0 0.0
    %909 = vmatprep.subr.mxu0 0.0
    %910 = vmatpush1.msra.mxu0 0.0
    %911 = vmatprep.subr.mxu0 0.0
    %912 = vmatpush1.msra.mxu0 0.0
    %913 = vmatprep.subr.mxu0 0.0
    %914 = vmatpush1.msra.mxu0 0.0
    %915 = vmatprep.subr.mxu0 0.0
    %916 = vmatpush1.msra.mxu0 0.0
    %917 = vmatprep.subr.mxu0 0.0
    %918 = vmatpush1.msra.mxu0 0.0
    %919 = vmatprep.subr.mxu0 0.0
    %920 = vmatpush1.msra.mxu0 0.0
    %921 = vmatprep.subr.mxu0 0.0
    %922 = vmatpush1.msra.mxu0 0.0
    %923 = vmatprep.subr.mxu0 0.0
    %924 = vmatpush1.msra.mxu0 0.0
    %925 = vmatprep.subr.mxu0 0.0
    %926 = vmatpush1.msra.mxu0 0.0
    %927 = vmatprep.subr.mxu0 0.0
    %928 = vmatpush1.msra.mxu0 0.0
    %929 = vmatprep.subr.mxu0 0.0
    %930 = vmatpush1.msra.mxu0 0.0
    %931 = vmatprep.subr.mxu0 0.0
    %932 = vmatpush1.msra.mxu0 0.0
    %933 = vmatprep.subr.mxu0 0.0
    %934 = vmatpush1.msra.mxu0 0.0
    %935 = vmatprep.subr.mxu0 0.0
    %936 = vmatpush1.msra.mxu0 0.0
    %937 = vmatprep.subr.mxu0 0.0
    %938 = vmatpush1.msra.mxu0 0.0
    %939 = vmatprep.subr.mxu0 0.0
    %940 = vmatpush1.msra.mxu0 0.0
    %941 = vmatprep.subr.mxu0 0.0
    %942 = vmatpush1.msra.mxu0 0.0
    %943 = vmatprep.subr.mxu0 0.0
    %944 = vmatpush1.msra.mxu0 0.0
    %945 = vmatprep.subr.mxu0 0.0
    %946 = vmatpush1.msra.mxu0 0.0
    %947 = vmatprep.subr.mxu0 0.0
    %948 = vmatpush1.msra.mxu0 0.0
    %949 = vmatprep.subr.mxu0 0.0
    %950 = vmatpush1.msra.mxu0 0.0
    %951 = vmatprep.subr.mxu0 0.0
    %952 = vmatpush1.msra.mxu0 0.0
    %953 = vmatprep.subr.mxu0 0.0
    %954 = vmatpush1.msra.mxu0 0.0
    %955 = vmatprep.mubr.f32.mxu0 0.0
    %956 = vmatmul.mubr.f32.gmra.mrb[0].mxu0 %v883
    %v957 = vpop.f32.mrb[0].mxu0
    %v958 = vadd.f32 0.0, %v957
    %v959 = vpop.f32.mrb[0].mxu0
    %960 = vmatprep.mubr.f32.mxu0 0.0
    %961 = vmatmul.mubr.f32.gmra.mrb[0].mxu0 %v886
    %v962 = vpop.f32.mrb[0].mxu0
    %v963 = vadd.f32 0.0, %v962
    %v964 = vpop.f32.mrb[0].mxu0
    %965 = vdwg.mxu0
    %s966 = scalar_lea.vmem %s10, 16
    %967 = vst.msk [vmem:[%s966] sm:$0xff] %vm298, %v958
    %968 = vst.msk [vmem:[%s966 + $0x8] sm:$0xff] %vm298, %v963
    %s969 = scalar_lea.vmem %s1, 256
    %v970 = vld [vmem:[%s969] sm:$0xff]
    %v971 = vld [vmem:[%s969 + $0x8] sm:$0xff]
    %v972 = vld [vmem:[%s969 + $0x10] sm:$0xff]
    %v973 = vld [vmem:[%s969 + $0x18] sm:$0xff]
    %v974 = vld [vmem:[%s969 + $0x20] sm:$0xff]
    %v975 = vld [vmem:[%s969 + $0x28] sm:$0xff]
    %v976 = vld [vmem:[%s969 + $0x30] sm:$0xff]
    %v977 = vld [vmem:[%s969 + $0x38] sm:$0xff]
    %v978 = vld [vmem:[%s969 + $0x40] sm:$0xff]
    %v979 = vld [vmem:[%s969 + $0x48] sm:$0xff]
    %v980 = vld [vmem:[%s969 + $0x50] sm:$0xff]
    %v981 = vld [vmem:[%s969 + $0x58] sm:$0xff]
    %v982 = vld [vmem:[%s969 + $0x60] sm:$0xff]
    %v983 = vld [vmem:[%s969 + $0x68] sm:$0xff]
    %v984 = vld [vmem:[%s969 + $0x70] sm:$0xff]
    %v985 = vld [vmem:[%s969 + $0x78] sm:$0xff]
    %v986 = vld [vmem:[%s969 + $0x80] sm:$0xff]
    %v987 = vld [vmem:[%s969 + $0x88] sm:$0xff]
    %v988 = vld [vmem:[%s969 + $0x90] sm:$0xff]
    %v989 = vld [vmem:[%s969 + $0x98] sm:$0xff]
    %v990 = vld [vmem:[%s969 + $0xa0] sm:$0xff]
    %v991 = vld [vmem:[%s969 + $0xa8] sm:$0xff]
    %v992 = vld [vmem:[%s969 + $0xb0] sm:$0xff]
    %v993 = vld [vmem:[%s969 + $0xb8] sm:$0xff]
    %v994 = vld [vmem:[%s969 + $0xc0] sm:$0xff]
    %v995 = vld [vmem:[%s969 + $0xc8] sm:$0xff]
    %v996 = vld [vmem:[%s969 + $0xd0] sm:$0xff]
    %v997 = vld [vmem:[%s969 + $0xd8] sm:$0xff]
    %v998 = vld [vmem:[%s969 + $0xe0] sm:$0xff]
    %v999 = vld [vmem:[%s969 + $0xe8] sm:$0xff]
    %v1000 = vld [vmem:[%s969 + $0xf0] sm:$0xff]
    %v1001 = vld [vmem:[%s969 + $0xf8] sm:$0xff]
    %1002 = vmatprep.subr.mxu0 0.0
    %1003 = vmatpush1.msra.mxu0 %v970
    %1004 = vmatprep.subr.mxu0 0.0
    %1005 = vmatpush1.msra.mxu0 %v971
    %1006 = vmatprep.subr.mxu0 0.0
    %1007 = vmatpush1.msra.mxu0 %v972
    %1008 = vmatprep.subr.mxu0 0.0
    %1009 = vmatpush1.msra.mxu0 %v973
    %1010 = vmatprep.subr.mxu0 0.0
    %1011 = vmatpush1.msra.mxu0 %v974
    %1012 = vmatprep.subr.mxu0 0.0
    %1013 = vmatpush1.msra.mxu0 %v975
    %1014 = vmatprep.subr.mxu0 0.0
    %1015 = vmatpush1.msra.mxu0 %v976
    %1016 = vmatprep.subr.mxu0 0.0
    %1017 = vmatpush1.msra.mxu0 %v977
    %1018 = vmatprep.subr.mxu0 0.0
    %1019 = vmatpush1.msra.mxu0 %v978
    %1020 = vmatprep.subr.mxu0 0.0
    %1021 = vmatpush1.msra.mxu0 %v979
    %1022 = vmatprep.subr.mxu0 0.0
    %1023 = vmatpush1.msra.mxu0 %v980
    %1024 = vmatprep.subr.mxu0 0.0
    %1025 = vmatpush1.msra.mxu0 %v981
    %1026 = vmatprep.subr.mxu0 0.0
    %1027 = vmatpush1.msra.mxu0 %v982
    %1028 = vmatprep.subr.mxu0 0.0
    %1029 = vmatpush1.msra.mxu0 %v983
    %1030 = vmatprep.subr.mxu0 0.0
    %1031 = vmatpush1.msra.mxu0 %v984
    %1032 = vmatprep.subr.mxu0 0.0
    %1033 = vmatpush1.msra.mxu0 %v985
    %1034 = vmatprep.subr.mxu0 0.0
    %1035 = vmatpush1.msra.mxu0 %v986
    %1036 = vmatprep.subr.mxu0 0.0
    %1037 = vmatpush1.msra.mxu0 %v987
    %1038 = vmatprep.subr.mxu0 0.0
    %1039 = vmatpush1.msra.mxu0 %v988
    %1040 = vmatprep.subr.mxu0 0.0
    %1041 = vmatpush1.msra.mxu0 %v989
    %1042 = vmatprep.subr.mxu0 0.0
    %1043 = vmatpush1.msra.mxu0 %v990
    %1044 = vmatprep.subr.mxu0 0.0
    %1045 = vmatpush1.msra.mxu0 %v991
    %1046 = vmatprep.subr.mxu0 0.0
    %1047 = vmatpush1.msra.mxu0 %v992
    %1048 = vmatprep.subr.mxu0 0.0
    %1049 = vmatpush1.msra.mxu0 %v993
    %1050 = vmatprep.subr.mxu0 0.0
    %1051 = vmatpush1.msra.mxu0 %v994
    %1052 = vmatprep.subr.mxu0 0.0
    %1053 = vmatpush1.msra.mxu0 %v995
    %1054 = vmatprep.subr.mxu0 0.0
    %1055 = vmatpush1.msra.mxu0 %v996
    %1056 = vmatprep.subr.mxu0 0.0
    %1057 = vmatpush1.msra.mxu0 %v997
    %1058 = vmatprep.subr.mxu0 0.0
    %1059 = vmatpush1.msra.mxu0 %v998
    %1060 = vmatprep.subr.mxu0 0.0
    %1061 = vmatpush1.msra.mxu0 %v999
    %1062 = vmatprep.subr.mxu0 0.0
    %1063 = vmatpush1.msra.mxu0 %v1000
    %1064 = vmatprep.subr.mxu0 0.0
    %1065 = vmatpush1.msra.mxu0 %v1001
    %1066 = vmatprep.mubr.f32.mxu0 %v719
    %1067 = vmatmul.mubr.f32.gmra.mrb[0].mxu0 %v718
    %v1068 = vpop.f32.mrb[0].mxu0
    %v1069 = vadd.f32 0.0, %v1068
    %v1070 = vpop.f32.mrb[0].mxu0
    %1071 = vmatprep.mubr.f32.mxu0 %v721
    %1072 = vmatmul.mubr.f32.gmra.mrb[0].mxu0 %v720
    %v1073 = vpop.f32.mrb[0].mxu0
    %v1074 = vadd.f32 0.0, %v1073
    %v1075 = vpop.f32.mrb[0].mxu0
    %1076 = vdwg.mxu0
    %v1077 = vadd.f32 %v718, %v719
    %1078 = vadd.xlane.f32.xlu0 %v1077
    %v1079 = vpop.xlane.xlu0 %1078
    %v1080 = vsel %vm128, %v720, 0.0
    %v1081 = vsel %vm128, %v721, 0.0
    %v1082 = vadd.f32 %v1080, %v1081
    %1083 = vadd.xlane.f32.xlu0 %v1082
    %v1084 = vpop.xlane.xlu0 %1083
    %v1085 = vadd.f32 %v1079, 1e-06
    %v1086 = vadd.f32 %v1084, 1e-06
    %v1087 = vrcp.pop %v1085
    %v1088 = vmul.f32 %v1069, %v1087
    %v1089 = vrcp.pop %v1086
    %v1090 = vmul.f32 %v1074, %v1089
    %v1091 = vld [vmem:[%s7] sm:$0x7]
    %v1093 = vsel %vm39, %v1088, 0
    %v1096 = vsel %vm39, %v1090, 0
    %v1099 = vsel %vm46, %v1091, 0
    %1101 = vmatprep.subr.mxu0 0.0
    %1102 = vmatpush1.msra.mxu0 %v1099
    %1103 = vmatprep.subr.mxu0 0.0
    %1104 = vmatpush1.msra.mxu0 0.0
    %1105 = vmatprep.subr.mxu0 0.0
    %1106 = vmatpush1.msra.mxu0 0.0
    %1107 = vmatprep.subr.mxu0 0.0
    %1108 = vmatpush1.msra.mxu0 0.0
    %1109 = vmatprep.subr.mxu0 0.0
    %1110 = vmatpush1.msra.mxu0 0.0
    %1111 = vmatprep.subr.mxu0 0.0
    %1112 = vmatpush1.msra.mxu0 0.0
    %1113 = vmatprep.subr.mxu0 0.0
    %1114 = vmatpush1.msra.mxu0 0.0
    %1115 = vmatprep.subr.mxu0 0.0
    %1116 = vmatpush1.msra.mxu0 0.0
    %1117 = vmatprep.subr.mxu0 0.0
    %1118 = vmatpush1.msra.mxu0 0.0
    %1119 = vmatprep.subr.mxu0 0.0
    %1120 = vmatpush1.msra.mxu0 0.0
    %1121 = vmatprep.subr.mxu0 0.0
    %1122 = vmatpush1.msra.mxu0 0.0
    %1123 = vmatprep.subr.mxu0 0.0
    %1124 = vmatpush1.msra.mxu0 0.0
    %1125 = vmatprep.subr.mxu0 0.0
    %1126 = vmatpush1.msra.mxu0 0.0
    %1127 = vmatprep.subr.mxu0 0.0
    %1128 = vmatpush1.msra.mxu0 0.0
    %1129 = vmatprep.subr.mxu0 0.0
    %1130 = vmatpush1.msra.mxu0 0.0
    %1131 = vmatprep.subr.mxu0 0.0
    %1132 = vmatpush1.msra.mxu0 0.0
    %1133 = vmatprep.subr.mxu0 0.0
    %1134 = vmatpush1.msra.mxu0 0.0
    %1135 = vmatprep.subr.mxu0 0.0
    %1136 = vmatpush1.msra.mxu0 0.0
    %1137 = vmatprep.subr.mxu0 0.0
    %1138 = vmatpush1.msra.mxu0 0.0
    %1139 = vmatprep.subr.mxu0 0.0
    %1140 = vmatpush1.msra.mxu0 0.0
    %1141 = vmatprep.subr.mxu0 0.0
    %1142 = vmatpush1.msra.mxu0 0.0
    %1143 = vmatprep.subr.mxu0 0.0
    %1144 = vmatpush1.msra.mxu0 0.0
    %1145 = vmatprep.subr.mxu0 0.0
    %1146 = vmatpush1.msra.mxu0 0.0
    %1147 = vmatprep.subr.mxu0 0.0
    %1148 = vmatpush1.msra.mxu0 0.0
    %1149 = vmatprep.subr.mxu0 0.0
    %1150 = vmatpush1.msra.mxu0 0.0
    %1151 = vmatprep.subr.mxu0 0.0
    %1152 = vmatpush1.msra.mxu0 0.0
    %1153 = vmatprep.subr.mxu0 0.0
    %1154 = vmatpush1.msra.mxu0 0.0
    %1155 = vmatprep.subr.mxu0 0.0
    %1156 = vmatpush1.msra.mxu0 0.0
    %1157 = vmatprep.subr.mxu0 0.0
    %1158 = vmatpush1.msra.mxu0 0.0
    %1159 = vmatprep.subr.mxu0 0.0
    %1160 = vmatpush1.msra.mxu0 0.0
    %1161 = vmatprep.subr.mxu0 0.0
    %1162 = vmatpush1.msra.mxu0 0.0
    %1163 = vmatprep.subr.mxu0 0.0
    %1164 = vmatpush1.msra.mxu0 0.0
    %1165 = vmatprep.mubr.f32.mxu0 0.0
    %1166 = vmatmul.mubr.f32.gmra.mrb[0].mxu0 %v1093
    %v1167 = vpop.f32.mrb[0].mxu0
    %v1168 = vadd.f32 0.0, %v1167
    %v1169 = vpop.f32.mrb[0].mxu0
    %1170 = vmatprep.mubr.f32.mxu0 0.0
    %1171 = vmatmul.mubr.f32.gmra.mrb[0].mxu0 %v1096
    %v1172 = vpop.f32.mrb[0].mxu0
    %v1173 = vadd.f32 0.0, %v1172
    %v1174 = vpop.f32.mrb[0].mxu0
    %1175 = vdwg.mxu0
    %s1176 = scalar_lea.vmem %s11, 16
    %1177 = vst.msk [vmem:[%s1176] sm:$0xff] %vm298, %v1168
    %1178 = vst.msk [vmem:[%s1176 + $0x8] sm:$0x1] %vm603, %v1173
    // Predicated region
    $region34: #{forward.5} parent=1 // pred_check
      _
    $region35: #{forward.5} parent=1 // pred_check_branch
      %1180 = sbr.rel (0) target = $region37
    $region36: #{forward.5} parent=1 // pred_region
      _
    $region37: #{forward.5} parent=1 // pred_fallthru
      _
    // Predicated region
    $region38: #{forward.5} parent=1 // pred_check
      _
    $region39: #{forward.5} parent=1 // pred_check_branch
      %1182 = sbr.rel (0) target = $region41
    $region40: #{forward.5} parent=1 // pred_region
      %s1184 = ssub.s32 2048, 2048
      %1185 = vsyncadd [#allocation3], %s1184
      %s1186 = sshll.u32 [#allocation2], 4
      %s1187 = int_to_ptr.vmem [resolvable:$true] %s1186
      %1192 = dma.vmem_to_hbm [thread:$0]  %s1187, 2048, %s9, [#allocation3], 128, 128, 8
    $region41: #{forward.5} parent=1 // pred_fallthru
      _
    // Predicated region
    $region42: #{forward.5} parent=1 // pred_check
      _
    $region43: #{forward.5} parent=1 // pred_check_branch
      %1194 = sbr.rel (0) target = $region45
    $region44: #{forward.5} parent=1 // pred_region
      _
    $region45: #{forward.5} parent=1 // pred_fallthru
      _
    // Predicated region
    $region46: #{forward.5} parent=1 // pred_check
      _
    $region47: #{forward.5} parent=1 // pred_check_branch
      %1196 = sbr.rel (0) target = $region49
    $region48: #{forward.5} parent=1 // pred_region
      _
    $region49: #{forward.5} parent=1 // pred_fallthru
      _
    // Predicated region
    $region50: #{forward.5} parent=1 // pred_check
      _
    $region51: #{forward.5} parent=1 // pred_check_branch
      %1198 = sbr.rel (0) target = $region53
    $region52: #{forward.5} parent=1 // pred_region
      _
    $region53: #{forward.5} parent=1 // pred_fallthru
      _
    // Predicated region
    $region54: #{forward.5} parent=1 // pred_check
      _
    $region55: #{forward.5} parent=1 // pred_check_branch
      %1200 = sbr.rel (0) target = $region57
    $region56: #{forward.5} parent=1 // pred_region
      %1201 = dma.done [#allocation3], 2048
    $region57: #{forward.5} parent=1 // pred_fallthru
      _
    // Predicated region
    $region58: #{forward.5} parent=1 // pred_check
      _
    $region59: #{forward.5} parent=1 // pred_check_branch
      %1203 = sbr.rel (0) target = $region61
    $region60: #{forward.5} parent=1 // pred_region
      _
    $region61: #{forward.5} parent=1 // pred_fallthru
      _
    // Predicated region
    $region62: #{forward.5} parent=1 // pred_check
      _
    $region63: #{forward.5} parent=1 // pred_check_branch
      %1205 = sbr.rel (0) target = $region65
    $region64: #{forward.5} parent=1 // pred_region
      _
    $region65: #{forward.5} parent=1 // pred_fallthru
      _
    %1206 = vsyncpa [#allocation3], 1

// kernel: forward.4
$region0: #{forward.4}
  #allocation0 [shape = 'u32[]', space=smem, size = 0x4, offset = 0x4, fixed_abs, tag = 'smem constant byte address 0x4 - core index']
  #allocation1 [shape = 'u32[144,128]{1,0:T(1,128)}', space=vmem, size = 0x12000, scoped, tag = 'internal scratch']
  %s0 = inlined_call_operand.vmem [shape: f32[34,48], index: 0, kind: input, shape index: {}]
  %s1 = inlined_call_operand.vmem [shape: f32[48,32], index: 1, kind: input, shape index: {}]
  %s2 = inlined_call_operand.vmem [shape: f32[12,32,32], index: 2, kind: input, shape index: {}]
  %s3 = inlined_call_operand.vmem [shape: f32[12,34,32], index: 3, kind: output, shape index: {}]
  %s4 = sld [smem:[#allocation0]]
  $region22: #{forward.4} parent=0
    _
  %s6 = ssub.s32 1, %s4
  %s7 = scalar_select 0, %s6, %s4
  // Predicated region
  $region2: #{forward.4} parent=0 // pred_check
    _
  $region3: #{forward.4} parent=0 // pred_check_branch
    %9 = sbr.rel (0) target = $region5
  $region4: #{forward.4} parent=0 // pred_region
    _
  $region5: #{forward.4} parent=0 // pred_fallthru
    _
  // Predicated region
  $region6: #{forward.4} parent=0 // pred_check
    _
  $region7: #{forward.4} parent=0 // pred_check_branch
    %11 = sbr.rel (0) target = $region9
  $region8: #{forward.4} parent=0 // pred_region
    _
  $region9: #{forward.4} parent=0 // pred_fallthru
    _
  // Predicated region
  $region10: #{forward.4} parent=0 // pred_check
    _
  $region11: #{forward.4} parent=0 // pred_check_branch
    %13 = sbr.rel (0) target = $region13
  $region12: #{forward.4} parent=0 // pred_region
    _
  $region13: #{forward.4} parent=0 // pred_fallthru
    _
  %v14 = vld [vmem:[%s0] sm:$0xff]
  %v15 = vld [vmem:[%s0 + $0x8] sm:$0xff]
  %v16 = vld [vmem:[%s0 + $0x10] sm:$0xff]
  %v17 = vld [vmem:[%s0 + $0x18] sm:$0xff]
  %v18 = vld [vmem:[%s0 + $0x20] sm:$0x3]
  %v19 = vld [vmem:[%s1] sm:$0xff]
  %v20 = vld [vmem:[%s1 + $0x8] sm:$0xff]
  %v21 = vld [vmem:[%s1 + $0x10] sm:$0xff]
  %v22 = vld [vmem:[%s1 + $0x18] sm:$0xff]
  %v23 = vld [vmem:[%s1 + $0x20] sm:$0xff]
  %v24 = vld [vmem:[%s1 + $0x28] sm:$0xff]
  %vm25 = vcmask 392192
  %v27 = vsel %vm25, %v14, 0
  %v30 = vsel %vm25, %v15, 0
  %v33 = vsel %vm25, %v16, 0
  %v36 = vsel %vm25, %v17, 0
  %v39 = vsel %vm25, %v18, 0
  %41 = vmatprep.subr.mxu0 0.0
  %42 = vmatpush1.msra.mxu0 %v19
  %43 = vmatprep.subr.mxu0 0.0
  %44 = vmatpush1.msra.mxu0 %v20
  %45 = vmatprep.subr.mxu0 0.0
  %46 = vmatpush1.msra.mxu0 %v21
  %47 = vmatprep.subr.mxu0 0.0
  %48 = vmatpush1.msra.mxu0 %v22
  %49 = vmatprep.subr.mxu0 0.0
  %50 = vmatpush1.msra.mxu0 %v23
  %51 = vmatprep.subr.mxu0 0.0
  %52 = vmatpush1.msra.mxu0 %v24
  %53 = vmatprep.subr.mxu0 0.0
  %54 = vmatpush1.msra.mxu0 0.0
  %55 = vmatprep.subr.mxu0 0.0
  %56 = vmatpush1.msra.mxu0 0.0
  %57 = vmatprep.subr.mxu0 0.0
  %58 = vmatpush1.msra.mxu0 0.0
  %59 = vmatprep.subr.mxu0 0.0
  %60 = vmatpush1.msra.mxu0 0.0
  %61 = vmatprep.subr.mxu0 0.0
  %62 = vmatpush1.msra.mxu0 0.0
  %63 = vmatprep.subr.mxu0 0.0
  %64 = vmatpush1.msra.mxu0 0.0
  %65 = vmatprep.subr.mxu0 0.0
  %66 = vmatpush1.msra.mxu0 0.0
  %67 = vmatprep.subr.mxu0 0.0
  %68 = vmatpush1.msra.mxu0 0.0
  %69 = vmatprep.subr.mxu0 0.0
  %70 = vmatpush1.msra.mxu0 0.0
  %71 = vmatprep.subr.mxu0 0.0
  %72 = vmatpush1.msra.mxu0 0.0
  %73 = vmatprep.subr.mxu0 0.0
  %74 = vmatpush1.msra.mxu0 0.0
  %75 = vmatprep.subr.mxu0 0.0
  %76 = vmatpush1.msra.mxu0 0.0
  %77 = vmatprep.subr.mxu0 0.0
  %78 = vmatpush1.msra.mxu0 0.0
  %79 = vmatprep.subr.mxu0 0.0
  %80 = vmatpush1.msra.mxu0 0.0
  %81 = vmatprep.subr.mxu0 0.0
  %82 = vmatpush1.msra.mxu0 0.0
  %83 = vmatprep.subr.mxu0 0.0
  %84 = vmatpush1.msra.mxu0 0.0
  %85 = vmatprep.subr.mxu0 0.0
  %86 = vmatpush1.msra.mxu0 0.0
  %87 = vmatprep.subr.mxu0 0.0
  %88 = vmatpush1.msra.mxu0 0.0
  %89 = vmatprep.subr.mxu0 0.0
  %90 = vmatpush1.msra.mxu0 0.0
  %91 = vmatprep.subr.mxu0 0.0
  %92 = vmatpush1.msra.mxu0 0.0
  %93 = vmatprep.subr.mxu0 0.0
  %94 = vmatpush1.msra.mxu0 0.0
  %95 = vmatprep.subr.mxu0 0.0
  %96 = vmatpush1.msra.mxu0 0.0
  %97 = vmatprep.subr.mxu0 0.0
  %98 = vmatpush1.msra.mxu0 0.0
  %99 = vmatprep.subr.mxu0 0.0
  %100 = vmatpush1.msra.mxu0 0.0
  %101 = vmatprep.subr.mxu0 0.0
  %102 = vmatpush1.msra.mxu0 0.0
  %103 = vmatprep.subr.mxu0 0.0
  %104 = vmatpush1.msra.mxu0 0.0
  %105 = vmatprep.mubr.f32.mxu0 0.0
  %106 = vmatmul.mubr.f32.gmra.mrb[0].mxu0 %v27
  %v107 = vpop.f32.mrb[0].mxu0
  %v108 = vadd.f32 0.0, %v107
  %v109 = vpop.f32.mrb[0].mxu0
  %110 = vmatprep.mubr.f32.mxu0 0.0
  %111 = vmatmul.mubr.f32.gmra.mrb[0].mxu0 %v30
  %v112 = vpop.f32.mrb[0].mxu0
  %v113 = vadd.f32 0.0, %v112
  %v114 = vpop.f32.mrb[0].mxu0
  %115 = vmatprep.mubr.f32.mxu0 0.0
  %116 = vmatmul.mubr.f32.gmra.mrb[0].mxu0 %v33
  %v117 = vpop.f32.mrb[0].mxu0
  %v118 = vadd.f32 0.0, %v117
  %v119 = vpop.f32.mrb[0].mxu0
  %120 = vmatprep.mubr.f32.mxu0 0.0
  %121 = vmatmul.mubr.f32.gmra.mrb[0].mxu0 %v36
  %v122 = vpop.f32.mrb[0].mxu0
  %v123 = vadd.f32 0.0, %v122
  %v124 = vpop.f32.mrb[0].mxu0
  %125 = vmatprep.mubr.f32.mxu0 0.0
  %126 = vmatmul.mubr.f32.gmra.mrb[0].mxu0 %v39
  %v127 = vpop.f32.mrb[0].mxu0
  %v128 = vadd.f32 0.0, %v127
  %v129 = vpop.f32.mrb[0].mxu0
  %130 = vdwg.mxu0
  %v131 = vld [vmem:[%s2] sm:$0xff]
  %v132 = vld [vmem:[%s2 + $0x8] sm:$0xff]
  %v133 = vld [vmem:[%s2 + $0x10] sm:$0xff]
  %v134 = vld [vmem:[%s2 + $0x18] sm:$0xff]
  %vm135 = vcmask 261120
  %v137 = vsel %vm135, %v108, 0
  %v140 = vsel %vm135, %v113, 0
  %v143 = vsel %vm135, %v118, 0
  %v146 = vsel %vm135, %v123, 0
  %v149 = vsel %vm135, %v128, 0
  %151 = vmatprep.subr.mxu0 0.0
  %152 = vmatpush1.msra.mxu0 %v131
  %153 = vmatprep.subr.mxu0 0.0
  %154 = vmatpush1.msra.mxu0 %v132
  %155 = vmatprep.subr.mxu0 0.0
  %156 = vmatpush1.msra.mxu0 %v133
  %157 = vmatprep.subr.mxu0 0.0
  %158 = vmatpush1.msra.mxu0 %v134
  %159 = vmatprep.subr.mxu0 0.0
  %160 = vmatpush1.msra.mxu0 0.0
  %161 = vmatprep.subr.mxu0 0.0
  %162 = vmatpush1.msra.mxu0 0.0
  %163 = vmatprep.subr.mxu0 0.0
  %164 = vmatpush1.msra.mxu0 0.0
  %165 = vmatprep.subr.mxu0 0.0
  %166 = vmatpush1.msra.mxu0 0.0
  %167 = vmatprep.subr.mxu0 0.0
  %168 = vmatpush1.msra.mxu0 0.0
  %169 = vmatprep.subr.mxu0 0.0
  %170 = vmatpush1.msra.mxu0 0.0
  %171 = vmatprep.subr.mxu0 0.0
  %172 = vmatpush1.msra.mxu0 0.0
  %173 = vmatprep.subr.mxu0 0.0
  %174 = vmatpush1.msra.mxu0 0.0
  %175 = vmatprep.subr.mxu0 0.0
  %176 = vmatpush1.msra.mxu0 0.0
  %177 = vmatprep.subr.mxu0 0.0
  %178 = vmatpush1.msra.mxu0 0.0
  %179 = vmatprep.subr.mxu0 0.0
  %180 = vmatpush1.msra.mxu0 0.0
  %181 = vmatprep.subr.mxu0 0.0
  %182 = vmatpush1.msra.mxu0 0.0
  %183 = vmatprep.subr.mxu0 0.0
  %184 = vmatpush1.msra.mxu0 0.0
  %185 = vmatprep.subr.mxu0 0.0
  %186 = vmatpush1.msra.mxu0 0.0
  %187 = vmatprep.subr.mxu0 0.0
  %188 = vmatpush1.msra.mxu0 0.0
  %189 = vmatprep.subr.mxu0 0.0
  %190 = vmatpush1.msra.mxu0 0.0
  %191 = vmatprep.subr.mxu0 0.0
  %192 = vmatpush1.msra.mxu0 0.0
  %193 = vmatprep.subr.mxu0 0.0
  %194 = vmatpush1.msra.mxu0 0.0
  %195 = vmatprep.subr.mxu0 0.0
  %196 = vmatpush1.msra.mxu0 0.0
  %197 = vmatprep.subr.mxu0 0.0
  %198 = vmatpush1.msra.mxu0 0.0
  %199 = vmatprep.subr.mxu0 0.0
  %200 = vmatpush1.msra.mxu0 0.0
  %201 = vmatprep.subr.mxu0 0.0
  %202 = vmatpush1.msra.mxu0 0.0
  %203 = vmatprep.subr.mxu0 0.0
  %204 = vmatpush1.msra.mxu0 0.0
  %205 = vmatprep.subr.mxu0 0.0
  %206 = vmatpush1.msra.mxu0 0.0
  %207 = vmatprep.subr.mxu0 0.0
  %208 = vmatpush1.msra.mxu0 0.0
  %209 = vmatprep.subr.mxu0 0.0
  %210 = vmatpush1.msra.mxu0 0.0
  %211 = vmatprep.subr.mxu0 0.0
  %212 = vmatpush1.msra.mxu0 0.0
  %213 = vmatprep.subr.mxu0 0.0
  %214 = vmatpush1.msra.mxu0 0.0
  %215 = vmatprep.mubr.f32.mxu0 0.0
  %216 = vmatmul.mubr.f32.gmra.mrb[0].mxu0 %v137
  %v217 = vpop.f32.mrb[0].mxu0
  %v218 = vadd.f32 0.0, %v217
  %v219 = vpop.f32.mrb[0].mxu0
  %220 = vmatprep.mubr.f32.mxu0 0.0
  %221 = vmatmul.mubr.f32.gmra.mrb[0].mxu0 %v140
  %v222 = vpop.f32.mrb[0].mxu0
  %v223 = vadd.f32 0.0, %v222
  %v224 = vpop.f32.mrb[0].mxu0
  %225 = vmatprep.mubr.f32.mxu0 0.0
  %226 = vmatmul.mubr.f32.gmra.mrb[0].mxu0 %v143
  %v227 = vpop.f32.mrb[0].mxu0
  %v228 = vadd.f32 0.0, %v227
  %v229 = vpop.f32.mrb[0].mxu0
  %230 = vmatprep.mubr.f32.mxu0 0.0
  %231 = vmatmul.mubr.f32.gmra.mrb[0].mxu0 %v146
  %v232 = vpop.f32.mrb[0].mxu0
  %v233 = vadd.f32 0.0, %v232
  %v234 = vpop.f32.mrb[0].mxu0
  %235 = vmatprep.mubr.f32.mxu0 0.0
  %236 = vmatmul.mubr.f32.gmra.mrb[0].mxu0 %v149
  %v237 = vpop.f32.mrb[0].mxu0
  %v238 = vadd.f32 0.0, %v237
  %v239 = vpop.f32.mrb[0].mxu0
  %240 = vdwg.mxu0
  %v241 = vtanh.pop %v218
  %v242 = vtanh.pop %v223
  %v243 = vtanh.pop %v228
  %v244 = vtanh.pop %v233
  %v245 = vtanh.pop %v238
  %v246 = vadd.f32 %v108, %v241
  %v247 = vadd.f32 %v113, %v242
  %v248 = vadd.f32 %v118, %v243
  %v249 = vadd.f32 %v123, %v244
  %v250 = vadd.f32 %v128, %v245
  %251 = vst.msk [vmem:[%s3] sm:$0xff] %vm135, %v246
  %252 = vst.msk [vmem:[%s3 + $0x8] sm:$0xff] %vm135, %v247
  %253 = vst.msk [vmem:[%s3 + $0x10] sm:$0xff] %vm135, %v248
  %254 = vst.msk [vmem:[%s3 + $0x18] sm:$0xff] %vm135, %v249
  %vm255 = vcmask 254976
  %256 = vst.msk [vmem:[%s3 + $0x20] sm:$0x3] %vm255, %v250
  %s257 = scalar_lea.vmem %s2, 32
  %v258 = vld [vmem:[%s257] sm:$0xff]
  %v259 = vld [vmem:[%s257 + $0x8] sm:$0xff]
  %v260 = vld [vmem:[%s257 + $0x10] sm:$0xff]
  %v261 = vld [vmem:[%s257 + $0x18] sm:$0xff]
  %v263 = vsel %vm135, %v246, 0
  %v266 = vsel %vm135, %v247, 0
  %v269 = vsel %vm135, %v248, 0
  %v272 = vsel %vm135, %v249, 0
  %v275 = vsel %vm135, %v250, 0
  %277 = vmatprep.subr.mxu0 0.0
  %278 = vmatpush1.msra.mxu0 %v258
  %279 = vmatprep.subr.mxu0 0.0
  %280 = vmatpush1.msra.mxu0 %v259
  %281 = vmatprep.subr.mxu0 0.0
  %282 = vmatpush1.msra.mxu0 %v260
  %283 = vmatprep.subr.mxu0 0.0
  %284 = vmatpush1.msra.mxu0 %v261
  %285 = vmatprep.subr.mxu0 0.0
  %286 = vmatpush1.msra.mxu0 0.0
  %287 = vmatprep.subr.mxu0 0.0
  %288 = vmatpush1.msra.mxu0 0.0
  %289 = vmatprep.subr.mxu0 0.0
  %290 = vmatpush1.msra.mxu0 0.0
  %291 = vmatprep.subr.mxu0 0.0
  %292 = vmatpush1.msra.mxu0 0.0
  %293 = vmatprep.subr.mxu0 0.0
  %294 = vmatpush1.msra.mxu0 0.0
  %295 = vmatprep.subr.mxu0 0.0
  %296 = vmatpush1.msra.mxu0 0.0
  %297 = vmatprep.subr.mxu0 0.0
  %298 = vmatpush1.msra.mxu0 0.0
  %299 = vmatprep.subr.mxu0 0.0
  %300 = vmatpush1.msra.mxu0 0.0
  %301 = vmatprep.subr.mxu0 0.0
  %302 = vmatpush1.msra.mxu0 0.0
  %303 = vmatprep.subr.mxu0 0.0
  %304 = vmatpush1.msra.mxu0 0.0
  %305 = vmatprep.subr.mxu0 0.0
  %306 = vmatpush1.msra.mxu0 0.0
  %307 = vmatprep.subr.mxu0 0.0
  %308 = vmatpush1.msra.mxu0 0.0
  %309 = vmatprep.subr.mxu0 0.0
  %310 = vmatpush1.msra.mxu0 0.0
  %311 = vmatprep.subr.mxu0 0.0
  %312 = vmatpush1.msra.mxu0 0.0
  %313 = vmatprep.subr.mxu0 0.0
  %314 = vmatpush1.msra.mxu0 0.0
  %315 = vmatprep.subr.mxu0 0.0
  %316 = vmatpush1.msra.mxu0 0.0
  %317 = vmatprep.subr.mxu0 0.0
  %318 = vmatpush1.msra.mxu0 0.0
  %319 = vmatprep.subr.mxu0 0.0
  %320 = vmatpush1.msra.mxu0 0.0
  %321 = vmatprep.subr.mxu0 0.0
  %322 = vmatpush1.msra.mxu0 0.0
  %323 = vmatprep.subr.mxu0 0.0
  %324 = vmatpush1.msra.mxu0 0.0
  %325 = vmatprep.subr.mxu0 0.0
  %326 = vmatpush1.msra.mxu0 0.0
  %327 = vmatprep.subr.mxu0 0.0
  %328 = vmatpush1.msra.mxu0 0.0
  %329 = vmatprep.subr.mxu0 0.0
  %330 = vmatpush1.msra.mxu0 0.0
  %331 = vmatprep.subr.mxu0 0.0
  %332 = vmatpush1.msra.mxu0 0.0
  %333 = vmatprep.subr.mxu0 0.0
  %334 = vmatpush1.msra.mxu0 0.0
  %335 = vmatprep.subr.mxu0 0.0
  %336 = vmatpush1.msra.mxu0 0.0
  %337 = vmatprep.subr.mxu0 0.0
  %338 = vmatpush1.msra.mxu0 0.0
  %339 = vmatprep.subr.mxu0 0.0
  %340 = vmatpush1.msra.mxu0 0.0
  %341 = vmatprep.mubr.f32.mxu0 0.0
  %342 = vmatmul.mubr.f32.gmra.mrb[0].mxu0 %v263
  %v343 = vpop.f32.mrb[0].mxu0
  %v344 = vadd.f32 0.0, %v343
  %v345 = vpop.f32.mrb[0].mxu0
  %346 = vmatprep.mubr.f32.mxu0 0.0
  %347 = vmatmul.mubr.f32.gmra.mrb[0].mxu0 %v266
  %v348 = vpop.f32.mrb[0].mxu0
  %v349 = vadd.f32 0.0, %v348
  %v350 = vpop.f32.mrb[0].mxu0
  %351 = vmatprep.mubr.f32.mxu0 0.0
  %352 = vmatmul.mubr.f32.gmra.mrb[0].mxu0 %v269
  %v353 = vpop.f32.mrb[0].mxu0
  %v354 = vadd.f32 0.0, %v353
  %v355 = vpop.f32.mrb[0].mxu0
  %356 = vmatprep.mubr.f32.mxu0 0.0
  %357 = vmatmul.mubr.f32.gmra.mrb[0].mxu0 %v272
  %v358 = vpop.f32.mrb[0].mxu0
  %v359 = vadd.f32 0.0, %v358
  %v360 = vpop.f32.mrb[0].mxu0
  %361 = vmatprep.mubr.f32.mxu0 0.0
  %362 = vmatmul.mubr.f32.gmra.mrb[0].mxu0 %v275
  %v363 = vpop.f32.mrb[0].mxu0
  %v364 = vadd.f32 0.0, %v363
  %v365 = vpop.f32.mrb[0].mxu0
  %366 = vdwg.mxu0
  %v367 = vtanh.pop %v344
  %v368 = vtanh.pop %v349
  %v369 = vtanh.pop %v354
  %v370 = vtanh.pop %v359
  %v371 = vtanh.pop %v364
  %v372 = vadd.f32 %v246, %v367
  %v373 = vadd.f32 %v247, %v368
  %v374 = vadd.f32 %v248, %v369
  %v375 = vadd.f32 %v249, %v370
  %v376 = vadd.f32 %v250, %v371
  %s377 = scalar_lea.vmem %s3, 40
  %378 = vst.msk [vmem:[%s377] sm:$0xff] %vm135, %v372
  %379 = vst.msk [vmem:[%s377 + $0x8] sm:$0xff] %vm135, %v373
  %380 = vst.msk [vmem:[%s377 + $0x10] sm:$0xff] %vm135, %v374
  %381 = vst.msk [vmem:[%s377 + $0x18] sm:$0xff] %vm135, %v375
  %382 = vst.msk [vmem:[%s377 + $0x20] sm:$0x3] %vm255, %v376
  %s383 = scalar_lea.vmem %s2, 64
  %v384 = vld [vmem:[%s383] sm:$0xff]
  %v385 = vld [vmem:[%s383 + $0x8] sm:$0xff]
  %v386 = vld [vmem:[%s383 + $0x10] sm:$0xff]
  %v387 = vld [vmem:[%s383 + $0x18] sm:$0xff]
  %v389 = vsel %vm135, %v372, 0
  %v392 = vsel %vm135, %v373, 0
  %v395 = vsel %vm135, %v374, 0
  %v398 = vsel %vm135, %v375, 0
  %v401 = vsel %vm135, %v376, 0
  %403 = vmatprep.subr.mxu0 0.0
  %404 = vmatpush1.msra.mxu0 %v384
  %405 = vmatprep.subr.mxu0 0.0
  %406 = vmatpush1.msra.mxu0 %v385
  %407 = vmatprep.subr.mxu0 0.0
  %408 = vmatpush1.msra.mxu0 %v386
  %409 = vmatprep.subr.mxu0 0.0
  %410 = vmatpush1.msra.mxu0 %v387
  %411 = vmatprep.subr.mxu0 0.0
  %412 = vmatpush1.msra.mxu0 0.0
  %413 = vmatprep.subr.mxu0 0.0
  %414 = vmatpush1.msra.mxu0 0.0
  %415 = vmatprep.subr.mxu0 0.0
  %416 = vmatpush1.msra.mxu0 0.0
  %417 = vmatprep.subr.mxu0 0.0
  %418 = vmatpush1.msra.mxu0 0.0
  %419 = vmatprep.subr.mxu0 0.0
  %420 = vmatpush1.msra.mxu0 0.0
  %421 = vmatprep.subr.mxu0 0.0
  %422 = vmatpush1.msra.mxu0 0.0
  %423 = vmatprep.subr.mxu0 0.0
  %424 = vmatpush1.msra.mxu0 0.0
  %425 = vmatprep.subr.mxu0 0.0
  %426 = vmatpush1.msra.mxu0 0.0
  %427 = vmatprep.subr.mxu0 0.0
  %428 = vmatpush1.msra.mxu0 0.0
  %429 = vmatprep.subr.mxu0 0.0
  %430 = vmatpush1.msra.mxu0 0.0
  %431 = vmatprep.subr.mxu0 0.0
  %432 = vmatpush1.msra.mxu0 0.0
  %433 = vmatprep.subr.mxu0 0.0
  %434 = vmatpush1.msra.mxu0 0.0
  %435 = vmatprep.subr.mxu0 0.0
  %436 = vmatpush1.msra.mxu0 0.0
  %437 = vmatprep.subr.mxu0 0.0
  %438 = vmatpush1.msra.mxu0 0.0
  %439 = vmatprep.subr.mxu0 0.0
  %440 = vmatpush1.msra.mxu0 0.0
  %441 = vmatprep.subr.mxu0 0.0
  %442 = vmatpush1.msra.mxu0 0.0
  %443 = vmatprep.subr.mxu0 0.0
  %444 = vmatpush1.msra.mxu0 0.0
  %445 = vmatprep.subr.mxu0 0.0
  %446 = vmatpush1.msra.mxu0 0.0
  %447 = vmatprep.subr.mxu0 0.0
  %448 = vmatpush1.msra.mxu0 0.0
  %449 = vmatprep.subr.mxu0 0.0
  %450 = vmatpush1.msra.mxu0 0.0
  %451 = vmatprep.subr.mxu0 0.0
  %452 = vmatpush1.msra.mxu0 0.0
  %453 = vmatprep.subr.mxu0 0.0
  %454 = vmatpush1.msra.mxu0 0.0
  %455 = vmatprep.subr.mxu0 0.0
  %456 = vmatpush1.msra.mxu0 0.0
  %457 = vmatprep.subr.mxu0 0.0
  %458 = vmatpush1.msra.mxu0 0.0
  %459 = vmatprep.subr.mxu0 0.0
  %460 = vmatpush1.msra.mxu0 0.0
  %461 = vmatprep.subr.mxu0 0.0
  %462 = vmatpush1.msra.mxu0 0.0
  %463 = vmatprep.subr.mxu0 0.0
  %464 = vmatpush1.msra.mxu0 0.0
  %465 = vmatprep.subr.mxu0 0.0
  %466 = vmatpush1.msra.mxu0 0.0
  %467 = vmatprep.mubr.f32.mxu0 0.0
  %468 = vmatmul.mubr.f32.gmra.mrb[0].mxu0 %v389
  %v469 = vpop.f32.mrb[0].mxu0
  %v470 = vadd.f32 0.0, %v469
  %v471 = vpop.f32.mrb[0].mxu0
  %472 = vmatprep.mubr.f32.mxu0 0.0
  %473 = vmatmul.mubr.f32.gmra.mrb[0].mxu0 %v392
  %v474 = vpop.f32.mrb[0].mxu0
  %v475 = vadd.f32 0.0, %v474
  %v476 = vpop.f32.mrb[0].mxu0
  %477 = vmatprep.mubr.f32.mxu0 0.0
  %478 = vmatmul.mubr.f32.gmra.mrb[0].mxu0 %v395
  %v479 = vpop.f32.mrb[0].mxu0
  %v480 = vadd.f32 0.0, %v479
  %v481 = vpop.f32.mrb[0].mxu0
  %482 = vmatprep.mubr.f32.mxu0 0.0
  %483 = vmatmul.mubr.f32.gmra.mrb[0].mxu0 %v398
  %v484 = vpop.f32.mrb[0].mxu0
  %v485 = vadd.f32 0.0, %v484
  %v486 = vpop.f32.mrb[0].mxu0
  %487 = vmatprep.mubr.f32.mxu0 0.0
  %488 = vmatmul.mubr.f32.gmra.mrb[0].mxu0 %v401
  %v489 = vpop.f32.mrb[0].mxu0
  %v490 = vadd.f32 0.0, %v489
  %v491 = vpop.f32.mrb[0].mxu0
  %492 = vdwg.mxu0
  %v493 = vtanh.pop %v470
  %v494 = vtanh.pop %v475
  %v495 = vtanh.pop %v480
  %v496 = vtanh.pop %v485
  %v497 = vtanh.pop %v490
  %v498 = vadd.f32 %v372, %v493
  %v499 = vadd.f32 %v373, %v494
  %v500 = vadd.f32 %v374, %v495
  %v501 = vadd.f32 %v375, %v496
  %v502 = vadd.f32 %v376, %v497
  %s503 = scalar_lea.vmem %s3, 80
  %504 = vst.msk [vmem:[%s503] sm:$0xff] %vm135, %v498
  %505 = vst.msk [vmem:[%s503 + $0x8] sm:$0xff] %vm135, %v499
  %506 = vst.msk [vmem:[%s503 + $0x10] sm:$0xff] %vm135, %v500
  %507 = vst.msk [vmem:[%s503 + $0x18] sm:$0xff] %vm135, %v501
  %508 = vst.msk [vmem:[%s503 + $0x20] sm:$0x3] %vm255, %v502
  %s509 = scalar_lea.vmem %s2, 96
  %v510 = vld [vmem:[%s509] sm:$0xff]
  %v511 = vld [vmem:[%s509 + $0x8] sm:$0xff]
  %v512 = vld [vmem:[%s509 + $0x10] sm:$0xff]
  %v513 = vld [vmem:[%s509 + $0x18] sm:$0xff]
  %v515 = vsel %vm135, %v498, 0
  %v518 = vsel %vm135, %v499, 0
  %v521 = vsel %vm135, %v500, 0
  %v524 = vsel %vm135, %v501, 0
  %v527 = vsel %vm135, %v502, 0
  %529 = vmatprep.subr.mxu0 0.0
  %530 = vmatpush1.msra.mxu0 %v510
  %531 = vmatprep.subr.mxu0 0.0
  %532 = vmatpush1.msra.mxu0 %v511
  %533 = vmatprep.subr.mxu0 0.0
  %534 = vmatpush1.msra.mxu0 %v512
  %535 = vmatprep.subr.mxu0 0.0
  %536 = vmatpush1.msra.mxu0 %v513
  %537 = vmatprep.subr.mxu0 0.0
  %538 = vmatpush1.msra.mxu0 0.0
  %539 = vmatprep.subr.mxu0 0.0
  %540 = vmatpush1.msra.mxu0 0.0
  %541 = vmatprep.subr.mxu0 0.0
  %542 = vmatpush1.msra.mxu0 0.0
  %543 = vmatprep.subr.mxu0 0.0
  %544 = vmatpush1.msra.mxu0 0.0
  %545 = vmatprep.subr.mxu0 0.0
  %546 = vmatpush1.msra.mxu0 0.0
  %547 = vmatprep.subr.mxu0 0.0
  %548 = vmatpush1.msra.mxu0 0.0
  %549 = vmatprep.subr.mxu0 0.0
  %550 = vmatpush1.msra.mxu0 0.0
  %551 = vmatprep.subr.mxu0 0.0
  %552 = vmatpush1.msra.mxu0 0.0
  %553 = vmatprep.subr.mxu0 0.0
  %554 = vmatpush1.msra.mxu0 0.0
  %555 = vmatprep.subr.mxu0 0.0
  %556 = vmatpush1.msra.mxu0 0.0
  %557 = vmatprep.subr.mxu0 0.0
  %558 = vmatpush1.msra.mxu0 0.0
  %559 = vmatprep.subr.mxu0 0.0
  %560 = vmatpush1.msra.mxu0 0.0
  %561 = vmatprep.subr.mxu0 0.0
  %562 = vmatpush1.msra.mxu0 0.0
  %563 = vmatprep.subr.mxu0 0.0
  %564 = vmatpush1.msra.mxu0 0.0
  %565 = vmatprep.subr.mxu0 0.0
  %566 = vmatpush1.msra.mxu0 0.0
  %567 = vmatprep.subr.mxu0 0.0
  %568 = vmatpush1.msra.mxu0 0.0
  %569 = vmatprep.subr.mxu0 0.0
  %570 = vmatpush1.msra.mxu0 0.0
  %571 = vmatprep.subr.mxu0 0.0
  %572 = vmatpush1.msra.mxu0 0.0
  %573 = vmatprep.subr.mxu0 0.0
  %574 = vmatpush1.msra.mxu0 0.0
  %575 = vmatprep.subr.mxu0 0.0
  %576 = vmatpush1.msra.mxu0 0.0
  %577 = vmatprep.subr.mxu0 0.0
  %578 = vmatpush1.msra.mxu0 0.0
  %579 = vmatprep.subr.mxu0 0.0
  %580 = vmatpush1.msra.mxu0 0.0
  %581 = vmatprep.subr.mxu0 0.0
  %582 = vmatpush1.msra.mxu0 0.0
  %583 = vmatprep.subr.mxu0 0.0
  %584 = vmatpush1.msra.mxu0 0.0
  %585 = vmatprep.subr.mxu0 0.0
  %586 = vmatpush1.msra.mxu0 0.0
  %587 = vmatprep.subr.mxu0 0.0
  %588 = vmatpush1.msra.mxu0 0.0
  %589 = vmatprep.subr.mxu0 0.0
  %590 = vmatpush1.msra.mxu0 0.0
  %591 = vmatprep.subr.mxu0 0.0
  %592 = vmatpush1.msra.mxu0 0.0
  %593 = vmatprep.mubr.f32.mxu0 0.0
  %594 = vmatmul.mubr.f32.gmra.mrb[0].mxu0 %v515
  %v595 = vpop.f32.mrb[0].mxu0
  %v596 = vadd.f32 0.0, %v595
  %v597 = vpop.f32.mrb[0].mxu0
  %598 = vmatprep.mubr.f32.mxu0 0.0
  %599 = vmatmul.mubr.f32.gmra.mrb[0].mxu0 %v518
  %v600 = vpop.f32.mrb[0].mxu0
  %v601 = vadd.f32 0.0, %v600
  %v602 = vpop.f32.mrb[0].mxu0
  %603 = vmatprep.mubr.f32.mxu0 0.0
  %604 = vmatmul.mubr.f32.gmra.mrb[0].mxu0 %v521
  %v605 = vpop.f32.mrb[0].mxu0
  %v606 = vadd.f32 0.0, %v605
  %v607 = vpop.f32.mrb[0].mxu0
  %608 = vmatprep.mubr.f32.mxu0 0.0
  %609 = vmatmul.mubr.f32.gmra.mrb[0].mxu0 %v524
  %v610 = vpop.f32.mrb[0].mxu0
  %v611 = vadd.f32 0.0, %v610
  %v612 = vpop.f32.mrb[0].mxu0
  %613 = vmatprep.mubr.f32.mxu0 0.0
  %614 = vmatmul.mubr.f32.gmra.mrb[0].mxu0 %v527
  %v615 = vpop.f32.mrb[0].mxu0
  %v616 = vadd.f32 0.0, %v615
  %v617 = vpop.f32.mrb[0].mxu0
  %618 = vdwg.mxu0
  %v619 = vtanh.pop %v596
  %v620 = vtanh.pop %v601
  %v621 = vtanh.pop %v606
  %v622 = vtanh.pop %v611
  %v623 = vtanh.pop %v616
  %v624 = vadd.f32 %v498, %v619
  %v625 = vadd.f32 %v499, %v620
  %v626 = vadd.f32 %v500, %v621
  %v627 = vadd.f32 %v501, %v622
  %v628 = vadd.f32 %v502, %v623
  %s629 = scalar_lea.vmem %s3, 120
  %630 = vst.msk [vmem:[%s629] sm:$0xff] %vm135, %v624
  %631 = vst.msk [vmem:[%s629 + $0x8] sm:$0xff] %vm135, %v625
  %632 = vst.msk [vmem:[%s629 + $0x10] sm:$0xff] %vm135, %v626
  %633 = vst.msk [vmem:[%s629 + $0x18] sm:$0xff] %vm135, %v627
  %634 = vst.msk [vmem:[%s629 + $0x20] sm:$0x3] %vm255, %v628
  %s635 = scalar_lea.vmem %s2, 128
  %v636 = vld [vmem:[%s635] sm:$0xff]
  %v637 = vld [vmem:[%s635 + $0x8] sm:$0xff]
  %v638 = vld [vmem:[%s635 + $0x10] sm:$0xff]
  %v639 = vld [vmem:[%s635 + $0x18] sm:$0xff]
  %v641 = vsel %vm135, %v624, 0
  %v644 = vsel %vm135, %v625, 0
  %v647 = vsel %vm135, %v626, 0
  %v650 = vsel %vm135, %v627, 0
  %v653 = vsel %vm135, %v628, 0
  %655 = vmatprep.subr.mxu0 0.0
  %656 = vmatpush1.msra.mxu0 %v636
  %657 = vmatprep.subr.mxu0 0.0
  %658 = vmatpush1.msra.mxu0 %v637
  %659 = vmatprep.subr.mxu0 0.0
  %660 = vmatpush1.msra.mxu0 %v638
  %661 = vmatprep.subr.mxu0 0.0
  %662 = vmatpush1.msra.mxu0 %v639
  %663 = vmatprep.subr.mxu0 0.0
  %664 = vmatpush1.msra.mxu0 0.0
  %665 = vmatprep.subr.mxu0 0.0
  %666 = vmatpush1.msra.mxu0 0.0
  %667 = vmatprep.subr.mxu0 0.0
  %668 = vmatpush1.msra.mxu0 0.0
  %669 = vmatprep.subr.mxu0 0.0
  %670 = vmatpush1.msra.mxu0 0.0
  %671 = vmatprep.subr.mxu0 0.0
  %672 = vmatpush1.msra.mxu0 0.0
  %673 = vmatprep.subr.mxu0 0.0
  %674 = vmatpush1.msra.mxu0 0.0
  %675 = vmatprep.subr.mxu0 0.0
  %676 = vmatpush1.msra.mxu0 0.0
  %677 = vmatprep.subr.mxu0 0.0
  %678 = vmatpush1.msra.mxu0 0.0
  %679 = vmatprep.subr.mxu0 0.0
  %680 = vmatpush1.msra.mxu0 0.0
  %681 = vmatprep.subr.mxu0 0.0
  %682 = vmatpush1.msra.mxu0 0.0
  %683 = vmatprep.subr.mxu0 0.0
  %684 = vmatpush1.msra.mxu0 0.0
  %685 = vmatprep.subr.mxu0 0.0
  %686 = vmatpush1.msra.mxu0 0.0
  %687 = vmatprep.subr.mxu0 0.0
  %688 = vmatpush1.msra.mxu0 0.0
  %689 = vmatprep.subr.mxu0 0.0
  %690 = vmatpush1.msra.mxu0 0.0
  %691 = vmatprep.subr.mxu0 0.0
  %692 = vmatpush1.msra.mxu0 0.0
  %693 = vmatprep.subr.mxu0 0.0
  %694 = vmatpush1.msra.mxu0 0.0
  %695 = vmatprep.subr.mxu0 0.0
  %696 = vmatpush1.msra.mxu0 0.0
  %697 = vmatprep.subr.mxu0 0.0
  %698 = vmatpush1.msra.mxu0 0.0
  %699 = vmatprep.subr.mxu0 0.0
  %700 = vmatpush1.msra.mxu0 0.0
  %701 = vmatprep.subr.mxu0 0.0
  %702 = vmatpush1.msra.mxu0 0.0
  %703 = vmatprep.subr.mxu0 0.0
  %704 = vmatpush1.msra.mxu0 0.0
  %705 = vmatprep.subr.mxu0 0.0
  %706 = vmatpush1.msra.mxu0 0.0
  %707 = vmatprep.subr.mxu0 0.0
  %708 = vmatpush1.msra.mxu0 0.0
  %709 = vmatprep.subr.mxu0 0.0
  %710 = vmatpush1.msra.mxu0 0.0
  %711 = vmatprep.subr.mxu0 0.0
  %712 = vmatpush1.msra.mxu0 0.0
  %713 = vmatprep.subr.mxu0 0.0
  %714 = vmatpush1.msra.mxu0 0.0
  %715 = vmatprep.subr.mxu0 0.0
  %716 = vmatpush1.msra.mxu0 0.0
  %717 = vmatprep.subr.mxu0 0.0
  %718 = vmatpush1.msra.mxu0 0.0
  %719 = vmatprep.mubr.f32.mxu0 0.0
  %720 = vmatmul.mubr.f32.gmra.mrb[0].mxu0 %v641
  %v721 = vpop.f32.mrb[0].mxu0
  %v722 = vadd.f32 0.0, %v721
  %v723 = vpop.f32.mrb[0].mxu0
  %724 = vmatprep.mubr.f32.mxu0 0.0
  %725 = vmatmul.mubr.f32.gmra.mrb[0].mxu0 %v644
  %v726 = vpop.f32.mrb[0].mxu0
  %v727 = vadd.f32 0.0, %v726
  %v728 = vpop.f32.mrb[0].mxu0
  %729 = vmatprep.mubr.f32.mxu0 0.0
  %730 = vmatmul.mubr.f32.gmra.mrb[0].mxu0 %v647
  %v731 = vpop.f32.mrb[0].mxu0
  %v732 = vadd.f32 0.0, %v731
  %v733 = vpop.f32.mrb[0].mxu0
  %734 = vmatprep.mubr.f32.mxu0 0.0
  %735 = vmatmul.mubr.f32.gmra.mrb[0].mxu0 %v650
  %v736 = vpop.f32.mrb[0].mxu0
  %v737 = vadd.f32 0.0, %v736
  %v738 = vpop.f32.mrb[0].mxu0
  %739 = vmatprep.mubr.f32.mxu0 0.0
  %740 = vmatmul.mubr.f32.gmra.mrb[0].mxu0 %v653
  %v741 = vpop.f32.mrb[0].mxu0
  %v742 = vadd.f32 0.0, %v741
  %v743 = vpop.f32.mrb[0].mxu0
  %744 = vdwg.mxu0
  %v745 = vtanh.pop %v722
  %v746 = vtanh.pop %v727
  %v747 = vtanh.pop %v732
  %v748 = vtanh.pop %v737
  %v749 = vtanh.pop %v742
  %v750 = vadd.f32 %v624, %v745
  %v751 = vadd.f32 %v625, %v746
  %v752 = vadd.f32 %v626, %v747
  %v753 = vadd.f32 %v627, %v748
  %v754 = vadd.f32 %v628, %v749
  %s755 = scalar_lea.vmem %s3, 160
  %756 = vst.msk [vmem:[%s755] sm:$0xff] %vm135, %v750
  %757 = vst.msk [vmem:[%s755 + $0x8] sm:$0xff] %vm135, %v751
  %758 = vst.msk [vmem:[%s755 + $0x10] sm:$0xff] %vm135, %v752
  %759 = vst.msk [vmem:[%s755 + $0x18] sm:$0xff] %vm135, %v753
  %760 = vst.msk [vmem:[%s755 + $0x20] sm:$0x3] %vm255, %v754
  %s761 = scalar_lea.vmem %s2, 160
  %v762 = vld [vmem:[%s761] sm:$0xff]
  %v763 = vld [vmem:[%s761 + $0x8] sm:$0xff]
  %v764 = vld [vmem:[%s761 + $0x10] sm:$0xff]
  %v765 = vld [vmem:[%s761 + $0x18] sm:$0xff]
  %v767 = vsel %vm135, %v750, 0
  %v770 = vsel %vm135, %v751, 0
  %v773 = vsel %vm135, %v752, 0
  %v776 = vsel %vm135, %v753, 0
  %v779 = vsel %vm135, %v754, 0
  %781 = vmatprep.subr.mxu0 0.0
  %782 = vmatpush1.msra.mxu0 %v762
  %783 = vmatprep.subr.mxu0 0.0
  %784 = vmatpush1.msra.mxu0 %v763
  %785 = vmatprep.subr.mxu0 0.0
  %786 = vmatpush1.msra.mxu0 %v764
  %787 = vmatprep.subr.mxu0 0.0
  %788 = vmatpush1.msra.mxu0 %v765
  %789 = vmatprep.subr.mxu0 0.0
  %790 = vmatpush1.msra.mxu0 0.0
  %791 = vmatprep.subr.mxu0 0.0
  %792 = vmatpush1.msra.mxu0 0.0
  %793 = vmatprep.subr.mxu0 0.0
  %794 = vmatpush1.msra.mxu0 0.0
  %795 = vmatprep.subr.mxu0 0.0
  %796 = vmatpush1.msra.mxu0 0.0
  %797 = vmatprep.subr.mxu0 0.0
  %798 = vmatpush1.msra.mxu0 0.0
  %799 = vmatprep.subr.mxu0 0.0
  %800 = vmatpush1.msra.mxu0 0.0
  %801 = vmatprep.subr.mxu0 0.0
  %802 = vmatpush1.msra.mxu0 0.0
  %803 = vmatprep.subr.mxu0 0.0
  %804 = vmatpush1.msra.mxu0 0.0
  %805 = vmatprep.subr.mxu0 0.0
  %806 = vmatpush1.msra.mxu0 0.0
  %807 = vmatprep.subr.mxu0 0.0
  %808 = vmatpush1.msra.mxu0 0.0
  %809 = vmatprep.subr.mxu0 0.0
  %810 = vmatpush1.msra.mxu0 0.0
  %811 = vmatprep.subr.mxu0 0.0
  %812 = vmatpush1.msra.mxu0 0.0
  %813 = vmatprep.subr.mxu0 0.0
  %814 = vmatpush1.msra.mxu0 0.0
  %815 = vmatprep.subr.mxu0 0.0
  %816 = vmatpush1.msra.mxu0 0.0
  %817 = vmatprep.subr.mxu0 0.0
  %818 = vmatpush1.msra.mxu0 0.0
  %819 = vmatprep.subr.mxu0 0.0
  %820 = vmatpush1.msra.mxu0 0.0
  %821 = vmatprep.subr.mxu0 0.0
  %822 = vmatpush1.msra.mxu0 0.0
  %823 = vmatprep.subr.mxu0 0.0
  %824 = vmatpush1.msra.mxu0 0.0
  %825 = vmatprep.subr.mxu0 0.0
  %826 = vmatpush1.msra.mxu0 0.0
  %827 = vmatprep.subr.mxu0 0.0
  %828 = vmatpush1.msra.mxu0 0.0
  %829 = vmatprep.subr.mxu0 0.0
  %830 = vmatpush1.msra.mxu0 0.0
  %831 = vmatprep.subr.mxu0 0.0
  %832 = vmatpush1.msra.mxu0 0.0
  %833 = vmatprep.subr.mxu0 0.0
  %834 = vmatpush1.msra.mxu0 0.0
  %835 = vmatprep.subr.mxu0 0.0
  %836 = vmatpush1.msra.mxu0 0.0
  %837 = vmatprep.subr.mxu0 0.0
  %838 = vmatpush1.msra.mxu0 0.0
  %839 = vmatprep.subr.mxu0 0.0
  %840 = vmatpush1.msra.mxu0 0.0
  %841 = vmatprep.subr.mxu0 0.0
  %842 = vmatpush1.msra.mxu0 0.0
  %843 = vmatprep.subr.mxu0 0.0
  %844 = vmatpush1.msra.mxu0 0.0
  %845 = vmatprep.mubr.f32.mxu0 0.0
  %846 = vmatmul.mubr.f32.gmra.mrb[0].mxu0 %v767
  %v847 = vpop.f32.mrb[0].mxu0
  %v848 = vadd.f32 0.0, %v847
  %v849 = vpop.f32.mrb[0].mxu0
  %850 = vmatprep.mubr.f32.mxu0 0.0
  %851 = vmatmul.mubr.f32.gmra.mrb[0].mxu0 %v770
  %v852 = vpop.f32.mrb[0].mxu0
  %v853 = vadd.f32 0.0, %v852
  %v854 = vpop.f32.mrb[0].mxu0
  %855 = vmatprep.mubr.f32.mxu0 0.0
  %856 = vmatmul.mubr.f32.gmra.mrb[0].mxu0 %v773
  %v857 = vpop.f32.mrb[0].mxu0
  %v858 = vadd.f32 0.0, %v857
  %v859 = vpop.f32.mrb[0].mxu0
  %860 = vmatprep.mubr.f32.mxu0 0.0
  %861 = vmatmul.mubr.f32.gmra.mrb[0].mxu0 %v776
  %v862 = vpop.f32.mrb[0].mxu0
  %v863 = vadd.f32 0.0, %v862
  %v864 = vpop.f32.mrb[0].mxu0
  %865 = vmatprep.mubr.f32.mxu0 0.0
  %866 = vmatmul.mubr.f32.gmra.mrb[0].mxu0 %v779
  %v867 = vpop.f32.mrb[0].mxu0
  %v868 = vadd.f32 0.0, %v867
  %v869 = vpop.f32.mrb[0].mxu0
  %870 = vdwg.mxu0
  %v871 = vtanh.pop %v848
  %v872 = vtanh.pop %v853
  %v873 = vtanh.pop %v858
  %v874 = vtanh.pop %v863
  %v875 = vtanh.pop %v868
  %v876 = vadd.f32 %v750, %v871
  %v877 = vadd.f32 %v751, %v872
  %v878 = vadd.f32 %v752, %v873
  %v879 = vadd.f32 %v753, %v874
  %v880 = vadd.f32 %v754, %v875
  %s881 = scalar_lea.vmem %s3, 200
  %882 = vst.msk [vmem:[%s881] sm:$0xff] %vm135, %v876
  %883 = vst.msk [vmem:[%s881 + $0x8] sm:$0xff] %vm135, %v877
  %884 = vst.msk [vmem:[%s881 + $0x10] sm:$0xff] %vm135, %v878
  %885 = vst.msk [vmem:[%s881 + $0x18] sm:$0xff] %vm135, %v879
  %886 = vst.msk [vmem:[%s881 + $0x20] sm:$0x3] %vm255, %v880
  %s887 = scalar_lea.vmem %s2, 192
  %v888 = vld [vmem:[%s887] sm:$0xff]
  %v889 = vld [vmem:[%s887 + $0x8] sm:$0xff]
  %v890 = vld [vmem:[%s887 + $0x10] sm:$0xff]
  %v891 = vld [vmem:[%s887 + $0x18] sm:$0xff]
  %v893 = vsel %vm135, %v876, 0
  %v896 = vsel %vm135, %v877, 0
  %v899 = vsel %vm135, %v878, 0
  %v902 = vsel %vm135, %v879, 0
  %v905 = vsel %vm135, %v880, 0
  %907 = vmatprep.subr.mxu0 0.0
  %908 = vmatpush1.msra.mxu0 %v888
  %909 = vmatprep.subr.mxu0 0.0
  %910 = vmatpush1.msra.mxu0 %v889
  %911 = vmatprep.subr.mxu0 0.0
  %912 = vmatpush1.msra.mxu0 %v890
  %913 = vmatprep.subr.mxu0 0.0
  %914 = vmatpush1.msra.mxu0 %v891
  %915 = vmatprep.subr.mxu0 0.0
  %916 = vmatpush1.msra.mxu0 0.0
  %917 = vmatprep.subr.mxu0 0.0
  %918 = vmatpush1.msra.mxu0 0.0
  %919 = vmatprep.subr.mxu0 0.0
  %920 = vmatpush1.msra.mxu0 0.0
  %921 = vmatprep.subr.mxu0 0.0
  %922 = vmatpush1.msra.mxu0 0.0
  %923 = vmatprep.subr.mxu0 0.0
  %924 = vmatpush1.msra.mxu0 0.0
  %925 = vmatprep.subr.mxu0 0.0
  %926 = vmatpush1.msra.mxu0 0.0
  %927 = vmatprep.subr.mxu0 0.0
  %928 = vmatpush1.msra.mxu0 0.0
  %929 = vmatprep.subr.mxu0 0.0
  %930 = vmatpush1.msra.mxu0 0.0
  %931 = vmatprep.subr.mxu0 0.0
  %932 = vmatpush1.msra.mxu0 0.0
  %933 = vmatprep.subr.mxu0 0.0
  %934 = vmatpush1.msra.mxu0 0.0
  %935 = vmatprep.subr.mxu0 0.0
  %936 = vmatpush1.msra.mxu0 0.0
  %937 = vmatprep.subr.mxu0 0.0
  %938 = vmatpush1.msra.mxu0 0.0
  %939 = vmatprep.subr.mxu0 0.0
  %940 = vmatpush1.msra.mxu0 0.0
  %941 = vmatprep.subr.mxu0 0.0
  %942 = vmatpush1.msra.mxu0 0.0
  %943 = vmatprep.subr.mxu0 0.0
  %944 = vmatpush1.msra.mxu0 0.0
  %945 = vmatprep.subr.mxu0 0.0
  %946 = vmatpush1.msra.mxu0 0.0
  %947 = vmatprep.subr.mxu0 0.0
  %948 = vmatpush1.msra.mxu0 0.0
  %949 = vmatprep.subr.mxu0 0.0
  %950 = vmatpush1.msra.mxu0 0.0
  %951 = vmatprep.subr.mxu0 0.0
  %952 = vmatpush1.msra.mxu0 0.0
  %953 = vmatprep.subr.mxu0 0.0
  %954 = vmatpush1.msra.mxu0 0.0
  %955 = vmatprep.subr.mxu0 0.0
  %956 = vmatpush1.msra.mxu0 0.0
  %957 = vmatprep.subr.mxu0 0.0
  %958 = vmatpush1.msra.mxu0 0.0
  %959 = vmatprep.subr.mxu0 0.0
  %960 = vmatpush1.msra.mxu0 0.0
  %961 = vmatprep.subr.mxu0 0.0
  %962 = vmatpush1.msra.mxu0 0.0
  %963 = vmatprep.subr.mxu0 0.0
  %964 = vmatpush1.msra.mxu0 0.0
  %965 = vmatprep.subr.mxu0 0.0
  %966 = vmatpush1.msra.mxu0 0.0
  %967 = vmatprep.subr.mxu0 0.0
  %968 = vmatpush1.msra.mxu0 0.0
  %969 = vmatprep.subr.mxu0 0.0
  %970 = vmatpush1.msra.mxu0 0.0
  %971 = vmatprep.mubr.f32.mxu0 0.0
  %972 = vmatmul.mubr.f32.gmra.mrb[0].mxu0 %v893
  %v973 = vpop.f32.mrb[0].mxu0
  %v974 = vadd.f32 0.0, %v973
  %v975 = vpop.f32.mrb[0].mxu0
  %976 = vmatprep.mubr.f32.mxu0 0.0
  %977 = vmatmul.mubr.f32.gmra.mrb[0].mxu0 %v896
  %v978 = vpop.f32.mrb[0].mxu0
  %v979 = vadd.f32 0.0, %v978
  %v980 = vpop.f32.mrb[0].mxu0
  %981 = vmatprep.mubr.f32.mxu0 0.0
  %982 = vmatmul.mubr.f32.gmra.mrb[0].mxu0 %v899
  %v983 = vpop.f32.mrb[0].mxu0
  %v984 = vadd.f32 0.0, %v983
  %v985 = vpop.f32.mrb[0].mxu0
  %986 = vmatprep.mubr.f32.mxu0 0.0
  %987 = vmatmul.mubr.f32.gmra.mrb[0].mxu0 %v902
  %v988 = vpop.f32.mrb[0].mxu0
  %v989 = vadd.f32 0.0, %v988
  %v990 = vpop.f32.mrb[0].mxu0
  %991 = vmatprep.mubr.f32.mxu0 0.0
  %992 = vmatmul.mubr.f32.gmra.mrb[0].mxu0 %v905
  %v993 = vpop.f32.mrb[0].mxu0
  %v994 = vadd.f32 0.0, %v993
  %v995 = vpop.f32.mrb[0].mxu0
  %996 = vdwg.mxu0
  %v997 = vtanh.pop %v974
  %v998 = vtanh.pop %v979
  %v999 = vtanh.pop %v984
  %v1000 = vtanh.pop %v989
  %v1001 = vtanh.pop %v994
  %v1002 = vadd.f32 %v876, %v997
  %v1003 = vadd.f32 %v877, %v998
  %v1004 = vadd.f32 %v878, %v999
  %v1005 = vadd.f32 %v879, %v1000
  %v1006 = vadd.f32 %v880, %v1001
  %s1007 = scalar_lea.vmem %s3, 240
  %1008 = vst.msk [vmem:[%s1007] sm:$0xff] %vm135, %v1002
  %1009 = vst.msk [vmem:[%s1007 + $0x8] sm:$0xff] %vm135, %v1003
  %1010 = vst.msk [vmem:[%s1007 + $0x10] sm:$0xff] %vm135, %v1004
  %1011 = vst.msk [vmem:[%s1007 + $0x18] sm:$0xff] %vm135, %v1005
  %1012 = vst.msk [vmem:[%s1007 + $0x20] sm:$0x3] %vm255, %v1006
  %s1013 = scalar_lea.vmem %s2, 224
  %v1014 = vld [vmem:[%s1013] sm:$0xff]
  %v1015 = vld [vmem:[%s1013 + $0x8] sm:$0xff]
  %v1016 = vld [vmem:[%s1013 + $0x10] sm:$0xff]
  %v1017 = vld [vmem:[%s1013 + $0x18] sm:$0xff]
  %v1019 = vsel %vm135, %v1002, 0
  %v1022 = vsel %vm135, %v1003, 0
  %v1025 = vsel %vm135, %v1004, 0
  %v1028 = vsel %vm135, %v1005, 0
  %v1031 = vsel %vm135, %v1006, 0
  %1033 = vmatprep.subr.mxu0 0.0
  %1034 = vmatpush1.msra.mxu0 %v1014
  %1035 = vmatprep.subr.mxu0 0.0
  %1036 = vmatpush1.msra.mxu0 %v1015
  %1037 = vmatprep.subr.mxu0 0.0
  %1038 = vmatpush1.msra.mxu0 %v1016
  %1039 = vmatprep.subr.mxu0 0.0
  %1040 = vmatpush1.msra.mxu0 %v1017
  %1041 = vmatprep.subr.mxu0 0.0
  %1042 = vmatpush1.msra.mxu0 0.0
  %1043 = vmatprep.subr.mxu0 0.0
  %1044 = vmatpush1.msra.mxu0 0.0
  %1045 = vmatprep.subr.mxu0 0.0
  %1046 = vmatpush1.msra.mxu0 0.0
  %1047 = vmatprep.subr.mxu0 0.0
  %1048 = vmatpush1.msra.mxu0 0.0
  %1049 = vmatprep.subr.mxu0 0.0
  %1050 = vmatpush1.msra.mxu0 0.0
  %1051 = vmatprep.subr.mxu0 0.0
  %1052 = vmatpush1.msra.mxu0 0.0
  %1053 = vmatprep.subr.mxu0 0.0
  %1054 = vmatpush1.msra.mxu0 0.0
  %1055 = vmatprep.subr.mxu0 0.0
  %1056 = vmatpush1.msra.mxu0 0.0
  %1057 = vmatprep.subr.mxu0 0.0
  %1058 = vmatpush1.msra.mxu0 0.0
  %1059 = vmatprep.subr.mxu0 0.0
  %1060 = vmatpush1.msra.mxu0 0.0
  %1061 = vmatprep.subr.mxu0 0.0
  %1062 = vmatpush1.msra.mxu0 0.0
  %1063 = vmatprep.subr.mxu0 0.0
  %1064 = vmatpush1.msra.mxu0 0.0
  %1065 = vmatprep.subr.mxu0 0.0
  %1066 = vmatpush1.msra.mxu0 0.0
  %1067 = vmatprep.subr.mxu0 0.0
  %1068 = vmatpush1.msra.mxu0 0.0
  %1069 = vmatprep.subr.mxu0 0.0
  %1070 = vmatpush1.msra.mxu0 0.0
  %1071 = vmatprep.subr.mxu0 0.0
  %1072 = vmatpush1.msra.mxu0 0.0
  %1073 = vmatprep.subr.mxu0 0.0
  %1074 = vmatpush1.msra.mxu0 0.0
  %1075 = vmatprep.subr.mxu0 0.0
  %1076 = vmatpush1.msra.mxu0 0.0
  %1077 = vmatprep.subr.mxu0 0.0
  %1078 = vmatpush1.msra.mxu0 0.0
  %1079 = vmatprep.subr.mxu0 0.0
  %1080 = vmatpush1.msra.mxu0 0.0
  %1081 = vmatprep.subr.mxu0 0.0
  %1082 = vmatpush1.msra.mxu0 0.0
  %1083 = vmatprep.subr.mxu0 0.0
  %1084 = vmatpush1.msra.mxu0 0.0
  %1085 = vmatprep.subr.mxu0 0.0
  %1086 = vmatpush1.msra.mxu0 0.0
  %1087 = vmatprep.subr.mxu0 0.0
  %1088 = vmatpush1.msra.mxu0 0.0
  %1089 = vmatprep.subr.mxu0 0.0
  %1090 = vmatpush1.msra.mxu0 0.0
  %1091 = vmatprep.subr.mxu0 0.0
  %1092 = vmatpush1.msra.mxu0 0.0
  %1093 = vmatprep.subr.mxu0 0.0
  %1094 = vmatpush1.msra.mxu0 0.0
  %1095 = vmatprep.subr.mxu0 0.0
  %1096 = vmatpush1.msra.mxu0 0.0
  %1097 = vmatprep.mubr.f32.mxu0 0.0
  %1098 = vmatmul.mubr.f32.gmra.mrb[0].mxu0 %v1019
  %v1099 = vpop.f32.mrb[0].mxu0
  %v1100 = vadd.f32 0.0, %v1099
  %v1101 = vpop.f32.mrb[0].mxu0
  %1102 = vmatprep.mubr.f32.mxu0 0.0
  %1103 = vmatmul.mubr.f32.gmra.mrb[0].mxu0 %v1022
  %v1104 = vpop.f32.mrb[0].mxu0
  %v1105 = vadd.f32 0.0, %v1104
  %v1106 = vpop.f32.mrb[0].mxu0
  %1107 = vmatprep.mubr.f32.mxu0 0.0
  %1108 = vmatmul.mubr.f32.gmra.mrb[0].mxu0 %v1025
  %v1109 = vpop.f32.mrb[0].mxu0
  %v1110 = vadd.f32 0.0, %v1109
  %v1111 = vpop.f32.mrb[0].mxu0
  %1112 = vmatprep.mubr.f32.mxu0 0.0
  %1113 = vmatmul.mubr.f32.gmra.mrb[0].mxu0 %v1028
  %v1114 = vpop.f32.mrb[0].mxu0
  %v1115 = vadd.f32 0.0, %v1114
  %v1116 = vpop.f32.mrb[0].mxu0
  %1117 = vmatprep.mubr.f32.mxu0 0.0
  %1118 = vmatmul.mubr.f32.gmra.mrb[0].mxu0 %v1031
  %v1119 = vpop.f32.mrb[0].mxu0
  %v1120 = vadd.f32 0.0, %v1119
  %v1121 = vpop.f32.mrb[0].mxu0
  %1122 = vdwg.mxu0
  %v1123 = vtanh.pop %v1100
  %v1124 = vtanh.pop %v1105
  %v1125 = vtanh.pop %v1110
  %v1126 = vtanh.pop %v1115
  %v1127 = vtanh.pop %v1120
  %v1128 = vadd.f32 %v1002, %v1123
  %v1129 = vadd.f32 %v1003, %v1124
  %v1130 = vadd.f32 %v1004, %v1125
  %v1131 = vadd.f32 %v1005, %v1126
  %v1132 = vadd.f32 %v1006, %v1127
  %s1133 = scalar_lea.vmem %s3, 280
  %1134 = vst.msk [vmem:[%s1133] sm:$0xff] %vm135, %v1128
  %1135 = vst.msk [vmem:[%s1133 + $0x8] sm:$0xff] %vm135, %v1129
  %1136 = vst.msk [vmem:[%s1133 + $0x10] sm:$0xff] %vm135, %v1130
  %1137 = vst.msk [vmem:[%s1133 + $0x18] sm:$0xff] %vm135, %v1131
  %1138 = vst.msk [vmem:[%s1133 + $0x20] sm:$0x3] %vm255, %v1132
  %s1139 = scalar_lea.vmem %s2, 256
  %v1140 = vld [vmem:[%s1139] sm:$0xff]
  %v1141 = vld [vmem:[%s1139 + $0x8] sm:$0xff]
  %v1142 = vld [vmem:[%s1139 + $0x10] sm:$0xff]
  %v1143 = vld [vmem:[%s1139 + $0x18] sm:$0xff]
  %v1145 = vsel %vm135, %v1128, 0
  %v1148 = vsel %vm135, %v1129, 0
  %v1151 = vsel %vm135, %v1130, 0
  %v1154 = vsel %vm135, %v1131, 0
  %v1157 = vsel %vm135, %v1132, 0
  %1159 = vmatprep.subr.mxu0 0.0
  %1160 = vmatpush1.msra.mxu0 %v1140
  %1161 = vmatprep.subr.mxu0 0.0
  %1162 = vmatpush1.msra.mxu0 %v1141
  %1163 = vmatprep.subr.mxu0 0.0
  %1164 = vmatpush1.msra.mxu0 %v1142
  %1165 = vmatprep.subr.mxu0 0.0
  %1166 = vmatpush1.msra.mxu0 %v1143
  %1167 = vmatprep.subr.mxu0 0.0
  %1168 = vmatpush1.msra.mxu0 0.0
  %1169 = vmatprep.subr.mxu0 0.0
  %1170 = vmatpush1.msra.mxu0 0.0
  %1171 = vmatprep.subr.mxu0 0.0
  %1172 = vmatpush1.msra.mxu0 0.0
  %1173 = vmatprep.subr.mxu0 0.0
  %1174 = vmatpush1.msra.mxu0 0.0
  %1175 = vmatprep.subr.mxu0 0.0
  %1176 = vmatpush1.msra.mxu0 0.0
  %1177 = vmatprep.subr.mxu0 0.0
  %1178 = vmatpush1.msra.mxu0 0.0
  %1179 = vmatprep.subr.mxu0 0.0
  %1180 = vmatpush1.msra.mxu0 0.0
  %1181 = vmatprep.subr.mxu0 0.0
  %1182 = vmatpush1.msra.mxu0 0.0
  %1183 = vmatprep.subr.mxu0 0.0
  %1184 = vmatpush1.msra.mxu0 0.0
  %1185 = vmatprep.subr.mxu0 0.0
  %1186 = vmatpush1.msra.mxu0 0.0
  %1187 = vmatprep.subr.mxu0 0.0
  %1188 = vmatpush1.msra.mxu0 0.0
  %1189 = vmatprep.subr.mxu0 0.0
  %1190 = vmatpush1.msra.mxu0 0.0
  %1191 = vmatprep.subr.mxu0 0.0
  %1192 = vmatpush1.msra.mxu0 0.0
  %1193 = vmatprep.subr.mxu0 0.0
  %1194 = vmatpush1.msra.mxu0 0.0
  %1195 = vmatprep.subr.mxu0 0.0
  %1196 = vmatpush1.msra.mxu0 0.0
  %1197 = vmatprep.subr.mxu0 0.0
  %1198 = vmatpush1.msra.mxu0 0.0
  %1199 = vmatprep.subr.mxu0 0.0
  %1200 = vmatpush1.msra.mxu0 0.0
  %1201 = vmatprep.subr.mxu0 0.0
  %1202 = vmatpush1.msra.mxu0 0.0
  %1203 = vmatprep.subr.mxu0 0.0
  %1204 = vmatpush1.msra.mxu0 0.0
  %1205 = vmatprep.subr.mxu0 0.0
  %1206 = vmatpush1.msra.mxu0 0.0
  %1207 = vmatprep.subr.mxu0 0.0
  %1208 = vmatpush1.msra.mxu0 0.0
  %1209 = vmatprep.subr.mxu0 0.0
  %1210 = vmatpush1.msra.mxu0 0.0
  %1211 = vmatprep.subr.mxu0 0.0
  %1212 = vmatpush1.msra.mxu0 0.0
  %1213 = vmatprep.subr.mxu0 0.0
  %1214 = vmatpush1.msra.mxu0 0.0
  %1215 = vmatprep.subr.mxu0 0.0
  %1216 = vmatpush1.msra.mxu0 0.0
  %1217 = vmatprep.subr.mxu0 0.0
  %1218 = vmatpush1.msra.mxu0 0.0
  %1219 = vmatprep.subr.mxu0 0.0
  %1220 = vmatpush1.msra.mxu0 0.0
  %1221 = vmatprep.subr.mxu0 0.0
  %1222 = vmatpush1.msra.mxu0 0.0
  %1223 = vmatprep.mubr.f32.mxu0 0.0
  %1224 = vmatmul.mubr.f32.gmra.mrb[0].mxu0 %v1145
  %v1225 = vpop.f32.mrb[0].mxu0
  %v1226 = vadd.f32 0.0, %v1225
  %v1227 = vpop.f32.mrb[0].mxu0
  %1228 = vmatprep.mubr.f32.mxu0 0.0
  %1229 = vmatmul.mubr.f32.gmra.mrb[0].mxu0 %v1148
  %v1230 = vpop.f32.mrb[0].mxu0
  %v1231 = vadd.f32 0.0, %v1230
  %v1232 = vpop.f32.mrb[0].mxu0
  %1233 = vmatprep.mubr.f32.mxu0 0.0
  %1234 = vmatmul.mubr.f32.gmra.mrb[0].mxu0 %v1151
  %v1235 = vpop.f32.mrb[0].mxu0
  %v1236 = vadd.f32 0.0, %v1235
  %v1237 = vpop.f32.mrb[0].mxu0
  %1238 = vmatprep.mubr.f32.mxu0 0.0
  %1239 = vmatmul.mubr.f32.gmra.mrb[0].mxu0 %v1154
  %v1240 = vpop.f32.mrb[0].mxu0
  %v1241 = vadd.f32 0.0, %v1240
  %v1242 = vpop.f32.mrb[0].mxu0
  %1243 = vmatprep.mubr.f32.mxu0 0.0
  %1244 = vmatmul.mubr.f32.gmra.mrb[0].mxu0 %v1157
  %v1245 = vpop.f32.mrb[0].mxu0
  %v1246 = vadd.f32 0.0, %v1245
  %v1247 = vpop.f32.mrb[0].mxu0
  %1248 = vdwg.mxu0
  %v1249 = vtanh.pop %v1226
  %v1250 = vtanh.pop %v1231
  %v1251 = vtanh.pop %v1236
  %v1252 = vtanh.pop %v1241
  %v1253 = vtanh.pop %v1246
  %v1254 = vadd.f32 %v1128, %v1249
  %v1255 = vadd.f32 %v1129, %v1250
  %v1256 = vadd.f32 %v1130, %v1251
  %v1257 = vadd.f32 %v1131, %v1252
  %v1258 = vadd.f32 %v1132, %v1253
  %s1259 = scalar_lea.vmem %s3, 320
  %1260 = vst.msk [vmem:[%s1259] sm:$0xff] %vm135, %v1254
  %1261 = vst.msk [vmem:[%s1259 + $0x8] sm:$0xff] %vm135, %v1255
  %1262 = vst.msk [vmem:[%s1259 + $0x10] sm:$0xff] %vm135, %v1256
  %1263 = vst.msk [vmem:[%s1259 + $0x18] sm:$0xff] %vm135, %v1257
  %1264 = vst.msk [vmem:[%s1259 + $0x20] sm:$0x3] %vm255, %v1258
  %s1265 = scalar_lea.vmem %s2, 288
  %v1266 = vld [vmem:[%s1265] sm:$0xff]
  %v1267 = vld [vmem:[%s1265 + $0x8] sm:$0xff]
  %v1268 = vld [vmem:[%s1265 + $0x10] sm:$0xff]
  %v1269 = vld [vmem:[%s1265 + $0x18] sm:$0xff]
  %v1271 = vsel %vm135, %v1254, 0
  %v1274 = vsel %vm135, %v1255, 0
  %v1277 = vsel %vm135, %v1256, 0
  %v1280 = vsel %vm135, %v1257, 0
  %v1283 = vsel %vm135, %v1258, 0
  %1285 = vmatprep.subr.mxu0 0.0
  %1286 = vmatpush1.msra.mxu0 %v1266
  %1287 = vmatprep.subr.mxu0 0.0
  %1288 = vmatpush1.msra.mxu0 %v1267
  %1289 = vmatprep.subr.mxu0 0.0
  %1290 = vmatpush1.msra.mxu0 %v1268
  %1291 = vmatprep.subr.mxu0 0.0
  %1292 = vmatpush1.msra.mxu0 %v1269
  %1293 = vmatprep.subr.mxu0 0.0
  %1294 = vmatpush1.msra.mxu0 0.0
  %1295 = vmatprep.subr.mxu0 0.0
  %1296 = vmatpush1.msra.mxu0 0.0
  %1297 = vmatprep.subr.mxu0 0.0
  %1298 = vmatpush1.msra.mxu0 0.0
  %1299 = vmatprep.subr.mxu0 0.0
  %1300 = vmatpush1.msra.mxu0 0.0
  %1301 = vmatprep.subr.mxu0 0.0
  %1302 = vmatpush1.msra.mxu0 0.0
  %1303 = vmatprep.subr.mxu0 0.0
  %1304 = vmatpush1.msra.mxu0 0.0
  %1305 = vmatprep.subr.mxu0 0.0
  %1306 = vmatpush1.msra.mxu0 0.0
  %1307 = vmatprep.subr.mxu0 0.0
  %1308 = vmatpush1.msra.mxu0 0.0
  %1309 = vmatprep.subr.mxu0 0.0
  %1310 = vmatpush1.msra.mxu0 0.0
  %1311 = vmatprep.subr.mxu0 0.0
  %1312 = vmatpush1.msra.mxu0 0.0
  %1313 = vmatprep.subr.mxu0 0.0
  %1314 = vmatpush1.msra.mxu0 0.0
  %1315 = vmatprep.subr.mxu0 0.0
  %1316 = vmatpush1.msra.mxu0 0.0
  %1317 = vmatprep.subr.mxu0 0.0
  %1318 = vmatpush1.msra.mxu0 0.0
  %1319 = vmatprep.subr.mxu0 0.0
  %1320 = vmatpush1.msra.mxu0 0.0
  %1321 = vmatprep.subr.mxu0 0.0
  %1322 = vmatpush1.msra.mxu0 0.0
  %1323 = vmatprep.subr.mxu0 0.0
  %1324 = vmatpush1.msra.mxu0 0.0
  %1325 = vmatprep.subr.mxu0 0.0
  %1326 = vmatpush1.msra.mxu0 0.0
  %1327 = vmatprep.subr.mxu0 0.0
  %1328 = vmatpush1.msra.mxu0 0.0
  %1329 = vmatprep.subr.mxu0 0.0
  %1330 = vmatpush1.msra.mxu0 0.0
  %1331 = vmatprep.subr.mxu0 0.0
  %1332 = vmatpush1.msra.mxu0 0.0
  %1333 = vmatprep.subr.mxu0 0.0
  %1334 = vmatpush1.msra.mxu0 0.0
  %1335 = vmatprep.subr.mxu0 0.0
  %1336 = vmatpush1.msra.mxu0 0.0
  %1337 = vmatprep.subr.mxu0 0.0
  %1338 = vmatpush1.msra.mxu0 0.0
  %1339 = vmatprep.subr.mxu0 0.0
  %1340 = vmatpush1.msra.mxu0 0.0
  %1341 = vmatprep.subr.mxu0 0.0
  %1342 = vmatpush1.msra.mxu0 0.0
  %1343 = vmatprep.subr.mxu0 0.0
  %1344 = vmatpush1.msra.mxu0 0.0
  %1345 = vmatprep.subr.mxu0 0.0
  %1346 = vmatpush1.msra.mxu0 0.0
  %1347 = vmatprep.subr.mxu0 0.0
  %1348 = vmatpush1.msra.mxu0 0.0
  %1349 = vmatprep.mubr.f32.mxu0 0.0
  %1350 = vmatmul.mubr.f32.gmra.mrb[0].mxu0 %v1271
  %v1351 = vpop.f32.mrb[0].mxu0
  %v1352 = vadd.f32 0.0, %v1351
  %v1353 = vpop.f32.mrb[0].mxu0
  %1354 = vmatprep.mubr.f32.mxu0 0.0
  %1355 = vmatmul.mubr.f32.gmra.mrb[0].mxu0 %v1274
  %v1356 = vpop.f32.mrb[0].mxu0
  %v1357 = vadd.f32 0.0, %v1356
  %v1358 = vpop.f32.mrb[0].mxu0
  %1359 = vmatprep.mubr.f32.mxu0 0.0
  %1360 = vmatmul.mubr.f32.gmra.mrb[0].mxu0 %v1277
  %v1361 = vpop.f32.mrb[0].mxu0
  %v1362 = vadd.f32 0.0, %v1361
  %v1363 = vpop.f32.mrb[0].mxu0
  %1364 = vmatprep.mubr.f32.mxu0 0.0
  %1365 = vmatmul.mubr.f32.gmra.mrb[0].mxu0 %v1280
  %v1366 = vpop.f32.mrb[0].mxu0
  %v1367 = vadd.f32 0.0, %v1366
  %v1368 = vpop.f32.mrb[0].mxu0
  %1369 = vmatprep.mubr.f32.mxu0 0.0
  %1370 = vmatmul.mubr.f32.gmra.mrb[0].mxu0 %v1283
  %v1371 = vpop.f32.mrb[0].mxu0
  %v1372 = vadd.f32 0.0, %v1371
  %v1373 = vpop.f32.mrb[0].mxu0
  %1374 = vdwg.mxu0
  %v1375 = vtanh.pop %v1352
  %v1376 = vtanh.pop %v1357
  %v1377 = vtanh.pop %v1362
  %v1378 = vtanh.pop %v1367
  %v1379 = vtanh.pop %v1372
  %v1380 = vadd.f32 %v1254, %v1375
  %v1381 = vadd.f32 %v1255, %v1376
  %v1382 = vadd.f32 %v1256, %v1377
  %v1383 = vadd.f32 %v1257, %v1378
  %v1384 = vadd.f32 %v1258, %v1379
  %s1385 = scalar_lea.vmem %s3, 360
  %1386 = vst.msk [vmem:[%s1385] sm:$0xff] %vm135, %v1380
  %1387 = vst.msk [vmem:[%s1385 + $0x8] sm:$0xff] %vm135, %v1381
  %1388 = vst.msk [vmem:[%s1385 + $0x10] sm:$0xff] %vm135, %v1382
  %1389 = vst.msk [vmem:[%s1385 + $0x18] sm:$0xff] %vm135, %v1383
  %1390 = vst.msk [vmem:[%s1385 + $0x20] sm:$0x3] %vm255, %v1384
  %s1391 = scalar_lea.vmem %s2, 320
  %v1392 = vld [vmem:[%s1391] sm:$0xff]
  %v1393 = vld [vmem:[%s1391 + $0x8] sm:$0xff]
  %v1394 = vld [vmem:[%s1391 + $0x10] sm:$0xff]
  %v1395 = vld [vmem:[%s1391 + $0x18] sm:$0xff]
  %v1397 = vsel %vm135, %v1380, 0
  %v1400 = vsel %vm135, %v1381, 0
  %v1403 = vsel %vm135, %v1382, 0
  %v1406 = vsel %vm135, %v1383, 0
  %v1409 = vsel %vm135, %v1384, 0
  %1411 = vmatprep.subr.mxu0 0.0
  %1412 = vmatpush1.msra.mxu0 %v1392
  %1413 = vmatprep.subr.mxu0 0.0
  %1414 = vmatpush1.msra.mxu0 %v1393
  %1415 = vmatprep.subr.mxu0 0.0
  %1416 = vmatpush1.msra.mxu0 %v1394
  %1417 = vmatprep.subr.mxu0 0.0
  %1418 = vmatpush1.msra.mxu0 %v1395
  %1419 = vmatprep.subr.mxu0 0.0
  %1420 = vmatpush1.msra.mxu0 0.0
  %1421 = vmatprep.subr.mxu0 0.0
  %1422 = vmatpush1.msra.mxu0 0.0
  %1423 = vmatprep.subr.mxu0 0.0
  %1424 = vmatpush1.msra.mxu0 0.0
  %1425 = vmatprep.subr.mxu0 0.0
  %1426 = vmatpush1.msra.mxu0 0.0
  %1427 = vmatprep.subr.mxu0 0.0
  %1428 = vmatpush1.msra.mxu0 0.0
  %1429 = vmatprep.subr.mxu0 0.0
  %1430 = vmatpush1.msra.mxu0 0.0
  %1431 = vmatprep.subr.mxu0 0.0
  %1432 = vmatpush1.msra.mxu0 0.0
  %1433 = vmatprep.subr.mxu0 0.0
  %1434 = vmatpush1.msra.mxu0 0.0
  %1435 = vmatprep.subr.mxu0 0.0
  %1436 = vmatpush1.msra.mxu0 0.0
  %1437 = vmatprep.subr.mxu0 0.0
  %1438 = vmatpush1.msra.mxu0 0.0
  %1439 = vmatprep.subr.mxu0 0.0
  %1440 = vmatpush1.msra.mxu0 0.0
  %1441 = vmatprep.subr.mxu0 0.0
  %1442 = vmatpush1.msra.mxu0 0.0
  %1443 = vmatprep.subr.mxu0 0.0
  %1444 = vmatpush1.msra.mxu0 0.0
  %1445 = vmatprep.subr.mxu0 0.0
  %1446 = vmatpush1.msra.mxu0 0.0
  %1447 = vmatprep.subr.mxu0 0.0
  %1448 = vmatpush1.msra.mxu0 0.0
  %1449 = vmatprep.subr.mxu0 0.0
  %1450 = vmatpush1.msra.mxu0 0.0
  %1451 = vmatprep.subr.mxu0 0.0
  %1452 = vmatpush1.msra.mxu0 0.0
  %1453 = vmatprep.subr.mxu0 0.0
  %1454 = vmatpush1.msra.mxu0 0.0
  %1455 = vmatprep.subr.mxu0 0.0
  %1456 = vmatpush1.msra.mxu0 0.0
  %1457 = vmatprep.subr.mxu0 0.0
  %1458 = vmatpush1.msra.mxu0 0.0
  %1459 = vmatprep.subr.mxu0 0.0
  %1460 = vmatpush1.msra.mxu0 0.0
  %1461 = vmatprep.subr.mxu0 0.0
  %1462 = vmatpush1.msra.mxu0 0.0
  %1463 = vmatprep.subr.mxu0 0.0
  %1464 = vmatpush1.msra.mxu0 0.0
  %1465 = vmatprep.subr.mxu0 0.0
  %1466 = vmatpush1.msra.mxu0 0.0
  %1467 = vmatprep.subr.mxu0 0.0
  %1468 = vmatpush1.msra.mxu0 0.0
  %1469 = vmatprep.subr.mxu0 0.0
  %1470 = vmatpush1.msra.mxu0 0.0
  %1471 = vmatprep.subr.mxu0 0.0
  %1472 = vmatpush1.msra.mxu0 0.0
  %1473 = vmatprep.subr.mxu0 0.0
  %1474 = vmatpush1.msra.mxu0 0.0
  %1475 = vmatprep.mubr.f32.mxu0 0.0
  %1476 = vmatmul.mubr.f32.gmra.mrb[0].mxu0 %v1397
  %v1477 = vpop.f32.mrb[0].mxu0
  %v1478 = vadd.f32 0.0, %v1477
  %v1479 = vpop.f32.mrb[0].mxu0
  %1480 = vmatprep.mubr.f32.mxu0 0.0
  %1481 = vmatmul.mubr.f32.gmra.mrb[0].mxu0 %v1400
  %v1482 = vpop.f32.mrb[0].mxu0
  %v1483 = vadd.f32 0.0, %v1482
  %v1484 = vpop.f32.mrb[0].mxu0
  %1485 = vmatprep.mubr.f32.mxu0 0.0
  %1486 = vmatmul.mubr.f32.gmra.mrb[0].mxu0 %v1403
  %v1487 = vpop.f32.mrb[0].mxu0
  %v1488 = vadd.f32 0.0, %v1487
  %v1489 = vpop.f32.mrb[0].mxu0
  %1490 = vmatprep.mubr.f32.mxu0 0.0
  %1491 = vmatmul.mubr.f32.gmra.mrb[0].mxu0 %v1406
  %v1492 = vpop.f32.mrb[0].mxu0
  %v1493 = vadd.f32 0.0, %v1492
  %v1494 = vpop.f32.mrb[0].mxu0
  %1495 = vmatprep.mubr.f32.mxu0 0.0
  %1496 = vmatmul.mubr.f32.gmra.mrb[0].mxu0 %v1409
  %v1497 = vpop.f32.mrb[0].mxu0
  %v1498 = vadd.f32 0.0, %v1497
  %v1499 = vpop.f32.mrb[0].mxu0
  %1500 = vdwg.mxu0
  %v1501 = vtanh.pop %v1478
  %v1502 = vtanh.pop %v1483
  %v1503 = vtanh.pop %v1488
  %v1504 = vtanh.pop %v1493
  %v1505 = vtanh.pop %v1498
  %v1506 = vadd.f32 %v1380, %v1501
  %v1507 = vadd.f32 %v1381, %v1502
  %v1508 = vadd.f32 %v1382, %v1503
  %v1509 = vadd.f32 %v1383, %v1504
  %v1510 = vadd.f32 %v1384, %v1505
  %s1511 = scalar_lea.vmem %s3, 400
  %1512 = vst.msk [vmem:[%s1511] sm:$0xff] %vm135, %v1506
  %1513 = vst.msk [vmem:[%s1511 + $0x8] sm:$0xff] %vm135, %v1507
  %1514 = vst.msk [vmem:[%s1511 + $0x10] sm:$0xff] %vm135, %v1508
  %1515 = vst.msk [vmem:[%s1511 + $0x18] sm:$0xff] %vm135, %v1509
  %1516 = vst.msk [vmem:[%s1511 + $0x20] sm:$0x3] %vm255, %v1510
  %s1517 = scalar_lea.vmem %s2, 352
  %v1518 = vld [vmem:[%s1517] sm:$0xff]
  %v1519 = vld [vmem:[%s1517 + $0x8] sm:$0xff]
  %v1520 = vld [vmem:[%s1517 + $0x10] sm:$0xff]
  %v1521 = vld [vmem:[%s1517 + $0x18] sm:$0xff]
  %v1523 = vsel %vm135, %v1506, 0
  %v1526 = vsel %vm135, %v1507, 0
  %v1529 = vsel %vm135, %v1508, 0
  %v1532 = vsel %vm135, %v1509, 0
  %v1535 = vsel %vm135, %v1510, 0
  %1537 = vmatprep.subr.mxu0 0.0
  %1538 = vmatpush1.msra.mxu0 %v1518
  %1539 = vmatprep.subr.mxu0 0.0
  %1540 = vmatpush1.msra.mxu0 %v1519
  %1541 = vmatprep.subr.mxu0 0.0
  %1542 = vmatpush1.msra.mxu0 %v1520
  %1543 = vmatprep.subr.mxu0 0.0
  %1544 = vmatpush1.msra.mxu0 %v1521
  %1545 = vmatprep.subr.mxu0 0.0
  %1546 = vmatpush1.msra.mxu0 0.0
  %1547 = vmatprep.subr.mxu0 0.0
  %1548 = vmatpush1.msra.mxu0 0.0
  %1549 = vmatprep.subr.mxu0 0.0
  %1550 = vmatpush1.msra.mxu0 0.0
  %1551 = vmatprep.subr.mxu0 0.0
  %1552 = vmatpush1.msra.mxu0 0.0
  %1553 = vmatprep.subr.mxu0 0.0
  %1554 = vmatpush1.msra.mxu0 0.0
  %1555 = vmatprep.subr.mxu0 0.0
  %1556 = vmatpush1.msra.mxu0 0.0
  %1557 = vmatprep.subr.mxu0 0.0
  %1558 = vmatpush1.msra.mxu0 0.0
  %1559 = vmatprep.subr.mxu0 0.0
  %1560 = vmatpush1.msra.mxu0 0.0
  %1561 = vmatprep.subr.mxu0 0.0
  %1562 = vmatpush1.msra.mxu0 0.0
  %1563 = vmatprep.subr.mxu0 0.0
  %1564 = vmatpush1.msra.mxu0 0.0
  %1565 = vmatprep.subr.mxu0 0.0
  %1566 = vmatpush1.msra.mxu0 0.0
  %1567 = vmatprep.subr.mxu0 0.0
  %1568 = vmatpush1.msra.mxu0 0.0
  %1569 = vmatprep.subr.mxu0 0.0
  %1570 = vmatpush1.msra.mxu0 0.0
  %1571 = vmatprep.subr.mxu0 0.0
  %1572 = vmatpush1.msra.mxu0 0.0
  %1573 = vmatprep.subr.mxu0 0.0
  %1574 = vmatpush1.msra.mxu0 0.0
  %1575 = vmatprep.subr.mxu0 0.0
  %1576 = vmatpush1.msra.mxu0 0.0
  %1577 = vmatprep.subr.mxu0 0.0
  %1578 = vmatpush1.msra.mxu0 0.0
  %1579 = vmatprep.subr.mxu0 0.0
  %1580 = vmatpush1.msra.mxu0 0.0
  %1581 = vmatprep.subr.mxu0 0.0
  %1582 = vmatpush1.msra.mxu0 0.0
  %1583 = vmatprep.subr.mxu0 0.0
  %1584 = vmatpush1.msra.mxu0 0.0
  %1585 = vmatprep.subr.mxu0 0.0
  %1586 = vmatpush1.msra.mxu0 0.0
  %1587 = vmatprep.subr.mxu0 0.0
  %1588 = vmatpush1.msra.mxu0 0.0
  %1589 = vmatprep.subr.mxu0 0.0
  %1590 = vmatpush1.msra.mxu0 0.0
  %1591 = vmatprep.subr.mxu0 0.0
  %1592 = vmatpush1.msra.mxu0 0.0
  %1593 = vmatprep.subr.mxu0 0.0
  %1594 = vmatpush1.msra.mxu0 0.0
  %1595 = vmatprep.subr.mxu0 0.0
  %1596 = vmatpush1.msra.mxu0 0.0
  %1597 = vmatprep.subr.mxu0 0.0
  %1598 = vmatpush1.msra.mxu0 0.0
  %1599 = vmatprep.subr.mxu0 0.0
  %1600 = vmatpush1.msra.mxu0 0.0
  %1601 = vmatprep.mubr.f32.mxu0 0.0
  %1602 = vmatmul.mubr.f32.gmra.mrb[0].mxu0 %v1523
  %v1603 = vpop.f32.mrb[0].mxu0
  %v1604 = vadd.f32 0.0, %v1603
  %v1605 = vpop.f32.mrb[0].mxu0
  %1606 = vmatprep.mubr.f32.mxu0 0.0
  %1607 = vmatmul.mubr.f32.gmra.mrb[0].mxu0 %v1526
  %v1608 = vpop.f32.mrb[0].mxu0
  %v1609 = vadd.f32 0.0, %v1608
  %v1610 = vpop.f32.mrb[0].mxu0
  %1611 = vmatprep.mubr.f32.mxu0 0.0
  %1612 = vmatmul.mubr.f32.gmra.mrb[0].mxu0 %v1529
  %v1613 = vpop.f32.mrb[0].mxu0
  %v1614 = vadd.f32 0.0, %v1613
  %v1615 = vpop.f32.mrb[0].mxu0
  %1616 = vmatprep.mubr.f32.mxu0 0.0
  %1617 = vmatmul.mubr.f32.gmra.mrb[0].mxu0 %v1532
  %v1618 = vpop.f32.mrb[0].mxu0
  %v1619 = vadd.f32 0.0, %v1618
  %v1620 = vpop.f32.mrb[0].mxu0
  %1621 = vmatprep.mubr.f32.mxu0 0.0
  %1622 = vmatmul.mubr.f32.gmra.mrb[0].mxu0 %v1535
  %v1623 = vpop.f32.mrb[0].mxu0
  %v1624 = vadd.f32 0.0, %v1623
  %v1625 = vpop.f32.mrb[0].mxu0
  %1626 = vdwg.mxu0
  %v1627 = vtanh.pop %v1604
  %v1628 = vtanh.pop %v1609
  %v1629 = vtanh.pop %v1614
  %v1630 = vtanh.pop %v1619
  %v1631 = vtanh.pop %v1624
  %v1632 = vadd.f32 %v1506, %v1627
  %v1633 = vadd.f32 %v1507, %v1628
  %v1634 = vadd.f32 %v1508, %v1629
  %v1635 = vadd.f32 %v1509, %v1630
  %v1636 = vadd.f32 %v1510, %v1631
  %s1637 = scalar_lea.vmem %s3, 440
  %1638 = vst.msk [vmem:[%s1637] sm:$0xff] %vm135, %v1632
  %1639 = vst.msk [vmem:[%s1637 + $0x8] sm:$0xff] %vm135, %v1633
  %1640 = vst.msk [vmem:[%s1637 + $0x10] sm:$0xff] %vm135, %v1634
  %1641 = vst.msk [vmem:[%s1637 + $0x18] sm:$0xff] %vm135, %v1635
  %1642 = vst.msk [vmem:[%s1637 + $0x20] sm:$0x3] %vm255, %v1636
  // Predicated region
  $region14: #{forward.4} parent=0 // pred_check
    _
  $region15: #{forward.4} parent=0 // pred_check_branch
    %1644 = sbr.rel (0) target = $region17
  $region16: #{forward.4} parent=0 // pred_region
    _
  $region17: #{forward.4} parent=0 // pred_fallthru
    _
  // Predicated region
  $region18: #{forward.4} parent=0 // pred_check
    _
  $region19: #{forward.4} parent=0 // pred_check_branch
    %1646 = sbr.rel (0) target = $region21
  $region20: #{forward.4} parent=0 // pred_region
    _
  $region21: #{forward.4} parent=0 // pred_fallthru
    _

// kernel: squeeze.5
$region0: #{squeeze.5}
  %s0 = inlined_call_operand.vmem [shape: f32[2,256], index: 0, kind: input, shape index: {}]
  %s1 = inlined_call_operand.hbm [shape: f32[2,1,16,16], index: 1, kind: output, shape index: {}]
  $region1: #{squeeze.5} parent=0
    #allocation0 [shape = 'u8[16384]{0}', space=vmem, size = 0x4000, scoped, tag = 'operand span for operand 1']
    #allocation1 [shape = 's32[1]{0}', space=sflag, size = 0x4, scoped, tag = 'scoped memory for squeeze.5']
    #allocation2 [shape = 'u8[8192]{0}', space=vmem, size = 0x2000, scoped, tag = 'scoped mem for input reshape']
    %2 = vsyncpa [#allocation1], 0
    %s4 = sshllo.u32 0, 2
    %s5 = scalar_lea.vmem %s0, 2
    %v6 = vld [vmem:[%s5] sm:%s4]
    %s7 = scalar_lea.vmem [#allocation2], 8
    %8 = vst [vmem:[%s7] sm:%s4] %v6
    %v9 = vld [vmem:[%s0] sm:%s4]
    %10 = vst [vmem:[#allocation2] sm:%s4] %v9
    %v11 = vld [vmem:[#allocation2] sm:$0x3]
    %vm12 = vcmask 130048
    %13 = vst.msk [vmem:[#allocation0] ss:$16 sm:$0x3] %vm12, %v11
    %s14 = scalar_lea.vmem [#allocation2], 8
    %v15 = vld [vmem:[%s14] sm:$0x3]
    %vm16 = vcmask 130048
    %s17 = scalar_lea.vmem [#allocation0], 8
    %18 = vst.msk [vmem:[%s17] ss:$16 sm:$0x3] %vm16, %v15
    %v19 = vld.sshfl [vmem:[#allocation2] sm:$0xff pattern:$0x99999180]
    %20 = vrot.lane.b32.xlu0 %v19, 112
    %v21 = vpop.permute.xlu0 %20
    %vm22 = vcmask 130048
    %s23 = scalar_lea.vmem [#allocation0], 1
    %24 = vst.msk [vmem:[%s23] ss:$8 sm:$0xf] %vm22, %v21
    %v25 = vld.sshfl [vmem:[#allocation2] sm:$0xff pattern:$0x99999180]
    %26 = vrot.lane.b32.xlu0 %v25, 96
    %v27 = vpop.permute.xlu0 %26
    %vm28 = vcmask 130048
    %s29 = scalar_lea.vmem [#allocation0], 2
    %30 = vst.msk [vmem:[%s29] ss:$8 sm:$0xf] %vm28, %v27
    %v31 = vld.sshfl [vmem:[#allocation2] sm:$0xff pattern:$0x99999180]
    %32 = vrot.lane.b32.xlu0 %v31, 80
    %v33 = vpop.permute.xlu0 %32
    %vm34 = vcmask 130048
    %s35 = scalar_lea.vmem [#allocation0], 3
    %36 = vst.msk [vmem:[%s35] ss:$8 sm:$0xf] %vm34, %v33
    %v37 = vld.sshfl [vmem:[#allocation2] sm:$0xff pattern:$0x99999180]
    %38 = vrot.lane.b32.xlu0 %v37, 64
    %v39 = vpop.permute.xlu0 %38
    %vm40 = vcmask 130048
    %s41 = scalar_lea.vmem [#allocation0], 4
    %42 = vst.msk [vmem:[%s41] ss:$8 sm:$0xf] %vm40, %v39
    %v43 = vld.sshfl [vmem:[#allocation2] sm:$0xff pattern:$0x99999180]
    %44 = vrot.lane.b32.xlu0 %v43, 48
    %v45 = vpop.permute.xlu0 %44
    %vm46 = vcmask 130048
    %s47 = scalar_lea.vmem [#allocation0], 5
    %48 = vst.msk [vmem:[%s47] ss:$8 sm:$0xf] %vm46, %v45
    %v49 = vld.sshfl [vmem:[#allocation2] sm:$0xff pattern:$0x99999180]
    %50 = vrot.lane.b32.xlu0 %v49, 32
    %v51 = vpop.permute.xlu0 %50
    %vm52 = vcmask 130048
    %s53 = scalar_lea.vmem [#allocation0], 6
    %54 = vst.msk [vmem:[%s53] ss:$8 sm:$0xf] %vm52, %v51
    %v55 = vld.sshfl [vmem:[#allocation2] sm:$0xff pattern:$0x99999180]
    %56 = vrot.lane.b32.xlu0 %v55, 16
    %v57 = vpop.permute.xlu0 %56
    %vm58 = vcmask 130048
    %s59 = scalar_lea.vmem [#allocation0], 7
    %60 = vst.msk [vmem:[%s59] ss:$8 sm:$0xf] %vm58, %v57
    %s62 = ssub.s32 512, 512
    %63 = vsyncadd [#allocation1], %s62
    %s65 = sshll.u32 [#allocation0], 4
    %s66 = int_to_ptr.vmem [resolvable:$true] %s65
    %68 = dma.vmem_to_hbm [thread:$0]  %s66, 512, %s1, [#allocation1]
    %69 = dma.done [#allocation1], 512
    %70 = vsyncpa [#allocation1], 1

// kernel: forward.7
$region0: #{forward.7}
  #allocation0 [shape = 'u32[]', space=smem, size = 0x4, offset = 0x4, fixed_abs, tag = 'smem constant byte address 0x4 - core index']
  #allocation1 [shape = 'u32[144,128]{1,0:T(1,128)}', space=vmem, size = 0x12000, scoped, tag = 'internal scratch']
  %s0 = inlined_call_operand.vmem [shape: f32[5,2,16,32], index: 0, kind: input, shape index: {}]
  %s1 = inlined_call_operand.vmem [shape: f32[5,2,9,32], index: 1, kind: input, shape index: {}]
  %s2 = inlined_call_operand.vmem [shape: f32[2,16,32], index: 2, kind: input, shape index: {}]
  %s3 = inlined_call_operand.vmem [shape: f32[2,9,256], index: 3, kind: input, shape index: {}]
  %s4 = inlined_call_operand.vmem [shape: f32[16,256], index: 4, kind: input, shape index: {}]
  %s5 = inlined_call_operand.vmem [shape: f32[3,32], index: 5, kind: input, shape index: {}]
  %s6 = inlined_call_operand.vmem [shape: f32[2,32], index: 6, kind: input, shape index: {}]
  %s7 = inlined_call_operand.vmem [shape: f32[2,5,256], index: 7, kind: output, shape index: {}]
  %s8 = sld [smem:[#allocation0]]
  $region38: #{forward.7} parent=0
    _
  %s10 = ssub.s32 1, %s8
  %s11 = scalar_select 0, %s10, %s8
  // Predicated region
  $region2: #{forward.7} parent=0 // pred_check
    _
  $region3: #{forward.7} parent=0 // pred_check_branch
    %13 = sbr.rel (0) target = $region5
  $region4: #{forward.7} parent=0 // pred_region
    _
  $region5: #{forward.7} parent=0 // pred_fallthru
    _
  // Predicated region
  $region6: #{forward.7} parent=0 // pred_check
    _
  $region7: #{forward.7} parent=0 // pred_check_branch
    %15 = sbr.rel (0) target = $region9
  $region8: #{forward.7} parent=0 // pred_region
    _
  $region9: #{forward.7} parent=0 // pred_fallthru
    _
  // Predicated region
  $region10: #{forward.7} parent=0 // pred_check
    _
  $region11: #{forward.7} parent=0 // pred_check_branch
    %17 = sbr.rel (0) target = $region13
  $region12: #{forward.7} parent=0 // pred_region
    _
  $region13: #{forward.7} parent=0 // pred_fallthru
    _
  // Predicated region
  $region14: #{forward.7} parent=0 // pred_check
    _
  $region15: #{forward.7} parent=0 // pred_check_branch
    %19 = sbr.rel (0) target = $region17
  $region16: #{forward.7} parent=0 // pred_region
    _
  $region17: #{forward.7} parent=0 // pred_fallthru
    _
  // Predicated region
  $region18: #{forward.7} parent=0 // pred_check
    _
  $region19: #{forward.7} parent=0 // pred_check_branch
    %21 = sbr.rel (0) target = $region21
  $region20: #{forward.7} parent=0 // pred_region
    _
  $region21: #{forward.7} parent=0 // pred_fallthru
    _
  // Predicated region
  $region22: #{forward.7} parent=0 // pred_check
    _
  $region23: #{forward.7} parent=0 // pred_check_branch
    %23 = sbr.rel (0) target = $region25
  $region24: #{forward.7} parent=0 // pred_region
    _
  $region25: #{forward.7} parent=0 // pred_fallthru
    _
  // Predicated region
  $region26: #{forward.7} parent=0 // pred_check
    _
  $region27: #{forward.7} parent=0 // pred_check_branch
    %25 = sbr.rel (0) target = $region29
  $region28: #{forward.7} parent=0 // pred_region
    _
  $region29: #{forward.7} parent=0 // pred_fallthru
    _
  %v26 = vld [vmem:[%s4] sm:$0xff]
  %v27 = vld [vmem:[%s4 + $0x8] sm:$0xff]
  %v28 = vld [vmem:[%s4 + $0x10] sm:$0xff]
  %v29 = vld [vmem:[%s4 + $0x18] sm:$0xff]
  %v30 = vld [vmem:[%s0] sm:$0xff]
  %v31 = vld [vmem:[%s0 + $0x8] sm:$0xff]
  %v32 = vld [vmem:[%s1] sm:$0xff]
  %v33 = vld [vmem:[%s1 + $0x8] sm:$0x1]
  %s34 = scalar_lea.vmem %s0, 32
  %v35 = vld [vmem:[%s34] sm:$0xff]
  %v36 = vld [vmem:[%s34 + $0x8] sm:$0xff]
  %v37 = vadd.f32 %v30, %v35
  %v38 = vadd.f32 %v31, %v36
  %s39 = scalar_lea.vmem %s1, 32
  %v40 = vld [vmem:[%s39] sm:$0xff]
  %v41 = vld [vmem:[%s39 + $0x8] sm:$0x1]
  %v42 = vadd.f32 %v32, %v40
  %v43 = vadd.f32 %v33, %v41
  %s44 = scalar_lea.vmem %s0, 64
  %v45 = vld [vmem:[%s44] sm:$0xff]
  %v46 = vld [vmem:[%s44 + $0x8] sm:$0xff]
  %v47 = vadd.f32 %v37, %v45
  %v48 = vadd.f32 %v38, %v46
  %s49 = scalar_lea.vmem %s1, 64
  %v50 = vld [vmem:[%s49] sm:$0xff]
  %v51 = vld [vmem:[%s49 + $0x8] sm:$0x1]
  %v52 = vadd.f32 %v42, %v50
  %v53 = vadd.f32 %v43, %v51
  %s54 = scalar_lea.vmem %s0, 96
  %v55 = vld [vmem:[%s54] sm:$0xff]
  %v56 = vld [vmem:[%s54 + $0x8] sm:$0xff]
  %v57 = vadd.f32 %v47, %v55
  %v58 = vadd.f32 %v48, %v56
  %s59 = scalar_lea.vmem %s1, 96
  %v60 = vld [vmem:[%s59] sm:$0xff]
  %v61 = vld [vmem:[%s59 + $0x8] sm:$0x1]
  %v62 = vadd.f32 %v52, %v60
  %v63 = vadd.f32 %v53, %v61
  %s64 = scalar_lea.vmem %s0, 128
  %v65 = vld [vmem:[%s64] sm:$0xff]
  %v66 = vld [vmem:[%s64 + $0x8] sm:$0xff]
  %v67 = vadd.f32 %v57, %v65
  %v68 = vadd.f32 %v58, %v66
  %s69 = scalar_lea.vmem %s1, 128
  %v70 = vld [vmem:[%s69] sm:$0xff]
  %v71 = vld [vmem:[%s69 + $0x8] sm:$0x1]
  %v72 = vadd.f32 %v62, %v70
  %v73 = vadd.f32 %v63, %v71
  %v74 = vmul.f32 %v67, 0.2
  %v75 = vmul.f32 %v68, 0.2
  %v76 = vmul.f32 %v72, 0.2
  %v77 = vmul.f32 %v73, 0.2
  %v78 = vld [vmem:[%s2] sm:$0xff]
  %v79 = vld [vmem:[%s2 + $0x8] sm:$0xff]
  %v80 = vadd.f32 %v78, %v74
  %v81 = vadd.f32 %v79, %v75
  %v82 = vld [vmem:[%s3] sm:$0xff]
  %v83 = vld [vmem:[%s3 + $0x8] sm:$0xff]
  %v84 = vld [vmem:[%s3 + $0x10] sm:$0x1]
  %v85 = vld [vmem:[%s3 + $0x18] sm:$0x1]
  %v86 = vld [vmem:[%s5] sm:$0x1]
  %vm87 = vcmask 261120
  %v89 = vsel %vm87, %v86, 0
  %v92 = vsel %vm87, %v80, 0
  %v95 = vsel %vm87, %v81, 0
  %97 = vmatprep.subr.mxu0 0.0
  %98 = vmatpush1.xpose.msra.mxu0 %v92
  %99 = vmatprep.subr.mxu0 0.0
  %100 = vmatpush1.xpose.msra.mxu0 %v95
  %101 = vmatprep.subr.mxu0 0.0
  %102 = vmatpush1.xpose.msra.mxu0 0.0
  %103 = vmatprep.subr.mxu0 0.0
  %104 = vmatpush1.xpose.msra.mxu0 0.0
  %105 = vmatprep.subr.mxu0 0.0
  %106 = vmatpush1.xpose.msra.mxu0 0.0
  %107 = vmatprep.subr.mxu0 0.0
  %108 = vmatpush1.xpose.msra.mxu0 0.0
  %109 = vmatprep.subr.mxu0 0.0
  %110 = vmatpush1.xpose.msra.mxu0 0.0
  %111 = vmatprep.subr.mxu0 0.0
  %112 = vmatpush1.xpose.msra.mxu0 0.0
  %113 = vmatprep.subr.mxu0 0.0
  %114 = vmatpush1.xpose.msra.mxu0 0.0
  %115 = vmatprep.subr.mxu0 0.0
  %116 = vmatpush1.xpose.msra.mxu0 0.0
  %117 = vmatprep.subr.mxu0 0.0
  %118 = vmatpush1.xpose.msra.mxu0 0.0
  %119 = vmatprep.subr.mxu0 0.0
  %120 = vmatpush1.xpose.msra.mxu0 0.0
  %121 = vmatprep.subr.mxu0 0.0
  %122 = vmatpush1.xpose.msra.mxu0 0.0
  %123 = vmatprep.subr.mxu0 0.0
  %124 = vmatpush1.xpose.msra.mxu0 0.0
  %125 = vmatprep.subr.mxu0 0.0
  %126 = vmatpush1.xpose.msra.mxu0 0.0
  %127 = vmatprep.subr.mxu0 0.0
  %128 = vmatpush1.xpose.msra.mxu0 0.0
  %129 = vmatprep.subr.mxu0 0.0
  %130 = vmatpush1.xpose.msra.mxu0 0.0
  %131 = vmatprep.subr.mxu0 0.0
  %132 = vmatpush1.xpose.msra.mxu0 0.0
  %133 = vmatprep.subr.mxu0 0.0
  %134 = vmatpush1.xpose.msra.mxu0 0.0
  %135 = vmatprep.subr.mxu0 0.0
  %136 = vmatpush1.xpose.msra.mxu0 0.0
  %137 = vmatprep.subr.mxu0 0.0
  %138 = vmatpush1.xpose.msra.mxu0 0.0
  %139 = vmatprep.subr.mxu0 0.0
  %140 = vmatpush1.xpose.msra.mxu0 0.0
  %141 = vmatprep.subr.mxu0 0.0
  %142 = vmatpush1.xpose.msra.mxu0 0.0
  %143 = vmatprep.subr.mxu0 0.0
  %144 = vmatpush1.xpose.msra.mxu0 0.0
  %145 = vmatprep.subr.mxu0 0.0
  %146 = vmatpush1.xpose.msra.mxu0 0.0
  %147 = vmatprep.subr.mxu0 0.0
  %148 = vmatpush1.xpose.msra.mxu0 0.0
  %149 = vmatprep.subr.mxu0 0.0
  %150 = vmatpush1.xpose.msra.mxu0 0.0
  %151 = vmatprep.subr.mxu0 0.0
  %152 = vmatpush1.xpose.msra.mxu0 0.0
  %153 = vmatprep.subr.mxu0 0.0
  %154 = vmatpush1.xpose.msra.mxu0 0.0
  %155 = vmatprep.subr.mxu0 0.0
  %156 = vmatpush1.xpose.msra.mxu0 0.0
  %157 = vmatprep.subr.mxu0 0.0
  %158 = vmatpush1.xpose.msra.mxu0 0.0
  %159 = vmatprep.subr.mxu0 0.0
  %160 = vmatpush1.xpose.msra.mxu0 0.0
  %161 = vmatprep.mubr.f32.mxu0 0.0
  %162 = vmatmul.mubr.f32.gmra.mrb[0].mxu0 %v89
  %v163 = vpop.f32.mrb[0].mxu0
  %v164 = vadd.f32 0.0, %v163
  %v165 = vpop.f32.mrb[0].mxu0
  %166 = vdwg.mxu0
  %v167 = vxor.u32 %v164, 2147483648
  %v168 = vmul.f32 %v167, 1.442695
  %v169 = vpow.pop %v168
  %v170 = vadd.f32 %v169, 1.0
  %v171 = vrcp.pop %v170
  %v172 = vmul.f32 1.0, %v171
  %v173 = vld [vmem:[%s5 + $0x1] sm:$0x1]
  %v175 = vsel %vm87, %v173, 0
  %v178 = vsel %vm87, %v74, 0
  %v181 = vsel %vm87, %v75, 0
  %183 = vmatprep.subr.mxu0 0.0
  %184 = vmatpush1.xpose.msra.mxu0 %v178
  %185 = vmatprep.subr.mxu0 0.0
  %186 = vmatpush1.xpose.msra.mxu0 %v181
  %187 = vmatprep.subr.mxu0 0.0
  %188 = vmatpush1.xpose.msra.mxu0 0.0
  %189 = vmatprep.subr.mxu0 0.0
  %190 = vmatpush1.xpose.msra.mxu0 0.0
  %191 = vmatprep.subr.mxu0 0.0
  %192 = vmatpush1.xpose.msra.mxu0 0.0
  %193 = vmatprep.subr.mxu0 0.0
  %194 = vmatpush1.xpose.msra.mxu0 0.0
  %195 = vmatprep.subr.mxu0 0.0
  %196 = vmatpush1.xpose.msra.mxu0 0.0
  %197 = vmatprep.subr.mxu0 0.0
  %198 = vmatpush1.xpose.msra.mxu0 0.0
  %199 = vmatprep.subr.mxu0 0.0
  %200 = vmatpush1.xpose.msra.mxu0 0.0
  %201 = vmatprep.subr.mxu0 0.0
  %202 = vmatpush1.xpose.msra.mxu0 0.0
  %203 = vmatprep.subr.mxu0 0.0
  %204 = vmatpush1.xpose.msra.mxu0 0.0
  %205 = vmatprep.subr.mxu0 0.0
  %206 = vmatpush1.xpose.msra.mxu0 0.0
  %207 = vmatprep.subr.mxu0 0.0
  %208 = vmatpush1.xpose.msra.mxu0 0.0
  %209 = vmatprep.subr.mxu0 0.0
  %210 = vmatpush1.xpose.msra.mxu0 0.0
  %211 = vmatprep.subr.mxu0 0.0
  %212 = vmatpush1.xpose.msra.mxu0 0.0
  %213 = vmatprep.subr.mxu0 0.0
  %214 = vmatpush1.xpose.msra.mxu0 0.0
  %215 = vmatprep.subr.mxu0 0.0
  %216 = vmatpush1.xpose.msra.mxu0 0.0
  %217 = vmatprep.subr.mxu0 0.0
  %218 = vmatpush1.xpose.msra.mxu0 0.0
  %219 = vmatprep.subr.mxu0 0.0
  %220 = vmatpush1.xpose.msra.mxu0 0.0
  %221 = vmatprep.subr.mxu0 0.0
  %222 = vmatpush1.xpose.msra.mxu0 0.0
  %223 = vmatprep.subr.mxu0 0.0
  %224 = vmatpush1.xpose.msra.mxu0 0.0
  %225 = vmatprep.subr.mxu0 0.0
  %226 = vmatpush1.xpose.msra.mxu0 0.0
  %227 = vmatprep.subr.mxu0 0.0
  %228 = vmatpush1.xpose.msra.mxu0 0.0
  %229 = vmatprep.subr.mxu0 0.0
  %230 = vmatpush1.xpose.msra.mxu0 0.0
  %231 = vmatprep.subr.mxu0 0.0
  %232 = vmatpush1.xpose.msra.mxu0 0.0
  %233 = vmatprep.subr.mxu0 0.0
  %234 = vmatpush1.xpose.msra.mxu0 0.0
  %235 = vmatprep.subr.mxu0 0.0
  %236 = vmatpush1.xpose.msra.mxu0 0.0
  %237 = vmatprep.subr.mxu0 0.0
  %238 = vmatpush1.xpose.msra.mxu0 0.0
  %239 = vmatprep.subr.mxu0 0.0
  %240 = vmatpush1.xpose.msra.mxu0 0.0
  %241 = vmatprep.subr.mxu0 0.0
  %242 = vmatpush1.xpose.msra.mxu0 0.0
  %243 = vmatprep.subr.mxu0 0.0
  %244 = vmatpush1.xpose.msra.mxu0 0.0
  %245 = vmatprep.subr.mxu0 0.0
  %246 = vmatpush1.xpose.msra.mxu0 0.0
  %247 = vmatprep.mubr.f32.mxu0 0.0
  %248 = vmatmul.mubr.f32.gmra.mrb[0].mxu0 %v175
  %v249 = vpop.f32.mrb[0].mxu0
  %v250 = vadd.f32 0.0, %v249
  %v251 = vpop.f32.mrb[0].mxu0
  %252 = vdwg.mxu0
  %v253 = vxor.u32 %v250, 2147483648
  %v254 = vmul.f32 %v253, 1.442695
  %v255 = vpow.pop %v254
  %v256 = vadd.f32 %v255, 1.0
  %v257 = vrcp.pop %v256
  %v258 = vmul.f32 1.0, %v257
  %v259 = vld [vmem:[%s5 + $0x2] sm:$0x1]
  %v261 = vsel %vm87, %v259, 0
  %v264 = vsel %vm87, %v65, 0
  %v267 = vsel %vm87, %v66, 0
  %269 = vmatprep.subr.mxu0 0.0
  %270 = vmatpush1.xpose.msra.mxu0 %v264
  %271 = vmatprep.subr.mxu0 0.0
  %272 = vmatpush1.xpose.msra.mxu0 %v267
  %273 = vmatprep.subr.mxu0 0.0
  %274 = vmatpush1.xpose.msra.mxu0 0.0
  %275 = vmatprep.subr.mxu0 0.0
  %276 = vmatpush1.xpose.msra.mxu0 0.0
  %277 = vmatprep.subr.mxu0 0.0
  %278 = vmatpush1.xpose.msra.mxu0 0.0
  %279 = vmatprep.subr.mxu0 0.0
  %280 = vmatpush1.xpose.msra.mxu0 0.0
  %281 = vmatprep.subr.mxu0 0.0
  %282 = vmatpush1.xpose.msra.mxu0 0.0
  %283 = vmatprep.subr.mxu0 0.0
  %284 = vmatpush1.xpose.msra.mxu0 0.0
  %285 = vmatprep.subr.mxu0 0.0
  %286 = vmatpush1.xpose.msra.mxu0 0.0
  %287 = vmatprep.subr.mxu0 0.0
  %288 = vmatpush1.xpose.msra.mxu0 0.0
  %289 = vmatprep.subr.mxu0 0.0
  %290 = vmatpush1.xpose.msra.mxu0 0.0
  %291 = vmatprep.subr.mxu0 0.0
  %292 = vmatpush1.xpose.msra.mxu0 0.0
  %293 = vmatprep.subr.mxu0 0.0
  %294 = vmatpush1.xpose.msra.mxu0 0.0
  %295 = vmatprep.subr.mxu0 0.0
  %296 = vmatpush1.xpose.msra.mxu0 0.0
  %297 = vmatprep.subr.mxu0 0.0
  %298 = vmatpush1.xpose.msra.mxu0 0.0
  %299 = vmatprep.subr.mxu0 0.0
  %300 = vmatpush1.xpose.msra.mxu0 0.0
  %301 = vmatprep.subr.mxu0 0.0
  %302 = vmatpush1.xpose.msra.mxu0 0.0
  %303 = vmatprep.subr.mxu0 0.0
  %304 = vmatpush1.xpose.msra.mxu0 0.0
  %305 = vmatprep.subr.mxu0 0.0
  %306 = vmatpush1.xpose.msra.mxu0 0.0
  %307 = vmatprep.subr.mxu0 0.0
  %308 = vmatpush1.xpose.msra.mxu0 0.0
  %309 = vmatprep.subr.mxu0 0.0
  %310 = vmatpush1.xpose.msra.mxu0 0.0
  %311 = vmatprep.subr.mxu0 0.0
  %312 = vmatpush1.xpose.msra.mxu0 0.0
  %313 = vmatprep.subr.mxu0 0.0
  %314 = vmatpush1.xpose.msra.mxu0 0.0
  %315 = vmatprep.subr.mxu0 0.0
  %316 = vmatpush1.xpose.msra.mxu0 0.0
  %317 = vmatprep.subr.mxu0 0.0
  %318 = vmatpush1.xpose.msra.mxu0 0.0
  %319 = vmatprep.subr.mxu0 0.0
  %320 = vmatpush1.xpose.msra.mxu0 0.0
  %321 = vmatprep.subr.mxu0 0.0
  %322 = vmatpush1.xpose.msra.mxu0 0.0
  %323 = vmatprep.subr.mxu0 0.0
  %324 = vmatpush1.xpose.msra.mxu0 0.0
  %325 = vmatprep.subr.mxu0 0.0
  %326 = vmatpush1.xpose.msra.mxu0 0.0
  %327 = vmatprep.subr.mxu0 0.0
  %328 = vmatpush1.xpose.msra.mxu0 0.0
  %329 = vmatprep.subr.mxu0 0.0
  %330 = vmatpush1.xpose.msra.mxu0 0.0
  %331 = vmatprep.subr.mxu0 0.0
  %332 = vmatpush1.xpose.msra.mxu0 0.0
  %333 = vmatprep.mubr.f32.mxu0 0.0
  %334 = vmatmul.mubr.f32.gmra.mrb[0].mxu0 %v261
  %v335 = vpop.f32.mrb[0].mxu0
  %v336 = vadd.f32 0.0, %v335
  %v337 = vpop.f32.mrb[0].mxu0
  %338 = vdwg.mxu0
  %v339 = vxor.u32 %v336, 2147483648
  %v340 = vmul.f32 %v339, 1.442695
  %v341 = vpow.pop %v340
  %v342 = vadd.f32 %v341, 1.0
  %v343 = vrcp.pop %v342
  %v344 = vmul.f32 1.0, %v343
  %v345 = vld [vmem:[%s6] sm:$0x1]
  %v347 = vsel %vm87, %v345, 0
  %v350 = vsel %vm87, %v76, 0
  %v353 = vsel %vm87, %v77, 0
  %355 = vmatprep.subr.mxu0 0.0
  %356 = vmatpush1.xpose.msra.mxu0 %v350
  %357 = vmatprep.subr.mxu0 0.0
  %358 = vmatpush1.xpose.msra.mxu0 %v353
  %359 = vmatprep.subr.mxu0 0.0
  %360 = vmatpush1.xpose.msra.mxu0 0.0
  %361 = vmatprep.subr.mxu0 0.0
  %362 = vmatpush1.xpose.msra.mxu0 0.0
  %363 = vmatprep.subr.mxu0 0.0
  %364 = vmatpush1.xpose.msra.mxu0 0.0
  %365 = vmatprep.subr.mxu0 0.0
  %366 = vmatpush1.xpose.msra.mxu0 0.0
  %367 = vmatprep.subr.mxu0 0.0
  %368 = vmatpush1.xpose.msra.mxu0 0.0
  %369 = vmatprep.subr.mxu0 0.0
  %370 = vmatpush1.xpose.msra.mxu0 0.0
  %371 = vmatprep.subr.mxu0 0.0
  %372 = vmatpush1.xpose.msra.mxu0 0.0
  %373 = vmatprep.subr.mxu0 0.0
  %374 = vmatpush1.xpose.msra.mxu0 0.0
  %375 = vmatprep.subr.mxu0 0.0
  %376 = vmatpush1.xpose.msra.mxu0 0.0
  %377 = vmatprep.subr.mxu0 0.0
  %378 = vmatpush1.xpose.msra.mxu0 0.0
  %379 = vmatprep.subr.mxu0 0.0
  %380 = vmatpush1.xpose.msra.mxu0 0.0
  %381 = vmatprep.subr.mxu0 0.0
  %382 = vmatpush1.xpose.msra.mxu0 0.0
  %383 = vmatprep.subr.mxu0 0.0
  %384 = vmatpush1.xpose.msra.mxu0 0.0
  %385 = vmatprep.subr.mxu0 0.0
  %386 = vmatpush1.xpose.msra.mxu0 0.0
  %387 = vmatprep.subr.mxu0 0.0
  %388 = vmatpush1.xpose.msra.mxu0 0.0
  %389 = vmatprep.subr.mxu0 0.0
  %390 = vmatpush1.xpose.msra.mxu0 0.0
  %391 = vmatprep.subr.mxu0 0.0
  %392 = vmatpush1.xpose.msra.mxu0 0.0
  %393 = vmatprep.subr.mxu0 0.0
  %394 = vmatpush1.xpose.msra.mxu0 0.0
  %395 = vmatprep.subr.mxu0 0.0
  %396 = vmatpush1.xpose.msra.mxu0 0.0
  %397 = vmatprep.subr.mxu0 0.0
  %398 = vmatpush1.xpose.msra.mxu0 0.0
  %399 = vmatprep.subr.mxu0 0.0
  %400 = vmatpush1.xpose.msra.mxu0 0.0
  %401 = vmatprep.subr.mxu0 0.0
  %402 = vmatpush1.xpose.msra.mxu0 0.0
  %403 = vmatprep.subr.mxu0 0.0
  %404 = vmatpush1.xpose.msra.mxu0 0.0
  %405 = vmatprep.subr.mxu0 0.0
  %406 = vmatpush1.xpose.msra.mxu0 0.0
  %407 = vmatprep.subr.mxu0 0.0
  %408 = vmatpush1.xpose.msra.mxu0 0.0
  %409 = vmatprep.subr.mxu0 0.0
  %410 = vmatpush1.xpose.msra.mxu0 0.0
  %411 = vmatprep.subr.mxu0 0.0
  %412 = vmatpush1.xpose.msra.mxu0 0.0
  %413 = vmatprep.subr.mxu0 0.0
  %414 = vmatpush1.xpose.msra.mxu0 0.0
  %415 = vmatprep.subr.mxu0 0.0
  %416 = vmatpush1.xpose.msra.mxu0 0.0
  %417 = vmatprep.subr.mxu0 0.0
  %418 = vmatpush1.xpose.msra.mxu0 0.0
  %419 = vmatprep.mubr.f32.mxu0 0.0
  %420 = vmatmul.mubr.f32.gmra.mrb[0].mxu0 %v347
  %v421 = vpop.f32.mrb[0].mxu0
  %v422 = vadd.f32 0.0, %v421
  %v423 = vpop.f32.mrb[0].mxu0
  %424 = vdwg.mxu0
  %v425 = vxor.u32 %v422, 2147483648
  %v426 = vmul.f32 %v425, 1.442695
  %v427 = vpow.pop %v426
  %v428 = vadd.f32 %v427, 1.0
  %v429 = vrcp.pop %v428
  %v430 = vmul.f32 1.0, %v429
  %v431 = vld [vmem:[%s6 + $0x1] sm:$0x1]
  %v433 = vsel %vm87, %v431, 0
  %v436 = vsel %vm87, %v70, 0
  %v439 = vsel %vm87, %v71, 0
  %441 = vmatprep.subr.mxu0 0.0
  %442 = vmatpush1.xpose.msra.mxu0 %v436
  %443 = vmatprep.subr.mxu0 0.0
  %444 = vmatpush1.xpose.msra.mxu0 %v439
  %445 = vmatprep.subr.mxu0 0.0
  %446 = vmatpush1.xpose.msra.mxu0 0.0
  %447 = vmatprep.subr.mxu0 0.0
  %448 = vmatpush1.xpose.msra.mxu0 0.0
  %449 = vmatprep.subr.mxu0 0.0
  %450 = vmatpush1.xpose.msra.mxu0 0.0
  %451 = vmatprep.subr.mxu0 0.0
  %452 = vmatpush1.xpose.msra.mxu0 0.0
  %453 = vmatprep.subr.mxu0 0.0
  %454 = vmatpush1.xpose.msra.mxu0 0.0
  %455 = vmatprep.subr.mxu0 0.0
  %456 = vmatpush1.xpose.msra.mxu0 0.0
  %457 = vmatprep.subr.mxu0 0.0
  %458 = vmatpush1.xpose.msra.mxu0 0.0
  %459 = vmatprep.subr.mxu0 0.0
  %460 = vmatpush1.xpose.msra.mxu0 0.0
  %461 = vmatprep.subr.mxu0 0.0
  %462 = vmatpush1.xpose.msra.mxu0 0.0
  %463 = vmatprep.subr.mxu0 0.0
  %464 = vmatpush1.xpose.msra.mxu0 0.0
  %465 = vmatprep.subr.mxu0 0.0
  %466 = vmatpush1.xpose.msra.mxu0 0.0
  %467 = vmatprep.subr.mxu0 0.0
  %468 = vmatpush1.xpose.msra.mxu0 0.0
  %469 = vmatprep.subr.mxu0 0.0
  %470 = vmatpush1.xpose.msra.mxu0 0.0
  %471 = vmatprep.subr.mxu0 0.0
  %472 = vmatpush1.xpose.msra.mxu0 0.0
  %473 = vmatprep.subr.mxu0 0.0
  %474 = vmatpush1.xpose.msra.mxu0 0.0
  %475 = vmatprep.subr.mxu0 0.0
  %476 = vmatpush1.xpose.msra.mxu0 0.0
  %477 = vmatprep.subr.mxu0 0.0
  %478 = vmatpush1.xpose.msra.mxu0 0.0
  %479 = vmatprep.subr.mxu0 0.0
  %480 = vmatpush1.xpose.msra.mxu0 0.0
  %481 = vmatprep.subr.mxu0 0.0
  %482 = vmatpush1.xpose.msra.mxu0 0.0
  %483 = vmatprep.subr.mxu0 0.0
  %484 = vmatpush1.xpose.msra.mxu0 0.0
  %485 = vmatprep.subr.mxu0 0.0
  %486 = vmatpush1.xpose.msra.mxu0 0.0
  %487 = vmatprep.subr.mxu0 0.0
  %488 = vmatpush1.xpose.msra.mxu0 0.0
  %489 = vmatprep.subr.mxu0 0.0
  %490 = vmatpush1.xpose.msra.mxu0 0.0
  %491 = vmatprep.subr.mxu0 0.0
  %492 = vmatpush1.xpose.msra.mxu0 0.0
  %493 = vmatprep.subr.mxu0 0.0
  %494 = vmatpush1.xpose.msra.mxu0 0.0
  %495 = vmatprep.subr.mxu0 0.0
  %496 = vmatpush1.xpose.msra.mxu0 0.0
  %497 = vmatprep.subr.mxu0 0.0
  %498 = vmatpush1.xpose.msra.mxu0 0.0
  %499 = vmatprep.subr.mxu0 0.0
  %500 = vmatpush1.xpose.msra.mxu0 0.0
  %501 = vmatprep.subr.mxu0 0.0
  %502 = vmatpush1.xpose.msra.mxu0 0.0
  %503 = vmatprep.subr.mxu0 0.0
  %504 = vmatpush1.xpose.msra.mxu0 0.0
  %505 = vmatprep.mubr.f32.mxu0 0.0
  %506 = vmatmul.mubr.f32.gmra.mrb[0].mxu0 %v433
  %v507 = vpop.f32.mrb[0].mxu0
  %v508 = vadd.f32 0.0, %v507
  %v509 = vpop.f32.mrb[0].mxu0
  %510 = vdwg.mxu0
  %v511 = vxor.u32 %v508, 2147483648
  %v512 = vmul.f32 %v511, 1.442695
  %v513 = vpow.pop %v512
  %v514 = vadd.f32 %v513, 1.0
  %v515 = vrcp.pop %v514
  %v516 = vmul.f32 1.0, %v515
  %vm517 = vcmask 130048
  %v519 = vsel %vm517, %v172, 0
  %521 = vmatprep.subr.mxu0 %v27
  %522 = vmatpush1.msra.mxu0 %v26
  %523 = vmatprep.subr.mxu0 %v29
  %524 = vmatpush1.msra.mxu0 %v28
  %525 = vmatprep.subr.mxu0 0.0
  %526 = vmatpush1.msra.mxu0 0.0
  %527 = vmatprep.subr.mxu0 0.0
  %528 = vmatpush1.msra.mxu0 0.0
  %529 = vmatprep.subr.mxu0 0.0
  %530 = vmatpush1.msra.mxu0 0.0
  %531 = vmatprep.subr.mxu0 0.0
  %532 = vmatpush1.msra.mxu0 0.0
  %533 = vmatprep.subr.mxu0 0.0
  %534 = vmatpush1.msra.mxu0 0.0
  %535 = vmatprep.subr.mxu0 0.0
  %536 = vmatpush1.msra.mxu0 0.0
  %537 = vmatprep.subr.mxu0 0.0
  %538 = vmatpush1.msra.mxu0 0.0
  %539 = vmatprep.subr.mxu0 0.0
  %540 = vmatpush1.msra.mxu0 0.0
  %541 = vmatprep.subr.mxu0 0.0
  %542 = vmatpush1.msra.mxu0 0.0
  %543 = vmatprep.subr.mxu0 0.0
  %544 = vmatpush1.msra.mxu0 0.0
  %545 = vmatprep.subr.mxu0 0.0
  %546 = vmatpush1.msra.mxu0 0.0
  %547 = vmatprep.subr.mxu0 0.0
  %548 = vmatpush1.msra.mxu0 0.0
  %549 = vmatprep.subr.mxu0 0.0
  %550 = vmatpush1.msra.mxu0 0.0
  %551 = vmatprep.subr.mxu0 0.0
  %552 = vmatpush1.msra.mxu0 0.0
  %553 = vmatprep.subr.mxu0 0.0
  %554 = vmatpush1.msra.mxu0 0.0
  %555 = vmatprep.subr.mxu0 0.0
  %556 = vmatpush1.msra.mxu0 0.0
  %557 = vmatprep.subr.mxu0 0.0
  %558 = vmatpush1.msra.mxu0 0.0
  %559 = vmatprep.subr.mxu0 0.0
  %560 = vmatpush1.msra.mxu0 0.0
  %561 = vmatprep.subr.mxu0 0.0
  %562 = vmatpush1.msra.mxu0 0.0
  %563 = vmatprep.subr.mxu0 0.0
  %564 = vmatpush1.msra.mxu0 0.0
  %565 = vmatprep.subr.mxu0 0.0
  %566 = vmatpush1.msra.mxu0 0.0
  %567 = vmatprep.subr.mxu0 0.0
  %568 = vmatpush1.msra.mxu0 0.0
  %569 = vmatprep.subr.mxu0 0.0
  %570 = vmatpush1.msra.mxu0 0.0
  %571 = vmatprep.subr.mxu0 0.0
  %572 = vmatpush1.msra.mxu0 0.0
  %573 = vmatprep.subr.mxu0 0.0
  %574 = vmatpush1.msra.mxu0 0.0
  %575 = vmatprep.subr.mxu0 0.0
  %576 = vmatpush1.msra.mxu0 0.0
  %577 = vmatprep.subr.mxu0 0.0
  %578 = vmatpush1.msra.mxu0 0.0
  %579 = vmatprep.subr.mxu0 0.0
  %580 = vmatpush1.msra.mxu0 0.0
  %581 = vmatprep.subr.mxu0 0.0
  %582 = vmatpush1.msra.mxu0 0.0
  %583 = vmatprep.subr.mxu0 0.0
  %584 = vmatpush1.msra.mxu0 0.0
  %585 = vmatprep.mubr.f32.mxu0 0.0
  %586 = vmatmul.mubr.f32.gmra.mrb[0].mxu0 %v519
  %v587 = vpop.f32.mrb[0].mxu0
  %v588 = vadd.f32 0.0, %v587
  %v589 = vpop.f32.mrb[0].mxu0
  %v590 = vadd.f32 0.0, %v589
  %591 = vdwg.mxu0
  %v594 = vcombine.low %v588, %v590
  %v596 = vunpack.c.l.s4 1966171168
  %v597 = vunpack.c.0.s8 %v596
  %v598 = vlaneseq
  %v599 = vshrl.u32 %v598, 7
  %v600 = vsub.s32 %v597, %v599
  %v601 = vrot.slane %v594, %v600
  %v603 = vunpack.c.l.s4 1966171168
  %v604 = vunpack.c.0.s8 %v603
  %v605 = vlaneseq
  %v606 = vshrl.u32 %v605, 7
  %v607 = vsub.s32 %v604, %v606
  %v608 = vrot.slane %v601, %v607
  %v610 = vlaneseq
  %vm611 = vcmp.ge.s32.totalorder %v610, 0
  %vm612 = vcmp.lt.s32.totalorder %v610, 256
  %vm613 = vmand %vm611, %vm612
  %614 = vst.msk [vmem:[%s7] ss:$8 sm:$0x3] %vm613, %v608
  %615 = vst.msk [vmem:[%s7] ss:$8 sm:$0x0] %vm613, %v608
  %v617 = vsel %vm517, %v258, 0
  %619 = vmatprep.subr.mxu0 %v27
  %620 = vmatpush1.msra.mxu0 %v26
  %621 = vmatprep.subr.mxu0 %v29
  %622 = vmatpush1.msra.mxu0 %v28
  %623 = vmatprep.subr.mxu0 0.0
  %624 = vmatpush1.msra.mxu0 0.0
  %625 = vmatprep.subr.mxu0 0.0
  %626 = vmatpush1.msra.mxu0 0.0
  %627 = vmatprep.subr.mxu0 0.0
  %628 = vmatpush1.msra.mxu0 0.0
  %629 = vmatprep.subr.mxu0 0.0
  %630 = vmatpush1.msra.mxu0 0.0
  %631 = vmatprep.subr.mxu0 0.0
  %632 = vmatpush1.msra.mxu0 0.0
  %633 = vmatprep.subr.mxu0 0.0
  %634 = vmatpush1.msra.mxu0 0.0
  %635 = vmatprep.subr.mxu0 0.0
  %636 = vmatpush1.msra.mxu0 0.0
  %637 = vmatprep.subr.mxu0 0.0
  %638 = vmatpush1.msra.mxu0 0.0
  %639 = vmatprep.subr.mxu0 0.0
  %640 = vmatpush1.msra.mxu0 0.0
  %641 = vmatprep.subr.mxu0 0.0
  %642 = vmatpush1.msra.mxu0 0.0
  %643 = vmatprep.subr.mxu0 0.0
  %644 = vmatpush1.msra.mxu0 0.0
  %645 = vmatprep.subr.mxu0 0.0
  %646 = vmatpush1.msra.mxu0 0.0
  %647 = vmatprep.subr.mxu0 0.0
  %648 = vmatpush1.msra.mxu0 0.0
  %649 = vmatprep.subr.mxu0 0.0
  %650 = vmatpush1.msra.mxu0 0.0
  %651 = vmatprep.subr.mxu0 0.0
  %652 = vmatpush1.msra.mxu0 0.0
  %653 = vmatprep.subr.mxu0 0.0
  %654 = vmatpush1.msra.mxu0 0.0
  %655 = vmatprep.subr.mxu0 0.0
  %656 = vmatpush1.msra.mxu0 0.0
  %657 = vmatprep.subr.mxu0 0.0
  %658 = vmatpush1.msra.mxu0 0.0
  %659 = vmatprep.subr.mxu0 0.0
  %660 = vmatpush1.msra.mxu0 0.0
  %661 = vmatprep.subr.mxu0 0.0
  %662 = vmatpush1.msra.mxu0 0.0
  %663 = vmatprep.subr.mxu0 0.0
  %664 = vmatpush1.msra.mxu0 0.0
  %665 = vmatprep.subr.mxu0 0.0
  %666 = vmatpush1.msra.mxu0 0.0
  %667 = vmatprep.subr.mxu0 0.0
  %668 = vmatpush1.msra.mxu0 0.0
  %669 = vmatprep.subr.mxu0 0.0
  %670 = vmatpush1.msra.mxu0 0.0
  %671 = vmatprep.subr.mxu0 0.0
  %672 = vmatpush1.msra.mxu0 0.0
  %673 = vmatprep.subr.mxu0 0.0
  %674 = vmatpush1.msra.mxu0 0.0
  %675 = vmatprep.subr.mxu0 0.0
  %676 = vmatpush1.msra.mxu0 0.0
  %677 = vmatprep.subr.mxu0 0.0
  %678 = vmatpush1.msra.mxu0 0.0
  %679 = vmatprep.subr.mxu0 0.0
  %680 = vmatpush1.msra.mxu0 0.0
  %681 = vmatprep.subr.mxu0 0.0
  %682 = vmatpush1.msra.mxu0 0.0
  %683 = vmatprep.mubr.f32.mxu0 0.0
  %684 = vmatmul.mubr.f32.gmra.mrb[0].mxu0 %v617
  %v685 = vpop.f32.mrb[0].mxu0
  %v686 = vadd.f32 0.0, %v685
  %v687 = vpop.f32.mrb[0].mxu0
  %v688 = vadd.f32 0.0, %v687
  %689 = vdwg.mxu0
  %v692 = vcombine.low %v686, %v688
  %v694 = vunpack.c.l.s4 1966171168
  %v695 = vunpack.c.0.s8 %v694
  %v696 = vlaneseq
  %v697 = vshrl.u32 %v696, 7
  %v698 = vsub.s32 %v695, %v697
  %v699 = vrot.slane %v692, %v698
  %v701 = vunpack.c.l.s4 1966171168
  %v702 = vunpack.c.0.s8 %v701
  %v703 = vlaneseq
  %v704 = vshrl.u32 %v703, 7
  %v705 = vsub.s32 %v702, %v704
  %v706 = vrot.slane %v699, %v705
  %s708 = scalar_lea.vmem %s7, 1
  %709 = vst.msk [vmem:[%s708] ss:$8 sm:$0x3] %vm613, %v706
  %710 = vst.msk [vmem:[%s708] ss:$8 sm:$0x0] %vm613, %v706
  %vm711 = vcmask 72704
  %v713 = vsel %vm711, %v430, 0
  %vm715 = vcmask 1040384
  %v717 = vsel %vm715, %v84, 0
  %v720 = vsel %vm715, %v85, 0
  %722 = vmatprep.subr.mxu0 %v83
  %723 = vmatpush1.msra.mxu0 %v82
  %724 = vmatprep.subr.mxu0 %v720
  %725 = vmatpush1.msra.mxu0 %v717
  %726 = vmatprep.subr.mxu0 0.0
  %727 = vmatpush1.msra.mxu0 0.0
  %728 = vmatprep.subr.mxu0 0.0
  %729 = vmatpush1.msra.mxu0 0.0
  %730 = vmatprep.subr.mxu0 0.0
  %731 = vmatpush1.msra.mxu0 0.0
  %732 = vmatprep.subr.mxu0 0.0
  %733 = vmatpush1.msra.mxu0 0.0
  %734 = vmatprep.subr.mxu0 0.0
  %735 = vmatpush1.msra.mxu0 0.0
  %736 = vmatprep.subr.mxu0 0.0
  %737 = vmatpush1.msra.mxu0 0.0
  %738 = vmatprep.subr.mxu0 0.0
  %739 = vmatpush1.msra.mxu0 0.0
  %740 = vmatprep.subr.mxu0 0.0
  %741 = vmatpush1.msra.mxu0 0.0
  %742 = vmatprep.subr.mxu0 0.0
  %743 = vmatpush1.msra.mxu0 0.0
  %744 = vmatprep.subr.mxu0 0.0
  %745 = vmatpush1.msra.mxu0 0.0
  %746 = vmatprep.subr.mxu0 0.0
  %747 = vmatpush1.msra.mxu0 0.0
  %748 = vmatprep.subr.mxu0 0.0
  %749 = vmatpush1.msra.mxu0 0.0
  %750 = vmatprep.subr.mxu0 0.0
  %751 = vmatpush1.msra.mxu0 0.0
  %752 = vmatprep.subr.mxu0 0.0
  %753 = vmatpush1.msra.mxu0 0.0
  %754 = vmatprep.subr.mxu0 0.0
  %755 = vmatpush1.msra.mxu0 0.0
  %756 = vmatprep.subr.mxu0 0.0
  %757 = vmatpush1.msra.mxu0 0.0
  %758 = vmatprep.subr.mxu0 0.0
  %759 = vmatpush1.msra.mxu0 0.0
  %760 = vmatprep.subr.mxu0 0.0
  %761 = vmatpush1.msra.mxu0 0.0
  %762 = vmatprep.subr.mxu0 0.0
  %763 = vmatpush1.msra.mxu0 0.0
  %764 = vmatprep.subr.mxu0 0.0
  %765 = vmatpush1.msra.mxu0 0.0
  %766 = vmatprep.subr.mxu0 0.0
  %767 = vmatpush1.msra.mxu0 0.0
  %768 = vmatprep.subr.mxu0 0.0
  %769 = vmatpush1.msra.mxu0 0.0
  %770 = vmatprep.subr.mxu0 0.0
  %771 = vmatpush1.msra.mxu0 0.0
  %772 = vmatprep.subr.mxu0 0.0
  %773 = vmatpush1.msra.mxu0 0.0
  %774 = vmatprep.subr.mxu0 0.0
  %775 = vmatpush1.msra.mxu0 0.0
  %776 = vmatprep.subr.mxu0 0.0
  %777 = vmatpush1.msra.mxu0 0.0
  %778 = vmatprep.subr.mxu0 0.0
  %779 = vmatpush1.msra.mxu0 0.0
  %780 = vmatprep.subr.mxu0 0.0
  %781 = vmatpush1.msra.mxu0 0.0
  %782 = vmatprep.subr.mxu0 0.0
  %783 = vmatpush1.msra.mxu0 0.0
  %784 = vmatprep.subr.mxu0 0.0
  %785 = vmatpush1.msra.mxu0 0.0
  %786 = vmatprep.mubr.f32.mxu0 0.0
  %787 = vmatmul.mubr.f32.gmra.mrb[0].mxu0 %v713
  %v788 = vpop.f32.mrb[0].mxu0
  %v789 = vadd.f32 0.0, %v788
  %v790 = vpop.f32.mrb[0].mxu0
  %v791 = vadd.f32 0.0, %v790
  %792 = vdwg.mxu0
  %v795 = vcombine.low %v789, %v791
  %v797 = vunpack.c.l.s4 1966171168
  %v798 = vunpack.c.0.s8 %v797
  %v799 = vlaneseq
  %v800 = vshrl.u32 %v799, 7
  %v801 = vsub.s32 %v798, %v800
  %v802 = vrot.slane %v795, %v801
  %v804 = vunpack.c.l.s4 1966171168
  %v805 = vunpack.c.0.s8 %v804
  %v806 = vlaneseq
  %v807 = vshrl.u32 %v806, 7
  %v808 = vsub.s32 %v805, %v807
  %v809 = vrot.slane %v802, %v808
  %s811 = scalar_lea.vmem %s7, 2
  %812 = vst.msk [vmem:[%s811] ss:$8 sm:$0x3] %vm613, %v809
  %813 = vst.msk [vmem:[%s811] ss:$8 sm:$0x0] %vm613, %v809
  %v815 = vsel %vm517, %v344, 0
  %817 = vmatprep.subr.mxu0 %v27
  %818 = vmatpush1.msra.mxu0 %v26
  %819 = vmatprep.subr.mxu0 %v29
  %820 = vmatpush1.msra.mxu0 %v28
  %821 = vmatprep.subr.mxu0 0.0
  %822 = vmatpush1.msra.mxu0 0.0
  %823 = vmatprep.subr.mxu0 0.0
  %824 = vmatpush1.msra.mxu0 0.0
  %825 = vmatprep.subr.mxu0 0.0
  %826 = vmatpush1.msra.mxu0 0.0
  %827 = vmatprep.subr.mxu0 0.0
  %828 = vmatpush1.msra.mxu0 0.0
  %829 = vmatprep.subr.mxu0 0.0
  %830 = vmatpush1.msra.mxu0 0.0
  %831 = vmatprep.subr.mxu0 0.0
  %832 = vmatpush1.msra.mxu0 0.0
  %833 = vmatprep.subr.mxu0 0.0
  %834 = vmatpush1.msra.mxu0 0.0
  %835 = vmatprep.subr.mxu0 0.0
  %836 = vmatpush1.msra.mxu0 0.0
  %837 = vmatprep.subr.mxu0 0.0
  %838 = vmatpush1.msra.mxu0 0.0
  %839 = vmatprep.subr.mxu0 0.0
  %840 = vmatpush1.msra.mxu0 0.0
  %841 = vmatprep.subr.mxu0 0.0
  %842 = vmatpush1.msra.mxu0 0.0
  %843 = vmatprep.subr.mxu0 0.0
  %844 = vmatpush1.msra.mxu0 0.0
  %845 = vmatprep.subr.mxu0 0.0
  %846 = vmatpush1.msra.mxu0 0.0
  %847 = vmatprep.subr.mxu0 0.0
  %848 = vmatpush1.msra.mxu0 0.0
  %849 = vmatprep.subr.mxu0 0.0
  %850 = vmatpush1.msra.mxu0 0.0
  %851 = vmatprep.subr.mxu0 0.0
  %852 = vmatpush1.msra.mxu0 0.0
  %853 = vmatprep.subr.mxu0 0.0
  %854 = vmatpush1.msra.mxu0 0.0
  %855 = vmatprep.subr.mxu0 0.0
  %856 = vmatpush1.msra.mxu0 0.0
  %857 = vmatprep.subr.mxu0 0.0
  %858 = vmatpush1.msra.mxu0 0.0
  %859 = vmatprep.subr.mxu0 0.0
  %860 = vmatpush1.msra.mxu0 0.0
  %861 = vmatprep.subr.mxu0 0.0
  %862 = vmatpush1.msra.mxu0 0.0
  %863 = vmatprep.subr.mxu0 0.0
  %864 = vmatpush1.msra.mxu0 0.0
  %865 = vmatprep.subr.mxu0 0.0
  %866 = vmatpush1.msra.mxu0 0.0
  %867 = vmatprep.subr.mxu0 0.0
  %868 = vmatpush1.msra.mxu0 0.0
  %869 = vmatprep.subr.mxu0 0.0
  %870 = vmatpush1.msra.mxu0 0.0
  %871 = vmatprep.subr.mxu0 0.0
  %872 = vmatpush1.msra.mxu0 0.0
  %873 = vmatprep.subr.mxu0 0.0
  %874 = vmatpush1.msra.mxu0 0.0
  %875 = vmatprep.subr.mxu0 0.0
  %876 = vmatpush1.msra.mxu0 0.0
  %877 = vmatprep.subr.mxu0 0.0
  %878 = vmatpush1.msra.mxu0 0.0
  %879 = vmatprep.subr.mxu0 0.0
  %880 = vmatpush1.msra.mxu0 0.0
  %881 = vmatprep.mubr.f32.mxu0 0.0
  %882 = vmatmul.mubr.f32.gmra.mrb[0].mxu0 %v815
  %v883 = vpop.f32.mrb[0].mxu0
  %v884 = vadd.f32 0.0, %v883
  %v885 = vpop.f32.mrb[0].mxu0
  %v886 = vadd.f32 0.0, %v885
  %887 = vdwg.mxu0
  %v890 = vcombine.low %v884, %v886
  %v892 = vunpack.c.l.s4 1966171168
  %v893 = vunpack.c.0.s8 %v892
  %v894 = vlaneseq
  %v895 = vshrl.u32 %v894, 7
  %v896 = vsub.s32 %v893, %v895
  %v897 = vrot.slane %v890, %v896
  %v899 = vunpack.c.l.s4 1966171168
  %v900 = vunpack.c.0.s8 %v899
  %v901 = vlaneseq
  %v902 = vshrl.u32 %v901, 7
  %v903 = vsub.s32 %v900, %v902
  %v904 = vrot.slane %v897, %v903
  %s906 = scalar_lea.vmem %s7, 3
  %907 = vst.msk [vmem:[%s906] ss:$8 sm:$0x3] %vm613, %v904
  %908 = vst.msk [vmem:[%s906] ss:$8 sm:$0x0] %vm613, %v904
  %v910 = vsel %vm711, %v516, 0
  %912 = vmatprep.subr.mxu0 %v83
  %913 = vmatpush1.msra.mxu0 %v82
  %914 = vmatprep.subr.mxu0 %v720
  %915 = vmatpush1.msra.mxu0 %v717
  %916 = vmatprep.subr.mxu0 0.0
  %917 = vmatpush1.msra.mxu0 0.0
  %918 = vmatprep.subr.mxu0 0.0
  %919 = vmatpush1.msra.mxu0 0.0
  %920 = vmatprep.subr.mxu0 0.0
  %921 = vmatpush1.msra.mxu0 0.0
  %922 = vmatprep.subr.mxu0 0.0
  %923 = vmatpush1.msra.mxu0 0.0
  %924 = vmatprep.subr.mxu0 0.0
  %925 = vmatpush1.msra.mxu0 0.0
  %926 = vmatprep.subr.mxu0 0.0
  %927 = vmatpush1.msra.mxu0 0.0
  %928 = vmatprep.subr.mxu0 0.0
  %929 = vmatpush1.msra.mxu0 0.0
  %930 = vmatprep.subr.mxu0 0.0
  %931 = vmatpush1.msra.mxu0 0.0
  %932 = vmatprep.subr.mxu0 0.0
  %933 = vmatpush1.msra.mxu0 0.0
  %934 = vmatprep.subr.mxu0 0.0
  %935 = vmatpush1.msra.mxu0 0.0
  %936 = vmatprep.subr.mxu0 0.0
  %937 = vmatpush1.msra.mxu0 0.0
  %938 = vmatprep.subr.mxu0 0.0
  %939 = vmatpush1.msra.mxu0 0.0
  %940 = vmatprep.subr.mxu0 0.0
  %941 = vmatpush1.msra.mxu0 0.0
  %942 = vmatprep.subr.mxu0 0.0
  %943 = vmatpush1.msra.mxu0 0.0
  %944 = vmatprep.subr.mxu0 0.0
  %945 = vmatpush1.msra.mxu0 0.0
  %946 = vmatprep.subr.mxu0 0.0
  %947 = vmatpush1.msra.mxu0 0.0
  %948 = vmatprep.subr.mxu0 0.0
  %949 = vmatpush1.msra.mxu0 0.0
  %950 = vmatprep.subr.mxu0 0.0
  %951 = vmatpush1.msra.mxu0 0.0
  %952 = vmatprep.subr.mxu0 0.0
  %953 = vmatpush1.msra.mxu0 0.0
  %954 = vmatprep.subr.mxu0 0.0
  %955 = vmatpush1.msra.mxu0 0.0
  %956 = vmatprep.subr.mxu0 0.0
  %957 = vmatpush1.msra.mxu0 0.0
  %958 = vmatprep.subr.mxu0 0.0
  %959 = vmatpush1.msra.mxu0 0.0
  %960 = vmatprep.subr.mxu0 0.0
  %961 = vmatpush1.msra.mxu0 0.0
  %962 = vmatprep.subr.mxu0 0.0
  %963 = vmatpush1.msra.mxu0 0.0
  %964 = vmatprep.subr.mxu0 0.0
  %965 = vmatpush1.msra.mxu0 0.0
  %966 = vmatprep.subr.mxu0 0.0
  %967 = vmatpush1.msra.mxu0 0.0
  %968 = vmatprep.subr.mxu0 0.0
  %969 = vmatpush1.msra.mxu0 0.0
  %970 = vmatprep.subr.mxu0 0.0
  %971 = vmatpush1.msra.mxu0 0.0
  %972 = vmatprep.subr.mxu0 0.0
  %973 = vmatpush1.msra.mxu0 0.0
  %974 = vmatprep.subr.mxu0 0.0
  %975 = vmatpush1.msra.mxu0 0.0
  %976 = vmatprep.mubr.f32.mxu0 0.0
  %977 = vmatmul.mubr.f32.gmra.mrb[0].mxu0 %v910
  %v978 = vpop.f32.mrb[0].mxu0
  %v979 = vadd.f32 0.0, %v978
  %v980 = vpop.f32.mrb[0].mxu0
  %v981 = vadd.f32 0.0, %v980
  %982 = vdwg.mxu0
  %v985 = vcombine.low %v979, %v981
  %v987 = vunpack.c.l.s4 1966171168
  %v988 = vunpack.c.0.s8 %v987
  %v989 = vlaneseq
  %v990 = vshrl.u32 %v989, 7
  %v991 = vsub.s32 %v988, %v990
  %v992 = vrot.slane %v985, %v991
  %v994 = vunpack.c.l.s4 1966171168
  %v995 = vunpack.c.0.s8 %v994
  %v996 = vlaneseq
  %v997 = vshrl.u32 %v996, 7
  %v998 = vsub.s32 %v995, %v997
  %v999 = vrot.slane %v992, %v998
  %s1001 = scalar_lea.vmem %s7, 4
  %1002 = vst.msk [vmem:[%s1001] ss:$8 sm:$0x3] %vm613, %v999
  %1003 = vst.msk [vmem:[%s1001] ss:$8 sm:$0x0] %vm613, %v999
  %s1004 = scalar_lea.vmem %s0, 16
  %v1005 = vld [vmem:[%s1004] sm:$0xff]
  %v1006 = vld [vmem:[%s1004 + $0x8] sm:$0xff]
  %s1007 = scalar_lea.vmem %s1, 16
  %v1008 = vld [vmem:[%s1007] sm:$0xff]
  %v1009 = vld [vmem:[%s1007 + $0x8] sm:$0x1]
  %s1010 = scalar_lea.vmem %s0, 48
  %v1011 = vld [vmem:[%s1010] sm:$0xff]
  %v1012 = vld [vmem:[%s1010 + $0x8] sm:$0xff]
  %v1013 = vadd.f32 %v1005, %v1011
  %v1014 = vadd.f32 %v1006, %v1012
  %s1015 = scalar_lea.vmem %s1, 48
  %v1016 = vld [vmem:[%s1015] sm:$0xff]
  %v1017 = vld [vmem:[%s1015 + $0x8] sm:$0x1]
  %v1018 = vadd.f32 %v1008, %v1016
  %v1019 = vadd.f32 %v1009, %v1017
  %s1020 = scalar_lea.vmem %s0, 80
  %v1021 = vld [vmem:[%s1020] sm:$0xff]
  %v1022 = vld [vmem:[%s1020 + $0x8] sm:$0xff]
  %v1023 = vadd.f32 %v1013, %v1021
  %v1024 = vadd.f32 %v1014, %v1022
  %s1025 = scalar_lea.vmem %s1, 80
  %v1026 = vld [vmem:[%s1025] sm:$0xff]
  %v1027 = vld [vmem:[%s1025 + $0x8] sm:$0x1]
  %v1028 = vadd.f32 %v1018, %v1026
  %v1029 = vadd.f32 %v1019, %v1027
  %s1030 = scalar_lea.vmem %s0, 112
  %v1031 = vld [vmem:[%s1030] sm:$0xff]
  %v1032 = vld [vmem:[%s1030 + $0x8] sm:$0xff]
  %v1033 = vadd.f32 %v1023, %v1031
  %v1034 = vadd.f32 %v1024, %v1032
  %s1035 = scalar_lea.vmem %s1, 112
  %v1036 = vld [vmem:[%s1035] sm:$0xff]
  %v1037 = vld [vmem:[%s1035 + $0x8] sm:$0x1]
  %v1038 = vadd.f32 %v1028, %v1036
  %v1039 = vadd.f32 %v1029, %v1037
  %s1040 = scalar_lea.vmem %s0, 144
  %v1041 = vld [vmem:[%s1040] sm:$0xff]
  %v1042 = vld [vmem:[%s1040 + $0x8] sm:$0xff]
  %v1043 = vadd.f32 %v1033, %v1041
  %v1044 = vadd.f32 %v1034, %v1042
  %s1045 = scalar_lea.vmem %s1, 144
  %v1046 = vld [vmem:[%s1045] sm:$0xff]
  %v1047 = vld [vmem:[%s1045 + $0x8] sm:$0x1]
  %v1048 = vadd.f32 %v1038, %v1046
  %v1049 = vadd.f32 %v1039, %v1047
  %v1050 = vmul.f32 %v1043, 0.2
  %v1051 = vmul.f32 %v1044, 0.2
  %v1052 = vmul.f32 %v1048, 0.2
  %v1053 = vmul.f32 %v1049, 0.2
  %s1054 = scalar_lea.vmem %s2, 16
  %v1055 = vld [vmem:[%s1054] sm:$0xff]
  %v1056 = vld [vmem:[%s1054 + $0x8] sm:$0xff]
  %v1057 = vadd.f32 %v1055, %v1050
  %v1058 = vadd.f32 %v1056, %v1051
  %s1059 = scalar_lea.vmem %s3, 32
  %v1060 = vld [vmem:[%s1059] sm:$0xff]
  %v1061 = vld [vmem:[%s1059 + $0x8] sm:$0xff]
  %v1062 = vld [vmem:[%s1059 + $0x10] sm:$0x1]
  %v1063 = vld [vmem:[%s1059 + $0x18] sm:$0x1]
  %v1064 = vld [vmem:[%s5] sm:$0x1]
  %v1066 = vsel %vm87, %v1064, 0
  %v1069 = vsel %vm87, %v1057, 0
  %v1072 = vsel %vm87, %v1058, 0
  %1074 = vmatprep.subr.mxu0 0.0
  %1075 = vmatpush1.xpose.msra.mxu0 %v1069
  %1076 = vmatprep.subr.mxu0 0.0
  %1077 = vmatpush1.xpose.msra.mxu0 %v1072
  %1078 = vmatprep.subr.mxu0 0.0
  %1079 = vmatpush1.xpose.msra.mxu0 0.0
  %1080 = vmatprep.subr.mxu0 0.0
  %1081 = vmatpush1.xpose.msra.mxu0 0.0
  %1082 = vmatprep.subr.mxu0 0.0
  %1083 = vmatpush1.xpose.msra.mxu0 0.0
  %1084 = vmatprep.subr.mxu0 0.0
  %1085 = vmatpush1.xpose.msra.mxu0 0.0
  %1086 = vmatprep.subr.mxu0 0.0
  %1087 = vmatpush1.xpose.msra.mxu0 0.0
  %1088 = vmatprep.subr.mxu0 0.0
  %1089 = vmatpush1.xpose.msra.mxu0 0.0
  %1090 = vmatprep.subr.mxu0 0.0
  %1091 = vmatpush1.xpose.msra.mxu0 0.0
  %1092 = vmatprep.subr.mxu0 0.0
  %1093 = vmatpush1.xpose.msra.mxu0 0.0
  %1094 = vmatprep.subr.mxu0 0.0
  %1095 = vmatpush1.xpose.msra.mxu0 0.0
  %1096 = vmatprep.subr.mxu0 0.0
  %1097 = vmatpush1.xpose.msra.mxu0 0.0
  %1098 = vmatprep.subr.mxu0 0.0
  %1099 = vmatpush1.xpose.msra.mxu0 0.0
  %1100 = vmatprep.subr.mxu0 0.0
  %1101 = vmatpush1.xpose.msra.mxu0 0.0
  %1102 = vmatprep.subr.mxu0 0.0
  %1103 = vmatpush1.xpose.msra.mxu0 0.0
  %1104 = vmatprep.subr.mxu0 0.0
  %1105 = vmatpush1.xpose.msra.mxu0 0.0
  %1106 = vmatprep.subr.mxu0 0.0
  %1107 = vmatpush1.xpose.msra.mxu0 0.0
  %1108 = vmatprep.subr.mxu0 0.0
  %1109 = vmatpush1.xpose.msra.mxu0 0.0
  %1110 = vmatprep.subr.mxu0 0.0
  %1111 = vmatpush1.xpose.msra.mxu0 0.0
  %1112 = vmatprep.subr.mxu0 0.0
  %1113 = vmatpush1.xpose.msra.mxu0 0.0
  %1114 = vmatprep.subr.mxu0 0.0
  %1115 = vmatpush1.xpose.msra.mxu0 0.0
  %1116 = vmatprep.subr.mxu0 0.0
  %1117 = vmatpush1.xpose.msra.mxu0 0.0
  %1118 = vmatprep.subr.mxu0 0.0
  %1119 = vmatpush1.xpose.msra.mxu0 0.0
  %1120 = vmatprep.subr.mxu0 0.0
  %1121 = vmatpush1.xpose.msra.mxu0 0.0
  %1122 = vmatprep.subr.mxu0 0.0
  %1123 = vmatpush1.xpose.msra.mxu0 0.0
  %1124 = vmatprep.subr.mxu0 0.0
  %1125 = vmatpush1.xpose.msra.mxu0 0.0
  %1126 = vmatprep.subr.mxu0 0.0
  %1127 = vmatpush1.xpose.msra.mxu0 0.0
  %1128 = vmatprep.subr.mxu0 0.0
  %1129 = vmatpush1.xpose.msra.mxu0 0.0
  %1130 = vmatprep.subr.mxu0 0.0
  %1131 = vmatpush1.xpose.msra.mxu0 0.0
  %1132 = vmatprep.subr.mxu0 0.0
  %1133 = vmatpush1.xpose.msra.mxu0 0.0
  %1134 = vmatprep.subr.mxu0 0.0
  %1135 = vmatpush1.xpose.msra.mxu0 0.0
  %1136 = vmatprep.subr.mxu0 0.0
  %1137 = vmatpush1.xpose.msra.mxu0 0.0
  %1138 = vmatprep.mubr.f32.mxu0 0.0
  %1139 = vmatmul.mubr.f32.gmra.mrb[0].mxu0 %v1066
  %v1140 = vpop.f32.mrb[0].mxu0
  %v1141 = vadd.f32 0.0, %v1140
  %v1142 = vpop.f32.mrb[0].mxu0
  %1143 = vdwg.mxu0
  %v1144 = vxor.u32 %v1141, 2147483648
  %v1145 = vmul.f32 %v1144, 1.442695
  %v1146 = vpow.pop %v1145
  %v1147 = vadd.f32 %v1146, 1.0
  %v1148 = vrcp.pop %v1147
  %v1149 = vmul.f32 1.0, %v1148
  %v1150 = vld [vmem:[%s5 + $0x1] sm:$0x1]
  %v1152 = vsel %vm87, %v1150, 0
  %v1155 = vsel %vm87, %v1050, 0
  %v1158 = vsel %vm87, %v1051, 0
  %1160 = vmatprep.subr.mxu0 0.0
  %1161 = vmatpush1.xpose.msra.mxu0 %v1155
  %1162 = vmatprep.subr.mxu0 0.0
  %1163 = vmatpush1.xpose.msra.mxu0 %v1158
  %1164 = vmatprep.subr.mxu0 0.0
  %1165 = vmatpush1.xpose.msra.mxu0 0.0
  %1166 = vmatprep.subr.mxu0 0.0
  %1167 = vmatpush1.xpose.msra.mxu0 0.0
  %1168 = vmatprep.subr.mxu0 0.0
  %1169 = vmatpush1.xpose.msra.mxu0 0.0
  %1170 = vmatprep.subr.mxu0 0.0
  %1171 = vmatpush1.xpose.msra.mxu0 0.0
  %1172 = vmatprep.subr.mxu0 0.0
  %1173 = vmatpush1.xpose.msra.mxu0 0.0
  %1174 = vmatprep.subr.mxu0 0.0
  %1175 = vmatpush1.xpose.msra.mxu0 0.0
  %1176 = vmatprep.subr.mxu0 0.0
  %1177 = vmatpush1.xpose.msra.mxu0 0.0
  %1178 = vmatprep.subr.mxu0 0.0
  %1179 = vmatpush1.xpose.msra.mxu0 0.0
  %1180 = vmatprep.subr.mxu0 0.0
  %1181 = vmatpush1.xpose.msra.mxu0 0.0
  %1182 = vmatprep.subr.mxu0 0.0
  %1183 = vmatpush1.xpose.msra.mxu0 0.0
  %1184 = vmatprep.subr.mxu0 0.0
  %1185 = vmatpush1.xpose.msra.mxu0 0.0
  %1186 = vmatprep.subr.mxu0 0.0
  %1187 = vmatpush1.xpose.msra.mxu0 0.0
  %1188 = vmatprep.subr.mxu0 0.0
  %1189 = vmatpush1.xpose.msra.mxu0 0.0
  %1190 = vmatprep.subr.mxu0 0.0
  %1191 = vmatpush1.xpose.msra.mxu0 0.0
  %1192 = vmatprep.subr.mxu0 0.0
  %1193 = vmatpush1.xpose.msra.mxu0 0.0
  %1194 = vmatprep.subr.mxu0 0.0
  %1195 = vmatpush1.xpose.msra.mxu0 0.0
  %1196 = vmatprep.subr.mxu0 0.0
  %1197 = vmatpush1.xpose.msra.mxu0 0.0
  %1198 = vmatprep.subr.mxu0 0.0
  %1199 = vmatpush1.xpose.msra.mxu0 0.0
  %1200 = vmatprep.subr.mxu0 0.0
  %1201 = vmatpush1.xpose.msra.mxu0 0.0
  %1202 = vmatprep.subr.mxu0 0.0
  %1203 = vmatpush1.xpose.msra.mxu0 0.0
  %1204 = vmatprep.subr.mxu0 0.0
  %1205 = vmatpush1.xpose.msra.mxu0 0.0
  %1206 = vmatprep.subr.mxu0 0.0
  %1207 = vmatpush1.xpose.msra.mxu0 0.0
  %1208 = vmatprep.subr.mxu0 0.0
  %1209 = vmatpush1.xpose.msra.mxu0 0.0
  %1210 = vmatprep.subr.mxu0 0.0
  %1211 = vmatpush1.xpose.msra.mxu0 0.0
  %1212 = vmatprep.subr.mxu0 0.0
  %1213 = vmatpush1.xpose.msra.mxu0 0.0
  %1214 = vmatprep.subr.mxu0 0.0
  %1215 = vmatpush1.xpose.msra.mxu0 0.0
  %1216 = vmatprep.subr.mxu0 0.0
  %1217 = vmatpush1.xpose.msra.mxu0 0.0
  %1218 = vmatprep.subr.mxu0 0.0
  %1219 = vmatpush1.xpose.msra.mxu0 0.0
  %1220 = vmatprep.subr.mxu0 0.0
  %1221 = vmatpush1.xpose.msra.mxu0 0.0
  %1222 = vmatprep.subr.mxu0 0.0
  %1223 = vmatpush1.xpose.msra.mxu0 0.0
  %1224 = vmatprep.mubr.f32.mxu0 0.0
  %1225 = vmatmul.mubr.f32.gmra.mrb[0].mxu0 %v1152
  %v1226 = vpop.f32.mrb[0].mxu0
  %v1227 = vadd.f32 0.0, %v1226
  %v1228 = vpop.f32.mrb[0].mxu0
  %1229 = vdwg.mxu0
  %v1230 = vxor.u32 %v1227, 2147483648
  %v1231 = vmul.f32 %v1230, 1.442695
  %v1232 = vpow.pop %v1231
  %v1233 = vadd.f32 %v1232, 1.0
  %v1234 = vrcp.pop %v1233
  %v1235 = vmul.f32 1.0, %v1234
  %v1236 = vld [vmem:[%s5 + $0x2] sm:$0x1]
  %v1238 = vsel %vm87, %v1236, 0
  %v1241 = vsel %vm87, %v1041, 0
  %v1244 = vsel %vm87, %v1042, 0
  %1246 = vmatprep.subr.mxu0 0.0
  %1247 = vmatpush1.xpose.msra.mxu0 %v1241
  %1248 = vmatprep.subr.mxu0 0.0
  %1249 = vmatpush1.xpose.msra.mxu0 %v1244
  %1250 = vmatprep.subr.mxu0 0.0
  %1251 = vmatpush1.xpose.msra.mxu0 0.0
  %1252 = vmatprep.subr.mxu0 0.0
  %1253 = vmatpush1.xpose.msra.mxu0 0.0
  %1254 = vmatprep.subr.mxu0 0.0
  %1255 = vmatpush1.xpose.msra.mxu0 0.0
  %1256 = vmatprep.subr.mxu0 0.0
  %1257 = vmatpush1.xpose.msra.mxu0 0.0
  %1258 = vmatprep.subr.mxu0 0.0
  %1259 = vmatpush1.xpose.msra.mxu0 0.0
  %1260 = vmatprep.subr.mxu0 0.0
  %1261 = vmatpush1.xpose.msra.mxu0 0.0
  %1262 = vmatprep.subr.mxu0 0.0
  %1263 = vmatpush1.xpose.msra.mxu0 0.0
  %1264 = vmatprep.subr.mxu0 0.0
  %1265 = vmatpush1.xpose.msra.mxu0 0.0
  %1266 = vmatprep.subr.mxu0 0.0
  %1267 = vmatpush1.xpose.msra.mxu0 0.0
  %1268 = vmatprep.subr.mxu0 0.0
  %1269 = vmatpush1.xpose.msra.mxu0 0.0
  %1270 = vmatprep.subr.mxu0 0.0
  %1271 = vmatpush1.xpose.msra.mxu0 0.0
  %1272 = vmatprep.subr.mxu0 0.0
  %1273 = vmatpush1.xpose.msra.mxu0 0.0
  %1274 = vmatprep.subr.mxu0 0.0
  %1275 = vmatpush1.xpose.msra.mxu0 0.0
  %1276 = vmatprep.subr.mxu0 0.0
  %1277 = vmatpush1.xpose.msra.mxu0 0.0
  %1278 = vmatprep.subr.mxu0 0.0
  %1279 = vmatpush1.xpose.msra.mxu0 0.0
  %1280 = vmatprep.subr.mxu0 0.0
  %1281 = vmatpush1.xpose.msra.mxu0 0.0
  %1282 = vmatprep.subr.mxu0 0.0
  %1283 = vmatpush1.xpose.msra.mxu0 0.0
  %1284 = vmatprep.subr.mxu0 0.0
  %1285 = vmatpush1.xpose.msra.mxu0 0.0
  %1286 = vmatprep.subr.mxu0 0.0
  %1287 = vmatpush1.xpose.msra.mxu0 0.0
  %1288 = vmatprep.subr.mxu0 0.0
  %1289 = vmatpush1.xpose.msra.mxu0 0.0
  %1290 = vmatprep.subr.mxu0 0.0
  %1291 = vmatpush1.xpose.msra.mxu0 0.0
  %1292 = vmatprep.subr.mxu0 0.0
  %1293 = vmatpush1.xpose.msra.mxu0 0.0
  %1294 = vmatprep.subr.mxu0 0.0
  %1295 = vmatpush1.xpose.msra.mxu0 0.0
  %1296 = vmatprep.subr.mxu0 0.0
  %1297 = vmatpush1.xpose.msra.mxu0 0.0
  %1298 = vmatprep.subr.mxu0 0.0
  %1299 = vmatpush1.xpose.msra.mxu0 0.0
  %1300 = vmatprep.subr.mxu0 0.0
  %1301 = vmatpush1.xpose.msra.mxu0 0.0
  %1302 = vmatprep.subr.mxu0 0.0
  %1303 = vmatpush1.xpose.msra.mxu0 0.0
  %1304 = vmatprep.subr.mxu0 0.0
  %1305 = vmatpush1.xpose.msra.mxu0 0.0
  %1306 = vmatprep.subr.mxu0 0.0
  %1307 = vmatpush1.xpose.msra.mxu0 0.0
  %1308 = vmatprep.subr.mxu0 0.0
  %1309 = vmatpush1.xpose.msra.mxu0 0.0
  %1310 = vmatprep.mubr.f32.mxu0 0.0
  %1311 = vmatmul.mubr.f32.gmra.mrb[0].mxu0 %v1238
  %v1312 = vpop.f32.mrb[0].mxu0
  %v1313 = vadd.f32 0.0, %v1312
  %v1314 = vpop.f32.mrb[0].mxu0
  %1315 = vdwg.mxu0
  %v1316 = vxor.u32 %v1313, 2147483648
  %v1317 = vmul.f32 %v1316, 1.442695
  %v1318 = vpow.pop %v1317
  %v1319 = vadd.f32 %v1318, 1.0
  %v1320 = vrcp.pop %v1319
  %v1321 = vmul.f32 1.0, %v1320
  %v1322 = vld [vmem:[%s6] sm:$0x1]
  %v1324 = vsel %vm87, %v1322, 0
  %v1327 = vsel %vm87, %v1052, 0
  %v1330 = vsel %vm87, %v1053, 0
  %1332 = vmatprep.subr.mxu0 0.0
  %1333 = vmatpush1.xpose.msra.mxu0 %v1327
  %1334 = vmatprep.subr.mxu0 0.0
  %1335 = vmatpush1.xpose.msra.mxu0 %v1330
  %1336 = vmatprep.subr.mxu0 0.0
  %1337 = vmatpush1.xpose.msra.mxu0 0.0
  %1338 = vmatprep.subr.mxu0 0.0
  %1339 = vmatpush1.xpose.msra.mxu0 0.0
  %1340 = vmatprep.subr.mxu0 0.0
  %1341 = vmatpush1.xpose.msra.mxu0 0.0
  %1342 = vmatprep.subr.mxu0 0.0
  %1343 = vmatpush1.xpose.msra.mxu0 0.0
  %1344 = vmatprep.subr.mxu0 0.0
  %1345 = vmatpush1.xpose.msra.mxu0 0.0
  %1346 = vmatprep.subr.mxu0 0.0
  %1347 = vmatpush1.xpose.msra.mxu0 0.0
  %1348 = vmatprep.subr.mxu0 0.0
  %1349 = vmatpush1.xpose.msra.mxu0 0.0
  %1350 = vmatprep.subr.mxu0 0.0
  %1351 = vmatpush1.xpose.msra.mxu0 0.0
  %1352 = vmatprep.subr.mxu0 0.0
  %1353 = vmatpush1.xpose.msra.mxu0 0.0
  %1354 = vmatprep.subr.mxu0 0.0
  %1355 = vmatpush1.xpose.msra.mxu0 0.0
  %1356 = vmatprep.subr.mxu0 0.0
  %1357 = vmatpush1.xpose.msra.mxu0 0.0
  %1358 = vmatprep.subr.mxu0 0.0
  %1359 = vmatpush1.xpose.msra.mxu0 0.0
  %1360 = vmatprep.subr.mxu0 0.0
  %1361 = vmatpush1.xpose.msra.mxu0 0.0
  %1362 = vmatprep.subr.mxu0 0.0
  %1363 = vmatpush1.xpose.msra.mxu0 0.0
  %1364 = vmatprep.subr.mxu0 0.0
  %1365 = vmatpush1.xpose.msra.mxu0 0.0
  %1366 = vmatprep.subr.mxu0 0.0
  %1367 = vmatpush1.xpose.msra.mxu0 0.0
  %1368 = vmatprep.subr.mxu0 0.0
  %1369 = vmatpush1.xpose.msra.mxu0 0.0
  %1370 = vmatprep.subr.mxu0 0.0
  %1371 = vmatpush1.xpose.msra.mxu0 0.0
  %1372 = vmatprep.subr.mxu0 0.0
  %1373 = vmatpush1.xpose.msra.mxu0 0.0
  %1374 = vmatprep.subr.mxu0 0.0
  %1375 = vmatpush1.xpose.msra.mxu0 0.0
  %1376 = vmatprep.subr.mxu0 0.0
  %1377 = vmatpush1.xpose.msra.mxu0 0.0
  %1378 = vmatprep.subr.mxu0 0.0
  %1379 = vmatpush1.xpose.msra.mxu0 0.0
  %1380 = vmatprep.subr.mxu0 0.0
  %1381 = vmatpush1.xpose.msra.mxu0 0.0
  %1382 = vmatprep.subr.mxu0 0.0
  %1383 = vmatpush1.xpose.msra.mxu0 0.0
  %1384 = vmatprep.subr.mxu0 0.0
  %1385 = vmatpush1.xpose.msra.mxu0 0.0
  %1386 = vmatprep.subr.mxu0 0.0
  %1387 = vmatpush1.xpose.msra.mxu0 0.0
  %1388 = vmatprep.subr.mxu0 0.0
  %1389 = vmatpush1.xpose.msra.mxu0 0.0
  %1390 = vmatprep.subr.mxu0 0.0
  %1391 = vmatpush1.xpose.msra.mxu0 0.0
  %1392 = vmatprep.subr.mxu0 0.0
  %1393 = vmatpush1.xpose.msra.mxu0 0.0
  %1394 = vmatprep.subr.mxu0 0.0
  %1395 = vmatpush1.xpose.msra.mxu0 0.0
  %1396 = vmatprep.mubr.f32.mxu0 0.0
  %1397 = vmatmul.mubr.f32.gmra.mrb[0].mxu0 %v1324
  %v1398 = vpop.f32.mrb[0].mxu0
  %v1399 = vadd.f32 0.0, %v1398
  %v1400 = vpop.f32.mrb[0].mxu0
  %1401 = vdwg.mxu0
  %v1402 = vxor.u32 %v1399, 2147483648
  %v1403 = vmul.f32 %v1402, 1.442695
  %v1404 = vpow.pop %v1403
  %v1405 = vadd.f32 %v1404, 1.0
  %v1406 = vrcp.pop %v1405
  %v1407 = vmul.f32 1.0, %v1406
  %v1408 = vld [vmem:[%s6 + $0x1] sm:$0x1]
  %v1410 = vsel %vm87, %v1408, 0
  %v1413 = vsel %vm87, %v1046, 0
  %v1416 = vsel %vm87, %v1047, 0
  %1418 = vmatprep.subr.mxu0 0.0
  %1419 = vmatpush1.xpose.msra.mxu0 %v1413
  %1420 = vmatprep.subr.mxu0 0.0
  %1421 = vmatpush1.xpose.msra.mxu0 %v1416
  %1422 = vmatprep.subr.mxu0 0.0
  %1423 = vmatpush1.xpose.msra.mxu0 0.0
  %1424 = vmatprep.subr.mxu0 0.0
  %1425 = vmatpush1.xpose.msra.mxu0 0.0
  %1426 = vmatprep.subr.mxu0 0.0
  %1427 = vmatpush1.xpose.msra.mxu0 0.0
  %1428 = vmatprep.subr.mxu0 0.0
  %1429 = vmatpush1.xpose.msra.mxu0 0.0
  %1430 = vmatprep.subr.mxu0 0.0
  %1431 = vmatpush1.xpose.msra.mxu0 0.0
  %1432 = vmatprep.subr.mxu0 0.0
  %1433 = vmatpush1.xpose.msra.mxu0 0.0
  %1434 = vmatprep.subr.mxu0 0.0
  %1435 = vmatpush1.xpose.msra.mxu0 0.0
  %1436 = vmatprep.subr.mxu0 0.0
  %1437 = vmatpush1.xpose.msra.mxu0 0.0
  %1438 = vmatprep.subr.mxu0 0.0
  %1439 = vmatpush1.xpose.msra.mxu0 0.0
  %1440 = vmatprep.subr.mxu0 0.0
  %1441 = vmatpush1.xpose.msra.mxu0 0.0
  %1442 = vmatprep.subr.mxu0 0.0
  %1443 = vmatpush1.xpose.msra.mxu0 0.0
  %1444 = vmatprep.subr.mxu0 0.0
  %1445 = vmatpush1.xpose.msra.mxu0 0.0
  %1446 = vmatprep.subr.mxu0 0.0
  %1447 = vmatpush1.xpose.msra.mxu0 0.0
  %1448 = vmatprep.subr.mxu0 0.0
  %1449 = vmatpush1.xpose.msra.mxu0 0.0
  %1450 = vmatprep.subr.mxu0 0.0
  %1451 = vmatpush1.xpose.msra.mxu0 0.0
  %1452 = vmatprep.subr.mxu0 0.0
  %1453 = vmatpush1.xpose.msra.mxu0 0.0
  %1454 = vmatprep.subr.mxu0 0.0
  %1455 = vmatpush1.xpose.msra.mxu0 0.0
  %1456 = vmatprep.subr.mxu0 0.0
  %1457 = vmatpush1.xpose.msra.mxu0 0.0
  %1458 = vmatprep.subr.mxu0 0.0
  %1459 = vmatpush1.xpose.msra.mxu0 0.0
  %1460 = vmatprep.subr.mxu0 0.0
  %1461 = vmatpush1.xpose.msra.mxu0 0.0
  %1462 = vmatprep.subr.mxu0 0.0
  %1463 = vmatpush1.xpose.msra.mxu0 0.0
  %1464 = vmatprep.subr.mxu0 0.0
  %1465 = vmatpush1.xpose.msra.mxu0 0.0
  %1466 = vmatprep.subr.mxu0 0.0
  %1467 = vmatpush1.xpose.msra.mxu0 0.0
  %1468 = vmatprep.subr.mxu0 0.0
  %1469 = vmatpush1.xpose.msra.mxu0 0.0
  %1470 = vmatprep.subr.mxu0 0.0
  %1471 = vmatpush1.xpose.msra.mxu0 0.0
  %1472 = vmatprep.subr.mxu0 0.0
  %1473 = vmatpush1.xpose.msra.mxu0 0.0
  %1474 = vmatprep.subr.mxu0 0.0
  %1475 = vmatpush1.xpose.msra.mxu0 0.0
  %1476 = vmatprep.subr.mxu0 0.0
  %1477 = vmatpush1.xpose.msra.mxu0 0.0
  %1478 = vmatprep.subr.mxu0 0.0
  %1479 = vmatpush1.xpose.msra.mxu0 0.0
  %1480 = vmatprep.subr.mxu0 0.0
  %1481 = vmatpush1.xpose.msra.mxu0 0.0
  %1482 = vmatprep.mubr.f32.mxu0 0.0
  %1483 = vmatmul.mubr.f32.gmra.mrb[0].mxu0 %v1410
  %v1484 = vpop.f32.mrb[0].mxu0
  %v1485 = vadd.f32 0.0, %v1484
  %v1486 = vpop.f32.mrb[0].mxu0
  %1487 = vdwg.mxu0
  %v1488 = vxor.u32 %v1485, 2147483648
  %v1489 = vmul.f32 %v1488, 1.442695
  %v1490 = vpow.pop %v1489
  %v1491 = vadd.f32 %v1490, 1.0
  %v1492 = vrcp.pop %v1491
  %v1493 = vmul.f32 1.0, %v1492
  %v1495 = vsel %vm517, %v1149, 0
  %1497 = vmatprep.subr.mxu0 %v27
  %1498 = vmatpush1.msra.mxu0 %v26
  %1499 = vmatprep.subr.mxu0 %v29
  %1500 = vmatpush1.msra.mxu0 %v28
  %1501 = vmatprep.subr.mxu0 0.0
  %1502 = vmatpush1.msra.mxu0 0.0
  %1503 = vmatprep.subr.mxu0 0.0
  %1504 = vmatpush1.msra.mxu0 0.0
  %1505 = vmatprep.subr.mxu0 0.0
  %1506 = vmatpush1.msra.mxu0 0.0
  %1507 = vmatprep.subr.mxu0 0.0
  %1508 = vmatpush1.msra.mxu0 0.0
  %1509 = vmatprep.subr.mxu0 0.0
  %1510 = vmatpush1.msra.mxu0 0.0
  %1511 = vmatprep.subr.mxu0 0.0
  %1512 = vmatpush1.msra.mxu0 0.0
  %1513 = vmatprep.subr.mxu0 0.0
  %1514 = vmatpush1.msra.mxu0 0.0
  %1515 = vmatprep.subr.mxu0 0.0
  %1516 = vmatpush1.msra.mxu0 0.0
  %1517 = vmatprep.subr.mxu0 0.0
  %1518 = vmatpush1.msra.mxu0 0.0
  %1519 = vmatprep.subr.mxu0 0.0
  %1520 = vmatpush1.msra.mxu0 0.0
  %1521 = vmatprep.subr.mxu0 0.0
  %1522 = vmatpush1.msra.mxu0 0.0
  %1523 = vmatprep.subr.mxu0 0.0
  %1524 = vmatpush1.msra.mxu0 0.0
  %1525 = vmatprep.subr.mxu0 0.0
  %1526 = vmatpush1.msra.mxu0 0.0
  %1527 = vmatprep.subr.mxu0 0.0
  %1528 = vmatpush1.msra.mxu0 0.0
  %1529 = vmatprep.subr.mxu0 0.0
  %1530 = vmatpush1.msra.mxu0 0.0
  %1531 = vmatprep.subr.mxu0 0.0
  %1532 = vmatpush1.msra.mxu0 0.0
  %1533 = vmatprep.subr.mxu0 0.0
  %1534 = vmatpush1.msra.mxu0 0.0
  %1535 = vmatprep.subr.mxu0 0.0
  %1536 = vmatpush1.msra.mxu0 0.0
  %1537 = vmatprep.subr.mxu0 0.0
  %1538 = vmatpush1.msra.mxu0 0.0
  %1539 = vmatprep.subr.mxu0 0.0
  %1540 = vmatpush1.msra.mxu0 0.0
  %1541 = vmatprep.subr.mxu0 0.0
  %1542 = vmatpush1.msra.mxu0 0.0
  %1543 = vmatprep.subr.mxu0 0.0
  %1544 = vmatpush1.msra.mxu0 0.0
  %1545 = vmatprep.subr.mxu0 0.0
  %1546 = vmatpush1.msra.mxu0 0.0
  %1547 = vmatprep.subr.mxu0 0.0
  %1548 = vmatpush1.msra.mxu0 0.0
  %1549 = vmatprep.subr.mxu0 0.0
  %1550 = vmatpush1.msra.mxu0 0.0
  %1551 = vmatprep.subr.mxu0 0.0
  %1552 = vmatpush1.msra.mxu0 0.0
  %1553 = vmatprep.subr.mxu0 0.0
  %1554 = vmatpush1.msra.mxu0 0.0
  %1555 = vmatprep.subr.mxu0 0.0
  %1556 = vmatpush1.msra.mxu0 0.0
  %1557 = vmatprep.subr.mxu0 0.0
  %1558 = vmatpush1.msra.mxu0 0.0
  %1559 = vmatprep.subr.mxu0 0.0
  %1560 = vmatpush1.msra.mxu0 0.0
  %1561 = vmatprep.mubr.f32.mxu0 0.0
  %1562 = vmatmul.mubr.f32.gmra.mrb[0].mxu0 %v1495
  %v1563 = vpop.f32.mrb[0].mxu0
  %v1564 = vadd.f32 0.0, %v1563
  %v1565 = vpop.f32.mrb[0].mxu0
  %v1566 = vadd.f32 0.0, %v1565
  %1567 = vdwg.mxu0
  %v1570 = vcombine.low %v1564, %v1566
  %v1572 = vunpack.c.l.s4 1966171168
  %v1573 = vunpack.c.0.s8 %v1572
  %v1574 = vlaneseq
  %v1575 = vshrl.u32 %v1574, 7
  %v1576 = vsub.s32 %v1573, %v1575
  %v1577 = vrot.slane %v1570, %v1576
  %v1579 = vunpack.c.l.s4 1966171168
  %v1580 = vunpack.c.0.s8 %v1579
  %v1581 = vlaneseq
  %v1582 = vshrl.u32 %v1581, 7
  %v1583 = vsub.s32 %v1580, %v1582
  %v1584 = vrot.slane %v1577, %v1583
  %s1586 = scalar_lea.vmem %s7, 16
  %1587 = vst.msk [vmem:[%s1586] ss:$8 sm:$0x3] %vm613, %v1584
  %1588 = vst.msk [vmem:[%s1586] ss:$8 sm:$0x0] %vm613, %v1584
  %v1590 = vsel %vm517, %v1235, 0
  %1592 = vmatprep.subr.mxu0 %v27
  %1593 = vmatpush1.msra.mxu0 %v26
  %1594 = vmatprep.subr.mxu0 %v29
  %1595 = vmatpush1.msra.mxu0 %v28
  %1596 = vmatprep.subr.mxu0 0.0
  %1597 = vmatpush1.msra.mxu0 0.0
  %1598 = vmatprep.subr.mxu0 0.0
  %1599 = vmatpush1.msra.mxu0 0.0
  %1600 = vmatprep.subr.mxu0 0.0
  %1601 = vmatpush1.msra.mxu0 0.0
  %1602 = vmatprep.subr.mxu0 0.0
  %1603 = vmatpush1.msra.mxu0 0.0
  %1604 = vmatprep.subr.mxu0 0.0
  %1605 = vmatpush1.msra.mxu0 0.0
  %1606 = vmatprep.subr.mxu0 0.0
  %1607 = vmatpush1.msra.mxu0 0.0
  %1608 = vmatprep.subr.mxu0 0.0
  %1609 = vmatpush1.msra.mxu0 0.0
  %1610 = vmatprep.subr.mxu0 0.0
  %1611 = vmatpush1.msra.mxu0 0.0
  %1612 = vmatprep.subr.mxu0 0.0
  %1613 = vmatpush1.msra.mxu0 0.0
  %1614 = vmatprep.subr.mxu0 0.0
  %1615 = vmatpush1.msra.mxu0 0.0
  %1616 = vmatprep.subr.mxu0 0.0
  %1617 = vmatpush1.msra.mxu0 0.0
  %1618 = vmatprep.subr.mxu0 0.0
  %1619 = vmatpush1.msra.mxu0 0.0
  %1620 = vmatprep.subr.mxu0 0.0
  %1621 = vmatpush1.msra.mxu0 0.0
  %1622 = vmatprep.subr.mxu0 0.0
  %1623 = vmatpush1.msra.mxu0 0.0
  %1624 = vmatprep.subr.mxu0 0.0
  %1625 = vmatpush1.msra.mxu0 0.0
  %1626 = vmatprep.subr.mxu0 0.0
  %1627 = vmatpush1.msra.mxu0 0.0
  %1628 = vmatprep.subr.mxu0 0.0
  %1629 = vmatpush1.msra.mxu0 0.0
  %1630 = vmatprep.subr.mxu0 0.0
  %1631 = vmatpush1.msra.mxu0 0.0
  %1632 = vmatprep.subr.mxu0 0.0
  %1633 = vmatpush1.msra.mxu0 0.0
  %1634 = vmatprep.subr.mxu0 0.0
  %1635 = vmatpush1.msra.mxu0 0.0
  %1636 = vmatprep.subr.mxu0 0.0
  %1637 = vmatpush1.msra.mxu0 0.0
  %1638 = vmatprep.subr.mxu0 0.0
  %1639 = vmatpush1.msra.mxu0 0.0
  %1640 = vmatprep.subr.mxu0 0.0
  %1641 = vmatpush1.msra.mxu0 0.0
  %1642 = vmatprep.subr.mxu0 0.0
  %1643 = vmatpush1.msra.mxu0 0.0
  %1644 = vmatprep.subr.mxu0 0.0
  %1645 = vmatpush1.msra.mxu0 0.0
  %1646 = vmatprep.subr.mxu0 0.0
  %1647 = vmatpush1.msra.mxu0 0.0
  %1648 = vmatprep.subr.mxu0 0.0
  %1649 = vmatpush1.msra.mxu0 0.0
  %1650 = vmatprep.subr.mxu0 0.0
  %1651 = vmatpush1.msra.mxu0 0.0
  %1652 = vmatprep.subr.mxu0 0.0
  %1653 = vmatpush1.msra.mxu0 0.0
  %1654 = vmatprep.subr.mxu0 0.0
  %1655 = vmatpush1.msra.mxu0 0.0
  %1656 = vmatprep.mubr.f32.mxu0 0.0
  %1657 = vmatmul.mubr.f32.gmra.mrb[0].mxu0 %v1590
  %v1658 = vpop.f32.mrb[0].mxu0
  %v1659 = vadd.f32 0.0, %v1658
  %v1660 = vpop.f32.mrb[0].mxu0
  %v1661 = vadd.f32 0.0, %v1660
  %1662 = vdwg.mxu0
  %v1665 = vcombine.low %v1659, %v1661
  %v1667 = vunpack.c.l.s4 1966171168
  %v1668 = vunpack.c.0.s8 %v1667
  %v1669 = vlaneseq
  %v1670 = vshrl.u32 %v1669, 7
  %v1671 = vsub.s32 %v1668, %v1670
  %v1672 = vrot.slane %v1665, %v1671
  %v1674 = vunpack.c.l.s4 1966171168
  %v1675 = vunpack.c.0.s8 %v1674
  %v1676 = vlaneseq
  %v1677 = vshrl.u32 %v1676, 7
  %v1678 = vsub.s32 %v1675, %v1677
  %v1679 = vrot.slane %v1672, %v1678
  %s1681 = scalar_lea.vmem %s1586, 1
  %1682 = vst.msk [vmem:[%s1681] ss:$8 sm:$0x3] %vm613, %v1679
  %1683 = vst.msk [vmem:[%s1681] ss:$8 sm:$0x0] %vm613, %v1679
  %v1685 = vsel %vm711, %v1407, 0
  %v1688 = vsel %vm715, %v1062, 0
  %v1691 = vsel %vm715, %v1063, 0
  %1693 = vmatprep.subr.mxu0 %v1061
  %1694 = vmatpush1.msra.mxu0 %v1060
  %1695 = vmatprep.subr.mxu0 %v1691
  %1696 = vmatpush1.msra.mxu0 %v1688
  %1697 = vmatprep.subr.mxu0 0.0
  %1698 = vmatpush1.msra.mxu0 0.0
  %1699 = vmatprep.subr.mxu0 0.0
  %1700 = vmatpush1.msra.mxu0 0.0
  %1701 = vmatprep.subr.mxu0 0.0
  %1702 = vmatpush1.msra.mxu0 0.0
  %1703 = vmatprep.subr.mxu0 0.0
  %1704 = vmatpush1.msra.mxu0 0.0
  %1705 = vmatprep.subr.mxu0 0.0
  %1706 = vmatpush1.msra.mxu0 0.0
  %1707 = vmatprep.subr.mxu0 0.0
  %1708 = vmatpush1.msra.mxu0 0.0
  %1709 = vmatprep.subr.mxu0 0.0
  %1710 = vmatpush1.msra.mxu0 0.0
  %1711 = vmatprep.subr.mxu0 0.0
  %1712 = vmatpush1.msra.mxu0 0.0
  %1713 = vmatprep.subr.mxu0 0.0
  %1714 = vmatpush1.msra.mxu0 0.0
  %1715 = vmatprep.subr.mxu0 0.0
  %1716 = vmatpush1.msra.mxu0 0.0
  %1717 = vmatprep.subr.mxu0 0.0
  %1718 = vmatpush1.msra.mxu0 0.0
  %1719 = vmatprep.subr.mxu0 0.0
  %1720 = vmatpush1.msra.mxu0 0.0
  %1721 = vmatprep.subr.mxu0 0.0
  %1722 = vmatpush1.msra.mxu0 0.0
  %1723 = vmatprep.subr.mxu0 0.0
  %1724 = vmatpush1.msra.mxu0 0.0
  %1725 = vmatprep.subr.mxu0 0.0
  %1726 = vmatpush1.msra.mxu0 0.0
  %1727 = vmatprep.subr.mxu0 0.0
  %1728 = vmatpush1.msra.mxu0 0.0
  %1729 = vmatprep.subr.mxu0 0.0
  %1730 = vmatpush1.msra.mxu0 0.0
  %1731 = vmatprep.subr.mxu0 0.0
  %1732 = vmatpush1.msra.mxu0 0.0
  %1733 = vmatprep.subr.mxu0 0.0
  %1734 = vmatpush1.msra.mxu0 0.0
  %1735 = vmatprep.subr.mxu0 0.0
  %1736 = vmatpush1.msra.mxu0 0.0
  %1737 = vmatprep.subr.mxu0 0.0
  %1738 = vmatpush1.msra.mxu0 0.0
  %1739 = vmatprep.subr.mxu0 0.0
  %1740 = vmatpush1.msra.mxu0 0.0
  %1741 = vmatprep.subr.mxu0 0.0
  %1742 = vmatpush1.msra.mxu0 0.0
  %1743 = vmatprep.subr.mxu0 0.0
  %1744 = vmatpush1.msra.mxu0 0.0
  %1745 = vmatprep.subr.mxu0 0.0
  %1746 = vmatpush1.msra.mxu0 0.0
  %1747 = vmatprep.subr.mxu0 0.0
  %1748 = vmatpush1.msra.mxu0 0.0
  %1749 = vmatprep.subr.mxu0 0.0
  %1750 = vmatpush1.msra.mxu0 0.0
  %1751 = vmatprep.subr.mxu0 0.0
  %1752 = vmatpush1.msra.mxu0 0.0
  %1753 = vmatprep.subr.mxu0 0.0
  %1754 = vmatpush1.msra.mxu0 0.0
  %1755 = vmatprep.subr.mxu0 0.0
  %1756 = vmatpush1.msra.mxu0 0.0
  %1757 = vmatprep.mubr.f32.mxu0 0.0
  %1758 = vmatmul.mubr.f32.gmra.mrb[0].mxu0 %v1685
  %v1759 = vpop.f32.mrb[0].mxu0
  %v1760 = vadd.f32 0.0, %v1759
  %v1761 = vpop.f32.mrb[0].mxu0
  %v1762 = vadd.f32 0.0, %v1761
  %1763 = vdwg.mxu0
  %v1766 = vcombine.low %v1760, %v1762
  %v1768 = vunpack.c.l.s4 1966171168
  %v1769 = vunpack.c.0.s8 %v1768
  %v1770 = vlaneseq
  %v1771 = vshrl.u32 %v1770, 7
  %v1772 = vsub.s32 %v1769, %v1771
  %v1773 = vrot.slane %v1766, %v1772
  %v1775 = vunpack.c.l.s4 1966171168
  %v1776 = vunpack.c.0.s8 %v1775
  %v1777 = vlaneseq
  %v1778 = vshrl.u32 %v1777, 7
  %v1779 = vsub.s32 %v1776, %v1778
  %v1780 = vrot.slane %v1773, %v1779
  %s1782 = scalar_lea.vmem %s1586, 2
  %1783 = vst.msk [vmem:[%s1782] ss:$8 sm:$0x3] %vm613, %v1780
  %1784 = vst.msk [vmem:[%s1782] ss:$8 sm:$0x0] %vm613, %v1780
  %v1786 = vsel %vm517, %v1321, 0
  %1788 = vmatprep.subr.mxu0 %v27
  %1789 = vmatpush1.msra.mxu0 %v26
  %1790 = vmatprep.subr.mxu0 %v29
  %1791 = vmatpush1.msra.mxu0 %v28
  %1792 = vmatprep.subr.mxu0 0.0
  %1793 = vmatpush1.msra.mxu0 0.0
  %1794 = vmatprep.subr.mxu0 0.0
  %1795 = vmatpush1.msra.mxu0 0.0
  %1796 = vmatprep.subr.mxu0 0.0
  %1797 = vmatpush1.msra.mxu0 0.0
  %1798 = vmatprep.subr.mxu0 0.0
  %1799 = vmatpush1.msra.mxu0 0.0
  %1800 = vmatprep.subr.mxu0 0.0
  %1801 = vmatpush1.msra.mxu0 0.0
  %1802 = vmatprep.subr.mxu0 0.0
  %1803 = vmatpush1.msra.mxu0 0.0
  %1804 = vmatprep.subr.mxu0 0.0
  %1805 = vmatpush1.msra.mxu0 0.0
  %1806 = vmatprep.subr.mxu0 0.0
  %1807 = vmatpush1.msra.mxu0 0.0
  %1808 = vmatprep.subr.mxu0 0.0
  %1809 = vmatpush1.msra.mxu0 0.0
  %1810 = vmatprep.subr.mxu0 0.0
  %1811 = vmatpush1.msra.mxu0 0.0
  %1812 = vmatprep.subr.mxu0 0.0
  %1813 = vmatpush1.msra.mxu0 0.0
  %1814 = vmatprep.subr.mxu0 0.0
  %1815 = vmatpush1.msra.mxu0 0.0
  %1816 = vmatprep.subr.mxu0 0.0
  %1817 = vmatpush1.msra.mxu0 0.0
  %1818 = vmatprep.subr.mxu0 0.0
  %1819 = vmatpush1.msra.mxu0 0.0
  %1820 = vmatprep.subr.mxu0 0.0
  %1821 = vmatpush1.msra.mxu0 0.0
  %1822 = vmatprep.subr.mxu0 0.0
  %1823 = vmatpush1.msra.mxu0 0.0
  %1824 = vmatprep.subr.mxu0 0.0
  %1825 = vmatpush1.msra.mxu0 0.0
  %1826 = vmatprep.subr.mxu0 0.0
  %1827 = vmatpush1.msra.mxu0 0.0
  %1828 = vmatprep.subr.mxu0 0.0
  %1829 = vmatpush1.msra.mxu0 0.0
  %1830 = vmatprep.subr.mxu0 0.0
  %1831 = vmatpush1.msra.mxu0 0.0
  %1832 = vmatprep.subr.mxu0 0.0
  %1833 = vmatpush1.msra.mxu0 0.0
  %1834 = vmatprep.subr.mxu0 0.0
  %1835 = vmatpush1.msra.mxu0 0.0
  %1836 = vmatprep.subr.mxu0 0.0
  %1837 = vmatpush1.msra.mxu0 0.0
  %1838 = vmatprep.subr.mxu0 0.0
  %1839 = vmatpush1.msra.mxu0 0.0
  %1840 = vmatprep.subr.mxu0 0.0
  %1841 = vmatpush1.msra.mxu0 0.0
  %1842 = vmatprep.subr.mxu0 0.0
  %1843 = vmatpush1.msra.mxu0 0.0
  %1844 = vmatprep.subr.mxu0 0.0
  %1845 = vmatpush1.msra.mxu0 0.0
  %1846 = vmatprep.subr.mxu0 0.0
  %1847 = vmatpush1.msra.mxu0 0.0
  %1848 = vmatprep.subr.mxu0 0.0
  %1849 = vmatpush1.msra.mxu0 0.0
  %1850 = vmatprep.subr.mxu0 0.0
  %1851 = vmatpush1.msra.mxu0 0.0
  %1852 = vmatprep.mubr.f32.mxu0 0.0
  %1853 = vmatmul.mubr.f32.gmra.mrb[0].mxu0 %v1786
  %v1854 = vpop.f32.mrb[0].mxu0
  %v1855 = vadd.f32 0.0, %v1854
  %v1856 = vpop.f32.mrb[0].mxu0
  %v1857 = vadd.f32 0.0, %v1856
  %1858 = vdwg.mxu0
  %v1861 = vcombine.low %v1855, %v1857
  %v1863 = vunpack.c.l.s4 1966171168
  %v1864 = vunpack.c.0.s8 %v1863
  %v1865 = vlaneseq
  %v1866 = vshrl.u32 %v1865, 7
  %v1867 = vsub.s32 %v1864, %v1866
  %v1868 = vrot.slane %v1861, %v1867
  %v1870 = vunpack.c.l.s4 1966171168
  %v1871 = vunpack.c.0.s8 %v1870
  %v1872 = vlaneseq
  %v1873 = vshrl.u32 %v1872, 7
  %v1874 = vsub.s32 %v1871, %v1873
  %v1875 = vrot.slane %v1868, %v1874
  %s1877 = scalar_lea.vmem %s1586, 3
  %1878 = vst.msk [vmem:[%s1877] ss:$8 sm:$0x3] %vm613, %v1875
  %1879 = vst.msk [vmem:[%s1877] ss:$8 sm:$0x0] %vm613, %v1875
  %v1881 = vsel %vm711, %v1493, 0
  %1883 = vmatprep.subr.mxu0 %v1061
  %1884 = vmatpush1.msra.mxu0 %v1060
  %1885 = vmatprep.subr.mxu0 %v1691
  %1886 = vmatpush1.msra.mxu0 %v1688
  %1887 = vmatprep.subr.mxu0 0.0
  %1888 = vmatpush1.msra.mxu0 0.0
  %1889 = vmatprep.subr.mxu0 0.0
  %1890 = vmatpush1.msra.mxu0 0.0
  %1891 = vmatprep.subr.mxu0 0.0
  %1892 = vmatpush1.msra.mxu0 0.0
  %1893 = vmatprep.subr.mxu0 0.0
  %1894 = vmatpush1.msra.mxu0 0.0
  %1895 = vmatprep.subr.mxu0 0.0
  %1896 = vmatpush1.msra.mxu0 0.0
  %1897 = vmatprep.subr.mxu0 0.0
  %1898 = vmatpush1.msra.mxu0 0.0
  %1899 = vmatprep.subr.mxu0 0.0
  %1900 = vmatpush1.msra.mxu0 0.0
  %1901 = vmatprep.subr.mxu0 0.0
  %1902 = vmatpush1.msra.mxu0 0.0
  %1903 = vmatprep.subr.mxu0 0.0
  %1904 = vmatpush1.msra.mxu0 0.0
  %1905 = vmatprep.subr.mxu0 0.0
  %1906 = vmatpush1.msra.mxu0 0.0
  %1907 = vmatprep.subr.mxu0 0.0
  %1908 = vmatpush1.msra.mxu0 0.0
  %1909 = vmatprep.subr.mxu0 0.0
  %1910 = vmatpush1.msra.mxu0 0.0
  %1911 = vmatprep.subr.mxu0 0.0
  %1912 = vmatpush1.msra.mxu0 0.0
  %1913 = vmatprep.subr.mxu0 0.0
  %1914 = vmatpush1.msra.mxu0 0.0
  %1915 = vmatprep.subr.mxu0 0.0
  %1916 = vmatpush1.msra.mxu0 0.0
  %1917 = vmatprep.subr.mxu0 0.0
  %1918 = vmatpush1.msra.mxu0 0.0
  %1919 = vmatprep.subr.mxu0 0.0
  %1920 = vmatpush1.msra.mxu0 0.0
  %1921 = vmatprep.subr.mxu0 0.0
  %1922 = vmatpush1.msra.mxu0 0.0
  %1923 = vmatprep.subr.mxu0 0.0
  %1924 = vmatpush1.msra.mxu0 0.0
  %1925 = vmatprep.subr.mxu0 0.0
  %1926 = vmatpush1.msra.mxu0 0.0
  %1927 = vmatprep.subr.mxu0 0.0
  %1928 = vmatpush1.msra.mxu0 0.0
  %1929 = vmatprep.subr.mxu0 0.0
  %1930 = vmatpush1.msra.mxu0 0.0
  %1931 = vmatprep.subr.mxu0 0.0
  %1932 = vmatpush1.msra.mxu0 0.0
  %1933 = vmatprep.subr.mxu0 0.0
  %1934 = vmatpush1.msra.mxu0 0.0
  %1935 = vmatprep.subr.mxu0 0.0
  %1936 = vmatpush1.msra.mxu0 0.0
  %1937 = vmatprep.subr.mxu0 0.0
  %1938 = vmatpush1.msra.mxu0 0.0
  %1939 = vmatprep.subr.mxu0 0.0
  %1940 = vmatpush1.msra.mxu0 0.0
  %1941 = vmatprep.subr.mxu0 0.0
  %1942 = vmatpush1.msra.mxu0 0.0
  %1943 = vmatprep.subr.mxu0 0.0
  %1944 = vmatpush1.msra.mxu0 0.0
  %1945 = vmatprep.subr.mxu0 0.0
  %1946 = vmatpush1.msra.mxu0 0.0
  %1947 = vmatprep.mubr.f32.mxu0 0.0
  %1948 = vmatmul.mubr.f32.gmra.mrb[0].mxu0 %v1881
  %v1949 = vpop.f32.mrb[0].mxu0
  %v1950 = vadd.f32 0.0, %v1949
  %v1951 = vpop.f32.mrb[0].mxu0
  %v1952 = vadd.f32 0.0, %v1951
  %1953 = vdwg.mxu0
  %v1956 = vcombine.low %v1950, %v1952
  %v1958 = vunpack.c.l.s4 1966171168
  %v1959 = vunpack.c.0.s8 %v1958
  %v1960 = vlaneseq
  %v1961 = vshrl.u32 %v1960, 7
  %v1962 = vsub.s32 %v1959, %v1961
  %v1963 = vrot.slane %v1956, %v1962
  %v1965 = vunpack.c.l.s4 1966171168
  %v1966 = vunpack.c.0.s8 %v1965
  %v1967 = vlaneseq
  %v1968 = vshrl.u32 %v1967, 7
  %v1969 = vsub.s32 %v1966, %v1968
  %v1970 = vrot.slane %v1963, %v1969
  %s1972 = scalar_lea.vmem %s1586, 4
  %1973 = vst.msk [vmem:[%s1972] ss:$8 sm:$0x3] %vm613, %v1970
  %1974 = vst.msk [vmem:[%s1972] ss:$8 sm:$0x0] %vm613, %v1970
  // Predicated region
  $region30: #{forward.7} parent=0 // pred_check
    _
  $region31: #{forward.7} parent=0 // pred_check_branch
    %1976 = sbr.rel (0) target = $region33
  $region32: #{forward.7} parent=0 // pred_region
    _
  $region33: #{forward.7} parent=0 // pred_fallthru
    _
  // Predicated region
  $region34: #{forward.7} parent=0 // pred_check
    _
  $region35: #{forward.7} parent=0 // pred_check_branch
    %1978 = sbr.rel (0) target = $region37
  $region36: #{forward.7} parent=0 // pred_region
    _
  $region37: #{forward.7} parent=0 // pred_fallthru
    _

// kernel: forward.6
$region0: #{forward.6}
  #allocation0 [shape = 'u32[]', space=smem, size = 0x4, offset = 0x4, fixed_abs, tag = 'smem constant byte address 0x4 - core index']
  #allocation1 [shape = 'u32[144,128]{1,0:T(1,128)}', space=vmem, size = 0x12000, scoped, tag = 'internal scratch']
  %s0 = inlined_call_operand.vmem [shape: f32[2,9,32], index: 0, kind: input, shape index: {}]
  %s1 = inlined_call_operand.vmem [shape: f32[11,2,16,32], index: 1, kind: input, shape index: {}]
  %s2 = inlined_call_operand.vmem [shape: f32[11,2,9,32], index: 2, kind: output, shape index: {}]
  %s3 = sld [smem:[#allocation0]]
  $region18: #{forward.6} parent=0
    _
  %s5 = ssub.s32 1, %s3
  %s6 = scalar_select 0, %s5, %s3
  // Predicated region
  $region2: #{forward.6} parent=0 // pred_check
    _
  $region3: #{forward.6} parent=0 // pred_check_branch
    %8 = sbr.rel (0) target = $region5
  $region4: #{forward.6} parent=0 // pred_region
    _
  $region5: #{forward.6} parent=0 // pred_fallthru
    _
  // Predicated region
  $region6: #{forward.6} parent=0 // pred_check
    _
  $region7: #{forward.6} parent=0 // pred_check_branch
    %10 = sbr.rel (0) target = $region9
  $region8: #{forward.6} parent=0 // pred_region
    _
  $region9: #{forward.6} parent=0 // pred_fallthru
    _
  %v11 = vld [vmem:[%s0] sm:$0xff]
  %v12 = vld [vmem:[%s0 + $0x8] sm:$0x1]
  %v13 = vld [vmem:[%s1] sm:$0xff]
  %v14 = vld [vmem:[%s1 + $0x8] sm:$0xff]
  %vm15 = vcmask 261120
  %v17 = vsel %vm15, %v11, 0
  %v20 = vsel %vm15, %v12, 0
  %v23 = vsel %vm15, %v13, 0
  %v26 = vsel %vm15, %v14, 0
  %28 = vmatprep.subr.mxu0 0.0
  %29 = vmatpush1.xpose.msra.mxu0 %v23
  %30 = vmatprep.subr.mxu0 0.0
  %31 = vmatpush1.xpose.msra.mxu0 %v26
  %32 = vmatprep.subr.mxu0 0.0
  %33 = vmatpush1.xpose.msra.mxu0 0.0
  %34 = vmatprep.subr.mxu0 0.0
  %35 = vmatpush1.xpose.msra.mxu0 0.0
  %36 = vmatprep.subr.mxu0 0.0
  %37 = vmatpush1.xpose.msra.mxu0 0.0
  %38 = vmatprep.subr.mxu0 0.0
  %39 = vmatpush1.xpose.msra.mxu0 0.0
  %40 = vmatprep.subr.mxu0 0.0
  %41 = vmatpush1.xpose.msra.mxu0 0.0
  %42 = vmatprep.subr.mxu0 0.0
  %43 = vmatpush1.xpose.msra.mxu0 0.0
  %44 = vmatprep.subr.mxu0 0.0
  %45 = vmatpush1.xpose.msra.mxu0 0.0
  %46 = vmatprep.subr.mxu0 0.0
  %47 = vmatpush1.xpose.msra.mxu0 0.0
  %48 = vmatprep.subr.mxu0 0.0
  %49 = vmatpush1.xpose.msra.mxu0 0.0
  %50 = vmatprep.subr.mxu0 0.0
  %51 = vmatpush1.xpose.msra.mxu0 0.0
  %52 = vmatprep.subr.mxu0 0.0
  %53 = vmatpush1.xpose.msra.mxu0 0.0
  %54 = vmatprep.subr.mxu0 0.0
  %55 = vmatpush1.xpose.msra.mxu0 0.0
  %56 = vmatprep.subr.mxu0 0.0
  %57 = vmatpush1.xpose.msra.mxu0 0.0
  %58 = vmatprep.subr.mxu0 0.0
  %59 = vmatpush1.xpose.msra.mxu0 0.0
  %60 = vmatprep.subr.mxu0 0.0
  %61 = vmatpush1.xpose.msra.mxu0 0.0
  %62 = vmatprep.subr.mxu0 0.0
  %63 = vmatpush1.xpose.msra.mxu0 0.0
  %64 = vmatprep.subr.mxu0 0.0
  %65 = vmatpush1.xpose.msra.mxu0 0.0
  %66 = vmatprep.subr.mxu0 0.0
  %67 = vmatpush1.xpose.msra.mxu0 0.0
  %68 = vmatprep.subr.mxu0 0.0
  %69 = vmatpush1.xpose.msra.mxu0 0.0
  %70 = vmatprep.subr.mxu0 0.0
  %71 = vmatpush1.xpose.msra.mxu0 0.0
  %72 = vmatprep.subr.mxu0 0.0
  %73 = vmatpush1.xpose.msra.mxu0 0.0
  %74 = vmatprep.subr.mxu0 0.0
  %75 = vmatpush1.xpose.msra.mxu0 0.0
  %76 = vmatprep.subr.mxu0 0.0
  %77 = vmatpush1.xpose.msra.mxu0 0.0
  %78 = vmatprep.subr.mxu0 0.0
  %79 = vmatpush1.xpose.msra.mxu0 0.0
  %80 = vmatprep.subr.mxu0 0.0
  %81 = vmatpush1.xpose.msra.mxu0 0.0
  %82 = vmatprep.subr.mxu0 0.0
  %83 = vmatpush1.xpose.msra.mxu0 0.0
  %84 = vmatprep.subr.mxu0 0.0
  %85 = vmatpush1.xpose.msra.mxu0 0.0
  %86 = vmatprep.subr.mxu0 0.0
  %87 = vmatpush1.xpose.msra.mxu0 0.0
  %88 = vmatprep.subr.mxu0 0.0
  %89 = vmatpush1.xpose.msra.mxu0 0.0
  %90 = vmatprep.subr.mxu0 0.0
  %91 = vmatpush1.xpose.msra.mxu0 0.0
  %92 = vmatprep.mubr.f32.mxu0 0.0
  %93 = vmatmul.mubr.f32.gmra.mrb[0].mxu0 %v17
  %v94 = vpop.f32.mrb[0].mxu0
  %v95 = vadd.f32 0.0, %v94
  %v96 = vpop.f32.mrb[0].mxu0
  %97 = vmatprep.mubr.f32.mxu0 0.0
  %98 = vmatmul.mubr.f32.gmra.mrb[0].mxu0 %v20
  %v99 = vpop.f32.mrb[0].mxu0
  %v100 = vadd.f32 0.0, %v99
  %v101 = vpop.f32.mrb[0].mxu0
  %102 = vdwg.mxu0
  %v103 = vmul.f32 %v95, 0.17677669
  %v104 = vmul.f32 %v100, 0.17677669
  %vm105 = vcmask 130048
  %v106 = vsel %vm105, %v103, -inf
  %107 = vmax.xlane.f32.xlu0 %v106
  %v108 = vpop.xlane.xlu0 %107
  %vm109 = vcmask 122880
  %v110 = vsel %vm109, %v104, -inf
  %111 = vmax.xlane.f32.xlu0 %v110
  %v112 = vpop.xlane.xlu0 %111
  %v113 = vsub.f32 %v103, %v108
  %v114 = vsub.f32 %v104, %v112
  %v115 = vmul.f32 %v113, 1.442695
  %v116 = vpow.pop %v115
  %v117 = vmul.f32 %v114, 1.442695
  %v118 = vpow.pop %v117
  %v119 = vsel %vm105, %v116, 0.0
  %120 = vadd.xlane.f32.xlu0 %v119
  %v121 = vpop.xlane.xlu0 %120
  %v122 = vsel %vm109, %v118, 0.0
  %123 = vadd.xlane.f32.xlu0 %v122
  %v124 = vpop.xlane.xlu0 %123
  %v125 = vrcp.pop %v121
  %v126 = vmul.f32 %v116, %v125
  %v127 = vrcp.pop %v124
  %v128 = vmul.f32 %v118, %v127
  %v130 = vsel %vm105, %v126, 0
  %v133 = vsel %vm105, %v128, 0
  %135 = vmatprep.subr.mxu0 0.0
  %136 = vmatpush1.msra.mxu0 %v13
  %137 = vmatprep.subr.mxu0 0.0
  %138 = vmatpush1.msra.mxu0 %v14
  %139 = vmatprep.subr.mxu0 0.0
  %140 = vmatpush1.msra.mxu0 0.0
  %141 = vmatprep.subr.mxu0 0.0
  %142 = vmatpush1.msra.mxu0 0.0
  %143 = vmatprep.subr.mxu0 0.0
  %144 = vmatpush1.msra.mxu0 0.0
  %145 = vmatprep.subr.mxu0 0.0
  %146 = vmatpush1.msra.mxu0 0.0
  %147 = vmatprep.subr.mxu0 0.0
  %148 = vmatpush1.msra.mxu0 0.0
  %149 = vmatprep.subr.mxu0 0.0
  %150 = vmatpush1.msra.mxu0 0.0
  %151 = vmatprep.subr.mxu0 0.0
  %152 = vmatpush1.msra.mxu0 0.0
  %153 = vmatprep.subr.mxu0 0.0
  %154 = vmatpush1.msra.mxu0 0.0
  %155 = vmatprep.subr.mxu0 0.0
  %156 = vmatpush1.msra.mxu0 0.0
  %157 = vmatprep.subr.mxu0 0.0
  %158 = vmatpush1.msra.mxu0 0.0
  %159 = vmatprep.subr.mxu0 0.0
  %160 = vmatpush1.msra.mxu0 0.0
  %161 = vmatprep.subr.mxu0 0.0
  %162 = vmatpush1.msra.mxu0 0.0
  %163 = vmatprep.subr.mxu0 0.0
  %164 = vmatpush1.msra.mxu0 0.0
  %165 = vmatprep.subr.mxu0 0.0
  %166 = vmatpush1.msra.mxu0 0.0
  %167 = vmatprep.subr.mxu0 0.0
  %168 = vmatpush1.msra.mxu0 0.0
  %169 = vmatprep.subr.mxu0 0.0
  %170 = vmatpush1.msra.mxu0 0.0
  %171 = vmatprep.subr.mxu0 0.0
  %172 = vmatpush1.msra.mxu0 0.0
  %173 = vmatprep.subr.mxu0 0.0
  %174 = vmatpush1.msra.mxu0 0.0
  %175 = vmatprep.subr.mxu0 0.0
  %176 = vmatpush1.msra.mxu0 0.0
  %177 = vmatprep.subr.mxu0 0.0
  %178 = vmatpush1.msra.mxu0 0.0
  %179 = vmatprep.subr.mxu0 0.0
  %180 = vmatpush1.msra.mxu0 0.0
  %181 = vmatprep.subr.mxu0 0.0
  %182 = vmatpush1.msra.mxu0 0.0
  %183 = vmatprep.subr.mxu0 0.0
  %184 = vmatpush1.msra.mxu0 0.0
  %185 = vmatprep.subr.mxu0 0.0
  %186 = vmatpush1.msra.mxu0 0.0
  %187 = vmatprep.subr.mxu0 0.0
  %188 = vmatpush1.msra.mxu0 0.0
  %189 = vmatprep.subr.mxu0 0.0
  %190 = vmatpush1.msra.mxu0 0.0
  %191 = vmatprep.subr.mxu0 0.0
  %192 = vmatpush1.msra.mxu0 0.0
  %193 = vmatprep.subr.mxu0 0.0
  %194 = vmatpush1.msra.mxu0 0.0
  %195 = vmatprep.subr.mxu0 0.0
  %196 = vmatpush1.msra.mxu0 0.0
  %197 = vmatprep.subr.mxu0 0.0
  %198 = vmatpush1.msra.mxu0 0.0
  %199 = vmatprep.mubr.f32.mxu0 0.0
  %200 = vmatmul.mubr.f32.gmra.mrb[0].mxu0 %v130
  %v201 = vpop.f32.mrb[0].mxu0
  %v202 = vadd.f32 0.0, %v201
  %v203 = vpop.f32.mrb[0].mxu0
  %204 = vmatprep.mubr.f32.mxu0 0.0
  %205 = vmatmul.mubr.f32.gmra.mrb[0].mxu0 %v133
  %v206 = vpop.f32.mrb[0].mxu0
  %v207 = vadd.f32 0.0, %v206
  %v208 = vpop.f32.mrb[0].mxu0
  %209 = vdwg.mxu0
  %v210 = vadd.f32 %v11, %v202
  %v211 = vadd.f32 %v12, %v207
  %212 = vst.msk [vmem:[%s2] sm:$0xff] %vm15, %v210
  %vm213 = vcmask 253952
  %214 = vst.msk [vmem:[%s2 + $0x8] sm:$0x1] %vm213, %v211
  %s215 = scalar_lea.vmem %s1, 32
  %v216 = vld [vmem:[%s215] sm:$0xff]
  %v217 = vld [vmem:[%s215 + $0x8] sm:$0xff]
  %v219 = vsel %vm15, %v210, 0
  %v222 = vsel %vm15, %v211, 0
  %v225 = vsel %vm15, %v216, 0
  %v228 = vsel %vm15, %v217, 0
  %230 = vmatprep.subr.mxu0 0.0
  %231 = vmatpush1.xpose.msra.mxu0 %v225
  %232 = vmatprep.subr.mxu0 0.0
  %233 = vmatpush1.xpose.msra.mxu0 %v228
  %234 = vmatprep.subr.mxu0 0.0
  %235 = vmatpush1.xpose.msra.mxu0 0.0
  %236 = vmatprep.subr.mxu0 0.0
  %237 = vmatpush1.xpose.msra.mxu0 0.0
  %238 = vmatprep.subr.mxu0 0.0
  %239 = vmatpush1.xpose.msra.mxu0 0.0
  %240 = vmatprep.subr.mxu0 0.0
  %241 = vmatpush1.xpose.msra.mxu0 0.0
  %242 = vmatprep.subr.mxu0 0.0
  %243 = vmatpush1.xpose.msra.mxu0 0.0
  %244 = vmatprep.subr.mxu0 0.0
  %245 = vmatpush1.xpose.msra.mxu0 0.0
  %246 = vmatprep.subr.mxu0 0.0
  %247 = vmatpush1.xpose.msra.mxu0 0.0
  %248 = vmatprep.subr.mxu0 0.0
  %249 = vmatpush1.xpose.msra.mxu0 0.0
  %250 = vmatprep.subr.mxu0 0.0
  %251 = vmatpush1.xpose.msra.mxu0 0.0
  %252 = vmatprep.subr.mxu0 0.0
  %253 = vmatpush1.xpose.msra.mxu0 0.0
  %254 = vmatprep.subr.mxu0 0.0
  %255 = vmatpush1.xpose.msra.mxu0 0.0
  %256 = vmatprep.subr.mxu0 0.0
  %257 = vmatpush1.xpose.msra.mxu0 0.0
  %258 = vmatprep.subr.mxu0 0.0
  %259 = vmatpush1.xpose.msra.mxu0 0.0
  %260 = vmatprep.subr.mxu0 0.0
  %261 = vmatpush1.xpose.msra.mxu0 0.0
  %262 = vmatprep.subr.mxu0 0.0
  %263 = vmatpush1.xpose.msra.mxu0 0.0
  %264 = vmatprep.subr.mxu0 0.0
  %265 = vmatpush1.xpose.msra.mxu0 0.0
  %266 = vmatprep.subr.mxu0 0.0
  %267 = vmatpush1.xpose.msra.mxu0 0.0
  %268 = vmatprep.subr.mxu0 0.0
  %269 = vmatpush1.xpose.msra.mxu0 0.0
  %270 = vmatprep.subr.mxu0 0.0
  %271 = vmatpush1.xpose.msra.mxu0 0.0
  %272 = vmatprep.subr.mxu0 0.0
  %273 = vmatpush1.xpose.msra.mxu0 0.0
  %274 = vmatprep.subr.mxu0 0.0
  %275 = vmatpush1.xpose.msra.mxu0 0.0
  %276 = vmatprep.subr.mxu0 0.0
  %277 = vmatpush1.xpose.msra.mxu0 0.0
  %278 = vmatprep.subr.mxu0 0.0
  %279 = vmatpush1.xpose.msra.mxu0 0.0
  %280 = vmatprep.subr.mxu0 0.0
  %281 = vmatpush1.xpose.msra.mxu0 0.0
  %282 = vmatprep.subr.mxu0 0.0
  %283 = vmatpush1.xpose.msra.mxu0 0.0
  %284 = vmatprep.subr.mxu0 0.0
  %285 = vmatpush1.xpose.msra.mxu0 0.0
  %286 = vmatprep.subr.mxu0 0.0
  %287 = vmatpush1.xpose.msra.mxu0 0.0
  %288 = vmatprep.subr.mxu0 0.0
  %289 = vmatpush1.xpose.msra.mxu0 0.0
  %290 = vmatprep.subr.mxu0 0.0
  %291 = vmatpush1.xpose.msra.mxu0 0.0
  %292 = vmatprep.subr.mxu0 0.0
  %293 = vmatpush1.xpose.msra.mxu0 0.0
  %294 = vmatprep.mubr.f32.mxu0 0.0
  %295 = vmatmul.mubr.f32.gmra.mrb[0].mxu0 %v219
  %v296 = vpop.f32.mrb[0].mxu0
  %v297 = vadd.f32 0.0, %v296
  %v298 = vpop.f32.mrb[0].mxu0
  %299 = vmatprep.mubr.f32.mxu0 0.0
  %300 = vmatmul.mubr.f32.gmra.mrb[0].mxu0 %v222
  %v301 = vpop.f32.mrb[0].mxu0
  %v302 = vadd.f32 0.0, %v301
  %v303 = vpop.f32.mrb[0].mxu0
  %304 = vdwg.mxu0
  %v305 = vmul.f32 %v297, 0.17677669
  %v306 = vmul.f32 %v302, 0.17677669
  %v307 = vsel %vm105, %v305, -inf
  %308 = vmax.xlane.f32.xlu0 %v307
  %v309 = vpop.xlane.xlu0 %308
  %v310 = vsel %vm109, %v306, -inf
  %311 = vmax.xlane.f32.xlu0 %v310
  %v312 = vpop.xlane.xlu0 %311
  %v313 = vsub.f32 %v305, %v309
  %v314 = vsub.f32 %v306, %v312
  %v315 = vmul.f32 %v313, 1.442695
  %v316 = vpow.pop %v315
  %v317 = vmul.f32 %v314, 1.442695
  %v318 = vpow.pop %v317
  %v319 = vsel %vm105, %v316, 0.0
  %320 = vadd.xlane.f32.xlu0 %v319
  %v321 = vpop.xlane.xlu0 %320
  %v322 = vsel %vm109, %v318, 0.0
  %323 = vadd.xlane.f32.xlu0 %v322
  %v324 = vpop.xlane.xlu0 %323
  %v325 = vrcp.pop %v321
  %v326 = vmul.f32 %v316, %v325
  %v327 = vrcp.pop %v324
  %v328 = vmul.f32 %v318, %v327
  %v330 = vsel %vm105, %v326, 0
  %v333 = vsel %vm105, %v328, 0
  %335 = vmatprep.subr.mxu0 0.0
  %336 = vmatpush1.msra.mxu0 %v216
  %337 = vmatprep.subr.mxu0 0.0
  %338 = vmatpush1.msra.mxu0 %v217
  %339 = vmatprep.subr.mxu0 0.0
  %340 = vmatpush1.msra.mxu0 0.0
  %341 = vmatprep.subr.mxu0 0.0
  %342 = vmatpush1.msra.mxu0 0.0
  %343 = vmatprep.subr.mxu0 0.0
  %344 = vmatpush1.msra.mxu0 0.0
  %345 = vmatprep.subr.mxu0 0.0
  %346 = vmatpush1.msra.mxu0 0.0
  %347 = vmatprep.subr.mxu0 0.0
  %348 = vmatpush1.msra.mxu0 0.0
  %349 = vmatprep.subr.mxu0 0.0
  %350 = vmatpush1.msra.mxu0 0.0
  %351 = vmatprep.subr.mxu0 0.0
  %352 = vmatpush1.msra.mxu0 0.0
  %353 = vmatprep.subr.mxu0 0.0
  %354 = vmatpush1.msra.mxu0 0.0
  %355 = vmatprep.subr.mxu0 0.0
  %356 = vmatpush1.msra.mxu0 0.0
  %357 = vmatprep.subr.mxu0 0.0
  %358 = vmatpush1.msra.mxu0 0.0
  %359 = vmatprep.subr.mxu0 0.0
  %360 = vmatpush1.msra.mxu0 0.0
  %361 = vmatprep.subr.mxu0 0.0
  %362 = vmatpush1.msra.mxu0 0.0
  %363 = vmatprep.subr.mxu0 0.0
  %364 = vmatpush1.msra.mxu0 0.0
  %365 = vmatprep.subr.mxu0 0.0
  %366 = vmatpush1.msra.mxu0 0.0
  %367 = vmatprep.subr.mxu0 0.0
  %368 = vmatpush1.msra.mxu0 0.0
  %369 = vmatprep.subr.mxu0 0.0
  %370 = vmatpush1.msra.mxu0 0.0
  %371 = vmatprep.subr.mxu0 0.0
  %372 = vmatpush1.msra.mxu0 0.0
  %373 = vmatprep.subr.mxu0 0.0
  %374 = vmatpush1.msra.mxu0 0.0
  %375 = vmatprep.subr.mxu0 0.0
  %376 = vmatpush1.msra.mxu0 0.0
  %377 = vmatprep.subr.mxu0 0.0
  %378 = vmatpush1.msra.mxu0 0.0
  %379 = vmatprep.subr.mxu0 0.0
  %380 = vmatpush1.msra.mxu0 0.0
  %381 = vmatprep.subr.mxu0 0.0
  %382 = vmatpush1.msra.mxu0 0.0
  %383 = vmatprep.subr.mxu0 0.0
  %384 = vmatpush1.msra.mxu0 0.0
  %385 = vmatprep.subr.mxu0 0.0
  %386 = vmatpush1.msra.mxu0 0.0
  %387 = vmatprep.subr.mxu0 0.0
  %388 = vmatpush1.msra.mxu0 0.0
  %389 = vmatprep.subr.mxu0 0.0
  %390 = vmatpush1.msra.mxu0 0.0
  %391 = vmatprep.subr.mxu0 0.0
  %392 = vmatpush1.msra.mxu0 0.0
  %393 = vmatprep.subr.mxu0 0.0
  %394 = vmatpush1.msra.mxu0 0.0
  %395 = vmatprep.subr.mxu0 0.0
  %396 = vmatpush1.msra.mxu0 0.0
  %397 = vmatprep.subr.mxu0 0.0
  %398 = vmatpush1.msra.mxu0 0.0
  %399 = vmatprep.mubr.f32.mxu0 0.0
  %400 = vmatmul.mubr.f32.gmra.mrb[0].mxu0 %v330
  %v401 = vpop.f32.mrb[0].mxu0
  %v402 = vadd.f32 0.0, %v401
  %v403 = vpop.f32.mrb[0].mxu0
  %404 = vmatprep.mubr.f32.mxu0 0.0
  %405 = vmatmul.mubr.f32.gmra.mrb[0].mxu0 %v333
  %v406 = vpop.f32.mrb[0].mxu0
  %v407 = vadd.f32 0.0, %v406
  %v408 = vpop.f32.mrb[0].mxu0
  %409 = vdwg.mxu0
  %v410 = vadd.f32 %v210, %v402
  %v411 = vadd.f32 %v211, %v407
  %s412 = scalar_lea.vmem %s2, 32
  %413 = vst.msk [vmem:[%s412] sm:$0xff] %vm15, %v410
  %414 = vst.msk [vmem:[%s412 + $0x8] sm:$0x1] %vm213, %v411
  %s415 = scalar_lea.vmem %s1, 64
  %v416 = vld [vmem:[%s415] sm:$0xff]
  %v417 = vld [vmem:[%s415 + $0x8] sm:$0xff]
  %v419 = vsel %vm15, %v410, 0
  %v422 = vsel %vm15, %v411, 0
  %v425 = vsel %vm15, %v416, 0
  %v428 = vsel %vm15, %v417, 0
  %430 = vmatprep.subr.mxu0 0.0
  %431 = vmatpush1.xpose.msra.mxu0 %v425
  %432 = vmatprep.subr.mxu0 0.0
  %433 = vmatpush1.xpose.msra.mxu0 %v428
  %434 = vmatprep.subr.mxu0 0.0
  %435 = vmatpush1.xpose.msra.mxu0 0.0
  %436 = vmatprep.subr.mxu0 0.0
  %437 = vmatpush1.xpose.msra.mxu0 0.0
  %438 = vmatprep.subr.mxu0 0.0
  %439 = vmatpush1.xpose.msra.mxu0 0.0
  %440 = vmatprep.subr.mxu0 0.0
  %441 = vmatpush1.xpose.msra.mxu0 0.0
  %442 = vmatprep.subr.mxu0 0.0
  %443 = vmatpush1.xpose.msra.mxu0 0.0
  %444 = vmatprep.subr.mxu0 0.0
  %445 = vmatpush1.xpose.msra.mxu0 0.0
  %446 = vmatprep.subr.mxu0 0.0
  %447 = vmatpush1.xpose.msra.mxu0 0.0
  %448 = vmatprep.subr.mxu0 0.0
  %449 = vmatpush1.xpose.msra.mxu0 0.0
  %450 = vmatprep.subr.mxu0 0.0
  %451 = vmatpush1.xpose.msra.mxu0 0.0
  %452 = vmatprep.subr.mxu0 0.0
  %453 = vmatpush1.xpose.msra.mxu0 0.0
  %454 = vmatprep.subr.mxu0 0.0
  %455 = vmatpush1.xpose.msra.mxu0 0.0
  %456 = vmatprep.subr.mxu0 0.0
  %457 = vmatpush1.xpose.msra.mxu0 0.0
  %458 = vmatprep.subr.mxu0 0.0
  %459 = vmatpush1.xpose.msra.mxu0 0.0
  %460 = vmatprep.subr.mxu0 0.0
  %461 = vmatpush1.xpose.msra.mxu0 0.0
  %462 = vmatprep.subr.mxu0 0.0
  %463 = vmatpush1.xpose.msra.mxu0 0.0
  %464 = vmatprep.subr.mxu0 0.0
  %465 = vmatpush1.xpose.msra.mxu0 0.0
  %466 = vmatprep.subr.mxu0 0.0
  %467 = vmatpush1.xpose.msra.mxu0 0.0
  %468 = vmatprep.subr.mxu0 0.0
  %469 = vmatpush1.xpose.msra.mxu0 0.0
  %470 = vmatprep.subr.mxu0 0.0
  %471 = vmatpush1.xpose.msra.mxu0 0.0
  %472 = vmatprep.subr.mxu0 0.0
  %473 = vmatpush1.xpose.msra.mxu0 0.0
  %474 = vmatprep.subr.mxu0 0.0
  %475 = vmatpush1.xpose.msra.mxu0 0.0
  %476 = vmatprep.subr.mxu0 0.0
  %477 = vmatpush1.xpose.msra.mxu0 0.0
  %478 = vmatprep.subr.mxu0 0.0
  %479 = vmatpush1.xpose.msra.mxu0 0.0
  %480 = vmatprep.subr.mxu0 0.0
  %481 = vmatpush1.xpose.msra.mxu0 0.0
  %482 = vmatprep.subr.mxu0 0.0
  %483 = vmatpush1.xpose.msra.mxu0 0.0
  %484 = vmatprep.subr.mxu0 0.0
  %485 = vmatpush1.xpose.msra.mxu0 0.0
  %486 = vmatprep.subr.mxu0 0.0
  %487 = vmatpush1.xpose.msra.mxu0 0.0
  %488 = vmatprep.subr.mxu0 0.0
  %489 = vmatpush1.xpose.msra.mxu0 0.0
  %490 = vmatprep.subr.mxu0 0.0
  %491 = vmatpush1.xpose.msra.mxu0 0.0
  %492 = vmatprep.subr.mxu0 0.0
  %493 = vmatpush1.xpose.msra.mxu0 0.0
  %494 = vmatprep.mubr.f32.mxu0 0.0
  %495 = vmatmul.mubr.f32.gmra.mrb[0].mxu0 %v419
  %v496 = vpop.f32.mrb[0].mxu0
  %v497 = vadd.f32 0.0, %v496
  %v498 = vpop.f32.mrb[0].mxu0
  %499 = vmatprep.mubr.f32.mxu0 0.0
  %500 = vmatmul.mubr.f32.gmra.mrb[0].mxu0 %v422
  %v501 = vpop.f32.mrb[0].mxu0
  %v502 = vadd.f32 0.0, %v501
  %v503 = vpop.f32.mrb[0].mxu0
  %504 = vdwg.mxu0
  %v505 = vmul.f32 %v497, 0.17677669
  %v506 = vmul.f32 %v502, 0.17677669
  %v507 = vsel %vm105, %v505, -inf
  %508 = vmax.xlane.f32.xlu0 %v507
  %v509 = vpop.xlane.xlu0 %508
  %v510 = vsel %vm109, %v506, -inf
  %511 = vmax.xlane.f32.xlu0 %v510
  %v512 = vpop.xlane.xlu0 %511
  %v513 = vsub.f32 %v505, %v509
  %v514 = vsub.f32 %v506, %v512
  %v515 = vmul.f32 %v513, 1.442695
  %v516 = vpow.pop %v515
  %v517 = vmul.f32 %v514, 1.442695
  %v518 = vpow.pop %v517
  %v519 = vsel %vm105, %v516, 0.0
  %520 = vadd.xlane.f32.xlu0 %v519
  %v521 = vpop.xlane.xlu0 %520
  %v522 = vsel %vm109, %v518, 0.0
  %523 = vadd.xlane.f32.xlu0 %v522
  %v524 = vpop.xlane.xlu0 %523
  %v525 = vrcp.pop %v521
  %v526 = vmul.f32 %v516, %v525
  %v527 = vrcp.pop %v524
  %v528 = vmul.f32 %v518, %v527
  %v530 = vsel %vm105, %v526, 0
  %v533 = vsel %vm105, %v528, 0
  %535 = vmatprep.subr.mxu0 0.0
  %536 = vmatpush1.msra.mxu0 %v416
  %537 = vmatprep.subr.mxu0 0.0
  %538 = vmatpush1.msra.mxu0 %v417
  %539 = vmatprep.subr.mxu0 0.0
  %540 = vmatpush1.msra.mxu0 0.0
  %541 = vmatprep.subr.mxu0 0.0
  %542 = vmatpush1.msra.mxu0 0.0
  %543 = vmatprep.subr.mxu0 0.0
  %544 = vmatpush1.msra.mxu0 0.0
  %545 = vmatprep.subr.mxu0 0.0
  %546 = vmatpush1.msra.mxu0 0.0
  %547 = vmatprep.subr.mxu0 0.0
  %548 = vmatpush1.msra.mxu0 0.0
  %549 = vmatprep.subr.mxu0 0.0
  %550 = vmatpush1.msra.mxu0 0.0
  %551 = vmatprep.subr.mxu0 0.0
  %552 = vmatpush1.msra.mxu0 0.0
  %553 = vmatprep.subr.mxu0 0.0
  %554 = vmatpush1.msra.mxu0 0.0
  %555 = vmatprep.subr.mxu0 0.0
  %556 = vmatpush1.msra.mxu0 0.0
  %557 = vmatprep.subr.mxu0 0.0
  %558 = vmatpush1.msra.mxu0 0.0
  %559 = vmatprep.subr.mxu0 0.0
  %560 = vmatpush1.msra.mxu0 0.0
  %561 = vmatprep.subr.mxu0 0.0
  %562 = vmatpush1.msra.mxu0 0.0
  %563 = vmatprep.subr.mxu0 0.0
  %564 = vmatpush1.msra.mxu0 0.0
  %565 = vmatprep.subr.mxu0 0.0
  %566 = vmatpush1.msra.mxu0 0.0
  %567 = vmatprep.subr.mxu0 0.0
  %568 = vmatpush1.msra.mxu0 0.0
  %569 = vmatprep.subr.mxu0 0.0
  %570 = vmatpush1.msra.mxu0 0.0
  %571 = vmatprep.subr.mxu0 0.0
  %572 = vmatpush1.msra.mxu0 0.0
  %573 = vmatprep.subr.mxu0 0.0
  %574 = vmatpush1.msra.mxu0 0.0
  %575 = vmatprep.subr.mxu0 0.0
  %576 = vmatpush1.msra.mxu0 0.0
  %577 = vmatprep.subr.mxu0 0.0
  %578 = vmatpush1.msra.mxu0 0.0
  %579 = vmatprep.subr.mxu0 0.0
  %580 = vmatpush1.msra.mxu0 0.0
  %581 = vmatprep.subr.mxu0 0.0
  %582 = vmatpush1.msra.mxu0 0.0
  %583 = vmatprep.subr.mxu0 0.0
  %584 = vmatpush1.msra.mxu0 0.0
  %585 = vmatprep.subr.mxu0 0.0
  %586 = vmatpush1.msra.mxu0 0.0
  %587 = vmatprep.subr.mxu0 0.0
  %588 = vmatpush1.msra.mxu0 0.0
  %589 = vmatprep.subr.mxu0 0.0
  %590 = vmatpush1.msra.mxu0 0.0
  %591 = vmatprep.subr.mxu0 0.0
  %592 = vmatpush1.msra.mxu0 0.0
  %593 = vmatprep.subr.mxu0 0.0
  %594 = vmatpush1.msra.mxu0 0.0
  %595 = vmatprep.subr.mxu0 0.0
  %596 = vmatpush1.msra.mxu0 0.0
  %597 = vmatprep.subr.mxu0 0.0
  %598 = vmatpush1.msra.mxu0 0.0
  %599 = vmatprep.mubr.f32.mxu0 0.0
  %600 = vmatmul.mubr.f32.gmra.mrb[0].mxu0 %v530
  %v601 = vpop.f32.mrb[0].mxu0
  %v602 = vadd.f32 0.0, %v601
  %v603 = vpop.f32.mrb[0].mxu0
  %604 = vmatprep.mubr.f32.mxu0 0.0
  %605 = vmatmul.mubr.f32.gmra.mrb[0].mxu0 %v533
  %v606 = vpop.f32.mrb[0].mxu0
  %v607 = vadd.f32 0.0, %v606
  %v608 = vpop.f32.mrb[0].mxu0
  %609 = vdwg.mxu0
  %v610 = vadd.f32 %v410, %v602
  %v611 = vadd.f32 %v411, %v607
  %s612 = scalar_lea.vmem %s2, 64
  %613 = vst.msk [vmem:[%s612] sm:$0xff] %vm15, %v610
  %614 = vst.msk [vmem:[%s612 + $0x8] sm:$0x1] %vm213, %v611
  %s615 = scalar_lea.vmem %s1, 96
  %v616 = vld [vmem:[%s615] sm:$0xff]
  %v617 = vld [vmem:[%s615 + $0x8] sm:$0xff]
  %v619 = vsel %vm15, %v610, 0
  %v622 = vsel %vm15, %v611, 0
  %v625 = vsel %vm15, %v616, 0
  %v628 = vsel %vm15, %v617, 0
  %630 = vmatprep.subr.mxu0 0.0
  %631 = vmatpush1.xpose.msra.mxu0 %v625
  %632 = vmatprep.subr.mxu0 0.0
  %633 = vmatpush1.xpose.msra.mxu0 %v628
  %634 = vmatprep.subr.mxu0 0.0
  %635 = vmatpush1.xpose.msra.mxu0 0.0
  %636 = vmatprep.subr.mxu0 0.0
  %637 = vmatpush1.xpose.msra.mxu0 0.0
  %638 = vmatprep.subr.mxu0 0.0
  %639 = vmatpush1.xpose.msra.mxu0 0.0
  %640 = vmatprep.subr.mxu0 0.0
  %641 = vmatpush1.xpose.msra.mxu0 0.0
  %642 = vmatprep.subr.mxu0 0.0
  %643 = vmatpush1.xpose.msra.mxu0 0.0
  %644 = vmatprep.subr.mxu0 0.0
  %645 = vmatpush1.xpose.msra.mxu0 0.0
  %646 = vmatprep.subr.mxu0 0.0
  %647 = vmatpush1.xpose.msra.mxu0 0.0
  %648 = vmatprep.subr.mxu0 0.0
  %649 = vmatpush1.xpose.msra.mxu0 0.0
  %650 = vmatprep.subr.mxu0 0.0
  %651 = vmatpush1.xpose.msra.mxu0 0.0
  %652 = vmatprep.subr.mxu0 0.0
  %653 = vmatpush1.xpose.msra.mxu0 0.0
  %654 = vmatprep.subr.mxu0 0.0
  %655 = vmatpush1.xpose.msra.mxu0 0.0
  %656 = vmatprep.subr.mxu0 0.0
  %657 = vmatpush1.xpose.msra.mxu0 0.0
  %658 = vmatprep.subr.mxu0 0.0
  %659 = vmatpush1.xpose.msra.mxu0 0.0
  %660 = vmatprep.subr.mxu0 0.0
  %661 = vmatpush1.xpose.msra.mxu0 0.0
  %662 = vmatprep.subr.mxu0 0.0
  %663 = vmatpush1.xpose.msra.mxu0 0.0
  %664 = vmatprep.subr.mxu0 0.0
  %665 = vmatpush1.xpose.msra.mxu0 0.0
  %666 = vmatprep.subr.mxu0 0.0
  %667 = vmatpush1.xpose.msra.mxu0 0.0
  %668 = vmatprep.subr.mxu0 0.0
  %669 = vmatpush1.xpose.msra.mxu0 0.0
  %670 = vmatprep.subr.mxu0 0.0
  %671 = vmatpush1.xpose.msra.mxu0 0.0
  %672 = vmatprep.subr.mxu0 0.0
  %673 = vmatpush1.xpose.msra.mxu0 0.0
  %674 = vmatprep.subr.mxu0 0.0
  %675 = vmatpush1.xpose.msra.mxu0 0.0
  %676 = vmatprep.subr.mxu0 0.0
  %677 = vmatpush1.xpose.msra.mxu0 0.0
  %678 = vmatprep.subr.mxu0 0.0
  %679 = vmatpush1.xpose.msra.mxu0 0.0
  %680 = vmatprep.subr.mxu0 0.0
  %681 = vmatpush1.xpose.msra.mxu0 0.0
  %682 = vmatprep.subr.mxu0 0.0
  %683 = vmatpush1.xpose.msra.mxu0 0.0
  %684 = vmatprep.subr.mxu0 0.0
  %685 = vmatpush1.xpose.msra.mxu0 0.0
  %686 = vmatprep.subr.mxu0 0.0
  %687 = vmatpush1.xpose.msra.mxu0 0.0
  %688 = vmatprep.subr.mxu0 0.0
  %689 = vmatpush1.xpose.msra.mxu0 0.0
  %690 = vmatprep.subr.mxu0 0.0
  %691 = vmatpush1.xpose.msra.mxu0 0.0
  %692 = vmatprep.subr.mxu0 0.0
  %693 = vmatpush1.xpose.msra.mxu0 0.0
  %694 = vmatprep.mubr.f32.mxu0 0.0
  %695 = vmatmul.mubr.f32.gmra.mrb[0].mxu0 %v619
  %v696 = vpop.f32.mrb[0].mxu0
  %v697 = vadd.f32 0.0, %v696
  %v698 = vpop.f32.mrb[0].mxu0
  %699 = vmatprep.mubr.f32.mxu0 0.0
  %700 = vmatmul.mubr.f32.gmra.mrb[0].mxu0 %v622
  %v701 = vpop.f32.mrb[0].mxu0
  %v702 = vadd.f32 0.0, %v701
  %v703 = vpop.f32.mrb[0].mxu0
  %704 = vdwg.mxu0
  %v705 = vmul.f32 %v697, 0.17677669
  %v706 = vmul.f32 %v702, 0.17677669
  %v707 = vsel %vm105, %v705, -inf
  %708 = vmax.xlane.f32.xlu0 %v707
  %v709 = vpop.xlane.xlu0 %708
  %v710 = vsel %vm109, %v706, -inf
  %711 = vmax.xlane.f32.xlu0 %v710
  %v712 = vpop.xlane.xlu0 %711
  %v713 = vsub.f32 %v705, %v709
  %v714 = vsub.f32 %v706, %v712
  %v715 = vmul.f32 %v713, 1.442695
  %v716 = vpow.pop %v715
  %v717 = vmul.f32 %v714, 1.442695
  %v718 = vpow.pop %v717
  %v719 = vsel %vm105, %v716, 0.0
  %720 = vadd.xlane.f32.xlu0 %v719
  %v721 = vpop.xlane.xlu0 %720
  %v722 = vsel %vm109, %v718, 0.0
  %723 = vadd.xlane.f32.xlu0 %v722
  %v724 = vpop.xlane.xlu0 %723
  %v725 = vrcp.pop %v721
  %v726 = vmul.f32 %v716, %v725
  %v727 = vrcp.pop %v724
  %v728 = vmul.f32 %v718, %v727
  %v730 = vsel %vm105, %v726, 0
  %v733 = vsel %vm105, %v728, 0
  %735 = vmatprep.subr.mxu0 0.0
  %736 = vmatpush1.msra.mxu0 %v616
  %737 = vmatprep.subr.mxu0 0.0
  %738 = vmatpush1.msra.mxu0 %v617
  %739 = vmatprep.subr.mxu0 0.0
  %740 = vmatpush1.msra.mxu0 0.0
  %741 = vmatprep.subr.mxu0 0.0
  %742 = vmatpush1.msra.mxu0 0.0
  %743 = vmatprep.subr.mxu0 0.0
  %744 = vmatpush1.msra.mxu0 0.0
  %745 = vmatprep.subr.mxu0 0.0
  %746 = vmatpush1.msra.mxu0 0.0
  %747 = vmatprep.subr.mxu0 0.0
  %748 = vmatpush1.msra.mxu0 0.0
  %749 = vmatprep.subr.mxu0 0.0
  %750 = vmatpush1.msra.mxu0 0.0
  %751 = vmatprep.subr.mxu0 0.0
  %752 = vmatpush1.msra.mxu0 0.0
  %753 = vmatprep.subr.mxu0 0.0
  %754 = vmatpush1.msra.mxu0 0.0
  %755 = vmatprep.subr.mxu0 0.0
  %756 = vmatpush1.msra.mxu0 0.0
  %757 = vmatprep.subr.mxu0 0.0
  %758 = vmatpush1.msra.mxu0 0.0
  %759 = vmatprep.subr.mxu0 0.0
  %760 = vmatpush1.msra.mxu0 0.0
  %761 = vmatprep.subr.mxu0 0.0
  %762 = vmatpush1.msra.mxu0 0.0
  %763 = vmatprep.subr.mxu0 0.0
  %764 = vmatpush1.msra.mxu0 0.0
  %765 = vmatprep.subr.mxu0 0.0
  %766 = vmatpush1.msra.mxu0 0.0
  %767 = vmatprep.subr.mxu0 0.0
  %768 = vmatpush1.msra.mxu0 0.0
  %769 = vmatprep.subr.mxu0 0.0
  %770 = vmatpush1.msra.mxu0 0.0
  %771 = vmatprep.subr.mxu0 0.0
  %772 = vmatpush1.msra.mxu0 0.0
  %773 = vmatprep.subr.mxu0 0.0
  %774 = vmatpush1.msra.mxu0 0.0
  %775 = vmatprep.subr.mxu0 0.0
  %776 = vmatpush1.msra.mxu0 0.0
  %777 = vmatprep.subr.mxu0 0.0
  %778 = vmatpush1.msra.mxu0 0.0
  %779 = vmatprep.subr.mxu0 0.0
  %780 = vmatpush1.msra.mxu0 0.0
  %781 = vmatprep.subr.mxu0 0.0
  %782 = vmatpush1.msra.mxu0 0.0
  %783 = vmatprep.subr.mxu0 0.0
  %784 = vmatpush1.msra.mxu0 0.0
  %785 = vmatprep.subr.mxu0 0.0
  %786 = vmatpush1.msra.mxu0 0.0
  %787 = vmatprep.subr.mxu0 0.0
  %788 = vmatpush1.msra.mxu0 0.0
  %789 = vmatprep.subr.mxu0 0.0
  %790 = vmatpush1.msra.mxu0 0.0
  %791 = vmatprep.subr.mxu0 0.0
  %792 = vmatpush1.msra.mxu0 0.0
  %793 = vmatprep.subr.mxu0 0.0
  %794 = vmatpush1.msra.mxu0 0.0
  %795 = vmatprep.subr.mxu0 0.0
  %796 = vmatpush1.msra.mxu0 0.0
  %797 = vmatprep.subr.mxu0 0.0
  %798 = vmatpush1.msra.mxu0 0.0
  %799 = vmatprep.mubr.f32.mxu0 0.0
  %800 = vmatmul.mubr.f32.gmra.mrb[0].mxu0 %v730
  %v801 = vpop.f32.mrb[0].mxu0
  %v802 = vadd.f32 0.0, %v801
  %v803 = vpop.f32.mrb[0].mxu0
  %804 = vmatprep.mubr.f32.mxu0 0.0
  %805 = vmatmul.mubr.f32.gmra.mrb[0].mxu0 %v733
  %v806 = vpop.f32.mrb[0].mxu0
  %v807 = vadd.f32 0.0, %v806
  %v808 = vpop.f32.mrb[0].mxu0
  %809 = vdwg.mxu0
  %v810 = vadd.f32 %v610, %v802
  %v811 = vadd.f32 %v611, %v807
  %s812 = scalar_lea.vmem %s2, 96
  %813 = vst.msk [vmem:[%s812] sm:$0xff] %vm15, %v810
  %814 = vst.msk [vmem:[%s812 + $0x8] sm:$0x1] %vm213, %v811
  %s815 = scalar_lea.vmem %s1, 128
  %v816 = vld [vmem:[%s815] sm:$0xff]
  %v817 = vld [vmem:[%s815 + $0x8] sm:$0xff]
  %v819 = vsel %vm15, %v810, 0
  %v822 = vsel %vm15, %v811, 0
  %v825 = vsel %vm15, %v816, 0
  %v828 = vsel %vm15, %v817, 0
  %830 = vmatprep.subr.mxu0 0.0
  %831 = vmatpush1.xpose.msra.mxu0 %v825
  %832 = vmatprep.subr.mxu0 0.0
  %833 = vmatpush1.xpose.msra.mxu0 %v828
  %834 = vmatprep.subr.mxu0 0.0
  %835 = vmatpush1.xpose.msra.mxu0 0.0
  %836 = vmatprep.subr.mxu0 0.0
  %837 = vmatpush1.xpose.msra.mxu0 0.0
  %838 = vmatprep.subr.mxu0 0.0
  %839 = vmatpush1.xpose.msra.mxu0 0.0
  %840 = vmatprep.subr.mxu0 0.0
  %841 = vmatpush1.xpose.msra.mxu0 0.0
  %842 = vmatprep.subr.mxu0 0.0
  %843 = vmatpush1.xpose.msra.mxu0 0.0
  %844 = vmatprep.subr.mxu0 0.0
  %845 = vmatpush1.xpose.msra.mxu0 0.0
  %846 = vmatprep.subr.mxu0 0.0
  %847 = vmatpush1.xpose.msra.mxu0 0.0
  %848 = vmatprep.subr.mxu0 0.0
  %849 = vmatpush1.xpose.msra.mxu0 0.0
  %850 = vmatprep.subr.mxu0 0.0
  %851 = vmatpush1.xpose.msra.mxu0 0.0
  %852 = vmatprep.subr.mxu0 0.0
  %853 = vmatpush1.xpose.msra.mxu0 0.0
  %854 = vmatprep.subr.mxu0 0.0
  %855 = vmatpush1.xpose.msra.mxu0 0.0
  %856 = vmatprep.subr.mxu0 0.0
  %857 = vmatpush1.xpose.msra.mxu0 0.0
  %858 = vmatprep.subr.mxu0 0.0
  %859 = vmatpush1.xpose.msra.mxu0 0.0
  %860 = vmatprep.subr.mxu0 0.0
  %861 = vmatpush1.xpose.msra.mxu0 0.0
  %862 = vmatprep.subr.mxu0 0.0
  %863 = vmatpush1.xpose.msra.mxu0 0.0
  %864 = vmatprep.subr.mxu0 0.0
  %865 = vmatpush1.xpose.msra.mxu0 0.0
  %866 = vmatprep.subr.mxu0 0.0
  %867 = vmatpush1.xpose.msra.mxu0 0.0
  %868 = vmatprep.subr.mxu0 0.0
  %869 = vmatpush1.xpose.msra.mxu0 0.0
  %870 = vmatprep.subr.mxu0 0.0
  %871 = vmatpush1.xpose.msra.mxu0 0.0
  %872 = vmatprep.subr.mxu0 0.0
  %873 = vmatpush1.xpose.msra.mxu0 0.0
  %874 = vmatprep.subr.mxu0 0.0
  %875 = vmatpush1.xpose.msra.mxu0 0.0
  %876 = vmatprep.subr.mxu0 0.0
  %877 = vmatpush1.xpose.msra.mxu0 0.0
  %878 = vmatprep.subr.mxu0 0.0
  %879 = vmatpush1.xpose.msra.mxu0 0.0
  %880 = vmatprep.subr.mxu0 0.0
  %881 = vmatpush1.xpose.msra.mxu0 0.0
  %882 = vmatprep.subr.mxu0 0.0
  %883 = vmatpush1.xpose.msra.mxu0 0.0
  %884 = vmatprep.subr.mxu0 0.0
  %885 = vmatpush1.xpose.msra.mxu0 0.0
  %886 = vmatprep.subr.mxu0 0.0
  %887 = vmatpush1.xpose.msra.mxu0 0.0
  %888 = vmatprep.subr.mxu0 0.0
  %889 = vmatpush1.xpose.msra.mxu0 0.0
  %890 = vmatprep.subr.mxu0 0.0
  %891 = vmatpush1.xpose.msra.mxu0 0.0
  %892 = vmatprep.subr.mxu0 0.0
  %893 = vmatpush1.xpose.msra.mxu0 0.0
  %894 = vmatprep.mubr.f32.mxu0 0.0
  %895 = vmatmul.mubr.f32.gmra.mrb[0].mxu0 %v819
  %v896 = vpop.f32.mrb[0].mxu0
  %v897 = vadd.f32 0.0, %v896
  %v898 = vpop.f32.mrb[0].mxu0
  %899 = vmatprep.mubr.f32.mxu0 0.0
  %900 = vmatmul.mubr.f32.gmra.mrb[0].mxu0 %v822
  %v901 = vpop.f32.mrb[0].mxu0
  %v902 = vadd.f32 0.0, %v901
  %v903 = vpop.f32.mrb[0].mxu0
  %904 = vdwg.mxu0
  %v905 = vmul.f32 %v897, 0.17677669
  %v906 = vmul.f32 %v902, 0.17677669
  %v907 = vsel %vm105, %v905, -inf
  %908 = vmax.xlane.f32.xlu0 %v907
  %v909 = vpop.xlane.xlu0 %908
  %v910 = vsel %vm109, %v906, -inf
  %911 = vmax.xlane.f32.xlu0 %v910
  %v912 = vpop.xlane.xlu0 %911
  %v913 = vsub.f32 %v905, %v909
  %v914 = vsub.f32 %v906, %v912
  %v915 = vmul.f32 %v913, 1.442695
  %v916 = vpow.pop %v915
  %v917 = vmul.f32 %v914, 1.442695
  %v918 = vpow.pop %v917
  %v919 = vsel %vm105, %v916, 0.0
  %920 = vadd.xlane.f32.xlu0 %v919
  %v921 = vpop.xlane.xlu0 %920
  %v922 = vsel %vm109, %v918, 0.0
  %923 = vadd.xlane.f32.xlu0 %v922
  %v924 = vpop.xlane.xlu0 %923
  %v925 = vrcp.pop %v921
  %v926 = vmul.f32 %v916, %v925
  %v927 = vrcp.pop %v924
  %v928 = vmul.f32 %v918, %v927
  %v930 = vsel %vm105, %v926, 0
  %v933 = vsel %vm105, %v928, 0
  %935 = vmatprep.subr.mxu0 0.0
  %936 = vmatpush1.msra.mxu0 %v816
  %937 = vmatprep.subr.mxu0 0.0
  %938 = vmatpush1.msra.mxu0 %v817
  %939 = vmatprep.subr.mxu0 0.0
  %940 = vmatpush1.msra.mxu0 0.0
  %941 = vmatprep.subr.mxu0 0.0
  %942 = vmatpush1.msra.mxu0 0.0
  %943 = vmatprep.subr.mxu0 0.0
  %944 = vmatpush1.msra.mxu0 0.0
  %945 = vmatprep.subr.mxu0 0.0
  %946 = vmatpush1.msra.mxu0 0.0
  %947 = vmatprep.subr.mxu0 0.0
  %948 = vmatpush1.msra.mxu0 0.0
  %949 = vmatprep.subr.mxu0 0.0
  %950 = vmatpush1.msra.mxu0 0.0
  %951 = vmatprep.subr.mxu0 0.0
  %952 = vmatpush1.msra.mxu0 0.0
  %953 = vmatprep.subr.mxu0 0.0
  %954 = vmatpush1.msra.mxu0 0.0
  %955 = vmatprep.subr.mxu0 0.0
  %956 = vmatpush1.msra.mxu0 0.0
  %957 = vmatprep.subr.mxu0 0.0
  %958 = vmatpush1.msra.mxu0 0.0
  %959 = vmatprep.subr.mxu0 0.0
  %960 = vmatpush1.msra.mxu0 0.0
  %961 = vmatprep.subr.mxu0 0.0
  %962 = vmatpush1.msra.mxu0 0.0
  %963 = vmatprep.subr.mxu0 0.0
  %964 = vmatpush1.msra.mxu0 0.0
  %965 = vmatprep.subr.mxu0 0.0
  %966 = vmatpush1.msra.mxu0 0.0
  %967 = vmatprep.subr.mxu0 0.0
  %968 = vmatpush1.msra.mxu0 0.0
  %969 = vmatprep.subr.mxu0 0.0
  %970 = vmatpush1.msra.mxu0 0.0
  %971 = vmatprep.subr.mxu0 0.0
  %972 = vmatpush1.msra.mxu0 0.0
  %973 = vmatprep.subr.mxu0 0.0
  %974 = vmatpush1.msra.mxu0 0.0
  %975 = vmatprep.subr.mxu0 0.0
  %976 = vmatpush1.msra.mxu0 0.0
  %977 = vmatprep.subr.mxu0 0.0
  %978 = vmatpush1.msra.mxu0 0.0
  %979 = vmatprep.subr.mxu0 0.0
  %980 = vmatpush1.msra.mxu0 0.0
  %981 = vmatprep.subr.mxu0 0.0
  %982 = vmatpush1.msra.mxu0 0.0
  %983 = vmatprep.subr.mxu0 0.0
  %984 = vmatpush1.msra.mxu0 0.0
  %985 = vmatprep.subr.mxu0 0.0
  %986 = vmatpush1.msra.mxu0 0.0
  %987 = vmatprep.subr.mxu0 0.0
  %988 = vmatpush1.msra.mxu0 0.0
  %989 = vmatprep.subr.mxu0 0.0
  %990 = vmatpush1.msra.mxu0 0.0
  %991 = vmatprep.subr.mxu0 0.0
  %992 = vmatpush1.msra.mxu0 0.0
  %993 = vmatprep.subr.mxu0 0.0
  %994 = vmatpush1.msra.mxu0 0.0
  %995 = vmatprep.subr.mxu0 0.0
  %996 = vmatpush1.msra.mxu0 0.0
  %997 = vmatprep.subr.mxu0 0.0
  %998 = vmatpush1.msra.mxu0 0.0
  %999 = vmatprep.mubr.f32.mxu0 0.0
  %1000 = vmatmul.mubr.f32.gmra.mrb[0].mxu0 %v930
  %v1001 = vpop.f32.mrb[0].mxu0
  %v1002 = vadd.f32 0.0, %v1001
  %v1003 = vpop.f32.mrb[0].mxu0
  %1004 = vmatprep.mubr.f32.mxu0 0.0
  %1005 = vmatmul.mubr.f32.gmra.mrb[0].mxu0 %v933
  %v1006 = vpop.f32.mrb[0].mxu0
  %v1007 = vadd.f32 0.0, %v1006
  %v1008 = vpop.f32.mrb[0].mxu0
  %1009 = vdwg.mxu0
  %v1010 = vadd.f32 %v810, %v1002
  %v1011 = vadd.f32 %v811, %v1007
  %s1012 = scalar_lea.vmem %s2, 128
  %1013 = vst.msk [vmem:[%s1012] sm:$0xff] %vm15, %v1010
  %1014 = vst.msk [vmem:[%s1012 + $0x8] sm:$0x1] %vm213, %v1011
  %s1015 = scalar_lea.vmem %s1, 160
  %v1016 = vld [vmem:[%s1015] sm:$0xff]
  %v1017 = vld [vmem:[%s1015 + $0x8] sm:$0xff]
  %v1019 = vsel %vm15, %v1010, 0
  %v1022 = vsel %vm15, %v1011, 0
  %v1025 = vsel %vm15, %v1016, 0
  %v1028 = vsel %vm15, %v1017, 0
  %1030 = vmatprep.subr.mxu0 0.0
  %1031 = vmatpush1.xpose.msra.mxu0 %v1025
  %1032 = vmatprep.subr.mxu0 0.0
  %1033 = vmatpush1.xpose.msra.mxu0 %v1028
  %1034 = vmatprep.subr.mxu0 0.0
  %1035 = vmatpush1.xpose.msra.mxu0 0.0
  %1036 = vmatprep.subr.mxu0 0.0
  %1037 = vmatpush1.xpose.msra.mxu0 0.0
  %1038 = vmatprep.subr.mxu0 0.0
  %1039 = vmatpush1.xpose.msra.mxu0 0.0
  %1040 = vmatprep.subr.mxu0 0.0
  %1041 = vmatpush1.xpose.msra.mxu0 0.0
  %1042 = vmatprep.subr.mxu0 0.0
  %1043 = vmatpush1.xpose.msra.mxu0 0.0
  %1044 = vmatprep.subr.mxu0 0.0
  %1045 = vmatpush1.xpose.msra.mxu0 0.0
  %1046 = vmatprep.subr.mxu0 0.0
  %1047 = vmatpush1.xpose.msra.mxu0 0.0
  %1048 = vmatprep.subr.mxu0 0.0
  %1049 = vmatpush1.xpose.msra.mxu0 0.0
  %1050 = vmatprep.subr.mxu0 0.0
  %1051 = vmatpush1.xpose.msra.mxu0 0.0
  %1052 = vmatprep.subr.mxu0 0.0
  %1053 = vmatpush1.xpose.msra.mxu0 0.0
  %1054 = vmatprep.subr.mxu0 0.0
  %1055 = vmatpush1.xpose.msra.mxu0 0.0
  %1056 = vmatprep.subr.mxu0 0.0
  %1057 = vmatpush1.xpose.msra.mxu0 0.0
  %1058 = vmatprep.subr.mxu0 0.0
  %1059 = vmatpush1.xpose.msra.mxu0 0.0
  %1060 = vmatprep.subr.mxu0 0.0
  %1061 = vmatpush1.xpose.msra.mxu0 0.0
  %1062 = vmatprep.subr.mxu0 0.0
  %1063 = vmatpush1.xpose.msra.mxu0 0.0
  %1064 = vmatprep.subr.mxu0 0.0
  %1065 = vmatpush1.xpose.msra.mxu0 0.0
  %1066 = vmatprep.subr.mxu0 0.0
  %1067 = vmatpush1.xpose.msra.mxu0 0.0
  %1068 = vmatprep.subr.mxu0 0.0
  %1069 = vmatpush1.xpose.msra.mxu0 0.0
  %1070 = vmatprep.subr.mxu0 0.0
  %1071 = vmatpush1.xpose.msra.mxu0 0.0
  %1072 = vmatprep.subr.mxu0 0.0
  %1073 = vmatpush1.xpose.msra.mxu0 0.0
  %1074 = vmatprep.subr.mxu0 0.0
  %1075 = vmatpush1.xpose.msra.mxu0 0.0
  %1076 = vmatprep.subr.mxu0 0.0
  %1077 = vmatpush1.xpose.msra.mxu0 0.0
  %1078 = vmatprep.subr.mxu0 0.0
  %1079 = vmatpush1.xpose.msra.mxu0 0.0
  %1080 = vmatprep.subr.mxu0 0.0
  %1081 = vmatpush1.xpose.msra.mxu0 0.0
  %1082 = vmatprep.subr.mxu0 0.0
  %1083 = vmatpush1.xpose.msra.mxu0 0.0
  %1084 = vmatprep.subr.mxu0 0.0
  %1085 = vmatpush1.xpose.msra.mxu0 0.0
  %1086 = vmatprep.subr.mxu0 0.0
  %1087 = vmatpush1.xpose.msra.mxu0 0.0
  %1088 = vmatprep.subr.mxu0 0.0
  %1089 = vmatpush1.xpose.msra.mxu0 0.0
  %1090 = vmatprep.subr.mxu0 0.0
  %1091 = vmatpush1.xpose.msra.mxu0 0.0
  %1092 = vmatprep.subr.mxu0 0.0
  %1093 = vmatpush1.xpose.msra.mxu0 0.0
  %1094 = vmatprep.mubr.f32.mxu0 0.0
  %1095 = vmatmul.mubr.f32.gmra.mrb[0].mxu0 %v1019
  %v1096 = vpop.f32.mrb[0].mxu0
  %v1097 = vadd.f32 0.0, %v1096
  %v1098 = vpop.f32.mrb[0].mxu0
  %1099 = vmatprep.mubr.f32.mxu0 0.0
  %1100 = vmatmul.mubr.f32.gmra.mrb[0].mxu0 %v1022
  %v1101 = vpop.f32.mrb[0].mxu0
  %v1102 = vadd.f32 0.0, %v1101
  %v1103 = vpop.f32.mrb[0].mxu0
  %1104 = vdwg.mxu0
  %v1105 = vmul.f32 %v1097, 0.17677669
  %v1106 = vmul.f32 %v1102, 0.17677669
  %v1107 = vsel %vm105, %v1105, -inf
  %1108 = vmax.xlane.f32.xlu0 %v1107
  %v1109 = vpop.xlane.xlu0 %1108
  %v1110 = vsel %vm109, %v1106, -inf
  %1111 = vmax.xlane.f32.xlu0 %v1110
  %v1112 = vpop.xlane.xlu0 %1111
  %v1113 = vsub.f32 %v1105, %v1109
  %v1114 = vsub.f32 %v1106, %v1112
  %v1115 = vmul.f32 %v1113, 1.442695
  %v1116 = vpow.pop %v1115
  %v1117 = vmul.f32 %v1114, 1.442695
  %v1118 = vpow.pop %v1117
  %v1119 = vsel %vm105, %v1116, 0.0
  %1120 = vadd.xlane.f32.xlu0 %v1119
  %v1121 = vpop.xlane.xlu0 %1120
  %v1122 = vsel %vm109, %v1118, 0.0
  %1123 = vadd.xlane.f32.xlu0 %v1122
  %v1124 = vpop.xlane.xlu0 %1123
  %v1125 = vrcp.pop %v1121
  %v1126 = vmul.f32 %v1116, %v1125
  %v1127 = vrcp.pop %v1124
  %v1128 = vmul.f32 %v1118, %v1127
  %v1130 = vsel %vm105, %v1126, 0
  %v1133 = vsel %vm105, %v1128, 0
  %1135 = vmatprep.subr.mxu0 0.0
  %1136 = vmatpush1.msra.mxu0 %v1016
  %1137 = vmatprep.subr.mxu0 0.0
  %1138 = vmatpush1.msra.mxu0 %v1017
  %1139 = vmatprep.subr.mxu0 0.0
  %1140 = vmatpush1.msra.mxu0 0.0
  %1141 = vmatprep.subr.mxu0 0.0
  %1142 = vmatpush1.msra.mxu0 0.0
  %1143 = vmatprep.subr.mxu0 0.0
  %1144 = vmatpush1.msra.mxu0 0.0
  %1145 = vmatprep.subr.mxu0 0.0
  %1146 = vmatpush1.msra.mxu0 0.0
  %1147 = vmatprep.subr.mxu0 0.0
  %1148 = vmatpush1.msra.mxu0 0.0
  %1149 = vmatprep.subr.mxu0 0.0
  %1150 = vmatpush1.msra.mxu0 0.0
  %1151 = vmatprep.subr.mxu0 0.0
  %1152 = vmatpush1.msra.mxu0 0.0
  %1153 = vmatprep.subr.mxu0 0.0
  %1154 = vmatpush1.msra.mxu0 0.0
  %1155 = vmatprep.subr.mxu0 0.0
  %1156 = vmatpush1.msra.mxu0 0.0
  %1157 = vmatprep.subr.mxu0 0.0
  %1158 = vmatpush1.msra.mxu0 0.0
  %1159 = vmatprep.subr.mxu0 0.0
  %1160 = vmatpush1.msra.mxu0 0.0
  %1161 = vmatprep.subr.mxu0 0.0
  %1162 = vmatpush1.msra.mxu0 0.0
  %1163 = vmatprep.subr.mxu0 0.0
  %1164 = vmatpush1.msra.mxu0 0.0
  %1165 = vmatprep.subr.mxu0 0.0
  %1166 = vmatpush1.msra.mxu0 0.0
  %1167 = vmatprep.subr.mxu0 0.0
  %1168 = vmatpush1.msra.mxu0 0.0
  %1169 = vmatprep.subr.mxu0 0.0
  %1170 = vmatpush1.msra.mxu0 0.0
  %1171 = vmatprep.subr.mxu0 0.0
  %1172 = vmatpush1.msra.mxu0 0.0
  %1173 = vmatprep.subr.mxu0 0.0
  %1174 = vmatpush1.msra.mxu0 0.0
  %1175 = vmatprep.subr.mxu0 0.0
  %1176 = vmatpush1.msra.mxu0 0.0
  %1177 = vmatprep.subr.mxu0 0.0
  %1178 = vmatpush1.msra.mxu0 0.0
  %1179 = vmatprep.subr.mxu0 0.0
  %1180 = vmatpush1.msra.mxu0 0.0
  %1181 = vmatprep.subr.mxu0 0.0
  %1182 = vmatpush1.msra.mxu0 0.0
  %1183 = vmatprep.subr.mxu0 0.0
  %1184 = vmatpush1.msra.mxu0 0.0
  %1185 = vmatprep.subr.mxu0 0.0
  %1186 = vmatpush1.msra.mxu0 0.0
  %1187 = vmatprep.subr.mxu0 0.0
  %1188 = vmatpush1.msra.mxu0 0.0
  %1189 = vmatprep.subr.mxu0 0.0
  %1190 = vmatpush1.msra.mxu0 0.0
  %1191 = vmatprep.subr.mxu0 0.0
  %1192 = vmatpush1.msra.mxu0 0.0
  %1193 = vmatprep.subr.mxu0 0.0
  %1194 = vmatpush1.msra.mxu0 0.0
  %1195 = vmatprep.subr.mxu0 0.0
  %1196 = vmatpush1.msra.mxu0 0.0
  %1197 = vmatprep.subr.mxu0 0.0
  %1198 = vmatpush1.msra.mxu0 0.0
  %1199 = vmatprep.mubr.f32.mxu0 0.0
  %1200 = vmatmul.mubr.f32.gmra.mrb[0].mxu0 %v1130
  %v1201 = vpop.f32.mrb[0].mxu0
  %v1202 = vadd.f32 0.0, %v1201
  %v1203 = vpop.f32.mrb[0].mxu0
  %1204 = vmatprep.mubr.f32.mxu0 0.0
  %1205 = vmatmul.mubr.f32.gmra.mrb[0].mxu0 %v1133
  %v1206 = vpop.f32.mrb[0].mxu0
  %v1207 = vadd.f32 0.0, %v1206
  %v1208 = vpop.f32.mrb[0].mxu0
  %1209 = vdwg.mxu0
  %v1210 = vadd.f32 %v1010, %v1202
  %v1211 = vadd.f32 %v1011, %v1207
  %s1212 = scalar_lea.vmem %s2, 160
  %1213 = vst.msk [vmem:[%s1212] sm:$0xff] %vm15, %v1210
  %1214 = vst.msk [vmem:[%s1212 + $0x8] sm:$0x1] %vm213, %v1211
  %s1215 = scalar_lea.vmem %s1, 192
  %v1216 = vld [vmem:[%s1215] sm:$0xff]
  %v1217 = vld [vmem:[%s1215 + $0x8] sm:$0xff]
  %v1219 = vsel %vm15, %v1210, 0
  %v1222 = vsel %vm15, %v1211, 0
  %v1225 = vsel %vm15, %v1216, 0
  %v1228 = vsel %vm15, %v1217, 0
  %1230 = vmatprep.subr.mxu0 0.0
  %1231 = vmatpush1.xpose.msra.mxu0 %v1225
  %1232 = vmatprep.subr.mxu0 0.0
  %1233 = vmatpush1.xpose.msra.mxu0 %v1228
  %1234 = vmatprep.subr.mxu0 0.0
  %1235 = vmatpush1.xpose.msra.mxu0 0.0
  %1236 = vmatprep.subr.mxu0 0.0
  %1237 = vmatpush1.xpose.msra.mxu0 0.0
  %1238 = vmatprep.subr.mxu0 0.0
  %1239 = vmatpush1.xpose.msra.mxu0 0.0
  %1240 = vmatprep.subr.mxu0 0.0
  %1241 = vmatpush1.xpose.msra.mxu0 0.0
  %1242 = vmatprep.subr.mxu0 0.0
  %1243 = vmatpush1.xpose.msra.mxu0 0.0
  %1244 = vmatprep.subr.mxu0 0.0
  %1245 = vmatpush1.xpose.msra.mxu0 0.0
  %1246 = vmatprep.subr.mxu0 0.0
  %1247 = vmatpush1.xpose.msra.mxu0 0.0
  %1248 = vmatprep.subr.mxu0 0.0
  %1249 = vmatpush1.xpose.msra.mxu0 0.0
  %1250 = vmatprep.subr.mxu0 0.0
  %1251 = vmatpush1.xpose.msra.mxu0 0.0
  %1252 = vmatprep.subr.mxu0 0.0
  %1253 = vmatpush1.xpose.msra.mxu0 0.0
  %1254 = vmatprep.subr.mxu0 0.0
  %1255 = vmatpush1.xpose.msra.mxu0 0.0
  %1256 = vmatprep.subr.mxu0 0.0
  %1257 = vmatpush1.xpose.msra.mxu0 0.0
  %1258 = vmatprep.subr.mxu0 0.0
  %1259 = vmatpush1.xpose.msra.mxu0 0.0
  %1260 = vmatprep.subr.mxu0 0.0
  %1261 = vmatpush1.xpose.msra.mxu0 0.0
  %1262 = vmatprep.subr.mxu0 0.0
  %1263 = vmatpush1.xpose.msra.mxu0 0.0
  %1264 = vmatprep.subr.mxu0 0.0
  %1265 = vmatpush1.xpose.msra.mxu0 0.0
  %1266 = vmatprep.subr.mxu0 0.0
  %1267 = vmatpush1.xpose.msra.mxu0 0.0
  %1268 = vmatprep.subr.mxu0 0.0
  %1269 = vmatpush1.xpose.msra.mxu0 0.0
  %1270 = vmatprep.subr.mxu0 0.0
  %1271 = vmatpush1.xpose.msra.mxu0 0.0
  %1272 = vmatprep.subr.mxu0 0.0
  %1273 = vmatpush1.xpose.msra.mxu0 0.0
  %1274 = vmatprep.subr.mxu0 0.0
  %1275 = vmatpush1.xpose.msra.mxu0 0.0
  %1276 = vmatprep.subr.mxu0 0.0
  %1277 = vmatpush1.xpose.msra.mxu0 0.0
  %1278 = vmatprep.subr.mxu0 0.0
  %1279 = vmatpush1.xpose.msra.mxu0 0.0
  %1280 = vmatprep.subr.mxu0 0.0
  %1281 = vmatpush1.xpose.msra.mxu0 0.0
  %1282 = vmatprep.subr.mxu0 0.0
  %1283 = vmatpush1.xpose.msra.mxu0 0.0
  %1284 = vmatprep.subr.mxu0 0.0
  %1285 = vmatpush1.xpose.msra.mxu0 0.0
  %1286 = vmatprep.subr.mxu0 0.0
  %1287 = vmatpush1.xpose.msra.mxu0 0.0
  %1288 = vmatprep.subr.mxu0 0.0
  %1289 = vmatpush1.xpose.msra.mxu0 0.0
  %1290 = vmatprep.subr.mxu0 0.0
  %1291 = vmatpush1.xpose.msra.mxu0 0.0
  %1292 = vmatprep.subr.mxu0 0.0
  %1293 = vmatpush1.xpose.msra.mxu0 0.0
  %1294 = vmatprep.mubr.f32.mxu0 0.0
  %1295 = vmatmul.mubr.f32.gmra.mrb[0].mxu0 %v1219
  %v1296 = vpop.f32.mrb[0].mxu0
  %v1297 = vadd.f32 0.0, %v1296
  %v1298 = vpop.f32.mrb[0].mxu0
  %1299 = vmatprep.mubr.f32.mxu0 0.0
  %1300 = vmatmul.mubr.f32.gmra.mrb[0].mxu0 %v1222
  %v1301 = vpop.f32.mrb[0].mxu0
  %v1302 = vadd.f32 0.0, %v1301
  %v1303 = vpop.f32.mrb[0].mxu0
  %1304 = vdwg.mxu0
  %v1305 = vmul.f32 %v1297, 0.17677669
  %v1306 = vmul.f32 %v1302, 0.17677669
  %v1307 = vsel %vm105, %v1305, -inf
  %1308 = vmax.xlane.f32.xlu0 %v1307
  %v1309 = vpop.xlane.xlu0 %1308
  %v1310 = vsel %vm109, %v1306, -inf
  %1311 = vmax.xlane.f32.xlu0 %v1310
  %v1312 = vpop.xlane.xlu0 %1311
  %v1313 = vsub.f32 %v1305, %v1309
  %v1314 = vsub.f32 %v1306, %v1312
  %v1315 = vmul.f32 %v1313, 1.442695
  %v1316 = vpow.pop %v1315
  %v1317 = vmul.f32 %v1314, 1.442695
  %v1318 = vpow.pop %v1317
  %v1319 = vsel %vm105, %v1316, 0.0
  %1320 = vadd.xlane.f32.xlu0 %v1319
  %v1321 = vpop.xlane.xlu0 %1320
  %v1322 = vsel %vm109, %v1318, 0.0
  %1323 = vadd.xlane.f32.xlu0 %v1322
  %v1324 = vpop.xlane.xlu0 %1323
  %v1325 = vrcp.pop %v1321
  %v1326 = vmul.f32 %v1316, %v1325
  %v1327 = vrcp.pop %v1324
  %v1328 = vmul.f32 %v1318, %v1327
  %v1330 = vsel %vm105, %v1326, 0
  %v1333 = vsel %vm105, %v1328, 0
  %1335 = vmatprep.subr.mxu0 0.0
  %1336 = vmatpush1.msra.mxu0 %v1216
  %1337 = vmatprep.subr.mxu0 0.0
  %1338 = vmatpush1.msra.mxu0 %v1217
  %1339 = vmatprep.subr.mxu0 0.0
  %1340 = vmatpush1.msra.mxu0 0.0
  %1341 = vmatprep.subr.mxu0 0.0
  %1342 = vmatpush1.msra.mxu0 0.0
  %1343 = vmatprep.subr.mxu0 0.0
  %1344 = vmatpush1.msra.mxu0 0.0
  %1345 = vmatprep.subr.mxu0 0.0
  %1346 = vmatpush1.msra.mxu0 0.0
  %1347 = vmatprep.subr.mxu0 0.0
  %1348 = vmatpush1.msra.mxu0 0.0
  %1349 = vmatprep.subr.mxu0 0.0
  %1350 = vmatpush1.msra.mxu0 0.0
  %1351 = vmatprep.subr.mxu0 0.0
  %1352 = vmatpush1.msra.mxu0 0.0
  %1353 = vmatprep.subr.mxu0 0.0
  %1354 = vmatpush1.msra.mxu0 0.0
  %1355 = vmatprep.subr.mxu0 0.0
  %1356 = vmatpush1.msra.mxu0 0.0
  %1357 = vmatprep.subr.mxu0 0.0
  %1358 = vmatpush1.msra.mxu0 0.0
  %1359 = vmatprep.subr.mxu0 0.0
  %1360 = vmatpush1.msra.mxu0 0.0
  %1361 = vmatprep.subr.mxu0 0.0
  %1362 = vmatpush1.msra.mxu0 0.0
  %1363 = vmatprep.subr.mxu0 0.0
  %1364 = vmatpush1.msra.mxu0 0.0
  %1365 = vmatprep.subr.mxu0 0.0
  %1366 = vmatpush1.msra.mxu0 0.0
  %1367 = vmatprep.subr.mxu0 0.0
  %1368 = vmatpush1.msra.mxu0 0.0
  %1369 = vmatprep.subr.mxu0 0.0
  %1370 = vmatpush1.msra.mxu0 0.0
  %1371 = vmatprep.subr.mxu0 0.0
  %1372 = vmatpush1.msra.mxu0 0.0
  %1373 = vmatprep.subr.mxu0 0.0
  %1374 = vmatpush1.msra.mxu0 0.0
  %1375 = vmatprep.subr.mxu0 0.0
  %1376 = vmatpush1.msra.mxu0 0.0
  %1377 = vmatprep.subr.mxu0 0.0
  %1378 = vmatpush1.msra.mxu0 0.0
  %1379 = vmatprep.subr.mxu0 0.0
  %1380 = vmatpush1.msra.mxu0 0.0
  %1381 = vmatprep.subr.mxu0 0.0
  %1382 = vmatpush1.msra.mxu0 0.0
  %1383 = vmatprep.subr.mxu0 0.0
  %1384 = vmatpush1.msra.mxu0 0.0
  %1385 = vmatprep.subr.mxu0 0.0
  %1386 = vmatpush1.msra.mxu0 0.0
  %1387 = vmatprep.subr.mxu0 0.0
  %1388 = vmatpush1.msra.mxu0 0.0
  %1389 = vmatprep.subr.mxu0 0.0
  %1390 = vmatpush1.msra.mxu0 0.0
  %1391 = vmatprep.subr.mxu0 0.0
  %1392 = vmatpush1.msra.mxu0 0.0
  %1393 = vmatprep.subr.mxu0 0.0
  %1394 = vmatpush1.msra.mxu0 0.0
  %1395 = vmatprep.subr.mxu0 0.0
  %1396 = vmatpush1.msra.mxu0 0.0
  %1397 = vmatprep.subr.mxu0 0.0
  %1398 = vmatpush1.msra.mxu0 0.0
  %1399 = vmatprep.mubr.f32.mxu0 0.0
  %1400 = vmatmul.mubr.f32.gmra.mrb[0].mxu0 %v1330
  %v1401 = vpop.f32.mrb[0].mxu0
  %v1402 = vadd.f32 0.0, %v1401
  %v1403 = vpop.f32.mrb[0].mxu0
  %1404 = vmatprep.mubr.f32.mxu0 0.0
  %1405 = vmatmul.mubr.f32.gmra.mrb[0].mxu0 %v1333
  %v1406 = vpop.f32.mrb[0].mxu0
  %v1407 = vadd.f32 0.0, %v1406
  %v1408 = vpop.f32.mrb[0].mxu0
  %1409 = vdwg.mxu0
  %v1410 = vadd.f32 %v1210, %v1402
  %v1411 = vadd.f32 %v1211, %v1407
  %s1412 = scalar_lea.vmem %s2, 192
  %1413 = vst.msk [vmem:[%s1412] sm:$0xff] %vm15, %v1410
  %1414 = vst.msk [vmem:[%s1412 + $0x8] sm:$0x1] %vm213, %v1411
  %s1415 = scalar_lea.vmem %s1, 224
  %v1416 = vld [vmem:[%s1415] sm:$0xff]
  %v1417 = vld [vmem:[%s1415 + $0x8] sm:$0xff]
  %v1419 = vsel %vm15, %v1410, 0
  %v1422 = vsel %vm15, %v1411, 0
  %v1425 = vsel %vm15, %v1416, 0
  %v1428 = vsel %vm15, %v1417, 0
  %1430 = vmatprep.subr.mxu0 0.0
  %1431 = vmatpush1.xpose.msra.mxu0 %v1425
  %1432 = vmatprep.subr.mxu0 0.0
  %1433 = vmatpush1.xpose.msra.mxu0 %v1428
  %1434 = vmatprep.subr.mxu0 0.0
  %1435 = vmatpush1.xpose.msra.mxu0 0.0
  %1436 = vmatprep.subr.mxu0 0.0
  %1437 = vmatpush1.xpose.msra.mxu0 0.0
  %1438 = vmatprep.subr.mxu0 0.0
  %1439 = vmatpush1.xpose.msra.mxu0 0.0
  %1440 = vmatprep.subr.mxu0 0.0
  %1441 = vmatpush1.xpose.msra.mxu0 0.0
  %1442 = vmatprep.subr.mxu0 0.0
  %1443 = vmatpush1.xpose.msra.mxu0 0.0
  %1444 = vmatprep.subr.mxu0 0.0
  %1445 = vmatpush1.xpose.msra.mxu0 0.0
  %1446 = vmatprep.subr.mxu0 0.0
  %1447 = vmatpush1.xpose.msra.mxu0 0.0
  %1448 = vmatprep.subr.mxu0 0.0
  %1449 = vmatpush1.xpose.msra.mxu0 0.0
  %1450 = vmatprep.subr.mxu0 0.0
  %1451 = vmatpush1.xpose.msra.mxu0 0.0
  %1452 = vmatprep.subr.mxu0 0.0
  %1453 = vmatpush1.xpose.msra.mxu0 0.0
  %1454 = vmatprep.subr.mxu0 0.0
  %1455 = vmatpush1.xpose.msra.mxu0 0.0
  %1456 = vmatprep.subr.mxu0 0.0
  %1457 = vmatpush1.xpose.msra.mxu0 0.0
  %1458 = vmatprep.subr.mxu0 0.0
  %1459 = vmatpush1.xpose.msra.mxu0 0.0
  %1460 = vmatprep.subr.mxu0 0.0
  %1461 = vmatpush1.xpose.msra.mxu0 0.0
  %1462 = vmatprep.subr.mxu0 0.0
  %1463 = vmatpush1.xpose.msra.mxu0 0.0
  %1464 = vmatprep.subr.mxu0 0.0
  %1465 = vmatpush1.xpose.msra.mxu0 0.0
  %1466 = vmatprep.subr.mxu0 0.0
  %1467 = vmatpush1.xpose.msra.mxu0 0.0
  %1468 = vmatprep.subr.mxu0 0.0
  %1469 = vmatpush1.xpose.msra.mxu0 0.0
  %1470 = vmatprep.subr.mxu0 0.0
  %1471 = vmatpush1.xpose.msra.mxu0 0.0
  %1472 = vmatprep.subr.mxu0 0.0
  %1473 = vmatpush1.xpose.msra.mxu0 0.0
  %1474 = vmatprep.subr.mxu0 0.0
  %1475 = vmatpush1.xpose.msra.mxu0 0.0
  %1476 = vmatprep.subr.mxu0 0.0
  %1477 = vmatpush1.xpose.msra.mxu0 0.0
  %1478 = vmatprep.subr.mxu0 0.0
  %1479 = vmatpush1.xpose.msra.mxu0 0.0
  %1480 = vmatprep.subr.mxu0 0.0
  %1481 = vmatpush1.xpose.msra.mxu0 0.0
  %1482 = vmatprep.subr.mxu0 0.0
  %1483 = vmatpush1.xpose.msra.mxu0 0.0
  %1484 = vmatprep.subr.mxu0 0.0
  %1485 = vmatpush1.xpose.msra.mxu0 0.0
  %1486 = vmatprep.subr.mxu0 0.0
  %1487 = vmatpush1.xpose.msra.mxu0 0.0
  %1488 = vmatprep.subr.mxu0 0.0
  %1489 = vmatpush1.xpose.msra.mxu0 0.0
  %1490 = vmatprep.subr.mxu0 0.0
  %1491 = vmatpush1.xpose.msra.mxu0 0.0
  %1492 = vmatprep.subr.mxu0 0.0
  %1493 = vmatpush1.xpose.msra.mxu0 0.0
  %1494 = vmatprep.mubr.f32.mxu0 0.0
  %1495 = vmatmul.mubr.f32.gmra.mrb[0].mxu0 %v1419
  %v1496 = vpop.f32.mrb[0].mxu0
  %v1497 = vadd.f32 0.0, %v1496
  %v1498 = vpop.f32.mrb[0].mxu0
  %1499 = vmatprep.mubr.f32.mxu0 0.0
  %1500 = vmatmul.mubr.f32.gmra.mrb[0].mxu0 %v1422
  %v1501 = vpop.f32.mrb[0].mxu0
  %v1502 = vadd.f32 0.0, %v1501
  %v1503 = vpop.f32.mrb[0].mxu0
  %1504 = vdwg.mxu0
  %v1505 = vmul.f32 %v1497, 0.17677669
  %v1506 = vmul.f32 %v1502, 0.17677669
  %v1507 = vsel %vm105, %v1505, -inf
  %1508 = vmax.xlane.f32.xlu0 %v1507
  %v1509 = vpop.xlane.xlu0 %1508
  %v1510 = vsel %vm109, %v1506, -inf
  %1511 = vmax.xlane.f32.xlu0 %v1510
  %v1512 = vpop.xlane.xlu0 %1511
  %v1513 = vsub.f32 %v1505, %v1509
  %v1514 = vsub.f32 %v1506, %v1512
  %v1515 = vmul.f32 %v1513, 1.442695
  %v1516 = vpow.pop %v1515
  %v1517 = vmul.f32 %v1514, 1.442695
  %v1518 = vpow.pop %v1517
  %v1519 = vsel %vm105, %v1516, 0.0
  %1520 = vadd.xlane.f32.xlu0 %v1519
  %v1521 = vpop.xlane.xlu0 %1520
  %v1522 = vsel %vm109, %v1518, 0.0
  %1523 = vadd.xlane.f32.xlu0 %v1522
  %v1524 = vpop.xlane.xlu0 %1523
  %v1525 = vrcp.pop %v1521
  %v1526 = vmul.f32 %v1516, %v1525
  %v1527 = vrcp.pop %v1524
  %v1528 = vmul.f32 %v1518, %v1527
  %v1530 = vsel %vm105, %v1526, 0
  %v1533 = vsel %vm105, %v1528, 0
  %1535 = vmatprep.subr.mxu0 0.0
  %1536 = vmatpush1.msra.mxu0 %v1416
  %1537 = vmatprep.subr.mxu0 0.0
  %1538 = vmatpush1.msra.mxu0 %v1417
  %1539 = vmatprep.subr.mxu0 0.0
  %1540 = vmatpush1.msra.mxu0 0.0
  %1541 = vmatprep.subr.mxu0 0.0
  %1542 = vmatpush1.msra.mxu0 0.0
  %1543 = vmatprep.subr.mxu0 0.0
  %1544 = vmatpush1.msra.mxu0 0.0
  %1545 = vmatprep.subr.mxu0 0.0
  %1546 = vmatpush1.msra.mxu0 0.0
  %1547 = vmatprep.subr.mxu0 0.0
  %1548 = vmatpush1.msra.mxu0 0.0
  %1549 = vmatprep.subr.mxu0 0.0
  %1550 = vmatpush1.msra.mxu0 0.0
  %1551 = vmatprep.subr.mxu0 0.0
  %1552 = vmatpush1.msra.mxu0 0.0
  %1553 = vmatprep.subr.mxu0 0.0
  %1554 = vmatpush1.msra.mxu0 0.0
  %1555 = vmatprep.subr.mxu0 0.0
  %1556 = vmatpush1.msra.mxu0 0.0
  %1557 = vmatprep.subr.mxu0 0.0
  %1558 = vmatpush1.msra.mxu0 0.0
  %1559 = vmatprep.subr.mxu0 0.0
  %1560 = vmatpush1.msra.mxu0 0.0
  %1561 = vmatprep.subr.mxu0 0.0
  %1562 = vmatpush1.msra.mxu0 0.0
  %1563 = vmatprep.subr.mxu0 0.0
  %1564 = vmatpush1.msra.mxu0 0.0
  %1565 = vmatprep.subr.mxu0 0.0
  %1566 = vmatpush1.msra.mxu0 0.0
  %1567 = vmatprep.subr.mxu0 0.0
  %1568 = vmatpush1.msra.mxu0 0.0
  %1569 = vmatprep.subr.mxu0 0.0
  %1570 = vmatpush1.msra.mxu0 0.0
  %1571 = vmatprep.subr.mxu0 0.0
  %1572 = vmatpush1.msra.mxu0 0.0
  %1573 = vmatprep.subr.mxu0 0.0
  %1574 = vmatpush1.msra.mxu0 0.0
  %1575 = vmatprep.subr.mxu0 0.0
  %1576 = vmatpush1.msra.mxu0 0.0
  %1577 = vmatprep.subr.mxu0 0.0
  %1578 = vmatpush1.msra.mxu0 0.0
  %1579 = vmatprep.subr.mxu0 0.0
  %1580 = vmatpush1.msra.mxu0 0.0
  %1581 = vmatprep.subr.mxu0 0.0
  %1582 = vmatpush1.msra.mxu0 0.0
  %1583 = vmatprep.subr.mxu0 0.0
  %1584 = vmatpush1.msra.mxu0 0.0
  %1585 = vmatprep.subr.mxu0 0.0
  %1586 = vmatpush1.msra.mxu0 0.0
  %1587 = vmatprep.subr.mxu0 0.0
  %1588 = vmatpush1.msra.mxu0 0.0
  %1589 = vmatprep.subr.mxu0 0.0
  %1590 = vmatpush1.msra.mxu0 0.0
  %1591 = vmatprep.subr.mxu0 0.0
  %1592 = vmatpush1.msra.mxu0 0.0
  %1593 = vmatprep.subr.mxu0 0.0
  %1594 = vmatpush1.msra.mxu0 0.0
  %1595 = vmatprep.subr.mxu0 0.0
  %1596 = vmatpush1.msra.mxu0 0.0
  %1597 = vmatprep.subr.mxu0 0.0
  %1598 = vmatpush1.msra.mxu0 0.0
  %1599 = vmatprep.mubr.f32.mxu0 0.0
  %1600 = vmatmul.mubr.f32.gmra.mrb[0].mxu0 %v1530
  %v1601 = vpop.f32.mrb[0].mxu0
  %v1602 = vadd.f32 0.0, %v1601
  %v1603 = vpop.f32.mrb[0].mxu0
  %1604 = vmatprep.mubr.f32.mxu0 0.0
  %1605 = vmatmul.mubr.f32.gmra.mrb[0].mxu0 %v1533
  %v1606 = vpop.f32.mrb[0].mxu0
  %v1607 = vadd.f32 0.0, %v1606
  %v1608 = vpop.f32.mrb[0].mxu0
  %1609 = vdwg.mxu0
  %v1610 = vadd.f32 %v1410, %v1602
  %v1611 = vadd.f32 %v1411, %v1607
  %s1612 = scalar_lea.vmem %s2, 224
  %1613 = vst.msk [vmem:[%s1612] sm:$0xff] %vm15, %v1610
  %1614 = vst.msk [vmem:[%s1612 + $0x8] sm:$0x1] %vm213, %v1611
  %s1615 = scalar_lea.vmem %s1, 256
  %v1616 = vld [vmem:[%s1615] sm:$0xff]
  %v1617 = vld [vmem:[%s1615 + $0x8] sm:$0xff]
  %v1619 = vsel %vm15, %v1610, 0
  %v1622 = vsel %vm15, %v1611, 0
  %v1625 = vsel %vm15, %v1616, 0
  %v1628 = vsel %vm15, %v1617, 0
  %1630 = vmatprep.subr.mxu0 0.0
  %1631 = vmatpush1.xpose.msra.mxu0 %v1625
  %1632 = vmatprep.subr.mxu0 0.0
  %1633 = vmatpush1.xpose.msra.mxu0 %v1628
  %1634 = vmatprep.subr.mxu0 0.0
  %1635 = vmatpush1.xpose.msra.mxu0 0.0
  %1636 = vmatprep.subr.mxu0 0.0
  %1637 = vmatpush1.xpose.msra.mxu0 0.0
  %1638 = vmatprep.subr.mxu0 0.0
  %1639 = vmatpush1.xpose.msra.mxu0 0.0
  %1640 = vmatprep.subr.mxu0 0.0
  %1641 = vmatpush1.xpose.msra.mxu0 0.0
  %1642 = vmatprep.subr.mxu0 0.0
  %1643 = vmatpush1.xpose.msra.mxu0 0.0
  %1644 = vmatprep.subr.mxu0 0.0
  %1645 = vmatpush1.xpose.msra.mxu0 0.0
  %1646 = vmatprep.subr.mxu0 0.0
  %1647 = vmatpush1.xpose.msra.mxu0 0.0
  %1648 = vmatprep.subr.mxu0 0.0
  %1649 = vmatpush1.xpose.msra.mxu0 0.0
  %1650 = vmatprep.subr.mxu0 0.0
  %1651 = vmatpush1.xpose.msra.mxu0 0.0
  %1652 = vmatprep.subr.mxu0 0.0
  %1653 = vmatpush1.xpose.msra.mxu0 0.0
  %1654 = vmatprep.subr.mxu0 0.0
  %1655 = vmatpush1.xpose.msra.mxu0 0.0
  %1656 = vmatprep.subr.mxu0 0.0
  %1657 = vmatpush1.xpose.msra.mxu0 0.0
  %1658 = vmatprep.subr.mxu0 0.0
  %1659 = vmatpush1.xpose.msra.mxu0 0.0
  %1660 = vmatprep.subr.mxu0 0.0
  %1661 = vmatpush1.xpose.msra.mxu0 0.0
  %1662 = vmatprep.subr.mxu0 0.0
  %1663 = vmatpush1.xpose.msra.mxu0 0.0
  %1664 = vmatprep.subr.mxu0 0.0
  %1665 = vmatpush1.xpose.msra.mxu0 0.0
  %1666 = vmatprep.subr.mxu0 0.0
  %1667 = vmatpush1.xpose.msra.mxu0 0.0
  %1668 = vmatprep.subr.mxu0 0.0
  %1669 = vmatpush1.xpose.msra.mxu0 0.0
  %1670 = vmatprep.subr.mxu0 0.0
  %1671 = vmatpush1.xpose.msra.mxu0 0.0
  %1672 = vmatprep.subr.mxu0 0.0
  %1673 = vmatpush1.xpose.msra.mxu0 0.0
  %1674 = vmatprep.subr.mxu0 0.0
  %1675 = vmatpush1.xpose.msra.mxu0 0.0
  %1676 = vmatprep.subr.mxu0 0.0
  %1677 = vmatpush1.xpose.msra.mxu0 0.0
  %1678 = vmatprep.subr.mxu0 0.0
  %1679 = vmatpush1.xpose.msra.mxu0 0.0
  %1680 = vmatprep.subr.mxu0 0.0
  %1681 = vmatpush1.xpose.msra.mxu0 0.0
  %1682 = vmatprep.subr.mxu0 0.0
  %1683 = vmatpush1.xpose.msra.mxu0 0.0
  %1684 = vmatprep.subr.mxu0 0.0
  %1685 = vmatpush1.xpose.msra.mxu0 0.0
  %1686 = vmatprep.subr.mxu0 0.0
  %1687 = vmatpush1.xpose.msra.mxu0 0.0
  %1688 = vmatprep.subr.mxu0 0.0
  %1689 = vmatpush1.xpose.msra.mxu0 0.0
  %1690 = vmatprep.subr.mxu0 0.0
  %1691 = vmatpush1.xpose.msra.mxu0 0.0
  %1692 = vmatprep.subr.mxu0 0.0
  %1693 = vmatpush1.xpose.msra.mxu0 0.0
  %1694 = vmatprep.mubr.f32.mxu0 0.0
  %1695 = vmatmul.mubr.f32.gmra.mrb[0].mxu0 %v1619
  %v1696 = vpop.f32.mrb[0].mxu0
  %v1697 = vadd.f32 0.0, %v1696
  %v1698 = vpop.f32.mrb[0].mxu0
  %1699 = vmatprep.mubr.f32.mxu0 0.0
  %1700 = vmatmul.mubr.f32.gmra.mrb[0].mxu0 %v1622
  %v1701 = vpop.f32.mrb[0].mxu0
  %v1702 = vadd.f32 0.0, %v1701
  %v1703 = vpop.f32.mrb[0].mxu0
  %1704 = vdwg.mxu0
  %v1705 = vmul.f32 %v1697, 0.17677669
  %v1706 = vmul.f32 %v1702, 0.17677669
  %v1707 = vsel %vm105, %v1705, -inf
  %1708 = vmax.xlane.f32.xlu0 %v1707
  %v1709 = vpop.xlane.xlu0 %1708
  %v1710 = vsel %vm109, %v1706, -inf
  %1711 = vmax.xlane.f32.xlu0 %v1710
  %v1712 = vpop.xlane.xlu0 %1711
  %v1713 = vsub.f32 %v1705, %v1709
  %v1714 = vsub.f32 %v1706, %v1712
  %v1715 = vmul.f32 %v1713, 1.442695
  %v1716 = vpow.pop %v1715
  %v1717 = vmul.f32 %v1714, 1.442695
  %v1718 = vpow.pop %v1717
  %v1719 = vsel %vm105, %v1716, 0.0
  %1720 = vadd.xlane.f32.xlu0 %v1719
  %v1721 = vpop.xlane.xlu0 %1720
  %v1722 = vsel %vm109, %v1718, 0.0
  %1723 = vadd.xlane.f32.xlu0 %v1722
  %v1724 = vpop.xlane.xlu0 %1723
  %v1725 = vrcp.pop %v1721
  %v1726 = vmul.f32 %v1716, %v1725
  %v1727 = vrcp.pop %v1724
  %v1728 = vmul.f32 %v1718, %v1727
  %v1730 = vsel %vm105, %v1726, 0
  %v1733 = vsel %vm105, %v1728, 0
  %1735 = vmatprep.subr.mxu0 0.0
  %1736 = vmatpush1.msra.mxu0 %v1616
  %1737 = vmatprep.subr.mxu0 0.0
  %1738 = vmatpush1.msra.mxu0 %v1617
  %1739 = vmatprep.subr.mxu0 0.0
  %1740 = vmatpush1.msra.mxu0 0.0
  %1741 = vmatprep.subr.mxu0 0.0
  %1742 = vmatpush1.msra.mxu0 0.0
  %1743 = vmatprep.subr.mxu0 0.0
  %1744 = vmatpush1.msra.mxu0 0.0
  %1745 = vmatprep.subr.mxu0 0.0
  %1746 = vmatpush1.msra.mxu0 0.0
  %1747 = vmatprep.subr.mxu0 0.0
  %1748 = vmatpush1.msra.mxu0 0.0
  %1749 = vmatprep.subr.mxu0 0.0
  %1750 = vmatpush1.msra.mxu0 0.0
  %1751 = vmatprep.subr.mxu0 0.0
  %1752 = vmatpush1.msra.mxu0 0.0
  %1753 = vmatprep.subr.mxu0 0.0
  %1754 = vmatpush1.msra.mxu0 0.0
  %1755 = vmatprep.subr.mxu0 0.0
  %1756 = vmatpush1.msra.mxu0 0.0
  %1757 = vmatprep.subr.mxu0 0.0
  %1758 = vmatpush1.msra.mxu0 0.0
  %1759 = vmatprep.subr.mxu0 0.0
  %1760 = vmatpush1.msra.mxu0 0.0
  %1761 = vmatprep.subr.mxu0 0.0
  %1762 = vmatpush1.msra.mxu0 0.0
  %1763 = vmatprep.subr.mxu0 0.0
  %1764 = vmatpush1.msra.mxu0 0.0
  %1765 = vmatprep.subr.mxu0 0.0
  %1766 = vmatpush1.msra.mxu0 0.0
  %1767 = vmatprep.subr.mxu0 0.0
  %1768 = vmatpush1.msra.mxu0 0.0
  %1769 = vmatprep.subr.mxu0 0.0
  %1770 = vmatpush1.msra.mxu0 0.0
  %1771 = vmatprep.subr.mxu0 0.0
  %1772 = vmatpush1.msra.mxu0 0.0
  %1773 = vmatprep.subr.mxu0 0.0
  %1774 = vmatpush1.msra.mxu0 0.0
  %1775 = vmatprep.subr.mxu0 0.0
  %1776 = vmatpush1.msra.mxu0 0.0
  %1777 = vmatprep.subr.mxu0 0.0
  %1778 = vmatpush1.msra.mxu0 0.0
  %1779 = vmatprep.subr.mxu0 0.0
  %1780 = vmatpush1.msra.mxu0 0.0
  %1781 = vmatprep.subr.mxu0 0.0
  %1782 = vmatpush1.msra.mxu0 0.0
  %1783 = vmatprep.subr.mxu0 0.0
  %1784 = vmatpush1.msra.mxu0 0.0
  %1785 = vmatprep.subr.mxu0 0.0
  %1786 = vmatpush1.msra.mxu0 0.0
  %1787 = vmatprep.subr.mxu0 0.0
  %1788 = vmatpush1.msra.mxu0 0.0
  %1789 = vmatprep.subr.mxu0 0.0
  %1790 = vmatpush1.msra.mxu0 0.0
  %1791 = vmatprep.subr.mxu0 0.0
  %1792 = vmatpush1.msra.mxu0 0.0
  %1793 = vmatprep.subr.mxu0 0.0
  %1794 = vmatpush1.msra.mxu0 0.0
  %1795 = vmatprep.subr.mxu0 0.0
  %1796 = vmatpush1.msra.mxu0 0.0
  %1797 = vmatprep.subr.mxu0 0.0
  %1798 = vmatpush1.msra.mxu0 0.0
  %1799 = vmatprep.mubr.f32.mxu0 0.0
  %1800 = vmatmul.mubr.f32.gmra.mrb[0].mxu0 %v1730
  %v1801 = vpop.f32.mrb[0].mxu0
  %v1802 = vadd.f32 0.0, %v1801
  %v1803 = vpop.f32.mrb[0].mxu0
  %1804 = vmatprep.mubr.f32.mxu0 0.0
  %1805 = vmatmul.mubr.f32.gmra.mrb[0].mxu0 %v1733
  %v1806 = vpop.f32.mrb[0].mxu0
  %v1807 = vadd.f32 0.0, %v1806
  %v1808 = vpop.f32.mrb[0].mxu0
  %1809 = vdwg.mxu0
  %v1810 = vadd.f32 %v1610, %v1802
  %v1811 = vadd.f32 %v1611, %v1807
  %s1812 = scalar_lea.vmem %s2, 256
  %1813 = vst.msk [vmem:[%s1812] sm:$0xff] %vm15, %v1810
  %1814 = vst.msk [vmem:[%s1812 + $0x8] sm:$0x1] %vm213, %v1811
  %s1815 = scalar_lea.vmem %s1, 288
  %v1816 = vld [vmem:[%s1815] sm:$0xff]
  %v1817 = vld [vmem:[%s1815 + $0x8] sm:$0xff]
  %v1819 = vsel %vm15, %v1810, 0
  %v1822 = vsel %vm15, %v1811, 0
  %v1825 = vsel %vm15, %v1816, 0
  %v1828 = vsel %vm15, %v1817, 0
  %1830 = vmatprep.subr.mxu0 0.0
  %1831 = vmatpush1.xpose.msra.mxu0 %v1825
  %1832 = vmatprep.subr.mxu0 0.0
  %1833 = vmatpush1.xpose.msra.mxu0 %v1828
  %1834 = vmatprep.subr.mxu0 0.0
  %1835 = vmatpush1.xpose.msra.mxu0 0.0
  %1836 = vmatprep.subr.mxu0 0.0
  %1837 = vmatpush1.xpose.msra.mxu0 0.0
  %1838 = vmatprep.subr.mxu0 0.0
  %1839 = vmatpush1.xpose.msra.mxu0 0.0
  %1840 = vmatprep.subr.mxu0 0.0
  %1841 = vmatpush1.xpose.msra.mxu0 0.0
  %1842 = vmatprep.subr.mxu0 0.0
  %1843 = vmatpush1.xpose.msra.mxu0 0.0
  %1844 = vmatprep.subr.mxu0 0.0
  %1845 = vmatpush1.xpose.msra.mxu0 0.0
  %1846 = vmatprep.subr.mxu0 0.0
  %1847 = vmatpush1.xpose.msra.mxu0 0.0
  %1848 = vmatprep.subr.mxu0 0.0
  %1849 = vmatpush1.xpose.msra.mxu0 0.0
  %1850 = vmatprep.subr.mxu0 0.0
  %1851 = vmatpush1.xpose.msra.mxu0 0.0
  %1852 = vmatprep.subr.mxu0 0.0
  %1853 = vmatpush1.xpose.msra.mxu0 0.0
  %1854 = vmatprep.subr.mxu0 0.0
  %1855 = vmatpush1.xpose.msra.mxu0 0.0
  %1856 = vmatprep.subr.mxu0 0.0
  %1857 = vmatpush1.xpose.msra.mxu0 0.0
  %1858 = vmatprep.subr.mxu0 0.0
  %1859 = vmatpush1.xpose.msra.mxu0 0.0
  %1860 = vmatprep.subr.mxu0 0.0
  %1861 = vmatpush1.xpose.msra.mxu0 0.0
  %1862 = vmatprep.subr.mxu0 0.0
  %1863 = vmatpush1.xpose.msra.mxu0 0.0
  %1864 = vmatprep.subr.mxu0 0.0
  %1865 = vmatpush1.xpose.msra.mxu0 0.0
  %1866 = vmatprep.subr.mxu0 0.0
  %1867 = vmatpush1.xpose.msra.mxu0 0.0
  %1868 = vmatprep.subr.mxu0 0.0
  %1869 = vmatpush1.xpose.msra.mxu0 0.0
  %1870 = vmatprep.subr.mxu0 0.0
  %1871 = vmatpush1.xpose.msra.mxu0 0.0
  %1872 = vmatprep.subr.mxu0 0.0
  %1873 = vmatpush1.xpose.msra.mxu0 0.0
  %1874 = vmatprep.subr.mxu0 0.0
  %1875 = vmatpush1.xpose.msra.mxu0 0.0
  %1876 = vmatprep.subr.mxu0 0.0
  %1877 = vmatpush1.xpose.msra.mxu0 0.0
  %1878 = vmatprep.subr.mxu0 0.0
  %1879 = vmatpush1.xpose.msra.mxu0 0.0
  %1880 = vmatprep.subr.mxu0 0.0
  %1881 = vmatpush1.xpose.msra.mxu0 0.0
  %1882 = vmatprep.subr.mxu0 0.0
  %1883 = vmatpush1.xpose.msra.mxu0 0.0
  %1884 = vmatprep.subr.mxu0 0.0
  %1885 = vmatpush1.xpose.msra.mxu0 0.0
  %1886 = vmatprep.subr.mxu0 0.0
  %1887 = vmatpush1.xpose.msra.mxu0 0.0
  %1888 = vmatprep.subr.mxu0 0.0
  %1889 = vmatpush1.xpose.msra.mxu0 0.0
  %1890 = vmatprep.subr.mxu0 0.0
  %1891 = vmatpush1.xpose.msra.mxu0 0.0
  %1892 = vmatprep.subr.mxu0 0.0
  %1893 = vmatpush1.xpose.msra.mxu0 0.0
  %1894 = vmatprep.mubr.f32.mxu0 0.0
  %1895 = vmatmul.mubr.f32.gmra.mrb[0].mxu0 %v1819
  %v1896 = vpop.f32.mrb[0].mxu0
  %v1897 = vadd.f32 0.0, %v1896
  %v1898 = vpop.f32.mrb[0].mxu0
  %1899 = vmatprep.mubr.f32.mxu0 0.0
  %1900 = vmatmul.mubr.f32.gmra.mrb[0].mxu0 %v1822
  %v1901 = vpop.f32.mrb[0].mxu0
  %v1902 = vadd.f32 0.0, %v1901
  %v1903 = vpop.f32.mrb[0].mxu0
  %1904 = vdwg.mxu0
  %v1905 = vmul.f32 %v1897, 0.17677669
  %v1906 = vmul.f32 %v1902, 0.17677669
  %v1907 = vsel %vm105, %v1905, -inf
  %1908 = vmax.xlane.f32.xlu0 %v1907
  %v1909 = vpop.xlane.xlu0 %1908
  %v1910 = vsel %vm109, %v1906, -inf
  %1911 = vmax.xlane.f32.xlu0 %v1910
  %v1912 = vpop.xlane.xlu0 %1911
  %v1913 = vsub.f32 %v1905, %v1909
  %v1914 = vsub.f32 %v1906, %v1912
  %v1915 = vmul.f32 %v1913, 1.442695
  %v1916 = vpow.pop %v1915
  %v1917 = vmul.f32 %v1914, 1.442695
  %v1918 = vpow.pop %v1917
  %v1919 = vsel %vm105, %v1916, 0.0
  %1920 = vadd.xlane.f32.xlu0 %v1919
  %v1921 = vpop.xlane.xlu0 %1920
  %v1922 = vsel %vm109, %v1918, 0.0
  %1923 = vadd.xlane.f32.xlu0 %v1922
  %v1924 = vpop.xlane.xlu0 %1923
  %v1925 = vrcp.pop %v1921
  %v1926 = vmul.f32 %v1916, %v1925
  %v1927 = vrcp.pop %v1924
  %v1928 = vmul.f32 %v1918, %v1927
  %v1930 = vsel %vm105, %v1926, 0
  %v1933 = vsel %vm105, %v1928, 0
  %1935 = vmatprep.subr.mxu0 0.0
  %1936 = vmatpush1.msra.mxu0 %v1816
  %1937 = vmatprep.subr.mxu0 0.0
  %1938 = vmatpush1.msra.mxu0 %v1817
  %1939 = vmatprep.subr.mxu0 0.0
  %1940 = vmatpush1.msra.mxu0 0.0
  %1941 = vmatprep.subr.mxu0 0.0
  %1942 = vmatpush1.msra.mxu0 0.0
  %1943 = vmatprep.subr.mxu0 0.0
  %1944 = vmatpush1.msra.mxu0 0.0
  %1945 = vmatprep.subr.mxu0 0.0
  %1946 = vmatpush1.msra.mxu0 0.0
  %1947 = vmatprep.subr.mxu0 0.0
  %1948 = vmatpush1.msra.mxu0 0.0
  %1949 = vmatprep.subr.mxu0 0.0
  %1950 = vmatpush1.msra.mxu0 0.0
  %1951 = vmatprep.subr.mxu0 0.0
  %1952 = vmatpush1.msra.mxu0 0.0
  %1953 = vmatprep.subr.mxu0 0.0
  %1954 = vmatpush1.msra.mxu0 0.0
  %1955 = vmatprep.subr.mxu0 0.0
  %1956 = vmatpush1.msra.mxu0 0.0
  %1957 = vmatprep.subr.mxu0 0.0
  %1958 = vmatpush1.msra.mxu0 0.0
  %1959 = vmatprep.subr.mxu0 0.0
  %1960 = vmatpush1.msra.mxu0 0.0
  %1961 = vmatprep.subr.mxu0 0.0
  %1962 = vmatpush1.msra.mxu0 0.0
  %1963 = vmatprep.subr.mxu0 0.0
  %1964 = vmatpush1.msra.mxu0 0.0
  %1965 = vmatprep.subr.mxu0 0.0
  %1966 = vmatpush1.msra.mxu0 0.0
  %1967 = vmatprep.subr.mxu0 0.0
  %1968 = vmatpush1.msra.mxu0 0.0
  %1969 = vmatprep.subr.mxu0 0.0
  %1970 = vmatpush1.msra.mxu0 0.0
  %1971 = vmatprep.subr.mxu0 0.0
  %1972 = vmatpush1.msra.mxu0 0.0
  %1973 = vmatprep.subr.mxu0 0.0
  %1974 = vmatpush1.msra.mxu0 0.0
  %1975 = vmatprep.subr.mxu0 0.0
  %1976 = vmatpush1.msra.mxu0 0.0
  %1977 = vmatprep.subr.mxu0 0.0
  %1978 = vmatpush1.msra.mxu0 0.0
  %1979 = vmatprep.subr.mxu0 0.0
  %1980 = vmatpush1.msra.mxu0 0.0
  %1981 = vmatprep.subr.mxu0 0.0
  %1982 = vmatpush1.msra.mxu0 0.0
  %1983 = vmatprep.subr.mxu0 0.0
  %1984 = vmatpush1.msra.mxu0 0.0
  %1985 = vmatprep.subr.mxu0 0.0
  %1986 = vmatpush1.msra.mxu0 0.0
  %1987 = vmatprep.subr.mxu0 0.0
  %1988 = vmatpush1.msra.mxu0 0.0
  %1989 = vmatprep.subr.mxu0 0.0
  %1990 = vmatpush1.msra.mxu0 0.0
  %1991 = vmatprep.subr.mxu0 0.0
  %1992 = vmatpush1.msra.mxu0 0.0
  %1993 = vmatprep.subr.mxu0 0.0
  %1994 = vmatpush1.msra.mxu0 0.0
  %1995 = vmatprep.subr.mxu0 0.0
  %1996 = vmatpush1.msra.mxu0 0.0
  %1997 = vmatprep.subr.mxu0 0.0
  %1998 = vmatpush1.msra.mxu0 0.0
  %1999 = vmatprep.mubr.f32.mxu0 0.0
  %2000 = vmatmul.mubr.f32.gmra.mrb[0].mxu0 %v1930
  %v2001 = vpop.f32.mrb[0].mxu0
  %v2002 = vadd.f32 0.0, %v2001
  %v2003 = vpop.f32.mrb[0].mxu0
  %2004 = vmatprep.mubr.f32.mxu0 0.0
  %2005 = vmatmul.mubr.f32.gmra.mrb[0].mxu0 %v1933
  %v2006 = vpop.f32.mrb[0].mxu0
  %v2007 = vadd.f32 0.0, %v2006
  %v2008 = vpop.f32.mrb[0].mxu0
  %2009 = vdwg.mxu0
  %v2010 = vadd.f32 %v1810, %v2002
  %v2011 = vadd.f32 %v1811, %v2007
  %s2012 = scalar_lea.vmem %s2, 288
  %2013 = vst.msk [vmem:[%s2012] sm:$0xff] %vm15, %v2010
  %2014 = vst.msk [vmem:[%s2012 + $0x8] sm:$0x1] %vm213, %v2011
  %s2015 = scalar_lea.vmem %s1, 320
  %v2016 = vld [vmem:[%s2015] sm:$0xff]
  %v2017 = vld [vmem:[%s2015 + $0x8] sm:$0xff]
  %v2019 = vsel %vm15, %v2010, 0
  %v2022 = vsel %vm15, %v2011, 0
  %v2025 = vsel %vm15, %v2016, 0
  %v2028 = vsel %vm15, %v2017, 0
  %2030 = vmatprep.subr.mxu0 0.0
  %2031 = vmatpush1.xpose.msra.mxu0 %v2025
  %2032 = vmatprep.subr.mxu0 0.0
  %2033 = vmatpush1.xpose.msra.mxu0 %v2028
  %2034 = vmatprep.subr.mxu0 0.0
  %2035 = vmatpush1.xpose.msra.mxu0 0.0
  %2036 = vmatprep.subr.mxu0 0.0
  %2037 = vmatpush1.xpose.msra.mxu0 0.0
  %2038 = vmatprep.subr.mxu0 0.0
  %2039 = vmatpush1.xpose.msra.mxu0 0.0
  %2040 = vmatprep.subr.mxu0 0.0
  %2041 = vmatpush1.xpose.msra.mxu0 0.0
  %2042 = vmatprep.subr.mxu0 0.0
  %2043 = vmatpush1.xpose.msra.mxu0 0.0
  %2044 = vmatprep.subr.mxu0 0.0
  %2045 = vmatpush1.xpose.msra.mxu0 0.0
  %2046 = vmatprep.subr.mxu0 0.0
  %2047 = vmatpush1.xpose.msra.mxu0 0.0
  %2048 = vmatprep.subr.mxu0 0.0
  %2049 = vmatpush1.xpose.msra.mxu0 0.0
  %2050 = vmatprep.subr.mxu0 0.0
  %2051 = vmatpush1.xpose.msra.mxu0 0.0
  %2052 = vmatprep.subr.mxu0 0.0
  %2053 = vmatpush1.xpose.msra.mxu0 0.0
  %2054 = vmatprep.subr.mxu0 0.0
  %2055 = vmatpush1.xpose.msra.mxu0 0.0
  %2056 = vmatprep.subr.mxu0 0.0
  %2057 = vmatpush1.xpose.msra.mxu0 0.0
  %2058 = vmatprep.subr.mxu0 0.0
  %2059 = vmatpush1.xpose.msra.mxu0 0.0
  %2060 = vmatprep.subr.mxu0 0.0
  %2061 = vmatpush1.xpose.msra.mxu0 0.0
  %2062 = vmatprep.subr.mxu0 0.0
  %2063 = vmatpush1.xpose.msra.mxu0 0.0
  %2064 = vmatprep.subr.mxu0 0.0
  %2065 = vmatpush1.xpose.msra.mxu0 0.0
  %2066 = vmatprep.subr.mxu0 0.0
  %2067 = vmatpush1.xpose.msra.mxu0 0.0
  %2068 = vmatprep.subr.mxu0 0.0
  %2069 = vmatpush1.xpose.msra.mxu0 0.0
  %2070 = vmatprep.subr.mxu0 0.0
  %2071 = vmatpush1.xpose.msra.mxu0 0.0
  %2072 = vmatprep.subr.mxu0 0.0
  %2073 = vmatpush1.xpose.msra.mxu0 0.0
  %2074 = vmatprep.subr.mxu0 0.0
  %2075 = vmatpush1.xpose.msra.mxu0 0.0
  %2076 = vmatprep.subr.mxu0 0.0
  %2077 = vmatpush1.xpose.msra.mxu0 0.0
  %2078 = vmatprep.subr.mxu0 0.0
  %2079 = vmatpush1.xpose.msra.mxu0 0.0
  %2080 = vmatprep.subr.mxu0 0.0
  %2081 = vmatpush1.xpose.msra.mxu0 0.0
  %2082 = vmatprep.subr.mxu0 0.0
  %2083 = vmatpush1.xpose.msra.mxu0 0.0
  %2084 = vmatprep.subr.mxu0 0.0
  %2085 = vmatpush1.xpose.msra.mxu0 0.0
  %2086 = vmatprep.subr.mxu0 0.0
  %2087 = vmatpush1.xpose.msra.mxu0 0.0
  %2088 = vmatprep.subr.mxu0 0.0
  %2089 = vmatpush1.xpose.msra.mxu0 0.0
  %2090 = vmatprep.subr.mxu0 0.0
  %2091 = vmatpush1.xpose.msra.mxu0 0.0
  %2092 = vmatprep.subr.mxu0 0.0
  %2093 = vmatpush1.xpose.msra.mxu0 0.0
  %2094 = vmatprep.mubr.f32.mxu0 0.0
  %2095 = vmatmul.mubr.f32.gmra.mrb[0].mxu0 %v2019
  %v2096 = vpop.f32.mrb[0].mxu0
  %v2097 = vadd.f32 0.0, %v2096
  %v2098 = vpop.f32.mrb[0].mxu0
  %2099 = vmatprep.mubr.f32.mxu0 0.0
  %2100 = vmatmul.mubr.f32.gmra.mrb[0].mxu0 %v2022
  %v2101 = vpop.f32.mrb[0].mxu0
  %v2102 = vadd.f32 0.0, %v2101
  %v2103 = vpop.f32.mrb[0].mxu0
  %2104 = vdwg.mxu0
  %v2105 = vmul.f32 %v2097, 0.17677669
  %v2106 = vmul.f32 %v2102, 0.17677669
  %v2107 = vsel %vm105, %v2105, -inf
  %2108 = vmax.xlane.f32.xlu0 %v2107
  %v2109 = vpop.xlane.xlu0 %2108
  %v2110 = vsel %vm109, %v2106, -inf
  %2111 = vmax.xlane.f32.xlu0 %v2110
  %v2112 = vpop.xlane.xlu0 %2111
  %v2113 = vsub.f32 %v2105, %v2109
  %v2114 = vsub.f32 %v2106, %v2112
  %v2115 = vmul.f32 %v2113, 1.442695
  %v2116 = vpow.pop %v2115
  %v2117 = vmul.f32 %v2114, 1.442695
  %v2118 = vpow.pop %v2117
  %v2119 = vsel %vm105, %v2116, 0.0
  %2120 = vadd.xlane.f32.xlu0 %v2119
  %v2121 = vpop.xlane.xlu0 %2120
  %v2122 = vsel %vm109, %v2118, 0.0
  %2123 = vadd.xlane.f32.xlu0 %v2122
  %v2124 = vpop.xlane.xlu0 %2123
  %v2125 = vrcp.pop %v2121
  %v2126 = vmul.f32 %v2116, %v2125
  %v2127 = vrcp.pop %v2124
  %v2128 = vmul.f32 %v2118, %v2127
  %v2130 = vsel %vm105, %v2126, 0
  %v2133 = vsel %vm105, %v2128, 0
  %2135 = vmatprep.subr.mxu0 0.0
  %2136 = vmatpush1.msra.mxu0 %v2016
  %2137 = vmatprep.subr.mxu0 0.0
  %2138 = vmatpush1.msra.mxu0 %v2017
  %2139 = vmatprep.subr.mxu0 0.0
  %2140 = vmatpush1.msra.mxu0 0.0
  %2141 = vmatprep.subr.mxu0 0.0
  %2142 = vmatpush1.msra.mxu0 0.0
  %2143 = vmatprep.subr.mxu0 0.0
  %2144 = vmatpush1.msra.mxu0 0.0
  %2145 = vmatprep.subr.mxu0 0.0
  %2146 = vmatpush1.msra.mxu0 0.0
  %2147 = vmatprep.subr.mxu0 0.0
  %2148 = vmatpush1.msra.mxu0 0.0
  %2149 = vmatprep.subr.mxu0 0.0
  %2150 = vmatpush1.msra.mxu0 0.0
  %2151 = vmatprep.subr.mxu0 0.0
  %2152 = vmatpush1.msra.mxu0 0.0
  %2153 = vmatprep.subr.mxu0 0.0
  %2154 = vmatpush1.msra.mxu0 0.0
  %2155 = vmatprep.subr.mxu0 0.0
  %2156 = vmatpush1.msra.mxu0 0.0
  %2157 = vmatprep.subr.mxu0 0.0
  %2158 = vmatpush1.msra.mxu0 0.0
  %2159 = vmatprep.subr.mxu0 0.0
  %2160 = vmatpush1.msra.mxu0 0.0
  %2161 = vmatprep.subr.mxu0 0.0
  %2162 = vmatpush1.msra.mxu0 0.0
  %2163 = vmatprep.subr.mxu0 0.0
  %2164 = vmatpush1.msra.mxu0 0.0
  %2165 = vmatprep.subr.mxu0 0.0
  %2166 = vmatpush1.msra.mxu0 0.0
  %2167 = vmatprep.subr.mxu0 0.0
  %2168 = vmatpush1.msra.mxu0 0.0
  %2169 = vmatprep.subr.mxu0 0.0
  %2170 = vmatpush1.msra.mxu0 0.0
  %2171 = vmatprep.subr.mxu0 0.0
  %2172 = vmatpush1.msra.mxu0 0.0
  %2173 = vmatprep.subr.mxu0 0.0
  %2174 = vmatpush1.msra.mxu0 0.0
  %2175 = vmatprep.subr.mxu0 0.0
  %2176 = vmatpush1.msra.mxu0 0.0
  %2177 = vmatprep.subr.mxu0 0.0
  %2178 = vmatpush1.msra.mxu0 0.0
  %2179 = vmatprep.subr.mxu0 0.0
  %2180 = vmatpush1.msra.mxu0 0.0
  %2181 = vmatprep.subr.mxu0 0.0
  %2182 = vmatpush1.msra.mxu0 0.0
  %2183 = vmatprep.subr.mxu0 0.0
  %2184 = vmatpush1.msra.mxu0 0.0
  %2185 = vmatprep.subr.mxu0 0.0
  %2186 = vmatpush1.msra.mxu0 0.0
  %2187 = vmatprep.subr.mxu0 0.0
  %2188 = vmatpush1.msra.mxu0 0.0
  %2189 = vmatprep.subr.mxu0 0.0
  %2190 = vmatpush1.msra.mxu0 0.0
  %2191 = vmatprep.subr.mxu0 0.0
  %2192 = vmatpush1.msra.mxu0 0.0
  %2193 = vmatprep.subr.mxu0 0.0
  %2194 = vmatpush1.msra.mxu0 0.0
  %2195 = vmatprep.subr.mxu0 0.0
  %2196 = vmatpush1.msra.mxu0 0.0
  %2197 = vmatprep.subr.mxu0 0.0
  %2198 = vmatpush1.msra.mxu0 0.0
  %2199 = vmatprep.mubr.f32.mxu0 0.0
  %2200 = vmatmul.mubr.f32.gmra.mrb[0].mxu0 %v2130
  %v2201 = vpop.f32.mrb[0].mxu0
  %v2202 = vadd.f32 0.0, %v2201
  %v2203 = vpop.f32.mrb[0].mxu0
  %2204 = vmatprep.mubr.f32.mxu0 0.0
  %2205 = vmatmul.mubr.f32.gmra.mrb[0].mxu0 %v2133
  %v2206 = vpop.f32.mrb[0].mxu0
  %v2207 = vadd.f32 0.0, %v2206
  %v2208 = vpop.f32.mrb[0].mxu0
  %2209 = vdwg.mxu0
  %v2210 = vadd.f32 %v2010, %v2202
  %v2211 = vadd.f32 %v2011, %v2207
  %s2212 = scalar_lea.vmem %s2, 320
  %2213 = vst.msk [vmem:[%s2212] sm:$0xff] %vm15, %v2210
  %2214 = vst.msk [vmem:[%s2212 + $0x8] sm:$0x1] %vm213, %v2211
  %s2215 = scalar_lea.vmem %s0, 16
  %v2216 = vld [vmem:[%s2215] sm:$0xff]
  %v2217 = vld [vmem:[%s2215 + $0x8] sm:$0x1]
  %s2218 = scalar_lea.vmem %s1, 16
  %v2219 = vld [vmem:[%s2218] sm:$0xff]
  %v2220 = vld [vmem:[%s2218 + $0x8] sm:$0xff]
  %v2222 = vsel %vm15, %v2216, 0
  %v2225 = vsel %vm15, %v2217, 0
  %v2228 = vsel %vm15, %v2219, 0
  %v2231 = vsel %vm15, %v2220, 0
  %2233 = vmatprep.subr.mxu0 0.0
  %2234 = vmatpush1.xpose.msra.mxu0 %v2228
  %2235 = vmatprep.subr.mxu0 0.0
  %2236 = vmatpush1.xpose.msra.mxu0 %v2231
  %2237 = vmatprep.subr.mxu0 0.0
  %2238 = vmatpush1.xpose.msra.mxu0 0.0
  %2239 = vmatprep.subr.mxu0 0.0
  %2240 = vmatpush1.xpose.msra.mxu0 0.0
  %2241 = vmatprep.subr.mxu0 0.0
  %2242 = vmatpush1.xpose.msra.mxu0 0.0
  %2243 = vmatprep.subr.mxu0 0.0
  %2244 = vmatpush1.xpose.msra.mxu0 0.0
  %2245 = vmatprep.subr.mxu0 0.0
  %2246 = vmatpush1.xpose.msra.mxu0 0.0
  %2247 = vmatprep.subr.mxu0 0.0
  %2248 = vmatpush1.xpose.msra.mxu0 0.0
  %2249 = vmatprep.subr.mxu0 0.0
  %2250 = vmatpush1.xpose.msra.mxu0 0.0
  %2251 = vmatprep.subr.mxu0 0.0
  %2252 = vmatpush1.xpose.msra.mxu0 0.0
  %2253 = vmatprep.subr.mxu0 0.0
  %2254 = vmatpush1.xpose.msra.mxu0 0.0
  %2255 = vmatprep.subr.mxu0 0.0
  %2256 = vmatpush1.xpose.msra.mxu0 0.0
  %2257 = vmatprep.subr.mxu0 0.0
  %2258 = vmatpush1.xpose.msra.mxu0 0.0
  %2259 = vmatprep.subr.mxu0 0.0
  %2260 = vmatpush1.xpose.msra.mxu0 0.0
  %2261 = vmatprep.subr.mxu0 0.0
  %2262 = vmatpush1.xpose.msra.mxu0 0.0
  %2263 = vmatprep.subr.mxu0 0.0
  %2264 = vmatpush1.xpose.msra.mxu0 0.0
  %2265 = vmatprep.subr.mxu0 0.0
  %2266 = vmatpush1.xpose.msra.mxu0 0.0
  %2267 = vmatprep.subr.mxu0 0.0
  %2268 = vmatpush1.xpose.msra.mxu0 0.0
  %2269 = vmatprep.subr.mxu0 0.0
  %2270 = vmatpush1.xpose.msra.mxu0 0.0
  %2271 = vmatprep.subr.mxu0 0.0
  %2272 = vmatpush1.xpose.msra.mxu0 0.0
  %2273 = vmatprep.subr.mxu0 0.0
  %2274 = vmatpush1.xpose.msra.mxu0 0.0
  %2275 = vmatprep.subr.mxu0 0.0
  %2276 = vmatpush1.xpose.msra.mxu0 0.0
  %2277 = vmatprep.subr.mxu0 0.0
  %2278 = vmatpush1.xpose.msra.mxu0 0.0
  %2279 = vmatprep.subr.mxu0 0.0
  %2280 = vmatpush1.xpose.msra.mxu0 0.0
  %2281 = vmatprep.subr.mxu0 0.0
  %2282 = vmatpush1.xpose.msra.mxu0 0.0
  %2283 = vmatprep.subr.mxu0 0.0
  %2284 = vmatpush1.xpose.msra.mxu0 0.0
  %2285 = vmatprep.subr.mxu0 0.0
  %2286 = vmatpush1.xpose.msra.mxu0 0.0
  %2287 = vmatprep.subr.mxu0 0.0
  %2288 = vmatpush1.xpose.msra.mxu0 0.0
  %2289 = vmatprep.subr.mxu0 0.0
  %2290 = vmatpush1.xpose.msra.mxu0 0.0
  %2291 = vmatprep.subr.mxu0 0.0
  %2292 = vmatpush1.xpose.msra.mxu0 0.0
  %2293 = vmatprep.subr.mxu0 0.0
  %2294 = vmatpush1.xpose.msra.mxu0 0.0
  %2295 = vmatprep.subr.mxu0 0.0
  %2296 = vmatpush1.xpose.msra.mxu0 0.0
  %2297 = vmatprep.mubr.f32.mxu0 0.0
  %2298 = vmatmul.mubr.f32.gmra.mrb[0].mxu0 %v2222
  %v2299 = vpop.f32.mrb[0].mxu0
  %v2300 = vadd.f32 0.0, %v2299
  %v2301 = vpop.f32.mrb[0].mxu0
  %2302 = vmatprep.mubr.f32.mxu0 0.0
  %2303 = vmatmul.mubr.f32.gmra.mrb[0].mxu0 %v2225
  %v2304 = vpop.f32.mrb[0].mxu0
  %v2305 = vadd.f32 0.0, %v2304
  %v2306 = vpop.f32.mrb[0].mxu0
  %2307 = vdwg.mxu0
  %v2308 = vmul.f32 %v2300, 0.17677669
  %v2309 = vmul.f32 %v2305, 0.17677669
  %v2310 = vsel %vm105, %v2308, -inf
  %2311 = vmax.xlane.f32.xlu0 %v2310
  %v2312 = vpop.xlane.xlu0 %2311
  %v2313 = vsel %vm109, %v2309, -inf
  %2314 = vmax.xlane.f32.xlu0 %v2313
  %v2315 = vpop.xlane.xlu0 %2314
  %v2316 = vsub.f32 %v2308, %v2312
  %v2317 = vsub.f32 %v2309, %v2315
  %v2318 = vmul.f32 %v2316, 1.442695
  %v2319 = vpow.pop %v2318
  %v2320 = vmul.f32 %v2317, 1.442695
  %v2321 = vpow.pop %v2320
  %v2322 = vsel %vm105, %v2319, 0.0
  %2323 = vadd.xlane.f32.xlu0 %v2322
  %v2324 = vpop.xlane.xlu0 %2323
  %v2325 = vsel %vm109, %v2321, 0.0
  %2326 = vadd.xlane.f32.xlu0 %v2325
  %v2327 = vpop.xlane.xlu0 %2326
  %v2328 = vrcp.pop %v2324
  %v2329 = vmul.f32 %v2319, %v2328
  %v2330 = vrcp.pop %v2327
  %v2331 = vmul.f32 %v2321, %v2330
  %v2333 = vsel %vm105, %v2329, 0
  %v2336 = vsel %vm105, %v2331, 0
  %2338 = vmatprep.subr.mxu0 0.0
  %2339 = vmatpush1.msra.mxu0 %v2219
  %2340 = vmatprep.subr.mxu0 0.0
  %2341 = vmatpush1.msra.mxu0 %v2220
  %2342 = vmatprep.subr.mxu0 0.0
  %2343 = vmatpush1.msra.mxu0 0.0
  %2344 = vmatprep.subr.mxu0 0.0
  %2345 = vmatpush1.msra.mxu0 0.0
  %2346 = vmatprep.subr.mxu0 0.0
  %2347 = vmatpush1.msra.mxu0 0.0
  %2348 = vmatprep.subr.mxu0 0.0
  %2349 = vmatpush1.msra.mxu0 0.0
  %2350 = vmatprep.subr.mxu0 0.0
  %2351 = vmatpush1.msra.mxu0 0.0
  %2352 = vmatprep.subr.mxu0 0.0
  %2353 = vmatpush1.msra.mxu0 0.0
  %2354 = vmatprep.subr.mxu0 0.0
  %2355 = vmatpush1.msra.mxu0 0.0
  %2356 = vmatprep.subr.mxu0 0.0
  %2357 = vmatpush1.msra.mxu0 0.0
  %2358 = vmatprep.subr.mxu0 0.0
  %2359 = vmatpush1.msra.mxu0 0.0
  %2360 = vmatprep.subr.mxu0 0.0
  %2361 = vmatpush1.msra.mxu0 0.0
  %2362 = vmatprep.subr.mxu0 0.0
  %2363 = vmatpush1.msra.mxu0 0.0
  %2364 = vmatprep.subr.mxu0 0.0
  %2365 = vmatpush1.msra.mxu0 0.0
  %2366 = vmatprep.subr.mxu0 0.0
  %2367 = vmatpush1.msra.mxu0 0.0
  %2368 = vmatprep.subr.mxu0 0.0
  %2369 = vmatpush1.msra.mxu0 0.0
  %2370 = vmatprep.subr.mxu0 0.0
  %2371 = vmatpush1.msra.mxu0 0.0
  %2372 = vmatprep.subr.mxu0 0.0
  %2373 = vmatpush1.msra.mxu0 0.0
  %2374 = vmatprep.subr.mxu0 0.0
  %2375 = vmatpush1.msra.mxu0 0.0
  %2376 = vmatprep.subr.mxu0 0.0
  %2377 = vmatpush1.msra.mxu0 0.0
  %2378 = vmatprep.subr.mxu0 0.0
  %2379 = vmatpush1.msra.mxu0 0.0
  %2380 = vmatprep.subr.mxu0 0.0
  %2381 = vmatpush1.msra.mxu0 0.0
  %2382 = vmatprep.subr.mxu0 0.0
  %2383 = vmatpush1.msra.mxu0 0.0
  %2384 = vmatprep.subr.mxu0 0.0
  %2385 = vmatpush1.msra.mxu0 0.0
  %2386 = vmatprep.subr.mxu0 0.0
  %2387 = vmatpush1.msra.mxu0 0.0
  %2388 = vmatprep.subr.mxu0 0.0
  %2389 = vmatpush1.msra.mxu0 0.0
  %2390 = vmatprep.subr.mxu0 0.0
  %2391 = vmatpush1.msra.mxu0 0.0
  %2392 = vmatprep.subr.mxu0 0.0
  %2393 = vmatpush1.msra.mxu0 0.0
  %2394 = vmatprep.subr.mxu0 0.0
  %2395 = vmatpush1.msra.mxu0 0.0
  %2396 = vmatprep.subr.mxu0 0.0
  %2397 = vmatpush1.msra.mxu0 0.0
  %2398 = vmatprep.subr.mxu0 0.0
  %2399 = vmatpush1.msra.mxu0 0.0
  %2400 = vmatprep.subr.mxu0 0.0
  %2401 = vmatpush1.msra.mxu0 0.0
  %2402 = vmatprep.mubr.f32.mxu0 0.0
  %2403 = vmatmul.mubr.f32.gmra.mrb[0].mxu0 %v2333
  %v2404 = vpop.f32.mrb[0].mxu0
  %v2405 = vadd.f32 0.0, %v2404
  %v2406 = vpop.f32.mrb[0].mxu0
  %2407 = vmatprep.mubr.f32.mxu0 0.0
  %2408 = vmatmul.mubr.f32.gmra.mrb[0].mxu0 %v2336
  %v2409 = vpop.f32.mrb[0].mxu0
  %v2410 = vadd.f32 0.0, %v2409
  %v2411 = vpop.f32.mrb[0].mxu0
  %2412 = vdwg.mxu0
  %v2413 = vadd.f32 %v2216, %v2405
  %v2414 = vadd.f32 %v2217, %v2410
  %s2415 = scalar_lea.vmem %s2, 16
  %2416 = vst.msk [vmem:[%s2415] sm:$0xff] %vm15, %v2413
  %2417 = vst.msk [vmem:[%s2415 + $0x8] sm:$0x1] %vm213, %v2414
  %s2418 = scalar_lea.vmem %s1, 48
  %v2419 = vld [vmem:[%s2418] sm:$0xff]
  %v2420 = vld [vmem:[%s2418 + $0x8] sm:$0xff]
  %v2422 = vsel %vm15, %v2413, 0
  %v2425 = vsel %vm15, %v2414, 0
  %v2428 = vsel %vm15, %v2419, 0
  %v2431 = vsel %vm15, %v2420, 0
  %2433 = vmatprep.subr.mxu0 0.0
  %2434 = vmatpush1.xpose.msra.mxu0 %v2428
  %2435 = vmatprep.subr.mxu0 0.0
  %2436 = vmatpush1.xpose.msra.mxu0 %v2431
  %2437 = vmatprep.subr.mxu0 0.0
  %2438 = vmatpush1.xpose.msra.mxu0 0.0
  %2439 = vmatprep.subr.mxu0 0.0
  %2440 = vmatpush1.xpose.msra.mxu0 0.0
  %2441 = vmatprep.subr.mxu0 0.0
  %2442 = vmatpush1.xpose.msra.mxu0 0.0
  %2443 = vmatprep.subr.mxu0 0.0
  %2444 = vmatpush1.xpose.msra.mxu0 0.0
  %2445 = vmatprep.subr.mxu0 0.0
  %2446 = vmatpush1.xpose.msra.mxu0 0.0
  %2447 = vmatprep.subr.mxu0 0.0
  %2448 = vmatpush1.xpose.msra.mxu0 0.0
  %2449 = vmatprep.subr.mxu0 0.0
  %2450 = vmatpush1.xpose.msra.mxu0 0.0
  %2451 = vmatprep.subr.mxu0 0.0
  %2452 = vmatpush1.xpose.msra.mxu0 0.0
  %2453 = vmatprep.subr.mxu0 0.0
  %2454 = vmatpush1.xpose.msra.mxu0 0.0
  %2455 = vmatprep.subr.mxu0 0.0
  %2456 = vmatpush1.xpose.msra.mxu0 0.0
  %2457 = vmatprep.subr.mxu0 0.0
  %2458 = vmatpush1.xpose.msra.mxu0 0.0
  %2459 = vmatprep.subr.mxu0 0.0
  %2460 = vmatpush1.xpose.msra.mxu0 0.0
  %2461 = vmatprep.subr.mxu0 0.0
  %2462 = vmatpush1.xpose.msra.mxu0 0.0
  %2463 = vmatprep.subr.mxu0 0.0
  %2464 = vmatpush1.xpose.msra.mxu0 0.0
  %2465 = vmatprep.subr.mxu0 0.0
  %2466 = vmatpush1.xpose.msra.mxu0 0.0
  %2467 = vmatprep.subr.mxu0 0.0
  %2468 = vmatpush1.xpose.msra.mxu0 0.0
  %2469 = vmatprep.subr.mxu0 0.0
  %2470 = vmatpush1.xpose.msra.mxu0 0.0
  %2471 = vmatprep.subr.mxu0 0.0
  %2472 = vmatpush1.xpose.msra.mxu0 0.0
  %2473 = vmatprep.subr.mxu0 0.0
  %2474 = vmatpush1.xpose.msra.mxu0 0.0
  %2475 = vmatprep.subr.mxu0 0.0
  %2476 = vmatpush1.xpose.msra.mxu0 0.0
  %2477 = vmatprep.subr.mxu0 0.0
  %2478 = vmatpush1.xpose.msra.mxu0 0.0
  %2479 = vmatprep.subr.mxu0 0.0
  %2480 = vmatpush1.xpose.msra.mxu0 0.0
  %2481 = vmatprep.subr.mxu0 0.0
  %2482 = vmatpush1.xpose.msra.mxu0 0.0
  %2483 = vmatprep.subr.mxu0 0.0
  %2484 = vmatpush1.xpose.msra.mxu0 0.0
  %2485 = vmatprep.subr.mxu0 0.0
  %2486 = vmatpush1.xpose.msra.mxu0 0.0
  %2487 = vmatprep.subr.mxu0 0.0
  %2488 = vmatpush1.xpose.msra.mxu0 0.0
  %2489 = vmatprep.subr.mxu0 0.0
  %2490 = vmatpush1.xpose.msra.mxu0 0.0
  %2491 = vmatprep.subr.mxu0 0.0
  %2492 = vmatpush1.xpose.msra.mxu0 0.0
  %2493 = vmatprep.subr.mxu0 0.0
  %2494 = vmatpush1.xpose.msra.mxu0 0.0
  %2495 = vmatprep.subr.mxu0 0.0
  %2496 = vmatpush1.xpose.msra.mxu0 0.0
  %2497 = vmatprep.mubr.f32.mxu0 0.0
  %2498 = vmatmul.mubr.f32.gmra.mrb[0].mxu0 %v2422
  %v2499 = vpop.f32.mrb[0].mxu0
  %v2500 = vadd.f32 0.0, %v2499
  %v2501 = vpop.f32.mrb[0].mxu0
  %2502 = vmatprep.mubr.f32.mxu0 0.0
  %2503 = vmatmul.mubr.f32.gmra.mrb[0].mxu0 %v2425
  %v2504 = vpop.f32.mrb[0].mxu0
  %v2505 = vadd.f32 0.0, %v2504
  %v2506 = vpop.f32.mrb[0].mxu0
  %2507 = vdwg.mxu0
  %v2508 = vmul.f32 %v2500, 0.17677669
  %v2509 = vmul.f32 %v2505, 0.17677669
  %v2510 = vsel %vm105, %v2508, -inf
  %2511 = vmax.xlane.f32.xlu0 %v2510
  %v2512 = vpop.xlane.xlu0 %2511
  %v2513 = vsel %vm109, %v2509, -inf
  %2514 = vmax.xlane.f32.xlu0 %v2513
  %v2515 = vpop.xlane.xlu0 %2514
  %v2516 = vsub.f32 %v2508, %v2512
  %v2517 = vsub.f32 %v2509, %v2515
  %v2518 = vmul.f32 %v2516, 1.442695
  %v2519 = vpow.pop %v2518
  %v2520 = vmul.f32 %v2517, 1.442695
  %v2521 = vpow.pop %v2520
  %v2522 = vsel %vm105, %v2519, 0.0
  %2523 = vadd.xlane.f32.xlu0 %v2522
  %v2524 = vpop.xlane.xlu0 %2523
  %v2525 = vsel %vm109, %v2521, 0.0
  %2526 = vadd.xlane.f32.xlu0 %v2525
  %v2527 = vpop.xlane.xlu0 %2526
  %v2528 = vrcp.pop %v2524
  %v2529 = vmul.f32 %v2519, %v2528
  %v2530 = vrcp.pop %v2527
  %v2531 = vmul.f32 %v2521, %v2530
  %v2533 = vsel %vm105, %v2529, 0
  %v2536 = vsel %vm105, %v2531, 0
  %2538 = vmatprep.subr.mxu0 0.0
  %2539 = vmatpush1.msra.mxu0 %v2419
  %2540 = vmatprep.subr.mxu0 0.0
  %2541 = vmatpush1.msra.mxu0 %v2420
  %2542 = vmatprep.subr.mxu0 0.0
  %2543 = vmatpush1.msra.mxu0 0.0
  %2544 = vmatprep.subr.mxu0 0.0
  %2545 = vmatpush1.msra.mxu0 0.0
  %2546 = vmatprep.subr.mxu0 0.0
  %2547 = vmatpush1.msra.mxu0 0.0
  %2548 = vmatprep.subr.mxu0 0.0
  %2549 = vmatpush1.msra.mxu0 0.0
  %2550 = vmatprep.subr.mxu0 0.0
  %2551 = vmatpush1.msra.mxu0 0.0
  %2552 = vmatprep.subr.mxu0 0.0
  %2553 = vmatpush1.msra.mxu0 0.0
  %2554 = vmatprep.subr.mxu0 0.0
  %2555 = vmatpush1.msra.mxu0 0.0
  %2556 = vmatprep.subr.mxu0 0.0
  %2557 = vmatpush1.msra.mxu0 0.0
  %2558 = vmatprep.subr.mxu0 0.0
  %2559 = vmatpush1.msra.mxu0 0.0
  %2560 = vmatprep.subr.mxu0 0.0
  %2561 = vmatpush1.msra.mxu0 0.0
  %2562 = vmatprep.subr.mxu0 0.0
  %2563 = vmatpush1.msra.mxu0 0.0
  %2564 = vmatprep.subr.mxu0 0.0
  %2565 = vmatpush1.msra.mxu0 0.0
  %2566 = vmatprep.subr.mxu0 0.0
  %2567 = vmatpush1.msra.mxu0 0.0
  %2568 = vmatprep.subr.mxu0 0.0
  %2569 = vmatpush1.msra.mxu0 0.0
  %2570 = vmatprep.subr.mxu0 0.0
  %2571 = vmatpush1.msra.mxu0 0.0
  %2572 = vmatprep.subr.mxu0 0.0
  %2573 = vmatpush1.msra.mxu0 0.0
  %2574 = vmatprep.subr.mxu0 0.0
  %2575 = vmatpush1.msra.mxu0 0.0
  %2576 = vmatprep.subr.mxu0 0.0
  %2577 = vmatpush1.msra.mxu0 0.0
  %2578 = vmatprep.subr.mxu0 0.0
  %2579 = vmatpush1.msra.mxu0 0.0
  %2580 = vmatprep.subr.mxu0 0.0
  %2581 = vmatpush1.msra.mxu0 0.0
  %2582 = vmatprep.subr.mxu0 0.0
  %2583 = vmatpush1.msra.mxu0 0.0
  %2584 = vmatprep.subr.mxu0 0.0
  %2585 = vmatpush1.msra.mxu0 0.0
  %2586 = vmatprep.subr.mxu0 0.0
  %2587 = vmatpush1.msra.mxu0 0.0
  %2588 = vmatprep.subr.mxu0 0.0
  %2589 = vmatpush1.msra.mxu0 0.0
  %2590 = vmatprep.subr.mxu0 0.0
  %2591 = vmatpush1.msra.mxu0 0.0
  %2592 = vmatprep.subr.mxu0 0.0
  %2593 = vmatpush1.msra.mxu0 0.0
  %2594 = vmatprep.subr.mxu0 0.0
  %2595 = vmatpush1.msra.mxu0 0.0
  %2596 = vmatprep.subr.mxu0 0.0
  %2597 = vmatpush1.msra.mxu0 0.0
  %2598 = vmatprep.subr.mxu0 0.0
  %2599 = vmatpush1.msra.mxu0 0.0
  %2600 = vmatprep.subr.mxu0 0.0
  %2601 = vmatpush1.msra.mxu0 0.0
  %2602 = vmatprep.mubr.f32.mxu0 0.0
  %2603 = vmatmul.mubr.f32.gmra.mrb[0].mxu0 %v2533
  %v2604 = vpop.f32.mrb[0].mxu0
  %v2605 = vadd.f32 0.0, %v2604
  %v2606 = vpop.f32.mrb[0].mxu0
  %2607 = vmatprep.mubr.f32.mxu0 0.0
  %2608 = vmatmul.mubr.f32.gmra.mrb[0].mxu0 %v2536
  %v2609 = vpop.f32.mrb[0].mxu0
  %v2610 = vadd.f32 0.0, %v2609
  %v2611 = vpop.f32.mrb[0].mxu0
  %2612 = vdwg.mxu0
  %v2613 = vadd.f32 %v2413, %v2605
  %v2614 = vadd.f32 %v2414, %v2610
  %s2615 = scalar_lea.vmem %s2, 48
  %2616 = vst.msk [vmem:[%s2615] sm:$0xff] %vm15, %v2613
  %2617 = vst.msk [vmem:[%s2615 + $0x8] sm:$0x1] %vm213, %v2614
  %s2618 = scalar_lea.vmem %s1, 80
  %v2619 = vld [vmem:[%s2618] sm:$0xff]
  %v2620 = vld [vmem:[%s2618 + $0x8] sm:$0xff]
  %v2622 = vsel %vm15, %v2613, 0
  %v2625 = vsel %vm15, %v2614, 0
  %v2628 = vsel %vm15, %v2619, 0
  %v2631 = vsel %vm15, %v2620, 0
  %2633 = vmatprep.subr.mxu0 0.0
  %2634 = vmatpush1.xpose.msra.mxu0 %v2628
  %2635 = vmatprep.subr.mxu0 0.0
  %2636 = vmatpush1.xpose.msra.mxu0 %v2631
  %2637 = vmatprep.subr.mxu0 0.0
  %2638 = vmatpush1.xpose.msra.mxu0 0.0
  %2639 = vmatprep.subr.mxu0 0.0
  %2640 = vmatpush1.xpose.msra.mxu0 0.0
  %2641 = vmatprep.subr.mxu0 0.0
  %2642 = vmatpush1.xpose.msra.mxu0 0.0
  %2643 = vmatprep.subr.mxu0 0.0
  %2644 = vmatpush1.xpose.msra.mxu0 0.0
  %2645 = vmatprep.subr.mxu0 0.0
  %2646 = vmatpush1.xpose.msra.mxu0 0.0
  %2647 = vmatprep.subr.mxu0 0.0
  %2648 = vmatpush1.xpose.msra.mxu0 0.0
  %2649 = vmatprep.subr.mxu0 0.0
  %2650 = vmatpush1.xpose.msra.mxu0 0.0
  %2651 = vmatprep.subr.mxu0 0.0
  %2652 = vmatpush1.xpose.msra.mxu0 0.0
  %2653 = vmatprep.subr.mxu0 0.0
  %2654 = vmatpush1.xpose.msra.mxu0 0.0
  %2655 = vmatprep.subr.mxu0 0.0
  %2656 = vmatpush1.xpose.msra.mxu0 0.0
  %2657 = vmatprep.subr.mxu0 0.0
  %2658 = vmatpush1.xpose.msra.mxu0 0.0
  %2659 = vmatprep.subr.mxu0 0.0
  %2660 = vmatpush1.xpose.msra.mxu0 0.0
  %2661 = vmatprep.subr.mxu0 0.0
  %2662 = vmatpush1.xpose.msra.mxu0 0.0
  %2663 = vmatprep.subr.mxu0 0.0
  %2664 = vmatpush1.xpose.msra.mxu0 0.0
  %2665 = vmatprep.subr.mxu0 0.0
  %2666 = vmatpush1.xpose.msra.mxu0 0.0
  %2667 = vmatprep.subr.mxu0 0.0
  %2668 = vmatpush1.xpose.msra.mxu0 0.0
  %2669 = vmatprep.subr.mxu0 0.0
  %2670 = vmatpush1.xpose.msra.mxu0 0.0
  %2671 = vmatprep.subr.mxu0 0.0
  %2672 = vmatpush1.xpose.msra.mxu0 0.0
  %2673 = vmatprep.subr.mxu0 0.0
  %2674 = vmatpush1.xpose.msra.mxu0 0.0
  %2675 = vmatprep.subr.mxu0 0.0
  %2676 = vmatpush1.xpose.msra.mxu0 0.0
  %2677 = vmatprep.subr.mxu0 0.0
  %2678 = vmatpush1.xpose.msra.mxu0 0.0
  %2679 = vmatprep.subr.mxu0 0.0
  %2680 = vmatpush1.xpose.msra.mxu0 0.0
  %2681 = vmatprep.subr.mxu0 0.0
  %2682 = vmatpush1.xpose.msra.mxu0 0.0
  %2683 = vmatprep.subr.mxu0 0.0
  %2684 = vmatpush1.xpose.msra.mxu0 0.0
  %2685 = vmatprep.subr.mxu0 0.0
  %2686 = vmatpush1.xpose.msra.mxu0 0.0
  %2687 = vmatprep.subr.mxu0 0.0
  %2688 = vmatpush1.xpose.msra.mxu0 0.0
  %2689 = vmatprep.subr.mxu0 0.0
  %2690 = vmatpush1.xpose.msra.mxu0 0.0
  %2691 = vmatprep.subr.mxu0 0.0
  %2692 = vmatpush1.xpose.msra.mxu0 0.0
  %2693 = vmatprep.subr.mxu0 0.0
  %2694 = vmatpush1.xpose.msra.mxu0 0.0
  %2695 = vmatprep.subr.mxu0 0.0
  %2696 = vmatpush1.xpose.msra.mxu0 0.0
  %2697 = vmatprep.mubr.f32.mxu0 0.0
  %2698 = vmatmul.mubr.f32.gmra.mrb[0].mxu0 %v2622
  %v2699 = vpop.f32.mrb[0].mxu0
  %v2700 = vadd.f32 0.0, %v2699
  %v2701 = vpop.f32.mrb[0].mxu0
  %2702 = vmatprep.mubr.f32.mxu0 0.0
  %2703 = vmatmul.mubr.f32.gmra.mrb[0].mxu0 %v2625
  %v2704 = vpop.f32.mrb[0].mxu0
  %v2705 = vadd.f32 0.0, %v2704
  %v2706 = vpop.f32.mrb[0].mxu0
  %2707 = vdwg.mxu0
  %v2708 = vmul.f32 %v2700, 0.17677669
  %v2709 = vmul.f32 %v2705, 0.17677669
  %v2710 = vsel %vm105, %v2708, -inf
  %2711 = vmax.xlane.f32.xlu0 %v2710
  %v2712 = vpop.xlane.xlu0 %2711
  %v2713 = vsel %vm109, %v2709, -inf
  %2714 = vmax.xlane.f32.xlu0 %v2713
  %v2715 = vpop.xlane.xlu0 %2714
  %v2716 = vsub.f32 %v2708, %v2712
  %v2717 = vsub.f32 %v2709, %v2715
  %v2718 = vmul.f32 %v2716, 1.442695
  %v2719 = vpow.pop %v2718
  %v2720 = vmul.f32 %v2717, 1.442695
  %v2721 = vpow.pop %v2720
  %v2722 = vsel %vm105, %v2719, 0.0
  %2723 = vadd.xlane.f32.xlu0 %v2722
  %v2724 = vpop.xlane.xlu0 %2723
  %v2725 = vsel %vm109, %v2721, 0.0
  %2726 = vadd.xlane.f32.xlu0 %v2725
  %v2727 = vpop.xlane.xlu0 %2726
  %v2728 = vrcp.pop %v2724
  %v2729 = vmul.f32 %v2719, %v2728
  %v2730 = vrcp.pop %v2727
  %v2731 = vmul.f32 %v2721, %v2730
  %v2733 = vsel %vm105, %v2729, 0
  %v2736 = vsel %vm105, %v2731, 0
  %2738 = vmatprep.subr.mxu0 0.0
  %2739 = vmatpush1.msra.mxu0 %v2619
  %2740 = vmatprep.subr.mxu0 0.0
  %2741 = vmatpush1.msra.mxu0 %v2620
  %2742 = vmatprep.subr.mxu0 0.0
  %2743 = vmatpush1.msra.mxu0 0.0
  %2744 = vmatprep.subr.mxu0 0.0
  %2745 = vmatpush1.msra.mxu0 0.0
  %2746 = vmatprep.subr.mxu0 0.0
  %2747 = vmatpush1.msra.mxu0 0.0
  %2748 = vmatprep.subr.mxu0 0.0
  %2749 = vmatpush1.msra.mxu0 0.0
  %2750 = vmatprep.subr.mxu0 0.0
  %2751 = vmatpush1.msra.mxu0 0.0
  %2752 = vmatprep.subr.mxu0 0.0
  %2753 = vmatpush1.msra.mxu0 0.0
  %2754 = vmatprep.subr.mxu0 0.0
  %2755 = vmatpush1.msra.mxu0 0.0
  %2756 = vmatprep.subr.mxu0 0.0
  %2757 = vmatpush1.msra.mxu0 0.0
  %2758 = vmatprep.subr.mxu0 0.0
  %2759 = vmatpush1.msra.mxu0 0.0
  %2760 = vmatprep.subr.mxu0 0.0
  %2761 = vmatpush1.msra.mxu0 0.0
  %2762 = vmatprep.subr.mxu0 0.0
  %2763 = vmatpush1.msra.mxu0 0.0
  %2764 = vmatprep.subr.mxu0 0.0
  %2765 = vmatpush1.msra.mxu0 0.0
  %2766 = vmatprep.subr.mxu0 0.0
  %2767 = vmatpush1.msra.mxu0 0.0
  %2768 = vmatprep.subr.mxu0 0.0
  %2769 = vmatpush1.msra.mxu0 0.0
  %2770 = vmatprep.subr.mxu0 0.0
  %2771 = vmatpush1.msra.mxu0 0.0
  %2772 = vmatprep.subr.mxu0 0.0
  %2773 = vmatpush1.msra.mxu0 0.0
  %2774 = vmatprep.subr.mxu0 0.0
  %2775 = vmatpush1.msra.mxu0 0.0
  %2776 = vmatprep.subr.mxu0 0.0
  %2777 = vmatpush1.msra.mxu0 0.0
  %2778 = vmatprep.subr.mxu0 0.0
  %2779 = vmatpush1.msra.mxu0 0.0
  %2780 = vmatprep.subr.mxu0 0.0
  %2781 = vmatpush1.msra.mxu0 0.0
  %2782 = vmatprep.subr.mxu0 0.0
  %2783 = vmatpush1.msra.mxu0 0.0
  %2784 = vmatprep.subr.mxu0 0.0
  %2785 = vmatpush1.msra.mxu0 0.0
  %2786 = vmatprep.subr.mxu0 0.0
  %2787 = vmatpush1.msra.mxu0 0.0
  %2788 = vmatprep.subr.mxu0 0.0
  %2789 = vmatpush1.msra.mxu0 0.0
  %2790 = vmatprep.subr.mxu0 0.0
  %2791 = vmatpush1.msra.mxu0 0.0
  %2792 = vmatprep.subr.mxu0 0.0
  %2793 = vmatpush1.msra.mxu0 0.0
  %2794 = vmatprep.subr.mxu0 0.0
  %2795 = vmatpush1.msra.mxu0 0.0
  %2796 = vmatprep.subr.mxu0 0.0
  %2797 = vmatpush1.msra.mxu0 0.0
  %2798 = vmatprep.subr.mxu0 0.0
  %2799 = vmatpush1.msra.mxu0 0.0
  %2800 = vmatprep.subr.mxu0 0.0
  %2801 = vmatpush1.msra.mxu0 0.0
  %2802 = vmatprep.mubr.f32.mxu0 0.0
  %2803 = vmatmul.mubr.f32.gmra.mrb[0].mxu0 %v2733
  %v2804 = vpop.f32.mrb[0].mxu0
  %v2805 = vadd.f32 0.0, %v2804
  %v2806 = vpop.f32.mrb[0].mxu0
  %2807 = vmatprep.mubr.f32.mxu0 0.0
  %2808 = vmatmul.mubr.f32.gmra.mrb[0].mxu0 %v2736
  %v2809 = vpop.f32.mrb[0].mxu0
  %v2810 = vadd.f32 0.0, %v2809
  %v2811 = vpop.f32.mrb[0].mxu0
  %2812 = vdwg.mxu0
  %v2813 = vadd.f32 %v2613, %v2805
  %v2814 = vadd.f32 %v2614, %v2810
  %s2815 = scalar_lea.vmem %s2, 80
  %2816 = vst.msk [vmem:[%s2815] sm:$0xff] %vm15, %v2813
  %2817 = vst.msk [vmem:[%s2815 + $0x8] sm:$0x1] %vm213, %v2814
  %s2818 = scalar_lea.vmem %s1, 112
  %v2819 = vld [vmem:[%s2818] sm:$0xff]
  %v2820 = vld [vmem:[%s2818 + $0x8] sm:$0xff]
  %v2822 = vsel %vm15, %v2813, 0
  %v2825 = vsel %vm15, %v2814, 0
  %v2828 = vsel %vm15, %v2819, 0
  %v2831 = vsel %vm15, %v2820, 0
  %2833 = vmatprep.subr.mxu0 0.0
  %2834 = vmatpush1.xpose.msra.mxu0 %v2828
  %2835 = vmatprep.subr.mxu0 0.0
  %2836 = vmatpush1.xpose.msra.mxu0 %v2831
  %2837 = vmatprep.subr.mxu0 0.0
  %2838 = vmatpush1.xpose.msra.mxu0 0.0
  %2839 = vmatprep.subr.mxu0 0.0
  %2840 = vmatpush1.xpose.msra.mxu0 0.0
  %2841 = vmatprep.subr.mxu0 0.0
  %2842 = vmatpush1.xpose.msra.mxu0 0.0
  %2843 = vmatprep.subr.mxu0 0.0
  %2844 = vmatpush1.xpose.msra.mxu0 0.0
  %2845 = vmatprep.subr.mxu0 0.0
  %2846 = vmatpush1.xpose.msra.mxu0 0.0
  %2847 = vmatprep.subr.mxu0 0.0
  %2848 = vmatpush1.xpose.msra.mxu0 0.0
  %2849 = vmatprep.subr.mxu0 0.0
  %2850 = vmatpush1.xpose.msra.mxu0 0.0
  %2851 = vmatprep.subr.mxu0 0.0
  %2852 = vmatpush1.xpose.msra.mxu0 0.0
  %2853 = vmatprep.subr.mxu0 0.0
  %2854 = vmatpush1.xpose.msra.mxu0 0.0
  %2855 = vmatprep.subr.mxu0 0.0
  %2856 = vmatpush1.xpose.msra.mxu0 0.0
  %2857 = vmatprep.subr.mxu0 0.0
  %2858 = vmatpush1.xpose.msra.mxu0 0.0
  %2859 = vmatprep.subr.mxu0 0.0
  %2860 = vmatpush1.xpose.msra.mxu0 0.0
  %2861 = vmatprep.subr.mxu0 0.0
  %2862 = vmatpush1.xpose.msra.mxu0 0.0
  %2863 = vmatprep.subr.mxu0 0.0
  %2864 = vmatpush1.xpose.msra.mxu0 0.0
  %2865 = vmatprep.subr.mxu0 0.0
  %2866 = vmatpush1.xpose.msra.mxu0 0.0
  %2867 = vmatprep.subr.mxu0 0.0
  %2868 = vmatpush1.xpose.msra.mxu0 0.0
  %2869 = vmatprep.subr.mxu0 0.0
  %2870 = vmatpush1.xpose.msra.mxu0 0.0
  %2871 = vmatprep.subr.mxu0 0.0
  %2872 = vmatpush1.xpose.msra.mxu0 0.0
  %2873 = vmatprep.subr.mxu0 0.0
  %2874 = vmatpush1.xpose.msra.mxu0 0.0
  %2875 = vmatprep.subr.mxu0 0.0
  %2876 = vmatpush1.xpose.msra.mxu0 0.0
  %2877 = vmatprep.subr.mxu0 0.0
  %2878 = vmatpush1.xpose.msra.mxu0 0.0
  %2879 = vmatprep.subr.mxu0 0.0
  %2880 = vmatpush1.xpose.msra.mxu0 0.0
  %2881 = vmatprep.subr.mxu0 0.0
  %2882 = vmatpush1.xpose.msra.mxu0 0.0
  %2883 = vmatprep.subr.mxu0 0.0
  %2884 = vmatpush1.xpose.msra.mxu0 0.0
  %2885 = vmatprep.subr.mxu0 0.0
  %2886 = vmatpush1.xpose.msra.mxu0 0.0
  %2887 = vmatprep.subr.mxu0 0.0
  %2888 = vmatpush1.xpose.msra.mxu0 0.0
  %2889 = vmatprep.subr.mxu0 0.0
  %2890 = vmatpush1.xpose.msra.mxu0 0.0
  %2891 = vmatprep.subr.mxu0 0.0
  %2892 = vmatpush1.xpose.msra.mxu0 0.0
  %2893 = vmatprep.subr.mxu0 0.0
  %2894 = vmatpush1.xpose.msra.mxu0 0.0
  %2895 = vmatprep.subr.mxu0 0.0
  %2896 = vmatpush1.xpose.msra.mxu0 0.0
  %2897 = vmatprep.mubr.f32.mxu0 0.0
  %2898 = vmatmul.mubr.f32.gmra.mrb[0].mxu0 %v2822
  %v2899 = vpop.f32.mrb[0].mxu0
  %v2900 = vadd.f32 0.0, %v2899
  %v2901 = vpop.f32.mrb[0].mxu0
  %2902 = vmatprep.mubr.f32.mxu0 0.0
  %2903 = vmatmul.mubr.f32.gmra.mrb[0].mxu0 %v2825
  %v2904 = vpop.f32.mrb[0].mxu0
  %v2905 = vadd.f32 0.0, %v2904
  %v2906 = vpop.f32.mrb[0].mxu0
  %2907 = vdwg.mxu0
  %v2908 = vmul.f32 %v2900, 0.17677669
  %v2909 = vmul.f32 %v2905, 0.17677669
  %v2910 = vsel %vm105, %v2908, -inf
  %2911 = vmax.xlane.f32.xlu0 %v2910
  %v2912 = vpop.xlane.xlu0 %2911
  %v2913 = vsel %vm109, %v2909, -inf
  %2914 = vmax.xlane.f32.xlu0 %v2913
  %v2915 = vpop.xlane.xlu0 %2914
  %v2916 = vsub.f32 %v2908, %v2912
  %v2917 = vsub.f32 %v2909, %v2915
  %v2918 = vmul.f32 %v2916, 1.442695
  %v2919 = vpow.pop %v2918
  %v2920 = vmul.f32 %v2917, 1.442695
  %v2921 = vpow.pop %v2920
  %v2922 = vsel %vm105, %v2919, 0.0
  %2923 = vadd.xlane.f32.xlu0 %v2922
  %v2924 = vpop.xlane.xlu0 %2923
  %v2925 = vsel %vm109, %v2921, 0.0
  %2926 = vadd.xlane.f32.xlu0 %v2925
  %v2927 = vpop.xlane.xlu0 %2926
  %v2928 = vrcp.pop %v2924
  %v2929 = vmul.f32 %v2919, %v2928
  %v2930 = vrcp.pop %v2927
  %v2931 = vmul.f32 %v2921, %v2930
  %v2933 = vsel %vm105, %v2929, 0
  %v2936 = vsel %vm105, %v2931, 0
  %2938 = vmatprep.subr.mxu0 0.0
  %2939 = vmatpush1.msra.mxu0 %v2819
  %2940 = vmatprep.subr.mxu0 0.0
  %2941 = vmatpush1.msra.mxu0 %v2820
  %2942 = vmatprep.subr.mxu0 0.0
  %2943 = vmatpush1.msra.mxu0 0.0
  %2944 = vmatprep.subr.mxu0 0.0
  %2945 = vmatpush1.msra.mxu0 0.0
  %2946 = vmatprep.subr.mxu0 0.0
  %2947 = vmatpush1.msra.mxu0 0.0
  %2948 = vmatprep.subr.mxu0 0.0
  %2949 = vmatpush1.msra.mxu0 0.0
  %2950 = vmatprep.subr.mxu0 0.0
  %2951 = vmatpush1.msra.mxu0 0.0
  %2952 = vmatprep.subr.mxu0 0.0
  %2953 = vmatpush1.msra.mxu0 0.0
  %2954 = vmatprep.subr.mxu0 0.0
  %2955 = vmatpush1.msra.mxu0 0.0
  %2956 = vmatprep.subr.mxu0 0.0
  %2957 = vmatpush1.msra.mxu0 0.0
  %2958 = vmatprep.subr.mxu0 0.0
  %2959 = vmatpush1.msra.mxu0 0.0
  %2960 = vmatprep.subr.mxu0 0.0
  %2961 = vmatpush1.msra.mxu0 0.0
  %2962 = vmatprep.subr.mxu0 0.0
  %2963 = vmatpush1.msra.mxu0 0.0
  %2964 = vmatprep.subr.mxu0 0.0
  %2965 = vmatpush1.msra.mxu0 0.0
  %2966 = vmatprep.subr.mxu0 0.0
  %2967 = vmatpush1.msra.mxu0 0.0
  %2968 = vmatprep.subr.mxu0 0.0
  %2969 = vmatpush1.msra.mxu0 0.0
  %2970 = vmatprep.subr.mxu0 0.0
  %2971 = vmatpush1.msra.mxu0 0.0
  %2972 = vmatprep.subr.mxu0 0.0
  %2973 = vmatpush1.msra.mxu0 0.0
  %2974 = vmatprep.subr.mxu0 0.0
  %2975 = vmatpush1.msra.mxu0 0.0
  %2976 = vmatprep.subr.mxu0 0.0
  %2977 = vmatpush1.msra.mxu0 0.0
  %2978 = vmatprep.subr.mxu0 0.0
  %2979 = vmatpush1.msra.mxu0 0.0
  %2980 = vmatprep.subr.mxu0 0.0
  %2981 = vmatpush1.msra.mxu0 0.0
  %2982 = vmatprep.subr.mxu0 0.0
  %2983 = vmatpush1.msra.mxu0 0.0
  %2984 = vmatprep.subr.mxu0 0.0
  %2985 = vmatpush1.msra.mxu0 0.0
  %2986 = vmatprep.subr.mxu0 0.0
  %2987 = vmatpush1.msra.mxu0 0.0
  %2988 = vmatprep.subr.mxu0 0.0
  %2989 = vmatpush1.msra.mxu0 0.0
  %2990 = vmatprep.subr.mxu0 0.0
  %2991 = vmatpush1.msra.mxu0 0.0
  %2992 = vmatprep.subr.mxu0 0.0
  %2993 = vmatpush1.msra.mxu0 0.0
  %2994 = vmatprep.subr.mxu0 0.0
  %2995 = vmatpush1.msra.mxu0 0.0
  %2996 = vmatprep.subr.mxu0 0.0
  %2997 = vmatpush1.msra.mxu0 0.0
  %2998 = vmatprep.subr.mxu0 0.0
  %2999 = vmatpush1.msra.mxu0 0.0
  %3000 = vmatprep.subr.mxu0 0.0
  %3001 = vmatpush1.msra.mxu0 0.0
  %3002 = vmatprep.mubr.f32.mxu0 0.0
  %3003 = vmatmul.mubr.f32.gmra.mrb[0].mxu0 %v2933
  %v3004 = vpop.f32.mrb[0].mxu0
  %v3005 = vadd.f32 0.0, %v3004
  %v3006 = vpop.f32.mrb[0].mxu0
  %3007 = vmatprep.mubr.f32.mxu0 0.0
  %3008 = vmatmul.mubr.f32.gmra.mrb[0].mxu0 %v2936
  %v3009 = vpop.f32.mrb[0].mxu0
  %v3010 = vadd.f32 0.0, %v3009
  %v3011 = vpop.f32.mrb[0].mxu0
  %3012 = vdwg.mxu0
  %v3013 = vadd.f32 %v2813, %v3005
  %v3014 = vadd.f32 %v2814, %v3010
  %s3015 = scalar_lea.vmem %s2, 112
  %3016 = vst.msk [vmem:[%s3015] sm:$0xff] %vm15, %v3013
  %3017 = vst.msk [vmem:[%s3015 + $0x8] sm:$0x1] %vm213, %v3014
  %s3018 = scalar_lea.vmem %s1, 144
  %v3019 = vld [vmem:[%s3018] sm:$0xff]
  %v3020 = vld [vmem:[%s3018 + $0x8] sm:$0xff]
  %v3022 = vsel %vm15, %v3013, 0
  %v3025 = vsel %vm15, %v3014, 0
  %v3028 = vsel %vm15, %v3019, 0
  %v3031 = vsel %vm15, %v3020, 0
  %3033 = vmatprep.subr.mxu0 0.0
  %3034 = vmatpush1.xpose.msra.mxu0 %v3028
  %3035 = vmatprep.subr.mxu0 0.0
  %3036 = vmatpush1.xpose.msra.mxu0 %v3031
  %3037 = vmatprep.subr.mxu0 0.0
  %3038 = vmatpush1.xpose.msra.mxu0 0.0
  %3039 = vmatprep.subr.mxu0 0.0
  %3040 = vmatpush1.xpose.msra.mxu0 0.0
  %3041 = vmatprep.subr.mxu0 0.0
  %3042 = vmatpush1.xpose.msra.mxu0 0.0
  %3043 = vmatprep.subr.mxu0 0.0
  %3044 = vmatpush1.xpose.msra.mxu0 0.0
  %3045 = vmatprep.subr.mxu0 0.0
  %3046 = vmatpush1.xpose.msra.mxu0 0.0
  %3047 = vmatprep.subr.mxu0 0.0
  %3048 = vmatpush1.xpose.msra.mxu0 0.0
  %3049 = vmatprep.subr.mxu0 0.0
  %3050 = vmatpush1.xpose.msra.mxu0 0.0
  %3051 = vmatprep.subr.mxu0 0.0
  %3052 = vmatpush1.xpose.msra.mxu0 0.0
  %3053 = vmatprep.subr.mxu0 0.0
  %3054 = vmatpush1.xpose.msra.mxu0 0.0
  %3055 = vmatprep.subr.mxu0 0.0
  %3056 = vmatpush1.xpose.msra.mxu0 0.0
  %3057 = vmatprep.subr.mxu0 0.0
  %3058 = vmatpush1.xpose.msra.mxu0 0.0
  %3059 = vmatprep.subr.mxu0 0.0
  %3060 = vmatpush1.xpose.msra.mxu0 0.0
  %3061 = vmatprep.subr.mxu0 0.0
  %3062 = vmatpush1.xpose.msra.mxu0 0.0
  %3063 = vmatprep.subr.mxu0 0.0
  %3064 = vmatpush1.xpose.msra.mxu0 0.0
  %3065 = vmatprep.subr.mxu0 0.0
  %3066 = vmatpush1.xpose.msra.mxu0 0.0
  %3067 = vmatprep.subr.mxu0 0.0
  %3068 = vmatpush1.xpose.msra.mxu0 0.0
  %3069 = vmatprep.subr.mxu0 0.0
  %3070 = vmatpush1.xpose.msra.mxu0 0.0
  %3071 = vmatprep.subr.mxu0 0.0
  %3072 = vmatpush1.xpose.msra.mxu0 0.0
  %3073 = vmatprep.subr.mxu0 0.0
  %3074 = vmatpush1.xpose.msra.mxu0 0.0
  %3075 = vmatprep.subr.mxu0 0.0
  %3076 = vmatpush1.xpose.msra.mxu0 0.0
  %3077 = vmatprep.subr.mxu0 0.0
  %3078 = vmatpush1.xpose.msra.mxu0 0.0
  %3079 = vmatprep.subr.mxu0 0.0
  %3080 = vmatpush1.xpose.msra.mxu0 0.0
  %3081 = vmatprep.subr.mxu0 0.0
  %3082 = vmatpush1.xpose.msra.mxu0 0.0
  %3083 = vmatprep.subr.mxu0 0.0
  %3084 = vmatpush1.xpose.msra.mxu0 0.0
  %3085 = vmatprep.subr.mxu0 0.0
  %3086 = vmatpush1.xpose.msra.mxu0 0.0
  %3087 = vmatprep.subr.mxu0 0.0
  %3088 = vmatpush1.xpose.msra.mxu0 0.0
  %3089 = vmatprep.subr.mxu0 0.0
  %3090 = vmatpush1.xpose.msra.mxu0 0.0
  %3091 = vmatprep.subr.mxu0 0.0
  %3092 = vmatpush1.xpose.msra.mxu0 0.0
  %3093 = vmatprep.subr.mxu0 0.0
  %3094 = vmatpush1.xpose.msra.mxu0 0.0
  %3095 = vmatprep.subr.mxu0 0.0
  %3096 = vmatpush1.xpose.msra.mxu0 0.0
  %3097 = vmatprep.mubr.f32.mxu0 0.0
  %3098 = vmatmul.mubr.f32.gmra.mrb[0].mxu0 %v3022
  %v3099 = vpop.f32.mrb[0].mxu0
  %v3100 = vadd.f32 0.0, %v3099
  %v3101 = vpop.f32.mrb[0].mxu0
  %3102 = vmatprep.mubr.f32.mxu0 0.0
  %3103 = vmatmul.mubr.f32.gmra.mrb[0].mxu0 %v3025
  %v3104 = vpop.f32.mrb[0].mxu0
  %v3105 = vadd.f32 0.0, %v3104
  %v3106 = vpop.f32.mrb[0].mxu0
  %3107 = vdwg.mxu0
  %v3108 = vmul.f32 %v3100, 0.17677669
  %v3109 = vmul.f32 %v3105, 0.17677669
  %v3110 = vsel %vm105, %v3108, -inf
  %3111 = vmax.xlane.f32.xlu0 %v3110
  %v3112 = vpop.xlane.xlu0 %3111
  %v3113 = vsel %vm109, %v3109, -inf
  %3114 = vmax.xlane.f32.xlu0 %v3113
  %v3115 = vpop.xlane.xlu0 %3114
  %v3116 = vsub.f32 %v3108, %v3112
  %v3117 = vsub.f32 %v3109, %v3115
  %v3118 = vmul.f32 %v3116, 1.442695
  %v3119 = vpow.pop %v3118
  %v3120 = vmul.f32 %v3117, 1.442695
  %v3121 = vpow.pop %v3120
  %v3122 = vsel %vm105, %v3119, 0.0
  %3123 = vadd.xlane.f32.xlu0 %v3122
  %v3124 = vpop.xlane.xlu0 %3123
  %v3125 = vsel %vm109, %v3121, 0.0
  %3126 = vadd.xlane.f32.xlu0 %v3125
  %v3127 = vpop.xlane.xlu0 %3126
  %v3128 = vrcp.pop %v3124
  %v3129 = vmul.f32 %v3119, %v3128
  %v3130 = vrcp.pop %v3127
  %v3131 = vmul.f32 %v3121, %v3130
  %v3133 = vsel %vm105, %v3129, 0
  %v3136 = vsel %vm105, %v3131, 0
  %3138 = vmatprep.subr.mxu0 0.0
  %3139 = vmatpush1.msra.mxu0 %v3019
  %3140 = vmatprep.subr.mxu0 0.0
  %3141 = vmatpush1.msra.mxu0 %v3020
  %3142 = vmatprep.subr.mxu0 0.0
  %3143 = vmatpush1.msra.mxu0 0.0
  %3144 = vmatprep.subr.mxu0 0.0
  %3145 = vmatpush1.msra.mxu0 0.0
  %3146 = vmatprep.subr.mxu0 0.0
  %3147 = vmatpush1.msra.mxu0 0.0
  %3148 = vmatprep.subr.mxu0 0.0
  %3149 = vmatpush1.msra.mxu0 0.0
  %3150 = vmatprep.subr.mxu0 0.0
  %3151 = vmatpush1.msra.mxu0 0.0
  %3152 = vmatprep.subr.mxu0 0.0
  %3153 = vmatpush1.msra.mxu0 0.0
  %3154 = vmatprep.subr.mxu0 0.0
  %3155 = vmatpush1.msra.mxu0 0.0
  %3156 = vmatprep.subr.mxu0 0.0
  %3157 = vmatpush1.msra.mxu0 0.0
  %3158 = vmatprep.subr.mxu0 0.0
  %3159 = vmatpush1.msra.mxu0 0.0
  %3160 = vmatprep.subr.mxu0 0.0
  %3161 = vmatpush1.msra.mxu0 0.0
  %3162 = vmatprep.subr.mxu0 0.0
  %3163 = vmatpush1.msra.mxu0 0.0
  %3164 = vmatprep.subr.mxu0 0.0
  %3165 = vmatpush1.msra.mxu0 0.0
  %3166 = vmatprep.subr.mxu0 0.0
  %3167 = vmatpush1.msra.mxu0 0.0
  %3168 = vmatprep.subr.mxu0 0.0
  %3169 = vmatpush1.msra.mxu0 0.0
  %3170 = vmatprep.subr.mxu0 0.0
  %3171 = vmatpush1.msra.mxu0 0.0
  %3172 = vmatprep.subr.mxu0 0.0
  %3173 = vmatpush1.msra.mxu0 0.0
  %3174 = vmatprep.subr.mxu0 0.0
  %3175 = vmatpush1.msra.mxu0 0.0
  %3176 = vmatprep.subr.mxu0 0.0
  %3177 = vmatpush1.msra.mxu0 0.0
  %3178 = vmatprep.subr.mxu0 0.0
  %3179 = vmatpush1.msra.mxu0 0.0
  %3180 = vmatprep.subr.mxu0 0.0
  %3181 = vmatpush1.msra.mxu0 0.0
  %3182 = vmatprep.subr.mxu0 0.0
  %3183 = vmatpush1.msra.mxu0 0.0
  %3184 = vmatprep.subr.mxu0 0.0
  %3185 = vmatpush1.msra.mxu0 0.0
  %3186 = vmatprep.subr.mxu0 0.0
  %3187 = vmatpush1.msra.mxu0 0.0
  %3188 = vmatprep.subr.mxu0 0.0
  %3189 = vmatpush1.msra.mxu0 0.0
  %3190 = vmatprep.subr.mxu0 0.0
  %3191 = vmatpush1.msra.mxu0 0.0
  %3192 = vmatprep.subr.mxu0 0.0
  %3193 = vmatpush1.msra.mxu0 0.0
  %3194 = vmatprep.subr.mxu0 0.0
  %3195 = vmatpush1.msra.mxu0 0.0
  %3196 = vmatprep.subr.mxu0 0.0
  %3197 = vmatpush1.msra.mxu0 0.0
  %3198 = vmatprep.subr.mxu0 0.0
  %3199 = vmatpush1.msra.mxu0 0.0
  %3200 = vmatprep.subr.mxu0 0.0
  %3201 = vmatpush1.msra.mxu0 0.0
  %3202 = vmatprep.mubr.f32.mxu0 0.0
  %3203 = vmatmul.mubr.f32.gmra.mrb[0].mxu0 %v3133
  %v3204 = vpop.f32.mrb[0].mxu0
  %v3205 = vadd.f32 0.0, %v3204
  %v3206 = vpop.f32.mrb[0].mxu0
  %3207 = vmatprep.mubr.f32.mxu0 0.0
  %3208 = vmatmul.mubr.f32.gmra.mrb[0].mxu0 %v3136
  %v3209 = vpop.f32.mrb[0].mxu0
  %v3210 = vadd.f32 0.0, %v3209
  %v3211 = vpop.f32.mrb[0].mxu0
  %3212 = vdwg.mxu0
  %v3213 = vadd.f32 %v3013, %v3205
  %v3214 = vadd.f32 %v3014, %v3210
  %s3215 = scalar_lea.vmem %s2, 144
  %3216 = vst.msk [vmem:[%s3215] sm:$0xff] %vm15, %v3213
  %3217 = vst.msk [vmem:[%s3215 + $0x8] sm:$0x1] %vm213, %v3214
  %s3218 = scalar_lea.vmem %s1, 176
  %v3219 = vld [vmem:[%s3218] sm:$0xff]
  %v3220 = vld [vmem:[%s3218 + $0x8] sm:$0xff]
  %v3222 = vsel %vm15, %v3213, 0
  %v3225 = vsel %vm15, %v3214, 0
  %v3228 = vsel %vm15, %v3219, 0
  %v3231 = vsel %vm15, %v3220, 0
  %3233 = vmatprep.subr.mxu0 0.0
  %3234 = vmatpush1.xpose.msra.mxu0 %v3228
  %3235 = vmatprep.subr.mxu0 0.0
  %3236 = vmatpush1.xpose.msra.mxu0 %v3231
  %3237 = vmatprep.subr.mxu0 0.0
  %3238 = vmatpush1.xpose.msra.mxu0 0.0
  %3239 = vmatprep.subr.mxu0 0.0
  %3240 = vmatpush1.xpose.msra.mxu0 0.0
  %3241 = vmatprep.subr.mxu0 0.0
  %3242 = vmatpush1.xpose.msra.mxu0 0.0
  %3243 = vmatprep.subr.mxu0 0.0
  %3244 = vmatpush1.xpose.msra.mxu0 0.0
  %3245 = vmatprep.subr.mxu0 0.0
  %3246 = vmatpush1.xpose.msra.mxu0 0.0
  %3247 = vmatprep.subr.mxu0 0.0
  %3248 = vmatpush1.xpose.msra.mxu0 0.0
  %3249 = vmatprep.subr.mxu0 0.0
  %3250 = vmatpush1.xpose.msra.mxu0 0.0
  %3251 = vmatprep.subr.mxu0 0.0
  %3252 = vmatpush1.xpose.msra.mxu0 0.0
  %3253 = vmatprep.subr.mxu0 0.0
  %3254 = vmatpush1.xpose.msra.mxu0 0.0
  %3255 = vmatprep.subr.mxu0 0.0
  %3256 = vmatpush1.xpose.msra.mxu0 0.0
  %3257 = vmatprep.subr.mxu0 0.0
  %3258 = vmatpush1.xpose.msra.mxu0 0.0
  %3259 = vmatprep.subr.mxu0 0.0
  %3260 = vmatpush1.xpose.msra.mxu0 0.0
  %3261 = vmatprep.subr.mxu0 0.0
  %3262 = vmatpush1.xpose.msra.mxu0 0.0
  %3263 = vmatprep.subr.mxu0 0.0
  %3264 = vmatpush1.xpose.msra.mxu0 0.0
  %3265 = vmatprep.subr.mxu0 0.0
  %3266 = vmatpush1.xpose.msra.mxu0 0.0
  %3267 = vmatprep.subr.mxu0 0.0
  %3268 = vmatpush1.xpose.msra.mxu0 0.0
  %3269 = vmatprep.subr.mxu0 0.0
  %3270 = vmatpush1.xpose.msra.mxu0 0.0
  %3271 = vmatprep.subr.mxu0 0.0
  %3272 = vmatpush1.xpose.msra.mxu0 0.0
  %3273 = vmatprep.subr.mxu0 0.0
  %3274 = vmatpush1.xpose.msra.mxu0 0.0
  %3275 = vmatprep.subr.mxu0 0.0
  %3276 = vmatpush1.xpose.msra.mxu0 0.0
  %3277 = vmatprep.subr.mxu0 0.0
  %3278 = vmatpush1.xpose.msra.mxu0 0.0
  %3279 = vmatprep.subr.mxu0 0.0
  %3280 = vmatpush1.xpose.msra.mxu0 0.0
  %3281 = vmatprep.subr.mxu0 0.0
  %3282 = vmatpush1.xpose.msra.mxu0 0.0
  %3283 = vmatprep.subr.mxu0 0.0
  %3284 = vmatpush1.xpose.msra.mxu0 0.0
  %3285 = vmatprep.subr.mxu0 0.0
  %3286 = vmatpush1.xpose.msra.mxu0 0.0
  %3287 = vmatprep.subr.mxu0 0.0
  %3288 = vmatpush1.xpose.msra.mxu0 0.0
  %3289 = vmatprep.subr.mxu0 0.0
  %3290 = vmatpush1.xpose.msra.mxu0 0.0
  %3291 = vmatprep.subr.mxu0 0.0
  %3292 = vmatpush1.xpose.msra.mxu0 0.0
  %3293 = vmatprep.subr.mxu0 0.0
  %3294 = vmatpush1.xpose.msra.mxu0 0.0
  %3295 = vmatprep.subr.mxu0 0.0
  %3296 = vmatpush1.xpose.msra.mxu0 0.0
  %3297 = vmatprep.mubr.f32.mxu0 0.0
  %3298 = vmatmul.mubr.f32.gmra.mrb[0].mxu0 %v3222
  %v3299 = vpop.f32.mrb[0].mxu0
  %v3300 = vadd.f32 0.0, %v3299
  %v3301 = vpop.f32.mrb[0].mxu0
  %3302 = vmatprep.mubr.f32.mxu0 0.0
  %3303 = vmatmul.mubr.f32.gmra.mrb[0].mxu0 %v3225
  %v3304 = vpop.f32.mrb[0].mxu0
  %v3305 = vadd.f32 0.0, %v3304
  %v3306 = vpop.f32.mrb[0].mxu0
  %3307 = vdwg.mxu0
  %v3308 = vmul.f32 %v3300, 0.17677669
  %v3309 = vmul.f32 %v3305, 0.17677669
  %v3310 = vsel %vm105, %v3308, -inf
  %3311 = vmax.xlane.f32.xlu0 %v3310
  %v3312 = vpop.xlane.xlu0 %3311
  %v3313 = vsel %vm109, %v3309, -inf
  %3314 = vmax.xlane.f32.xlu0 %v3313
  %v3315 = vpop.xlane.xlu0 %3314
  %v3316 = vsub.f32 %v3308, %v3312
  %v3317 = vsub.f32 %v3309, %v3315
  %v3318 = vmul.f32 %v3316, 1.442695
  %v3319 = vpow.pop %v3318
  %v3320 = vmul.f32 %v3317, 1.442695
  %v3321 = vpow.pop %v3320
  %v3322 = vsel %vm105, %v3319, 0.0
  %3323 = vadd.xlane.f32.xlu0 %v3322
  %v3324 = vpop.xlane.xlu0 %3323
  %v3325 = vsel %vm109, %v3321, 0.0
  %3326 = vadd.xlane.f32.xlu0 %v3325
  %v3327 = vpop.xlane.xlu0 %3326
  %v3328 = vrcp.pop %v3324
  %v3329 = vmul.f32 %v3319, %v3328
  %v3330 = vrcp.pop %v3327
  %v3331 = vmul.f32 %v3321, %v3330
  %v3333 = vsel %vm105, %v3329, 0
  %v3336 = vsel %vm105, %v3331, 0
  %3338 = vmatprep.subr.mxu0 0.0
  %3339 = vmatpush1.msra.mxu0 %v3219
  %3340 = vmatprep.subr.mxu0 0.0
  %3341 = vmatpush1.msra.mxu0 %v3220
  %3342 = vmatprep.subr.mxu0 0.0
  %3343 = vmatpush1.msra.mxu0 0.0
  %3344 = vmatprep.subr.mxu0 0.0
  %3345 = vmatpush1.msra.mxu0 0.0
  %3346 = vmatprep.subr.mxu0 0.0
  %3347 = vmatpush1.msra.mxu0 0.0
  %3348 = vmatprep.subr.mxu0 0.0
  %3349 = vmatpush1.msra.mxu0 0.0
  %3350 = vmatprep.subr.mxu0 0.0
  %3351 = vmatpush1.msra.mxu0 0.0
  %3352 = vmatprep.subr.mxu0 0.0
  %3353 = vmatpush1.msra.mxu0 0.0
  %3354 = vmatprep.subr.mxu0 0.0
  %3355 = vmatpush1.msra.mxu0 0.0
  %3356 = vmatprep.subr.mxu0 0.0
  %3357 = vmatpush1.msra.mxu0 0.0
  %3358 = vmatprep.subr.mxu0 0.0
  %3359 = vmatpush1.msra.mxu0 0.0
  %3360 = vmatprep.subr.mxu0 0.0
  %3361 = vmatpush1.msra.mxu0 0.0
  %3362 = vmatprep.subr.mxu0 0.0
  %3363 = vmatpush1.msra.mxu0 0.0
  %3364 = vmatprep.subr.mxu0 0.0
  %3365 = vmatpush1.msra.mxu0 0.0
  %3366 = vmatprep.subr.mxu0 0.0
  %3367 = vmatpush1.msra.mxu0 0.0
  %3368 = vmatprep.subr.mxu0 0.0
  %3369 = vmatpush1.msra.mxu0 0.0
  %3370 = vmatprep.subr.mxu0 0.0
  %3371 = vmatpush1.msra.mxu0 0.0
  %3372 = vmatprep.subr.mxu0 0.0
  %3373 = vmatpush1.msra.mxu0 0.0
  %3374 = vmatprep.subr.mxu0 0.0
  %3375 = vmatpush1.msra.mxu0 0.0
  %3376 = vmatprep.subr.mxu0 0.0
  %3377 = vmatpush1.msra.mxu0 0.0
  %3378 = vmatprep.subr.mxu0 0.0
  %3379 = vmatpush1.msra.mxu0 0.0
  %3380 = vmatprep.subr.mxu0 0.0
  %3381 = vmatpush1.msra.mxu0 0.0
  %3382 = vmatprep.subr.mxu0 0.0
  %3383 = vmatpush1.msra.mxu0 0.0
  %3384 = vmatprep.subr.mxu0 0.0
  %3385 = vmatpush1.msra.mxu0 0.0
  %3386 = vmatprep.subr.mxu0 0.0
  %3387 = vmatpush1.msra.mxu0 0.0
  %3388 = vmatprep.subr.mxu0 0.0
  %3389 = vmatpush1.msra.mxu0 0.0
  %3390 = vmatprep.subr.mxu0 0.0
  %3391 = vmatpush1.msra.mxu0 0.0
  %3392 = vmatprep.subr.mxu0 0.0
  %3393 = vmatpush1.msra.mxu0 0.0
  %3394 = vmatprep.subr.mxu0 0.0
  %3395 = vmatpush1.msra.mxu0 0.0
  %3396 = vmatprep.subr.mxu0 0.0
  %3397 = vmatpush1.msra.mxu0 0.0
  %3398 = vmatprep.subr.mxu0 0.0
  %3399 = vmatpush1.msra.mxu0 0.0
  %3400 = vmatprep.subr.mxu0 0.0
  %3401 = vmatpush1.msra.mxu0 0.0
  %3402 = vmatprep.mubr.f32.mxu0 0.0
  %3403 = vmatmul.mubr.f32.gmra.mrb[0].mxu0 %v3333
  %v3404 = vpop.f32.mrb[0].mxu0
  %v3405 = vadd.f32 0.0, %v3404
  %v3406 = vpop.f32.mrb[0].mxu0
  %3407 = vmatprep.mubr.f32.mxu0 0.0
  %3408 = vmatmul.mubr.f32.gmra.mrb[0].mxu0 %v3336
  %v3409 = vpop.f32.mrb[0].mxu0
  %v3410 = vadd.f32 0.0, %v3409
  %v3411 = vpop.f32.mrb[0].mxu0
  %3412 = vdwg.mxu0
  %v3413 = vadd.f32 %v3213, %v3405
  %v3414 = vadd.f32 %v3214, %v3410
  %s3415 = scalar_lea.vmem %s2, 176
  %3416 = vst.msk [vmem:[%s3415] sm:$0xff] %vm15, %v3413
  %3417 = vst.msk [vmem:[%s3415 + $0x8] sm:$0x1] %vm213, %v3414
  %s3418 = scalar_lea.vmem %s1, 208
  %v3419 = vld [vmem:[%s3418] sm:$0xff]
  %v3420 = vld [vmem:[%s3418 + $0x8] sm:$0xff]
  %v3422 = vsel %vm15, %v3413, 0
  %v3425 = vsel %vm15, %v3414, 0
  %v3428 = vsel %vm15, %v3419, 0
  %v3431 = vsel %vm15, %v3420, 0
  %3433 = vmatprep.subr.mxu0 0.0
  %3434 = vmatpush1.xpose.msra.mxu0 %v3428
  %3435 = vmatprep.subr.mxu0 0.0
  %3436 = vmatpush1.xpose.msra.mxu0 %v3431
  %3437 = vmatprep.subr.mxu0 0.0
  %3438 = vmatpush1.xpose.msra.mxu0 0.0
  %3439 = vmatprep.subr.mxu0 0.0
  %3440 = vmatpush1.xpose.msra.mxu0 0.0
  %3441 = vmatprep.subr.mxu0 0.0
  %3442 = vmatpush1.xpose.msra.mxu0 0.0
  %3443 = vmatprep.subr.mxu0 0.0
  %3444 = vmatpush1.xpose.msra.mxu0 0.0
  %3445 = vmatprep.subr.mxu0 0.0
  %3446 = vmatpush1.xpose.msra.mxu0 0.0
  %3447 = vmatprep.subr.mxu0 0.0
  %3448 = vmatpush1.xpose.msra.mxu0 0.0
  %3449 = vmatprep.subr.mxu0 0.0
  %3450 = vmatpush1.xpose.msra.mxu0 0.0
  %3451 = vmatprep.subr.mxu0 0.0
  %3452 = vmatpush1.xpose.msra.mxu0 0.0
  %3453 = vmatprep.subr.mxu0 0.0
  %3454 = vmatpush1.xpose.msra.mxu0 0.0
  %3455 = vmatprep.subr.mxu0 0.0
  %3456 = vmatpush1.xpose.msra.mxu0 0.0
  %3457 = vmatprep.subr.mxu0 0.0
  %3458 = vmatpush1.xpose.msra.mxu0 0.0
  %3459 = vmatprep.subr.mxu0 0.0
  %3460 = vmatpush1.xpose.msra.mxu0 0.0
  %3461 = vmatprep.subr.mxu0 0.0
  %3462 = vmatpush1.xpose.msra.mxu0 0.0
  %3463 = vmatprep.subr.mxu0 0.0
  %3464 = vmatpush1.xpose.msra.mxu0 0.0
  %3465 = vmatprep.subr.mxu0 0.0
  %3466 = vmatpush1.xpose.msra.mxu0 0.0
  %3467 = vmatprep.subr.mxu0 0.0
  %3468 = vmatpush1.xpose.msra.mxu0 0.0
  %3469 = vmatprep.subr.mxu0 0.0
  %3470 = vmatpush1.xpose.msra.mxu0 0.0
  %3471 = vmatprep.subr.mxu0 0.0
  %3472 = vmatpush1.xpose.msra.mxu0 0.0
  %3473 = vmatprep.subr.mxu0 0.0
  %3474 = vmatpush1.xpose.msra.mxu0 0.0
  %3475 = vmatprep.subr.mxu0 0.0
  %3476 = vmatpush1.xpose.msra.mxu0 0.0
  %3477 = vmatprep.subr.mxu0 0.0
  %3478 = vmatpush1.xpose.msra.mxu0 0.0
  %3479 = vmatprep.subr.mxu0 0.0
  %3480 = vmatpush1.xpose.msra.mxu0 0.0
  %3481 = vmatprep.subr.mxu0 0.0
  %3482 = vmatpush1.xpose.msra.mxu0 0.0
  %3483 = vmatprep.subr.mxu0 0.0
  %3484 = vmatpush1.xpose.msra.mxu0 0.0
  %3485 = vmatprep.subr.mxu0 0.0
  %3486 = vmatpush1.xpose.msra.mxu0 0.0
  %3487 = vmatprep.subr.mxu0 0.0
  %3488 = vmatpush1.xpose.msra.mxu0 0.0
  %3489 = vmatprep.subr.mxu0 0.0
  %3490 = vmatpush1.xpose.msra.mxu0 0.0
  %3491 = vmatprep.subr.mxu0 0.0
  %3492 = vmatpush1.xpose.msra.mxu0 0.0
  %3493 = vmatprep.subr.mxu0 0.0
  %3494 = vmatpush1.xpose.msra.mxu0 0.0
  %3495 = vmatprep.subr.mxu0 0.0
  %3496 = vmatpush1.xpose.msra.mxu0 0.0
  %3497 = vmatprep.mubr.f32.mxu0 0.0
  %3498 = vmatmul.mubr.f32.gmra.mrb[0].mxu0 %v3422
  %v3499 = vpop.f32.mrb[0].mxu0
  %v3500 = vadd.f32 0.0, %v3499
  %v3501 = vpop.f32.mrb[0].mxu0
  %3502 = vmatprep.mubr.f32.mxu0 0.0
  %3503 = vmatmul.mubr.f32.gmra.mrb[0].mxu0 %v3425
  %v3504 = vpop.f32.mrb[0].mxu0
  %v3505 = vadd.f32 0.0, %v3504
  %v3506 = vpop.f32.mrb[0].mxu0
  %3507 = vdwg.mxu0
  %v3508 = vmul.f32 %v3500, 0.17677669
  %v3509 = vmul.f32 %v3505, 0.17677669
  %v3510 = vsel %vm105, %v3508, -inf
  %3511 = vmax.xlane.f32.xlu0 %v3510
  %v3512 = vpop.xlane.xlu0 %3511
  %v3513 = vsel %vm109, %v3509, -inf
  %3514 = vmax.xlane.f32.xlu0 %v3513
  %v3515 = vpop.xlane.xlu0 %3514
  %v3516 = vsub.f32 %v3508, %v3512
  %v3517 = vsub.f32 %v3509, %v3515
  %v3518 = vmul.f32 %v3516, 1.442695
  %v3519 = vpow.pop %v3518
  %v3520 = vmul.f32 %v3517, 1.442695
  %v3521 = vpow.pop %v3520
  %v3522 = vsel %vm105, %v3519, 0.0
  %3523 = vadd.xlane.f32.xlu0 %v3522
  %v3524 = vpop.xlane.xlu0 %3523
  %v3525 = vsel %vm109, %v3521, 0.0
  %3526 = vadd.xlane.f32.xlu0 %v3525
  %v3527 = vpop.xlane.xlu0 %3526
  %v3528 = vrcp.pop %v3524
  %v3529 = vmul.f32 %v3519, %v3528
  %v3530 = vrcp.pop %v3527
  %v3531 = vmul.f32 %v3521, %v3530
  %v3533 = vsel %vm105, %v3529, 0
  %v3536 = vsel %vm105, %v3531, 0
  %3538 = vmatprep.subr.mxu0 0.0
  %3539 = vmatpush1.msra.mxu0 %v3419
  %3540 = vmatprep.subr.mxu0 0.0
  %3541 = vmatpush1.msra.mxu0 %v3420
  %3542 = vmatprep.subr.mxu0 0.0
  %3543 = vmatpush1.msra.mxu0 0.0
  %3544 = vmatprep.subr.mxu0 0.0
  %3545 = vmatpush1.msra.mxu0 0.0
  %3546 = vmatprep.subr.mxu0 0.0
  %3547 = vmatpush1.msra.mxu0 0.0
  %3548 = vmatprep.subr.mxu0 0.0
  %3549 = vmatpush1.msra.mxu0 0.0
  %3550 = vmatprep.subr.mxu0 0.0
  %3551 = vmatpush1.msra.mxu0 0.0
  %3552 = vmatprep.subr.mxu0 0.0
  %3553 = vmatpush1.msra.mxu0 0.0
  %3554 = vmatprep.subr.mxu0 0.0
  %3555 = vmatpush1.msra.mxu0 0.0
  %3556 = vmatprep.subr.mxu0 0.0
  %3557 = vmatpush1.msra.mxu0 0.0
  %3558 = vmatprep.subr.mxu0 0.0
  %3559 = vmatpush1.msra.mxu0 0.0
  %3560 = vmatprep.subr.mxu0 0.0
  %3561 = vmatpush1.msra.mxu0 0.0
  %3562 = vmatprep.subr.mxu0 0.0
  %3563 = vmatpush1.msra.mxu0 0.0
  %3564 = vmatprep.subr.mxu0 0.0
  %3565 = vmatpush1.msra.mxu0 0.0
  %3566 = vmatprep.subr.mxu0 0.0
  %3567 = vmatpush1.msra.mxu0 0.0
  %3568 = vmatprep.subr.mxu0 0.0
  %3569 = vmatpush1.msra.mxu0 0.0
  %3570 = vmatprep.subr.mxu0 0.0
  %3571 = vmatpush1.msra.mxu0 0.0
  %3572 = vmatprep.subr.mxu0 0.0
  %3573 = vmatpush1.msra.mxu0 0.0
  %3574 = vmatprep.subr.mxu0 0.0
  %3575 = vmatpush1.msra.mxu0 0.0
  %3576 = vmatprep.subr.mxu0 0.0
  %3577 = vmatpush1.msra.mxu0 0.0
  %3578 = vmatprep.subr.mxu0 0.0
  %3579 = vmatpush1.msra.mxu0 0.0
  %3580 = vmatprep.subr.mxu0 0.0
  %3581 = vmatpush1.msra.mxu0 0.0
  %3582 = vmatprep.subr.mxu0 0.0
  %3583 = vmatpush1.msra.mxu0 0.0
  %3584 = vmatprep.subr.mxu0 0.0
  %3585 = vmatpush1.msra.mxu0 0.0
  %3586 = vmatprep.subr.mxu0 0.0
  %3587 = vmatpush1.msra.mxu0 0.0
  %3588 = vmatprep.subr.mxu0 0.0
  %3589 = vmatpush1.msra.mxu0 0.0
  %3590 = vmatprep.subr.mxu0 0.0
  %3591 = vmatpush1.msra.mxu0 0.0
  %3592 = vmatprep.subr.mxu0 0.0
  %3593 = vmatpush1.msra.mxu0 0.0
  %3594 = vmatprep.subr.mxu0 0.0
  %3595 = vmatpush1.msra.mxu0 0.0
  %3596 = vmatprep.subr.mxu0 0.0
  %3597 = vmatpush1.msra.mxu0 0.0
  %3598 = vmatprep.subr.mxu0 0.0
  %3599 = vmatpush1.msra.mxu0 0.0
  %3600 = vmatprep.subr.mxu0 0.0
  %3601 = vmatpush1.msra.mxu0 0.0
  %3602 = vmatprep.mubr.f32.mxu0 0.0
  %3603 = vmatmul.mubr.f32.gmra.mrb[0].mxu0 %v3533
  %v3604 = vpop.f32.mrb[0].mxu0
  %v3605 = vadd.f32 0.0, %v3604
  %v3606 = vpop.f32.mrb[0].mxu0
  %3607 = vmatprep.mubr.f32.mxu0 0.0
  %3608 = vmatmul.mubr.f32.gmra.mrb[0].mxu0 %v3536
  %v3609 = vpop.f32.mrb[0].mxu0
  %v3610 = vadd.f32 0.0, %v3609
  %v3611 = vpop.f32.mrb[0].mxu0
  %3612 = vdwg.mxu0
  %v3613 = vadd.f32 %v3413, %v3605
  %v3614 = vadd.f32 %v3414, %v3610
  %s3615 = scalar_lea.vmem %s2, 208
  %3616 = vst.msk [vmem:[%s3615] sm:$0xff] %vm15, %v3613
  %3617 = vst.msk [vmem:[%s3615 + $0x8] sm:$0x1] %vm213, %v3614
  %s3618 = scalar_lea.vmem %s1, 240
  %v3619 = vld [vmem:[%s3618] sm:$0xff]
  %v3620 = vld [vmem:[%s3618 + $0x8] sm:$0xff]
  %v3622 = vsel %vm15, %v3613, 0
  %v3625 = vsel %vm15, %v3614, 0
  %v3628 = vsel %vm15, %v3619, 0
  %v3631 = vsel %vm15, %v3620, 0
  %3633 = vmatprep.subr.mxu0 0.0
  %3634 = vmatpush1.xpose.msra.mxu0 %v3628
  %3635 = vmatprep.subr.mxu0 0.0
  %3636 = vmatpush1.xpose.msra.mxu0 %v3631
  %3637 = vmatprep.subr.mxu0 0.0
  %3638 = vmatpush1.xpose.msra.mxu0 0.0
  %3639 = vmatprep.subr.mxu0 0.0
  %3640 = vmatpush1.xpose.msra.mxu0 0.0
  %3641 = vmatprep.subr.mxu0 0.0
  %3642 = vmatpush1.xpose.msra.mxu0 0.0
  %3643 = vmatprep.subr.mxu0 0.0
  %3644 = vmatpush1.xpose.msra.mxu0 0.0
  %3645 = vmatprep.subr.mxu0 0.0
  %3646 = vmatpush1.xpose.msra.mxu0 0.0
  %3647 = vmatprep.subr.mxu0 0.0
  %3648 = vmatpush1.xpose.msra.mxu0 0.0
  %3649 = vmatprep.subr.mxu0 0.0
  %3650 = vmatpush1.xpose.msra.mxu0 0.0
  %3651 = vmatprep.subr.mxu0 0.0
  %3652 = vmatpush1.xpose.msra.mxu0 0.0
  %3653 = vmatprep.subr.mxu0 0.0
  %3654 = vmatpush1.xpose.msra.mxu0 0.0
  %3655 = vmatprep.subr.mxu0 0.0
  %3656 = vmatpush1.xpose.msra.mxu0 0.0
  %3657 = vmatprep.subr.mxu0 0.0
  %3658 = vmatpush1.xpose.msra.mxu0 0.0
  %3659 = vmatprep.subr.mxu0 0.0
  %3660 = vmatpush1.xpose.msra.mxu0 0.0
  %3661 = vmatprep.subr.mxu0 0.0
  %3662 = vmatpush1.xpose.msra.mxu0 0.0
  %3663 = vmatprep.subr.mxu0 0.0
  %3664 = vmatpush1.xpose.msra.mxu0 0.0
  %3665 = vmatprep.subr.mxu0 0.0
  %3666 = vmatpush1.xpose.msra.mxu0 0.0
  %3667 = vmatprep.subr.mxu0 0.0
  %3668 = vmatpush1.xpose.msra.mxu0 0.0
  %3669 = vmatprep.subr.mxu0 0.0
  %3670 = vmatpush1.xpose.msra.mxu0 0.0
  %3671 = vmatprep.subr.mxu0 0.0
  %3672 = vmatpush1.xpose.msra.mxu0 0.0
  %3673 = vmatprep.subr.mxu0 0.0
  %3674 = vmatpush1.xpose.msra.mxu0 0.0
  %3675 = vmatprep.subr.mxu0 0.0
  %3676 = vmatpush1.xpose.msra.mxu0 0.0
  %3677 = vmatprep.subr.mxu0 0.0
  %3678 = vmatpush1.xpose.msra.mxu0 0.0
  %3679 = vmatprep.subr.mxu0 0.0
  %3680 = vmatpush1.xpose.msra.mxu0 0.0
  %3681 = vmatprep.subr.mxu0 0.0
  %3682 = vmatpush1.xpose.msra.mxu0 0.0
  %3683 = vmatprep.subr.mxu0 0.0
  %3684 = vmatpush1.xpose.msra.mxu0 0.0
  %3685 = vmatprep.subr.mxu0 0.0
  %3686 = vmatpush1.xpose.msra.mxu0 0.0
  %3687 = vmatprep.subr.mxu0 0.0
  %3688 = vmatpush1.xpose.msra.mxu0 0.0
  %3689 = vmatprep.subr.mxu0 0.0
  %3690 = vmatpush1.xpose.msra.mxu0 0.0
  %3691 = vmatprep.subr.mxu0 0.0
  %3692 = vmatpush1.xpose.msra.mxu0 0.0
  %3693 = vmatprep.subr.mxu0 0.0
  %3694 = vmatpush1.xpose.msra.mxu0 0.0
  %3695 = vmatprep.subr.mxu0 0.0
  %3696 = vmatpush1.xpose.msra.mxu0 0.0
  %3697 = vmatprep.mubr.f32.mxu0 0.0
  %3698 = vmatmul.mubr.f32.gmra.mrb[0].mxu0 %v3622
  %v3699 = vpop.f32.mrb[0].mxu0
  %v3700 = vadd.f32 0.0, %v3699
  %v3701 = vpop.f32.mrb[0].mxu0
  %3702 = vmatprep.mubr.f32.mxu0 0.0
  %3703 = vmatmul.mubr.f32.gmra.mrb[0].mxu0 %v3625
  %v3704 = vpop.f32.mrb[0].mxu0
  %v3705 = vadd.f32 0.0, %v3704
  %v3706 = vpop.f32.mrb[0].mxu0
  %3707 = vdwg.mxu0
  %v3708 = vmul.f32 %v3700, 0.17677669
  %v3709 = vmul.f32 %v3705, 0.17677669
  %v3710 = vsel %vm105, %v3708, -inf
  %3711 = vmax.xlane.f32.xlu0 %v3710
  %v3712 = vpop.xlane.xlu0 %3711
  %v3713 = vsel %vm109, %v3709, -inf
  %3714 = vmax.xlane.f32.xlu0 %v3713
  %v3715 = vpop.xlane.xlu0 %3714
  %v3716 = vsub.f32 %v3708, %v3712
  %v3717 = vsub.f32 %v3709, %v3715
  %v3718 = vmul.f32 %v3716, 1.442695
  %v3719 = vpow.pop %v3718
  %v3720 = vmul.f32 %v3717, 1.442695
  %v3721 = vpow.pop %v3720
  %v3722 = vsel %vm105, %v3719, 0.0
  %3723 = vadd.xlane.f32.xlu0 %v3722
  %v3724 = vpop.xlane.xlu0 %3723
  %v3725 = vsel %vm109, %v3721, 0.0
  %3726 = vadd.xlane.f32.xlu0 %v3725
  %v3727 = vpop.xlane.xlu0 %3726
  %v3728 = vrcp.pop %v3724
  %v3729 = vmul.f32 %v3719, %v3728
  %v3730 = vrcp.pop %v3727
  %v3731 = vmul.f32 %v3721, %v3730
  %v3733 = vsel %vm105, %v3729, 0
  %v3736 = vsel %vm105, %v3731, 0
  %3738 = vmatprep.subr.mxu0 0.0
  %3739 = vmatpush1.msra.mxu0 %v3619
  %3740 = vmatprep.subr.mxu0 0.0
  %3741 = vmatpush1.msra.mxu0 %v3620
  %3742 = vmatprep.subr.mxu0 0.0
  %3743 = vmatpush1.msra.mxu0 0.0
  %3744 = vmatprep.subr.mxu0 0.0
  %3745 = vmatpush1.msra.mxu0 0.0
  %3746 = vmatprep.subr.mxu0 0.0
  %3747 = vmatpush1.msra.mxu0 0.0
  %3748 = vmatprep.subr.mxu0 0.0
  %3749 = vmatpush1.msra.mxu0 0.0
  %3750 = vmatprep.subr.mxu0 0.0
  %3751 = vmatpush1.msra.mxu0 0.0
  %3752 = vmatprep.subr.mxu0 0.0
  %3753 = vmatpush1.msra.mxu0 0.0
  %3754 = vmatprep.subr.mxu0 0.0
  %3755 = vmatpush1.msra.mxu0 0.0
  %3756 = vmatprep.subr.mxu0 0.0
  %3757 = vmatpush1.msra.mxu0 0.0
  %3758 = vmatprep.subr.mxu0 0.0
  %3759 = vmatpush1.msra.mxu0 0.0
  %3760 = vmatprep.subr.mxu0 0.0
  %3761 = vmatpush1.msra.mxu0 0.0
  %3762 = vmatprep.subr.mxu0 0.0
  %3763 = vmatpush1.msra.mxu0 0.0
  %3764 = vmatprep.subr.mxu0 0.0
  %3765 = vmatpush1.msra.mxu0 0.0
  %3766 = vmatprep.subr.mxu0 0.0
  %3767 = vmatpush1.msra.mxu0 0.0
  %3768 = vmatprep.subr.mxu0 0.0
  %3769 = vmatpush1.msra.mxu0 0.0
  %3770 = vmatprep.subr.mxu0 0.0
  %3771 = vmatpush1.msra.mxu0 0.0
  %3772 = vmatprep.subr.mxu0 0.0
  %3773 = vmatpush1.msra.mxu0 0.0
  %3774 = vmatprep.subr.mxu0 0.0
  %3775 = vmatpush1.msra.mxu0 0.0
  %3776 = vmatprep.subr.mxu0 0.0
  %3777 = vmatpush1.msra.mxu0 0.0
  %3778 = vmatprep.subr.mxu0 0.0
  %3779 = vmatpush1.msra.mxu0 0.0
  %3780 = vmatprep.subr.mxu0 0.0
  %3781 = vmatpush1.msra.mxu0 0.0
  %3782 = vmatprep.subr.mxu0 0.0
  %3783 = vmatpush1.msra.mxu0 0.0
  %3784 = vmatprep.subr.mxu0 0.0
  %3785 = vmatpush1.msra.mxu0 0.0
  %3786 = vmatprep.subr.mxu0 0.0
  %3787 = vmatpush1.msra.mxu0 0.0
  %3788 = vmatprep.subr.mxu0 0.0
  %3789 = vmatpush1.msra.mxu0 0.0
  %3790 = vmatprep.subr.mxu0 0.0
  %3791 = vmatpush1.msra.mxu0 0.0
  %3792 = vmatprep.subr.mxu0 0.0
  %3793 = vmatpush1.msra.mxu0 0.0
  %3794 = vmatprep.subr.mxu0 0.0
  %3795 = vmatpush1.msra.mxu0 0.0
  %3796 = vmatprep.subr.mxu0 0.0
  %3797 = vmatpush1.msra.mxu0 0.0
  %3798 = vmatprep.subr.mxu0 0.0
  %3799 = vmatpush1.msra.mxu0 0.0
  %3800 = vmatprep.subr.mxu0 0.0
  %3801 = vmatpush1.msra.mxu0 0.0
  %3802 = vmatprep.mubr.f32.mxu0 0.0
  %3803 = vmatmul.mubr.f32.gmra.mrb[0].mxu0 %v3733
  %v3804 = vpop.f32.mrb[0].mxu0
  %v3805 = vadd.f32 0.0, %v3804
  %v3806 = vpop.f32.mrb[0].mxu0
  %3807 = vmatprep.mubr.f32.mxu0 0.0
  %3808 = vmatmul.mubr.f32.gmra.mrb[0].mxu0 %v3736
  %v3809 = vpop.f32.mrb[0].mxu0
  %v3810 = vadd.f32 0.0, %v3809
  %v3811 = vpop.f32.mrb[0].mxu0
  %3812 = vdwg.mxu0
  %v3813 = vadd.f32 %v3613, %v3805
  %v3814 = vadd.f32 %v3614, %v3810
  %s3815 = scalar_lea.vmem %s2, 240
  %3816 = vst.msk [vmem:[%s3815] sm:$0xff] %vm15, %v3813
  %3817 = vst.msk [vmem:[%s3815 + $0x8] sm:$0x1] %vm213, %v3814
  %s3818 = scalar_lea.vmem %s1, 272
  %v3819 = vld [vmem:[%s3818] sm:$0xff]
  %v3820 = vld [vmem:[%s3818 + $0x8] sm:$0xff]
  %v3822 = vsel %vm15, %v3813, 0
  %v3825 = vsel %vm15, %v3814, 0
  %v3828 = vsel %vm15, %v3819, 0
  %v3831 = vsel %vm15, %v3820, 0
  %3833 = vmatprep.subr.mxu0 0.0
  %3834 = vmatpush1.xpose.msra.mxu0 %v3828
  %3835 = vmatprep.subr.mxu0 0.0
  %3836 = vmatpush1.xpose.msra.mxu0 %v3831
  %3837 = vmatprep.subr.mxu0 0.0
  %3838 = vmatpush1.xpose.msra.mxu0 0.0
  %3839 = vmatprep.subr.mxu0 0.0
  %3840 = vmatpush1.xpose.msra.mxu0 0.0
  %3841 = vmatprep.subr.mxu0 0.0
  %3842 = vmatpush1.xpose.msra.mxu0 0.0
  %3843 = vmatprep.subr.mxu0 0.0
  %3844 = vmatpush1.xpose.msra.mxu0 0.0
  %3845 = vmatprep.subr.mxu0 0.0
  %3846 = vmatpush1.xpose.msra.mxu0 0.0
  %3847 = vmatprep.subr.mxu0 0.0
  %3848 = vmatpush1.xpose.msra.mxu0 0.0
  %3849 = vmatprep.subr.mxu0 0.0
  %3850 = vmatpush1.xpose.msra.mxu0 0.0
  %3851 = vmatprep.subr.mxu0 0.0
  %3852 = vmatpush1.xpose.msra.mxu0 0.0
  %3853 = vmatprep.subr.mxu0 0.0
  %3854 = vmatpush1.xpose.msra.mxu0 0.0
  %3855 = vmatprep.subr.mxu0 0.0
  %3856 = vmatpush1.xpose.msra.mxu0 0.0
  %3857 = vmatprep.subr.mxu0 0.0
  %3858 = vmatpush1.xpose.msra.mxu0 0.0
  %3859 = vmatprep.subr.mxu0 0.0
  %3860 = vmatpush1.xpose.msra.mxu0 0.0
  %3861 = vmatprep.subr.mxu0 0.0
  %3862 = vmatpush1.xpose.msra.mxu0 0.0
  %3863 = vmatprep.subr.mxu0 0.0
  %3864 = vmatpush1.xpose.msra.mxu0 0.0
  %3865 = vmatprep.subr.mxu0 0.0
  %3866 = vmatpush1.xpose.msra.mxu0 0.0
  %3867 = vmatprep.subr.mxu0 0.0
  %3868 = vmatpush1.xpose.msra.mxu0 0.0
  %3869 = vmatprep.subr.mxu0 0.0
  %3870 = vmatpush1.xpose.msra.mxu0 0.0
  %3871 = vmatprep.subr.mxu0 0.0
  %3872 = vmatpush1.xpose.msra.mxu0 0.0
  %3873 = vmatprep.subr.mxu0 0.0
  %3874 = vmatpush1.xpose.msra.mxu0 0.0
  %3875 = vmatprep.subr.mxu0 0.0
  %3876 = vmatpush1.xpose.msra.mxu0 0.0
  %3877 = vmatprep.subr.mxu0 0.0
  %3878 = vmatpush1.xpose.msra.mxu0 0.0
  %3879 = vmatprep.subr.mxu0 0.0
  %3880 = vmatpush1.xpose.msra.mxu0 0.0
  %3881 = vmatprep.subr.mxu0 0.0
  %3882 = vmatpush1.xpose.msra.mxu0 0.0
  %3883 = vmatprep.subr.mxu0 0.0
  %3884 = vmatpush1.xpose.msra.mxu0 0.0
  %3885 = vmatprep.subr.mxu0 0.0
  %3886 = vmatpush1.xpose.msra.mxu0 0.0
  %3887 = vmatprep.subr.mxu0 0.0
  %3888 = vmatpush1.xpose.msra.mxu0 0.0
  %3889 = vmatprep.subr.mxu0 0.0
  %3890 = vmatpush1.xpose.msra.mxu0 0.0
  %3891 = vmatprep.subr.mxu0 0.0
  %3892 = vmatpush1.xpose.msra.mxu0 0.0
  %3893 = vmatprep.subr.mxu0 0.0
  %3894 = vmatpush1.xpose.msra.mxu0 0.0
  %3895 = vmatprep.subr.mxu0 0.0
  %3896 = vmatpush1.xpose.msra.mxu0 0.0
  %3897 = vmatprep.mubr.f32.mxu0 0.0
  %3898 = vmatmul.mubr.f32.gmra.mrb[0].mxu0 %v3822
  %v3899 = vpop.f32.mrb[0].mxu0
  %v3900 = vadd.f32 0.0, %v3899
  %v3901 = vpop.f32.mrb[0].mxu0
  %3902 = vmatprep.mubr.f32.mxu0 0.0
  %3903 = vmatmul.mubr.f32.gmra.mrb[0].mxu0 %v3825
  %v3904 = vpop.f32.mrb[0].mxu0
  %v3905 = vadd.f32 0.0, %v3904
  %v3906 = vpop.f32.mrb[0].mxu0
  %3907 = vdwg.mxu0
  %v3908 = vmul.f32 %v3900, 0.17677669
  %v3909 = vmul.f32 %v3905, 0.17677669
  %v3910 = vsel %vm105, %v3908, -inf
  %3911 = vmax.xlane.f32.xlu0 %v3910
  %v3912 = vpop.xlane.xlu0 %3911
  %v3913 = vsel %vm109, %v3909, -inf
  %3914 = vmax.xlane.f32.xlu0 %v3913
  %v3915 = vpop.xlane.xlu0 %3914
  %v3916 = vsub.f32 %v3908, %v3912
  %v3917 = vsub.f32 %v3909, %v3915
  %v3918 = vmul.f32 %v3916, 1.442695
  %v3919 = vpow.pop %v3918
  %v3920 = vmul.f32 %v3917, 1.442695
  %v3921 = vpow.pop %v3920
  %v3922 = vsel %vm105, %v3919, 0.0
  %3923 = vadd.xlane.f32.xlu0 %v3922
  %v3924 = vpop.xlane.xlu0 %3923
  %v3925 = vsel %vm109, %v3921, 0.0
  %3926 = vadd.xlane.f32.xlu0 %v3925
  %v3927 = vpop.xlane.xlu0 %3926
  %v3928 = vrcp.pop %v3924
  %v3929 = vmul.f32 %v3919, %v3928
  %v3930 = vrcp.pop %v3927
  %v3931 = vmul.f32 %v3921, %v3930
  %v3933 = vsel %vm105, %v3929, 0
  %v3936 = vsel %vm105, %v3931, 0
  %3938 = vmatprep.subr.mxu0 0.0
  %3939 = vmatpush1.msra.mxu0 %v3819
  %3940 = vmatprep.subr.mxu0 0.0
  %3941 = vmatpush1.msra.mxu0 %v3820
  %3942 = vmatprep.subr.mxu0 0.0
  %3943 = vmatpush1.msra.mxu0 0.0
  %3944 = vmatprep.subr.mxu0 0.0
  %3945 = vmatpush1.msra.mxu0 0.0
  %3946 = vmatprep.subr.mxu0 0.0
  %3947 = vmatpush1.msra.mxu0 0.0
  %3948 = vmatprep.subr.mxu0 0.0
  %3949 = vmatpush1.msra.mxu0 0.0
  %3950 = vmatprep.subr.mxu0 0.0
  %3951 = vmatpush1.msra.mxu0 0.0
  %3952 = vmatprep.subr.mxu0 0.0
  %3953 = vmatpush1.msra.mxu0 0.0
  %3954 = vmatprep.subr.mxu0 0.0
  %3955 = vmatpush1.msra.mxu0 0.0
  %3956 = vmatprep.subr.mxu0 0.0
  %3957 = vmatpush1.msra.mxu0 0.0
  %3958 = vmatprep.subr.mxu0 0.0
  %3959 = vmatpush1.msra.mxu0 0.0
  %3960 = vmatprep.subr.mxu0 0.0
  %3961 = vmatpush1.msra.mxu0 0.0
  %3962 = vmatprep.subr.mxu0 0.0
  %3963 = vmatpush1.msra.mxu0 0.0
  %3964 = vmatprep.subr.mxu0 0.0
  %3965 = vmatpush1.msra.mxu0 0.0
  %3966 = vmatprep.subr.mxu0 0.0
  %3967 = vmatpush1.msra.mxu0 0.0
  %3968 = vmatprep.subr.mxu0 0.0
  %3969 = vmatpush1.msra.mxu0 0.0
  %3970 = vmatprep.subr.mxu0 0.0
  %3971 = vmatpush1.msra.mxu0 0.0
  %3972 = vmatprep.subr.mxu0 0.0
  %3973 = vmatpush1.msra.mxu0 0.0
  %3974 = vmatprep.subr.mxu0 0.0
  %3975 = vmatpush1.msra.mxu0 0.0
  %3976 = vmatprep.subr.mxu0 0.0
  %3977 = vmatpush1.msra.mxu0 0.0
  %3978 = vmatprep.subr.mxu0 0.0
  %3979 = vmatpush1.msra.mxu0 0.0
  %3980 = vmatprep.subr.mxu0 0.0
  %3981 = vmatpush1.msra.mxu0 0.0
  %3982 = vmatprep.subr.mxu0 0.0
  %3983 = vmatpush1.msra.mxu0 0.0
  %3984 = vmatprep.subr.mxu0 0.0
  %3985 = vmatpush1.msra.mxu0 0.0
  %3986 = vmatprep.subr.mxu0 0.0
  %3987 = vmatpush1.msra.mxu0 0.0
  %3988 = vmatprep.subr.mxu0 0.0
  %3989 = vmatpush1.msra.mxu0 0.0
  %3990 = vmatprep.subr.mxu0 0.0
  %3991 = vmatpush1.msra.mxu0 0.0
  %3992 = vmatprep.subr.mxu0 0.0
  %3993 = vmatpush1.msra.mxu0 0.0
  %3994 = vmatprep.subr.mxu0 0.0
  %3995 = vmatpush1.msra.mxu0 0.0
  %3996 = vmatprep.subr.mxu0 0.0
  %3997 = vmatpush1.msra.mxu0 0.0
  %3998 = vmatprep.subr.mxu0 0.0
  %3999 = vmatpush1.msra.mxu0 0.0
  %4000 = vmatprep.subr.mxu0 0.0
  %4001 = vmatpush1.msra.mxu0 0.0
  %4002 = vmatprep.mubr.f32.mxu0 0.0
  %4003 = vmatmul.mubr.f32.gmra.mrb[0].mxu0 %v3933
  %v4004 = vpop.f32.mrb[0].mxu0
  %v4005 = vadd.f32 0.0, %v4004
  %v4006 = vpop.f32.mrb[0].mxu0
  %4007 = vmatprep.mubr.f32.mxu0 0.0
  %4008 = vmatmul.mubr.f32.gmra.mrb[0].mxu0 %v3936
  %v4009 = vpop.f32.mrb[0].mxu0
  %v4010 = vadd.f32 0.0, %v4009
  %v4011 = vpop.f32.mrb[0].mxu0
  %4012 = vdwg.mxu0
  %v4013 = vadd.f32 %v3813, %v4005
  %v4014 = vadd.f32 %v3814, %v4010
  %s4015 = scalar_lea.vmem %s2, 272
  %4016 = vst.msk [vmem:[%s4015] sm:$0xff] %vm15, %v4013
  %4017 = vst.msk [vmem:[%s4015 + $0x8] sm:$0x1] %vm213, %v4014
  %s4018 = scalar_lea.vmem %s1, 304
  %v4019 = vld [vmem:[%s4018] sm:$0xff]
  %v4020 = vld [vmem:[%s4018 + $0x8] sm:$0xff]
  %v4022 = vsel %vm15, %v4013, 0
  %v4025 = vsel %vm15, %v4014, 0
  %v4028 = vsel %vm15, %v4019, 0
  %v4031 = vsel %vm15, %v4020, 0
  %4033 = vmatprep.subr.mxu0 0.0
  %4034 = vmatpush1.xpose.msra.mxu0 %v4028
  %4035 = vmatprep.subr.mxu0 0.0
  %4036 = vmatpush1.xpose.msra.mxu0 %v4031
  %4037 = vmatprep.subr.mxu0 0.0
  %4038 = vmatpush1.xpose.msra.mxu0 0.0
  %4039 = vmatprep.subr.mxu0 0.0
  %4040 = vmatpush1.xpose.msra.mxu0 0.0
  %4041 = vmatprep.subr.mxu0 0.0
  %4042 = vmatpush1.xpose.msra.mxu0 0.0
  %4043 = vmatprep.subr.mxu0 0.0
  %4044 = vmatpush1.xpose.msra.mxu0 0.0
  %4045 = vmatprep.subr.mxu0 0.0
  %4046 = vmatpush1.xpose.msra.mxu0 0.0
  %4047 = vmatprep.subr.mxu0 0.0
  %4048 = vmatpush1.xpose.msra.mxu0 0.0
  %4049 = vmatprep.subr.mxu0 0.0
  %4050 = vmatpush1.xpose.msra.mxu0 0.0
  %4051 = vmatprep.subr.mxu0 0.0
  %4052 = vmatpush1.xpose.msra.mxu0 0.0
  %4053 = vmatprep.subr.mxu0 0.0
  %4054 = vmatpush1.xpose.msra.mxu0 0.0
  %4055 = vmatprep.subr.mxu0 0.0
  %4056 = vmatpush1.xpose.msra.mxu0 0.0
  %4057 = vmatprep.subr.mxu0 0.0
  %4058 = vmatpush1.xpose.msra.mxu0 0.0
  %4059 = vmatprep.subr.mxu0 0.0
  %4060 = vmatpush1.xpose.msra.mxu0 0.0
  %4061 = vmatprep.subr.mxu0 0.0
  %4062 = vmatpush1.xpose.msra.mxu0 0.0
  %4063 = vmatprep.subr.mxu0 0.0
  %4064 = vmatpush1.xpose.msra.mxu0 0.0
  %4065 = vmatprep.subr.mxu0 0.0
  %4066 = vmatpush1.xpose.msra.mxu0 0.0
  %4067 = vmatprep.subr.mxu0 0.0
  %4068 = vmatpush1.xpose.msra.mxu0 0.0
  %4069 = vmatprep.subr.mxu0 0.0
  %4070 = vmatpush1.xpose.msra.mxu0 0.0
  %4071 = vmatprep.subr.mxu0 0.0
  %4072 = vmatpush1.xpose.msra.mxu0 0.0
  %4073 = vmatprep.subr.mxu0 0.0
  %4074 = vmatpush1.xpose.msra.mxu0 0.0
  %4075 = vmatprep.subr.mxu0 0.0
  %4076 = vmatpush1.xpose.msra.mxu0 0.0
  %4077 = vmatprep.subr.mxu0 0.0
  %4078 = vmatpush1.xpose.msra.mxu0 0.0
  %4079 = vmatprep.subr.mxu0 0.0
  %4080 = vmatpush1.xpose.msra.mxu0 0.0
  %4081 = vmatprep.subr.mxu0 0.0
  %4082 = vmatpush1.xpose.msra.mxu0 0.0
  %4083 = vmatprep.subr.mxu0 0.0
  %4084 = vmatpush1.xpose.msra.mxu0 0.0
  %4085 = vmatprep.subr.mxu0 0.0
  %4086 = vmatpush1.xpose.msra.mxu0 0.0
  %4087 = vmatprep.subr.mxu0 0.0
  %4088 = vmatpush1.xpose.msra.mxu0 0.0
  %4089 = vmatprep.subr.mxu0 0.0
  %4090 = vmatpush1.xpose.msra.mxu0 0.0
  %4091 = vmatprep.subr.mxu0 0.0
  %4092 = vmatpush1.xpose.msra.mxu0 0.0
  %4093 = vmatprep.subr.mxu0 0.0
  %4094 = vmatpush1.xpose.msra.mxu0 0.0
  %4095 = vmatprep.subr.mxu0 0.0
  %4096 = vmatpush1.xpose.msra.mxu0 0.0
  %4097 = vmatprep.mubr.f32.mxu0 0.0
  %4098 = vmatmul.mubr.f32.gmra.mrb[0].mxu0 %v4022
  %v4099 = vpop.f32.mrb[0].mxu0
  %v4100 = vadd.f32 0.0, %v4099
  %v4101 = vpop.f32.mrb[0].mxu0
  %4102 = vmatprep.mubr.f32.mxu0 0.0
  %4103 = vmatmul.mubr.f32.gmra.mrb[0].mxu0 %v4025
  %v4104 = vpop.f32.mrb[0].mxu0
  %v4105 = vadd.f32 0.0, %v4104
  %v4106 = vpop.f32.mrb[0].mxu0
  %4107 = vdwg.mxu0
  %v4108 = vmul.f32 %v4100, 0.17677669
  %v4109 = vmul.f32 %v4105, 0.17677669
  %v4110 = vsel %vm105, %v4108, -inf
  %4111 = vmax.xlane.f32.xlu0 %v4110
  %v4112 = vpop.xlane.xlu0 %4111
  %v4113 = vsel %vm109, %v4109, -inf
  %4114 = vmax.xlane.f32.xlu0 %v4113
  %v4115 = vpop.xlane.xlu0 %4114
  %v4116 = vsub.f32 %v4108, %v4112
  %v4117 = vsub.f32 %v4109, %v4115
  %v4118 = vmul.f32 %v4116, 1.442695
  %v4119 = vpow.pop %v4118
  %v4120 = vmul.f32 %v4117, 1.442695
  %v4121 = vpow.pop %v4120
  %v4122 = vsel %vm105, %v4119, 0.0
  %4123 = vadd.xlane.f32.xlu0 %v4122
  %v4124 = vpop.xlane.xlu0 %4123
  %v4125 = vsel %vm109, %v4121, 0.0
  %4126 = vadd.xlane.f32.xlu0 %v4125
  %v4127 = vpop.xlane.xlu0 %4126
  %v4128 = vrcp.pop %v4124
  %v4129 = vmul.f32 %v4119, %v4128
  %v4130 = vrcp.pop %v4127
  %v4131 = vmul.f32 %v4121, %v4130
  %v4133 = vsel %vm105, %v4129, 0
  %v4136 = vsel %vm105, %v4131, 0
  %4138 = vmatprep.subr.mxu0 0.0
  %4139 = vmatpush1.msra.mxu0 %v4019
  %4140 = vmatprep.subr.mxu0 0.0
  %4141 = vmatpush1.msra.mxu0 %v4020
  %4142 = vmatprep.subr.mxu0 0.0
  %4143 = vmatpush1.msra.mxu0 0.0
  %4144 = vmatprep.subr.mxu0 0.0
  %4145 = vmatpush1.msra.mxu0 0.0
  %4146 = vmatprep.subr.mxu0 0.0
  %4147 = vmatpush1.msra.mxu0 0.0
  %4148 = vmatprep.subr.mxu0 0.0
  %4149 = vmatpush1.msra.mxu0 0.0
  %4150 = vmatprep.subr.mxu0 0.0
  %4151 = vmatpush1.msra.mxu0 0.0
  %4152 = vmatprep.subr.mxu0 0.0
  %4153 = vmatpush1.msra.mxu0 0.0
  %4154 = vmatprep.subr.mxu0 0.0
  %4155 = vmatpush1.msra.mxu0 0.0
  %4156 = vmatprep.subr.mxu0 0.0
  %4157 = vmatpush1.msra.mxu0 0.0
  %4158 = vmatprep.subr.mxu0 0.0
  %4159 = vmatpush1.msra.mxu0 0.0
  %4160 = vmatprep.subr.mxu0 0.0
  %4161 = vmatpush1.msra.mxu0 0.0
  %4162 = vmatprep.subr.mxu0 0.0
  %4163 = vmatpush1.msra.mxu0 0.0
  %4164 = vmatprep.subr.mxu0 0.0
  %4165 = vmatpush1.msra.mxu0 0.0
  %4166 = vmatprep.subr.mxu0 0.0
  %4167 = vmatpush1.msra.mxu0 0.0
  %4168 = vmatprep.subr.mxu0 0.0
  %4169 = vmatpush1.msra.mxu0 0.0
  %4170 = vmatprep.subr.mxu0 0.0
  %4171 = vmatpush1.msra.mxu0 0.0
  %4172 = vmatprep.subr.mxu0 0.0
  %4173 = vmatpush1.msra.mxu0 0.0
  %4174 = vmatprep.subr.mxu0 0.0
  %4175 = vmatpush1.msra.mxu0 0.0
  %4176 = vmatprep.subr.mxu0 0.0
  %4177 = vmatpush1.msra.mxu0 0.0
  %4178 = vmatprep.subr.mxu0 0.0
  %4179 = vmatpush1.msra.mxu0 0.0
  %4180 = vmatprep.subr.mxu0 0.0
  %4181 = vmatpush1.msra.mxu0 0.0
  %4182 = vmatprep.subr.mxu0 0.0
  %4183 = vmatpush1.msra.mxu0 0.0
  %4184 = vmatprep.subr.mxu0 0.0
  %4185 = vmatpush1.msra.mxu0 0.0
  %4186 = vmatprep.subr.mxu0 0.0
  %4187 = vmatpush1.msra.mxu0 0.0
  %4188 = vmatprep.subr.mxu0 0.0
  %4189 = vmatpush1.msra.mxu0 0.0
  %4190 = vmatprep.subr.mxu0 0.0
  %4191 = vmatpush1.msra.mxu0 0.0
  %4192 = vmatprep.subr.mxu0 0.0
  %4193 = vmatpush1.msra.mxu0 0.0
  %4194 = vmatprep.subr.mxu0 0.0
  %4195 = vmatpush1.msra.mxu0 0.0
  %4196 = vmatprep.subr.mxu0 0.0
  %4197 = vmatpush1.msra.mxu0 0.0
  %4198 = vmatprep.subr.mxu0 0.0
  %4199 = vmatpush1.msra.mxu0 0.0
  %4200 = vmatprep.subr.mxu0 0.0
  %4201 = vmatpush1.msra.mxu0 0.0
  %4202 = vmatprep.mubr.f32.mxu0 0.0
  %4203 = vmatmul.mubr.f32.gmra.mrb[0].mxu0 %v4133
  %v4204 = vpop.f32.mrb[0].mxu0
  %v4205 = vadd.f32 0.0, %v4204
  %v4206 = vpop.f32.mrb[0].mxu0
  %4207 = vmatprep.mubr.f32.mxu0 0.0
  %4208 = vmatmul.mubr.f32.gmra.mrb[0].mxu0 %v4136
  %v4209 = vpop.f32.mrb[0].mxu0
  %v4210 = vadd.f32 0.0, %v4209
  %v4211 = vpop.f32.mrb[0].mxu0
  %4212 = vdwg.mxu0
  %v4213 = vadd.f32 %v4013, %v4205
  %v4214 = vadd.f32 %v4014, %v4210
  %s4215 = scalar_lea.vmem %s2, 304
  %4216 = vst.msk [vmem:[%s4215] sm:$0xff] %vm15, %v4213
  %4217 = vst.msk [vmem:[%s4215 + $0x8] sm:$0x1] %vm213, %v4214
  %s4218 = scalar_lea.vmem %s1, 336
  %v4219 = vld [vmem:[%s4218] sm:$0xff]
  %v4220 = vld [vmem:[%s4218 + $0x8] sm:$0xff]
  %v4222 = vsel %vm15, %v4213, 0
  %v4225 = vsel %vm15, %v4214, 0
  %v4228 = vsel %vm15, %v4219, 0
  %v4231 = vsel %vm15, %v4220, 0
  %4233 = vmatprep.subr.mxu0 0.0
  %4234 = vmatpush1.xpose.msra.mxu0 %v4228
  %4235 = vmatprep.subr.mxu0 0.0
  %4236 = vmatpush1.xpose.msra.mxu0 %v4231
  %4237 = vmatprep.subr.mxu0 0.0
  %4238 = vmatpush1.xpose.msra.mxu0 0.0
  %4239 = vmatprep.subr.mxu0 0.0
  %4240 = vmatpush1.xpose.msra.mxu0 0.0
  %4241 = vmatprep.subr.mxu0 0.0
  %4242 = vmatpush1.xpose.msra.mxu0 0.0
  %4243 = vmatprep.subr.mxu0 0.0
  %4244 = vmatpush1.xpose.msra.mxu0 0.0
  %4245 = vmatprep.subr.mxu0 0.0
  %4246 = vmatpush1.xpose.msra.mxu0 0.0
  %4247 = vmatprep.subr.mxu0 0.0
  %4248 = vmatpush1.xpose.msra.mxu0 0.0
  %4249 = vmatprep.subr.mxu0 0.0
  %4250 = vmatpush1.xpose.msra.mxu0 0.0
  %4251 = vmatprep.subr.mxu0 0.0
  %4252 = vmatpush1.xpose.msra.mxu0 0.0
  %4253 = vmatprep.subr.mxu0 0.0
  %4254 = vmatpush1.xpose.msra.mxu0 0.0
  %4255 = vmatprep.subr.mxu0 0.0
  %4256 = vmatpush1.xpose.msra.mxu0 0.0
  %4257 = vmatprep.subr.mxu0 0.0
  %4258 = vmatpush1.xpose.msra.mxu0 0.0
  %4259 = vmatprep.subr.mxu0 0.0
  %4260 = vmatpush1.xpose.msra.mxu0 0.0
  %4261 = vmatprep.subr.mxu0 0.0
  %4262 = vmatpush1.xpose.msra.mxu0 0.0
  %4263 = vmatprep.subr.mxu0 0.0
  %4264 = vmatpush1.xpose.msra.mxu0 0.0
  %4265 = vmatprep.subr.mxu0 0.0
  %4266 = vmatpush1.xpose.msra.mxu0 0.0
  %4267 = vmatprep.subr.mxu0 0.0
  %4268 = vmatpush1.xpose.msra.mxu0 0.0
  %4269 = vmatprep.subr.mxu0 0.0
  %4270 = vmatpush1.xpose.msra.mxu0 0.0
  %4271 = vmatprep.subr.mxu0 0.0
  %4272 = vmatpush1.xpose.msra.mxu0 0.0
  %4273 = vmatprep.subr.mxu0 0.0
  %4274 = vmatpush1.xpose.msra.mxu0 0.0
  %4275 = vmatprep.subr.mxu0 0.0
  %4276 = vmatpush1.xpose.msra.mxu0 0.0
  %4277 = vmatprep.subr.mxu0 0.0
  %4278 = vmatpush1.xpose.msra.mxu0 0.0
  %4279 = vmatprep.subr.mxu0 0.0
  %4280 = vmatpush1.xpose.msra.mxu0 0.0
  %4281 = vmatprep.subr.mxu0 0.0
  %4282 = vmatpush1.xpose.msra.mxu0 0.0
  %4283 = vmatprep.subr.mxu0 0.0
  %4284 = vmatpush1.xpose.msra.mxu0 0.0
  %4285 = vmatprep.subr.mxu0 0.0
  %4286 = vmatpush1.xpose.msra.mxu0 0.0
  %4287 = vmatprep.subr.mxu0 0.0
  %4288 = vmatpush1.xpose.msra.mxu0 0.0
  %4289 = vmatprep.subr.mxu0 0.0
  %4290 = vmatpush1.xpose.msra.mxu0 0.0
  %4291 = vmatprep.subr.mxu0 0.0
  %4292 = vmatpush1.xpose.msra.mxu0 0.0
  %4293 = vmatprep.subr.mxu0 0.0
  %4294 = vmatpush1.xpose.msra.mxu0 0.0
  %4295 = vmatprep.subr.mxu0 0.0
  %4296 = vmatpush1.xpose.msra.mxu0 0.0
  %4297 = vmatprep.mubr.f32.mxu0 0.0
  %4298 = vmatmul.mubr.f32.gmra.mrb[0].mxu0 %v4222
  %v4299 = vpop.f32.mrb[0].mxu0
  %v4300 = vadd.f32 0.0, %v4299
  %v4301 = vpop.f32.mrb[0].mxu0
  %4302 = vmatprep.mubr.f32.mxu0 0.0
  %4303 = vmatmul.mubr.f32.gmra.mrb[0].mxu0 %v4225
  %v4304 = vpop.f32.mrb[0].mxu0
  %v4305 = vadd.f32 0.0, %v4304
  %v4306 = vpop.f32.mrb[0].mxu0
  %4307 = vdwg.mxu0
  %v4308 = vmul.f32 %v4300, 0.17677669
  %v4309 = vmul.f32 %v4305, 0.17677669
  %v4310 = vsel %vm105, %v4308, -inf
  %4311 = vmax.xlane.f32.xlu0 %v4310
  %v4312 = vpop.xlane.xlu0 %4311
  %v4313 = vsel %vm109, %v4309, -inf
  %4314 = vmax.xlane.f32.xlu0 %v4313
  %v4315 = vpop.xlane.xlu0 %4314
  %v4316 = vsub.f32 %v4308, %v4312
  %v4317 = vsub.f32 %v4309, %v4315
  %v4318 = vmul.f32 %v4316, 1.442695
  %v4319 = vpow.pop %v4318
  %v4320 = vmul.f32 %v4317, 1.442695
  %v4321 = vpow.pop %v4320
  %v4322 = vsel %vm105, %v4319, 0.0
  %4323 = vadd.xlane.f32.xlu0 %v4322
  %v4324 = vpop.xlane.xlu0 %4323
  %v4325 = vsel %vm109, %v4321, 0.0
  %4326 = vadd.xlane.f32.xlu0 %v4325
  %v4327 = vpop.xlane.xlu0 %4326
  %v4328 = vrcp.pop %v4324
  %v4329 = vmul.f32 %v4319, %v4328
  %v4330 = vrcp.pop %v4327
  %v4331 = vmul.f32 %v4321, %v4330
  %v4333 = vsel %vm105, %v4329, 0
  %v4336 = vsel %vm105, %v4331, 0
  %4338 = vmatprep.subr.mxu0 0.0
  %4339 = vmatpush1.msra.mxu0 %v4219
  %4340 = vmatprep.subr.mxu0 0.0
  %4341 = vmatpush1.msra.mxu0 %v4220
  %4342 = vmatprep.subr.mxu0 0.0
  %4343 = vmatpush1.msra.mxu0 0.0
  %4344 = vmatprep.subr.mxu0 0.0
  %4345 = vmatpush1.msra.mxu0 0.0
  %4346 = vmatprep.subr.mxu0 0.0
  %4347 = vmatpush1.msra.mxu0 0.0
  %4348 = vmatprep.subr.mxu0 0.0
  %4349 = vmatpush1.msra.mxu0 0.0
  %4350 = vmatprep.subr.mxu0 0.0
  %4351 = vmatpush1.msra.mxu0 0.0
  %4352 = vmatprep.subr.mxu0 0.0
  %4353 = vmatpush1.msra.mxu0 0.0
  %4354 = vmatprep.subr.mxu0 0.0
  %4355 = vmatpush1.msra.mxu0 0.0
  %4356 = vmatprep.subr.mxu0 0.0
  %4357 = vmatpush1.msra.mxu0 0.0
  %4358 = vmatprep.subr.mxu0 0.0
  %4359 = vmatpush1.msra.mxu0 0.0
  %4360 = vmatprep.subr.mxu0 0.0
  %4361 = vmatpush1.msra.mxu0 0.0
  %4362 = vmatprep.subr.mxu0 0.0
  %4363 = vmatpush1.msra.mxu0 0.0
  %4364 = vmatprep.subr.mxu0 0.0
  %4365 = vmatpush1.msra.mxu0 0.0
  %4366 = vmatprep.subr.mxu0 0.0
  %4367 = vmatpush1.msra.mxu0 0.0
  %4368 = vmatprep.subr.mxu0 0.0
  %4369 = vmatpush1.msra.mxu0 0.0
  %4370 = vmatprep.subr.mxu0 0.0
  %4371 = vmatpush1.msra.mxu0 0.0
  %4372 = vmatprep.subr.mxu0 0.0
  %4373 = vmatpush1.msra.mxu0 0.0
  %4374 = vmatprep.subr.mxu0 0.0
  %4375 = vmatpush1.msra.mxu0 0.0
  %4376 = vmatprep.subr.mxu0 0.0
  %4377 = vmatpush1.msra.mxu0 0.0
  %4378 = vmatprep.subr.mxu0 0.0
  %4379 = vmatpush1.msra.mxu0 0.0
  %4380 = vmatprep.subr.mxu0 0.0
  %4381 = vmatpush1.msra.mxu0 0.0
  %4382 = vmatprep.subr.mxu0 0.0
  %4383 = vmatpush1.msra.mxu0 0.0
  %4384 = vmatprep.subr.mxu0 0.0
  %4385 = vmatpush1.msra.mxu0 0.0
  %4386 = vmatprep.subr.mxu0 0.0
  %4387 = vmatpush1.msra.mxu0 0.0
  %4388 = vmatprep.subr.mxu0 0.0
  %4389 = vmatpush1.msra.mxu0 0.0
  %4390 = vmatprep.subr.mxu0 0.0
  %4391 = vmatpush1.msra.mxu0 0.0
  %4392 = vmatprep.subr.mxu0 0.0
  %4393 = vmatpush1.msra.mxu0 0.0
  %4394 = vmatprep.subr.mxu0 0.0
  %4395 = vmatpush1.msra.mxu0 0.0
  %4396 = vmatprep.subr.mxu0 0.0
  %4397 = vmatpush1.msra.mxu0 0.0
  %4398 = vmatprep.subr.mxu0 0.0
  %4399 = vmatpush1.msra.mxu0 0.0
  %4400 = vmatprep.subr.mxu0 0.0
  %4401 = vmatpush1.msra.mxu0 0.0
  %4402 = vmatprep.mubr.f32.mxu0 0.0
  %4403 = vmatmul.mubr.f32.gmra.mrb[0].mxu0 %v4333
  %v4404 = vpop.f32.mrb[0].mxu0
  %v4405 = vadd.f32 0.0, %v4404
  %v4406 = vpop.f32.mrb[0].mxu0
  %4407 = vmatprep.mubr.f32.mxu0 0.0
  %4408 = vmatmul.mubr.f32.gmra.mrb[0].mxu0 %v4336
  %v4409 = vpop.f32.mrb[0].mxu0
  %v4410 = vadd.f32 0.0, %v4409
  %v4411 = vpop.f32.mrb[0].mxu0
  %4412 = vdwg.mxu0
  %v4413 = vadd.f32 %v4213, %v4405
  %v4414 = vadd.f32 %v4214, %v4410
  %s4415 = scalar_lea.vmem %s2, 336
  %4416 = vst.msk [vmem:[%s4415] sm:$0xff] %vm15, %v4413
  %4417 = vst.msk [vmem:[%s4415 + $0x8] sm:$0x1] %vm213, %v4414
  // Predicated region
  $region10: #{forward.6} parent=0 // pred_check
    _
  $region11: #{forward.6} parent=0 // pred_check_branch
    %4419 = sbr.rel (0) target = $region13
  $region12: #{forward.6} parent=0 // pred_region
    _
  $region13: #{forward.6} parent=0 // pred_fallthru
    _
  // Predicated region
  $region14: #{forward.6} parent=0 // pred_check
    _
  $region15: #{forward.6} parent=0 // pred_check_branch
    %4421 = sbr.rel (0) target = $region17
  $region16: #{forward.6} parent=0 // pred_region
    _
  $region17: #{forward.6} parent=0 // pred_fallthru
    _

</llo_original>
